<compile_context>
chip_gen: v7x
topology: tpu7x:2x2x1
jax: 0.10.0
libtpu: 0.0.40
codegen_flags: <defaults>
</compile_context>

<pallas_src>
import functools
import math

import jax
import jax.numpy as jnp
from jax import lax
from jax.experimental import pallas as pl
from jax.experimental.pallas import tpu as pltpu

# ----------------------------- model config ---------------------------------
VOCAB_SIZE = 5000
D_MODEL = 128
NUM_LAYERS = 6
NUM_HEADS = 8
HEAD_DIM = D_MODEL // NUM_HEADS
MLP_DIM = 256
BLOCK = 128            # fp8 block size (per reference)
LN_EPS = 1e-5
VOCAB_PAD = pl.cdiv(VOCAB_SIZE, BLOCK) * BLOCK   # 5120, lane-dense lm_head

F8_E4M3 = jnp.float8_e4m3fn
F8_E5M2 = jnp.float8_e5m2

# (max finite value, mantissa bits, min normal exponent)
FP8_SPEC_E4M3 = (448.0, 3, -6)
FP8_SPEC_E5M2 = (57344.0, 2, -14)

_MAGIC = 1.5 * (2.0 ** 23)   # RNE integer-rounding magic constant for f32


# ========================= in-kernel math helpers ============================
def _round_to_fp8(x, max_val, mant_bits, min_normal_exp):
    """Emulate f32 -> fp8 -> f32 (round-to-nearest) using only VPU ops.

    Normal range: Veltkamp split keeps a (1 + mant_bits)-bit significand.
    Subnormal range: fixed quantum 2^(min_normal_exp - mant_bits).
    Out-of-range values saturate to +-max_val.
    """
    c = 2.0 ** (23 - mant_bits) + 1.0
    y = x * c
    normal = y - (y - x)
    quantum = 2.0 ** (min_normal_exp - mant_bits)
    t = x * (1.0 / quantum) + _MAGIC
    sub = (t - _MAGIC) * quantum
    out = jnp.where(jnp.abs(x) < 2.0 ** min_normal_exp, sub, normal)
    return jnp.clip(out, -max_val, max_val)


def _fp8_matmul(x, w_bf16, spec):
    """Emulated FP8Linear matmul: per-128-K-block absmax act quant, bf16 MXU
    GEMM (exact for fp8-valued operands), per-block scale applied to the f32
    accumulator.  Weight scales are ones (reference init) and baked into w."""
    max_val, mant_bits, min_exp = spec
    _, kdim = x.shape
    acc = None
    for kb in range(kdim // BLOCK):
        xb = x[:, kb * BLOCK:(kb + 1) * BLOCK]
        amax = jnp.max(jnp.abs(xb), axis=-1, keepdims=True)     # (M, 1)
        safe = amax > 0.0
        denom = jnp.where(safe, amax, 1.0)
        s_inv = jnp.where(safe, max_val / denom, 1.0)            # (M, 1) divide
        s = jnp.where(safe, amax * (1.0 / max_val), 1.0)         # (M, 1)
        xq = _round_to_fp8(xb * s_inv, max_val, mant_bits, min_exp)
        part = jnp.dot(xq.astype(jnp.bfloat16),
                       w_bf16[kb * BLOCK:(kb + 1) * BLOCK, :],
                       preferred_element_type=jnp.float32)
        term = part * s
        acc = term if acc is None else acc + term
    return acc


def _layer_norm(x, gamma, beta, eps=LN_EPS):
    mean = jnp.mean(x, axis=-1, keepdims=True)
    xc = x - mean
    var = jnp.mean(xc * xc, axis=-1, keepdims=True)   # unbiased=False
    return xc * lax.rsqrt(var + eps) * gamma + beta


def _erf(x):
    # Abramowitz & Stegun 7.1.26 rational approximation, |abs err| <= 1.5e-7.
    # TODO(synk): use lax.erf once its Mosaic in-kernel lowering is guaranteed
    #             on all TPU generations (would move this onto the idle EUP).
    p = 0.3275911
    a1, a2, a3, a4, a5 = (0.254829592, -0.284496736, 1.421413741,
                          -1.453152027, 1.061405429)
    ax = jnp.abs(x)
    t = 1.0 / (1.0 + p * ax)
    poly = ((((a5 * t + a4) * t + a3) * t + a2) * t + a1) * t
    y = 1.0 - poly * jnp.exp(-ax * ax)
    return jnp.where(x >= 0.0, y, -y)


def _gelu_exact(x):
    return 0.5 * x * (1.0 + _erf(x * (1.0 / math.sqrt(2.0))))


def _attention(q, k, v, batch, seq):
    """Bidirectional softmax attention, all heads in-kernel, context returned
    as a register value (no VMEM scratch, no masked partial stores).

    Per-(batch, head) matmuls are statically unrolled (B*H = 16; compute is
    negligible at these shapes); head outputs are assembled lane-dense with
    jnp.concatenate in registers."""
    inv_scale = 1.0 / math.sqrt(HEAD_DIM)
    batch_rows = []
    for b in range(batch):
        r0 = b * seq
        qb = q[r0:r0 + seq, :]
        kb = k[r0:r0 + seq, :]
        vb = v[r0:r0 + seq, :]
        heads = []
        for h in range(NUM_HEADS):
            c0 = h * HEAD_DIM
            qh = qb[:, c0:c0 + HEAD_DIM]
            kh = kb[:, c0:c0 + HEAD_DIM]
            vh = vb[:, c0:c0 + HEAD_DIM]
            # q @ k^T without materializing a transpose.
            s = lax.dot_general(qh, kh, (((1,), (1,)), ((), ())),
                                preferred_element_type=jnp.float32) * inv_scale
            s = s - jnp.max(s, axis=-1, keepdims=True)
            p = jnp.exp(s)
            p = p / jnp.sum(p, axis=-1, keepdims=True)    # exact division
            heads.append(jnp.dot(p, vh, preferred_element_type=jnp.float32))
        batch_rows.append(jnp.concatenate(heads, axis=-1))   # (T, 128)
    return jnp.concatenate(batch_rows, axis=0)               # (B*T, 128)


# ===================== fused transformer-stack kernel ========================
def _stack_kernel(x_in_ref, wa_ref, w2_ref, misc_ref, fnorm_ref, x_out_ref,
                  *, batch, seq):
    l = pl.program_id(0)
    last = pl.num_programs(0) - 1

    @pl.when(l == 0)
    def _():
        x_out_ref[...] = x_in_ref[...]       # seed the resident activation

    x = x_out_ref[...]                       # (M, 128) carried across layers

    # ---- consolidated per-layer operands (static slices are cheap views) ----
    wa = wa_ref[0]                                    # (128, 768) bf16
    w_qkv = wa[:, 0:3 * D_MODEL]                      # (128, 384)
    w_out = wa[:, 3 * D_MODEL:4 * D_MODEL]            # (128, 128)
    w_fc1 = wa[:, 4 * D_MODEL:6 * D_MODEL]            # (128, 256)
    w_fc2 = w2_ref[0]                                 # (256, 128) bf16

    misc = misc_ref[0]                                # (8, 256) f32
    b1 = misc[0:1, :]                                 # (1, 256)
    b2 = misc[1:2, 0:D_MODEL]                         # (1, 128)
    ln1_g = misc[2:3, 0:D_MODEL]
    ln1_b = misc[2:3, D_MODEL:2 * D_MODEL]
    ln2_g = misc[3:4, 0:D_MODEL]
    ln2_b = misc[3:4, D_MODEL:2 * D_MODEL]

    # ---- self attention (q/k/v/out_proj are bias-free, fmt = e5m2) ----------
    qkv = _fp8_matmul(x, w_qkv, FP8_SPEC_E5M2)        # (M, 384)
    q = qkv[:, 0:D_MODEL]
    k = qkv[:, D_MODEL:2 * D_MODEL]
    v = qkv[:, 2 * D_MODEL:3 * D_MODEL]
    ctx = _attention(q, k, v, batch, seq)             # register value (M, 128)
    attn_out = _fp8_matmul(ctx, w_out, FP8_SPEC_E5M2)
    x = _layer_norm(x + attn_out, ln1_g, ln1_b)       # dropout1 == identity

    # ---- MLP (fc1/fc2 have bias, fmt = e4m3) --------------------------------
    h = _fp8_matmul(x, w_fc1, FP8_SPEC_E4M3) + b1
    h = _gelu_exact(h)
    h = _fp8_matmul(h, w_fc2, FP8_SPEC_E4M3) + b2
    x = _layer_norm(x + h, ln2_g, ln2_b)              # dropout2 == identity

    @pl.when(l != last)
    def _():
        x_out_ref[...] = x

    @pl.when(l == last)
    def _():
        # FP8Transformer.norm followed by MiniLM.norm, fused into the last step
        # (single store on the final step).
        fn = fnorm_ref[...]                           # (8, 128)
        y = _layer_norm(x, fn[0:1, :], fn[1:2, :])
        y = _layer_norm(y, fn[2:3, :], fn[3:4, :])
        x_out_ref[...] = y


def transformer_stack(x2d, params, *, batch, seq):
    m, d = x2d.shape
    kernel = functools.partial(_stack_kernel, batch=batch, seq=seq)
    per_layer = lambda l: (l, 0, 0)
    full2d = lambda l: (0, 0)
    return pl.pallas_call(
        kernel,
        out_shape=jax.ShapeDtypeStruct((m, d), jnp.float32),
        grid=(NUM_LAYERS,),
        in_specs=[
            pl.BlockSpec((m, d), full2d),                          # x
            pl.BlockSpec((1, D_MODEL, 6 * D_MODEL), per_layer),    # Wqkv|Wout|W1
            pl.BlockSpec((1, MLP_DIM, D_MODEL), per_layer),        # W2
            pl.BlockSpec((1, 8, 2 * D_MODEL), per_layer),          # b1/b2/ln1/ln2
            pl.BlockSpec((8, D_MODEL), full2d),                    # final norms
        ],
        out_specs=pl.BlockSpec((m, d), full2d),
        compiler_params=pltpu.CompilerParams(
            dimension_semantics=("arbitrary",)),       # sequential over layers
    )(x2d, params["wa"], params["w2"], params["misc"], params["fnorm"])


# ============================== lm_head kernel ===============================
def _lm_head_kernel(x_ref, w_ref, b_ref, o_ref):
    o_ref[...] = _fp8_matmul(x_ref[...], w_ref[...], FP8_SPEC_E4M3) + b_ref[...]


def _lm_head_tile():
    """Single-TensorCore chips (v5e/v6e): 2 big tiles (halve per-step overhead).
    Dual-TC / unknown chips: 4 tiles of 1280 so each core keeps DMA/compute
    pipelining.  Trace-time Python only."""
    try:
        kind = jax.devices()[0].device_kind.lower()
    except Exception:
        kind = ""
    single_tc = any(t in kind for t in ("v5e", "v5 lite", "v5lite",
                                        "v6e", "v6 lite", "v6lite"))
    return 2560 if single_tc else 1280


def lm_head(x2d, w_pad, b_pad):
    m, d = x2d.shape
    n_pad = w_pad.shape[1]
    tile = _lm_head_tile()
    return pl.pallas_call(
        _lm_head_kernel,
        out_shape=jax.ShapeDtypeStruct((m, n_pad), jnp.float32),
        grid=(n_pad // tile,),
        in_specs=[
            pl.BlockSpec((m, d), lambda j: (0, 0)),
            pl.BlockSpec((d, tile), lambda j: (0, j)),
            pl.BlockSpec((1, tile), lambda j: (0, j)),
        ],
        out_specs=pl.BlockSpec((m, tile), lambda j: (0, j)),
        compiler_params=pltpu.CompilerParams(
            dimension_semantics=("parallel",)),
    )(x2d, w_pad, b_pad)


# ============================= parameter init ================================
def _xavier_fp8_weight(key, in_f, out_f, fmt):
    limit = math.sqrt(6.0 / (in_f + out_f))                 # xavier uniform
    w = jax.random.uniform(key, (out_f, in_f), jnp.float32, -limit, limit)
    # Exact fp8 round trip at init (plain XLA cast). weight_scale == 1
    # (reference init), so the dequantized weight equals the stored fp8 value
    # and is exactly representable in bf16 -> bf16 MXU path matches.
    wq = w.astype(fmt).astype(jnp.float32)
    # TODO(synk): store as fp8/uint8 in HBM and upcast in-kernel to halve
    #             weight DMA once fp8 in-kernel casts are verified on all gens.
    return wq.T.astype(jnp.bfloat16)                        # (in_f, out_f)


def init_minilm(key):
    keys = jax.random.split(key, 2 + NUM_LAYERS * 6)
    embed = jax.random.normal(keys[0], (VOCAB_SIZE, D_MODEL), jnp.float32)

    wa_list, w2_list, misc_list = [], [], []
    for l in range(NUM_LAYERS):
        k = keys[2 + l * 6: 2 + (l + 1) * 6]
        wq = _xavier_fp8_weight(k[0], D_MODEL, D_MODEL, F8_E5M2)
        wk = _xavier_fp8_weight(k[1], D_MODEL, D_MODEL, F8_E5M2)
        wv = _xavier_fp8_weight(k[2], D_MODEL, D_MODEL, F8_E5M2)
        wo = _xavier_fp8_weight(k[3], D_MODEL, D_MODEL, F8_E5M2)
        w1 = _xavier_fp8_weight(k[4], D_MODEL, MLP_DIM, F8_E4M3)
        w2 = _xavier_fp8_weight(k[5], MLP_DIM, D_MODEL, F8_E4M3)
        # Consolidated same-K weights: [Wqkv (384) | Wout (128) | W1 (256)].
        wa_list.append(jnp.concatenate([wq, wk, wv, wo, w1], axis=1))  # (128,768)
        w2_list.append(w2)                                             # (256,128)
        # Misc per-layer slab (8, 256):
        #   row0 = b1 (256, zeros), row1 = [b2 | 0], row2 = [ln1_g | ln1_b],
        #   row3 = [ln2_g | ln2_b], rows 4-7 pad.
        # FP8LayerNorm: weight = fp8(1)*scale(1) = 1, bias = fp8(0)*1 = 0.
        misc = jnp.zeros((8, 2 * D_MODEL), jnp.float32)
        misc = misc.at[2, 0:D_MODEL].set(1.0)   # ln1 gamma
        misc = misc.at[3, 0:D_MODEL].set(1.0)   # ln2 gamma
        misc_list.append(misc)

    # Final norms slab (8, 128): rows = [t_gamma, t_beta, f_gamma, f_beta, pad].
    fnorm = jnp.zeros((8, D_MODEL), jnp.float32)
    fnorm = fnorm.at[0].set(1.0).at[2].set(1.0)

    # lm_head: pad N 5000 -> 5120 for lane-dense stores; slice after the kernel.
    w_lm = _xavier_fp8_weight(keys[1], D_MODEL, VOCAB_SIZE, F8_E4M3)  # (128,5000)
    w_lm_pad = jnp.zeros((D_MODEL, VOCAB_PAD), jnp.bfloat16)
    w_lm_pad = w_lm_pad.at[:, :VOCAB_SIZE].set(w_lm)
    b_lm_pad = jnp.zeros((1, VOCAB_PAD), jnp.float32)

    return {"embed": embed,
            "wa": jnp.stack(wa_list),        # (L, 128, 768) bf16
            "w2": jnp.stack(w2_list),        # (L, 256, 128) bf16
            "misc": jnp.stack(misc_list),    # (L, 8, 256) f32
            "fnorm": fnorm,                  # (8, 128) f32
            "w_lm": w_lm_pad, "b_lm": b_lm_pad}


# ================================ forward ====================================
def minilm_forward(params, input_ids):
    B, T = input_ids.shape
    x = params["embed"][input_ids].reshape(B * T, D_MODEL)   # embedding gather (glue)
    x = transformer_stack(x, params, batch=B, seq=T)         # 6 layers + 2 final LNs
    logits = lm_head(x, params["w_lm"], params["b_lm"])      # (B*T, VOCAB_PAD)
    return logits[:, :VOCAB_SIZE].reshape(B, T, VOCAB_SIZE)


# ================================== main =====================================
if __name__ == "__main__":
    key = jax.random.PRNGKey(0)
    pkey, ikey = jax.random.split(key)

    params = init_minilm(pkey)

    B, T = 2, 16
    input_ids = jax.random.randint(ikey, (B, T), 0, VOCAB_SIZE, dtype=jnp.int32)

    logits = jax.jit(minilm_forward)(params, input_ids)
    jax.block_until_ready(logits)

    assert logits.shape == (B, T, VOCAB_SIZE), logits.shape
    assert bool(jnp.all(jnp.isfinite(logits)))
    print("KERNEL_OK")
</pallas_src>

<mosaic_0001>
module attributes {stable_mosaic.version = 11 : i64} {
  func.func @_lm_head_kernel(%arg0: i32, %arg1: memref<32x128xf32, #tpu.memory_space<vmem>>, %arg2: memref<128x1280xbf16, #tpu.memory_space<vmem>>, %arg3: memref<1x1280xf32, #tpu.memory_space<vmem>>, %arg4: memref<32x1280xf32, #tpu.memory_space<vmem>>) attributes {dimension_semantics = [#tpu.dimension_semantics<parallel>], iteration_bounds = array<i64: 4>, scalar_prefetch = 0 : i64, scratch_operands = 0 : i64, tpu.core_type = #tpu.core_type<tc>, window_params = [{pipeline_mode = #tpu.pipeline_mode<synchronous>, transform_indices = @transform_0, window_bounds = array<i64: 32, 128>}, {transform_indices = @transform_1, window_bounds = array<i64: 128, 1280>}, {transform_indices = @transform_2, window_bounds = array<i64: 1, 1280>}, {transform_indices = @transform_3, window_bounds = array<i64: 32, 1280>}]} {
    %c0 = arith.constant 0 : index
    %c0_0 = arith.constant 0 : index
    %0 = vector.load %arg1[%c0, %c0_0] : memref<32x128xf32, #tpu.memory_space<vmem>>, vector<32x128xf32>
    %c0_1 = arith.constant 0 : index
    %c0_2 = arith.constant 0 : index
    %1 = vector.load %arg2[%c0_1, %c0_2] : memref<128x1280xbf16, #tpu.memory_space<vmem>>, vector<128x1280xbf16>
    %2 = math.absf %0 : vector<32x128xf32>
    %cst = arith.constant dense<0xFF800000> : vector<32xf32>
    %3 = vector.multi_reduction <maximumf>, %2, %cst [1] : vector<32x128xf32> to vector<32xf32>
    %4 = vector.shape_cast %3 : vector<32xf32> to vector<32x1xf32>
    %cst_3 = arith.constant 0.000000e+00 : f32
    %5 = vector.broadcast %cst_3 : f32 to vector<32x1xf32>
    %6 = arith.cmpf ogt, %4, %5 : vector<32x1xf32>
    %cst_4 = arith.constant 1.000000e+00 : f32
    %7 = vector.broadcast %cst_4 : f32 to vector<32x1xf32>
    %8 = arith.select %6, %4, %7 : vector<32x1xi1>, vector<32x1xf32>
    %cst_5 = arith.constant 4.480000e+02 : f32
    %9 = vector.broadcast %cst_5 : f32 to vector<32x1xf32>
    %10 = arith.divf %9, %8 : vector<32x1xf32>
    %cst_6 = arith.constant 1.000000e+00 : f32
    %11 = vector.broadcast %cst_6 : f32 to vector<32x1xf32>
    %12 = arith.select %6, %10, %11 : vector<32x1xi1>, vector<32x1xf32>
    %cst_7 = arith.constant 0.00223214296 : f32
    %13 = vector.broadcast %cst_7 : f32 to vector<32x1xf32>
    %14 = arith.mulf %4, %13 : vector<32x1xf32>
    %cst_8 = arith.constant 1.000000e+00 : f32
    %15 = vector.broadcast %cst_8 : f32 to vector<32x1xf32>
    %16 = arith.select %6, %14, %15 : vector<32x1xi1>, vector<32x1xf32>
    %17 = vector.broadcast %12 : vector<32x1xf32> to vector<32x128xf32>
    %18 = arith.mulf %0, %17 : vector<32x128xf32>
    %cst_9 = arith.constant 0x49800008 : f32
    %19 = vector.broadcast %cst_9 : f32 to vector<32x128xf32>
    %20 = arith.mulf %18, %19 : vector<32x128xf32>
    %21 = arith.subf %20, %18 : vector<32x128xf32>
    %22 = arith.subf %20, %21 : vector<32x128xf32>
    %cst_10 = arith.constant 5.120000e+02 : f32
    %23 = vector.broadcast %cst_10 : f32 to vector<32x128xf32>
    %24 = arith.mulf %18, %23 : vector<32x128xf32>
    %cst_11 = arith.constant 0x4B400000 : f32
    %25 = vector.broadcast %cst_11 : f32 to vector<32x128xf32>
    %26 = arith.addf %24, %25 : vector<32x128xf32>
    %cst_12 = arith.constant 0x4B400000 : f32
    %27 = vector.broadcast %cst_12 : f32 to vector<32x128xf32>
    %28 = arith.subf %26, %27 : vector<32x128xf32>
    %cst_13 = arith.constant 0.001953125 : f32
    %29 = vector.broadcast %cst_13 : f32 to vector<32x128xf32>
    %30 = arith.mulf %28, %29 : vector<32x128xf32>
    %31 = math.absf %18 : vector<32x128xf32>
    %cst_14 = arith.constant 1.562500e-02 : f32
    %32 = vector.broadcast %cst_14 : f32 to vector<32x128xf32>
    %33 = arith.cmpf olt, %31, %32 : vector<32x128xf32>
    %34 = arith.select %33, %30, %22 : vector<32x128xi1>, vector<32x128xf32>
    %cst_15 = arith.constant -4.480000e+02 : f32
    %cst_16 = arith.constant 4.480000e+02 : f32
    %35 = vector.broadcast %cst_15 : f32 to vector<32x128xf32>
    %36 = arith.maximumf %35, %34 : vector<32x128xf32>
    %37 = vector.broadcast %cst_16 : f32 to vector<32x128xf32>
    %38 = arith.minimumf %37, %36 : vector<32x128xf32>
    %39 = arith.truncf %38 : vector<32x128xf32> to vector<32x128xbf16>
    %cst_17 = arith.constant dense<0.000000e+00> : vector<32x1280xf32>
    %40 = tpu.matmul %39, %1, %cst_17 {dimension_numbers = #tpu.dot_dimension_numbers<[1], [0], [0], [1], [0, 0, 1, 1], [], []>} : vector<32x128xbf16>, vector<128x1280xbf16>, vector<32x1280xf32> -> vector<32x1280xf32>
    %41 = vector.broadcast %16 : vector<32x1xf32> to vector<32x1280xf32>
    %42 = arith.mulf %40, %41 : vector<32x1280xf32>
    %c0_18 = arith.constant 0 : index
    %c0_19 = arith.constant 0 : index
    %43 = vector.load %arg3[%c0_18, %c0_19] : memref<1x1280xf32, #tpu.memory_space<vmem>>, vector<1x1280xf32>
    %44 = vector.broadcast %43 : vector<1x1280xf32> to vector<32x1280xf32>
    %45 = arith.addf %42, %44 : vector<32x1280xf32>
    %c0_20 = arith.constant 0 : index
    %c0_21 = arith.constant 0 : index
    %46 = vector.load %arg4[%c0_20, %c0_21] : memref<32x1280xf32, #tpu.memory_space<vmem>>, vector<32x1280xf32>
    tpu.vector_store %arg4[%c0_20, %c0_21], %45 {strides = array<i32>} : memref<32x1280xf32, #tpu.memory_space<vmem>>, vector<32x1280xf32>,
    return
  }
  func.func @transform_0(%arg0: i32) -> (i32, i32) {
    %c0_i32 = arith.constant 0 : i32
    %c0_i32_0 = arith.constant 0 : i32
    %c0_i32_1 = arith.constant 0 : i32
    return %c0_i32, %c0_i32_0 : i32, i32
  }
  func.func @transform_1(%arg0: i32) -> (i32, i32) {
    %c0_i32 = arith.constant 0 : i32
    %c0_i32_0 = arith.constant 0 : i32
    return %c0_i32, %arg0 : i32, i32
  }
  func.func @transform_2(%arg0: i32) -> (i32, i32) {
    %c0_i32 = arith.constant 0 : i32
    %c0_i32_0 = arith.constant 0 : i32
    return %c0_i32, %arg0 : i32, i32
  }
  func.func @transform_3(%arg0: i32) -> (i32, i32) {
    %c0_i32 = arith.constant 0 : i32
    %c0_i32_0 = arith.constant 0 : i32
    return %c0_i32, %arg0 : i32, i32
  }
}

module attributes {stable_mosaic.version = 11 : i64} {
  func.func @_stack_kernel(%arg0: i32, %arg1: memref<32x128xf32, #tpu.memory_space<vmem>>, %arg2: memref<1x128x768xbf16, #tpu.memory_space<vmem>>, %arg3: memref<1x256x128xbf16, #tpu.memory_space<vmem>>, %arg4: memref<1x8x256xf32, #tpu.memory_space<vmem>>, %arg5: memref<8x128xf32, #tpu.memory_space<vmem>>, %arg6: memref<32x128xf32, #tpu.memory_space<vmem>>) attributes {dimension_semantics = [#tpu.dimension_semantics<arbitrary>], iteration_bounds = array<i64: 6>, scalar_prefetch = 0 : i64, scratch_operands = 0 : i64, tpu.core_type = #tpu.core_type<tc>, window_params = [{pipeline_mode = #tpu.pipeline_mode<synchronous>, transform_indices = @transform_0, window_bounds = array<i64: 32, 128>}, {transform_indices = @transform_1, window_bounds = array<i64: 1, 128, 768>}, {transform_indices = @transform_2, window_bounds = array<i64: 1, 256, 128>}, {transform_indices = @transform_3, window_bounds = array<i64: 1, 8, 256>}, {pipeline_mode = #tpu.pipeline_mode<synchronous>, transform_indices = @transform_4, window_bounds = array<i64: 8, 128>}, {pipeline_mode = #tpu.pipeline_mode<synchronous>, transform_indices = @transform_5, window_bounds = array<i64: 32, 128>}]} {
    %c0_i32 = arith.constant 0 : i32
    %0 = arith.cmpi eq, %arg0, %c0_i32 : i32
    %1 = arith.extui %0 : i1 to i32
    %c0_i32_0 = arith.constant 0 : i32
    %2 = arith.cmpi ne, %1, %c0_i32_0 : i32
    scf.if %2 {
      %c0_198 = arith.constant 0 : index
      %c0_199 = arith.constant 0 : index
      %589 = vector.load %arg1[%c0_198, %c0_199] : memref<32x128xf32, #tpu.memory_space<vmem>>, vector<32x128xf32>
      %c0_200 = arith.constant 0 : index
      %c0_201 = arith.constant 0 : index
      %590 = vector.load %arg6[%c0_200, %c0_201] : memref<32x128xf32, #tpu.memory_space<vmem>>, vector<32x128xf32>
      tpu.vector_store %arg6[%c0_200, %c0_201], %589 {strides = array<i32>} : memref<32x128xf32, #tpu.memory_space<vmem>>, vector<32x128xf32>,
    } else {
    }
    %c0 = arith.constant 0 : index
    %c0_1 = arith.constant 0 : index
    %3 = vector.load %arg6[%c0, %c0_1] : memref<32x128xf32, #tpu.memory_space<vmem>>, vector<32x128xf32>
    %c0_2 = arith.constant 0 : index
    %c0_3 = arith.constant 0 : index
    %c0_4 = arith.constant 0 : index
    %4 = vector.load %arg2[%c0_2, %c0_3, %c0_4] : memref<1x128x768xbf16, #tpu.memory_space<vmem>>, vector<1x128x768xbf16>
    %5 = vector.shape_cast %4 : vector<1x128x768xbf16> to vector<128x768xbf16>
    %6 = vector.extract_strided_slice %5 {offsets = [0, 0], sizes = [128, 384], strides = [1, 1]} : vector<128x768xbf16> to vector<128x384xbf16>
    %7 = vector.extract_strided_slice %5 {offsets = [0, 384], sizes = [128, 128], strides = [1, 1]} : vector<128x768xbf16> to vector<128x128xbf16>
    %8 = vector.extract_strided_slice %5 {offsets = [0, 512], sizes = [128, 256], strides = [1, 1]} : vector<128x768xbf16> to vector<128x256xbf16>
    %c0_5 = arith.constant 0 : index
    %c0_6 = arith.constant 0 : index
    %c0_7 = arith.constant 0 : index
    %9 = vector.load %arg3[%c0_5, %c0_6, %c0_7] : memref<1x256x128xbf16, #tpu.memory_space<vmem>>, vector<1x256x128xbf16>
    %10 = vector.shape_cast %9 : vector<1x256x128xbf16> to vector<256x128xbf16>
    %c0_8 = arith.constant 0 : index
    %c0_9 = arith.constant 0 : index
    %c0_10 = arith.constant 0 : index
    %11 = vector.load %arg4[%c0_8, %c0_9, %c0_10] : memref<1x8x256xf32, #tpu.memory_space<vmem>>, vector<1x8x256xf32>
    %12 = vector.shape_cast %11 : vector<1x8x256xf32> to vector<8x256xf32>
    %13 = vector.extract_strided_slice %12 {offsets = [0, 0], sizes = [1, 256], strides = [1, 1]} : vector<8x256xf32> to vector<1x256xf32>
    %14 = vector.extract_strided_slice %12 {offsets = [1, 0], sizes = [1, 128], strides = [1, 1]} : vector<8x256xf32> to vector<1x128xf32>
    %15 = vector.extract_strided_slice %12 {offsets = [2, 0], sizes = [1, 128], strides = [1, 1]} : vector<8x256xf32> to vector<1x128xf32>
    %16 = vector.extract_strided_slice %12 {offsets = [2, 128], sizes = [1, 128], strides = [1, 1]} : vector<8x256xf32> to vector<1x128xf32>
    %17 = vector.extract_strided_slice %12 {offsets = [3, 0], sizes = [1, 128], strides = [1, 1]} : vector<8x256xf32> to vector<1x128xf32>
    %18 = vector.extract_strided_slice %12 {offsets = [3, 128], sizes = [1, 128], strides = [1, 1]} : vector<8x256xf32> to vector<1x128xf32>
    %19 = math.absf %3 : vector<32x128xf32>
    %cst = arith.constant dense<0xFF800000> : vector<32xf32>
    %20 = vector.multi_reduction <maximumf>, %19, %cst [1] : vector<32x128xf32> to vector<32xf32>
    %21 = vector.shape_cast %20 : vector<32xf32> to vector<32x1xf32>
    %cst_11 = arith.constant 0.000000e+00 : f32
    %22 = vector.broadcast %cst_11 : f32 to vector<32x1xf32>
    %23 = arith.cmpf ogt, %21, %22 : vector<32x1xf32>
    %cst_12 = arith.constant 1.000000e+00 : f32
    %24 = vector.broadcast %cst_12 : f32 to vector<32x1xf32>
    %25 = arith.select %23, %21, %24 : vector<32x1xi1>, vector<32x1xf32>
    %cst_13 = arith.constant 5.734400e+04 : f32
    %26 = vector.broadcast %cst_13 : f32 to vector<32x1xf32>
    %27 = arith.divf %26, %25 : vector<32x1xf32>
    %cst_14 = arith.constant 1.000000e+00 : f32
    %28 = vector.broadcast %cst_14 : f32 to vector<32x1xf32>
    %29 = arith.select %23, %27, %28 : vector<32x1xi1>, vector<32x1xf32>
    %cst_15 = arith.constant 1.74386169E-5 : f32
    %30 = vector.broadcast %cst_15 : f32 to vector<32x1xf32>
    %31 = arith.mulf %21, %30 : vector<32x1xf32>
    %cst_16 = arith.constant 1.000000e+00 : f32
    %32 = vector.broadcast %cst_16 : f32 to vector<32x1xf32>
    %33 = arith.select %23, %31, %32 : vector<32x1xi1>, vector<32x1xf32>
    %34 = vector.broadcast %29 : vector<32x1xf32> to vector<32x128xf32>
    %35 = arith.mulf %3, %34 : vector<32x128xf32>
    %cst_17 = arith.constant 0x4A000004 : f32
    %36 = vector.broadcast %cst_17 : f32 to vector<32x128xf32>
    %37 = arith.mulf %35, %36 : vector<32x128xf32>
    %38 = arith.subf %37, %35 : vector<32x128xf32>
    %39 = arith.subf %37, %38 : vector<32x128xf32>
    %cst_18 = arith.constant 6.553600e+04 : f32
    %40 = vector.broadcast %cst_18 : f32 to vector<32x128xf32>
    %41 = arith.mulf %35, %40 : vector<32x128xf32>
    %cst_19 = arith.constant 0x4B400000 : f32
    %42 = vector.broadcast %cst_19 : f32 to vector<32x128xf32>
    %43 = arith.addf %41, %42 : vector<32x128xf32>
    %cst_20 = arith.constant 0x4B400000 : f32
    %44 = vector.broadcast %cst_20 : f32 to vector<32x128xf32>
    %45 = arith.subf %43, %44 : vector<32x128xf32>
    %cst_21 = arith.constant 1.52587891E-5 : f32
    %46 = vector.broadcast %cst_21 : f32 to vector<32x128xf32>
    %47 = arith.mulf %45, %46 : vector<32x128xf32>
    %48 = math.absf %35 : vector<32x128xf32>
    %cst_22 = arith.constant 6.10351563E-5 : f32
    %49 = vector.broadcast %cst_22 : f32 to vector<32x128xf32>
    %50 = arith.cmpf olt, %48, %49 : vector<32x128xf32>
    %51 = arith.select %50, %47, %39 : vector<32x128xi1>, vector<32x128xf32>
    %cst_23 = arith.constant -5.734400e+04 : f32
    %cst_24 = arith.constant 5.734400e+04 : f32
    %52 = vector.broadcast %cst_23 : f32 to vector<32x128xf32>
    %53 = arith.maximumf %52, %51 : vector<32x128xf32>
    %54 = vector.broadcast %cst_24 : f32 to vector<32x128xf32>
    %55 = arith.minimumf %54, %53 : vector<32x128xf32>
    %56 = arith.truncf %55 : vector<32x128xf32> to vector<32x128xbf16>
    %cst_25 = arith.constant dense<0.000000e+00> : vector<32x384xf32>
    %57 = tpu.matmul %56, %6, %cst_25 {dimension_numbers = #tpu.dot_dimension_numbers<[1], [0], [0], [1], [0, 0, 1, 1], [], []>} : vector<32x128xbf16>, vector<128x384xbf16>, vector<32x384xf32> -> vector<32x384xf32>
    %58 = vector.broadcast %33 : vector<32x1xf32> to vector<32x384xf32>
    %59 = arith.mulf %57, %58 : vector<32x384xf32>
    %60 = vector.extract_strided_slice %59 {offsets = [0, 0], sizes = [32, 128], strides = [1, 1]} : vector<32x384xf32> to vector<32x128xf32>
    %61 = vector.extract_strided_slice %59 {offsets = [0, 128], sizes = [32, 128], strides = [1, 1]} : vector<32x384xf32> to vector<32x128xf32>
    %62 = vector.extract_strided_slice %59 {offsets = [0, 256], sizes = [32, 128], strides = [1, 1]} : vector<32x384xf32> to vector<32x128xf32>
    %63 = vector.extract_strided_slice %60 {offsets = [0, 0], sizes = [16, 128], strides = [1, 1]} : vector<32x128xf32> to vector<16x128xf32>
    %64 = vector.extract_strided_slice %61 {offsets = [0, 0], sizes = [16, 128], strides = [1, 1]} : vector<32x128xf32> to vector<16x128xf32>
    %65 = vector.extract_strided_slice %62 {offsets = [0, 0], sizes = [16, 128], strides = [1, 1]} : vector<32x128xf32> to vector<16x128xf32>
    %66 = vector.extract_strided_slice %63 {offsets = [0, 0], sizes = [16, 16], strides = [1, 1]} : vector<16x128xf32> to vector<16x16xf32>
    %67 = vector.extract_strided_slice %64 {offsets = [0, 0], sizes = [16, 16], strides = [1, 1]} : vector<16x128xf32> to vector<16x16xf32>
    %68 = vector.extract_strided_slice %65 {offsets = [0, 0], sizes = [16, 16], strides = [1, 1]} : vector<16x128xf32> to vector<16x16xf32>
    %cst_26 = arith.constant dense<0.000000e+00> : vector<16x16xf32>
    %69 = tpu.matmul %66, %67, %cst_26 {dimension_numbers = #tpu.dot_dimension_numbers<[1], [1], [0], [0], [0, 0, 1, 0], [], []>} : vector<16x16xf32>, vector<16x16xf32>, vector<16x16xf32> -> vector<16x16xf32>
    %cst_27 = arith.constant 2.500000e-01 : f32
    %70 = vector.broadcast %cst_27 : f32 to vector<16x16xf32>
    %71 = arith.mulf %69, %70 : vector<16x16xf32>
    %cst_28 = arith.constant dense<0xFF800000> : vector<16xf32>
    %72 = vector.multi_reduction <maximumf>, %71, %cst_28 [1] : vector<16x16xf32> to vector<16xf32>
    %73 = vector.shape_cast %72 : vector<16xf32> to vector<16x1xf32>
    %74 = vector.broadcast %73 : vector<16x1xf32> to vector<16x16xf32>
    %75 = arith.subf %71, %74 : vector<16x16xf32>
    %76 = math.exp %75 : vector<16x16xf32>
    %cst_29 = arith.constant dense<0.000000e+00> : vector<16xf32>
    %77 = vector.multi_reduction <add>, %76, %cst_29 [1] : vector<16x16xf32> to vector<16xf32>
    %78 = vector.shape_cast %77 : vector<16xf32> to vector<16x1xf32>
    %79 = vector.broadcast %78 : vector<16x1xf32> to vector<16x16xf32>
    %80 = arith.divf %76, %79 : vector<16x16xf32>
    %cst_30 = arith.constant dense<0.000000e+00> : vector<16x16xf32>
    %81 = tpu.matmul %80, %68, %cst_30 {dimension_numbers = #tpu.dot_dimension_numbers<[1], [0], [0], [1], [0, 0, 1, 1], [], []>} : vector<16x16xf32>, vector<16x16xf32>, vector<16x16xf32> -> vector<16x16xf32>
    %82 = vector.extract_strided_slice %63 {offsets = [0, 16], sizes = [16, 16], strides = [1, 1]} : vector<16x128xf32> to vector<16x16xf32>
    %83 = vector.extract_strided_slice %64 {offsets = [0, 16], sizes = [16, 16], strides = [1, 1]} : vector<16x128xf32> to vector<16x16xf32>
    %84 = vector.extract_strided_slice %65 {offsets = [0, 16], sizes = [16, 16], strides = [1, 1]} : vector<16x128xf32> to vector<16x16xf32>
    %cst_31 = arith.constant dense<0.000000e+00> : vector<16x16xf32>
    %85 = tpu.matmul %82, %83, %cst_31 {dimension_numbers = #tpu.dot_dimension_numbers<[1], [1], [0], [0], [0, 0, 1, 0], [], []>} : vector<16x16xf32>, vector<16x16xf32>, vector<16x16xf32> -> vector<16x16xf32>
    %cst_32 = arith.constant 2.500000e-01 : f32
    %86 = vector.broadcast %cst_32 : f32 to vector<16x16xf32>
    %87 = arith.mulf %85, %86 : vector<16x16xf32>
    %cst_33 = arith.constant dense<0xFF800000> : vector<16xf32>
    %88 = vector.multi_reduction <maximumf>, %87, %cst_33 [1] : vector<16x16xf32> to vector<16xf32>
    %89 = vector.shape_cast %88 : vector<16xf32> to vector<16x1xf32>
    %90 = vector.broadcast %89 : vector<16x1xf32> to vector<16x16xf32>
    %91 = arith.subf %87, %90 : vector<16x16xf32>
    %92 = math.exp %91 : vector<16x16xf32>
    %cst_34 = arith.constant dense<0.000000e+00> : vector<16xf32>
    %93 = vector.multi_reduction <add>, %92, %cst_34 [1] : vector<16x16xf32> to vector<16xf32>
    %94 = vector.shape_cast %93 : vector<16xf32> to vector<16x1xf32>
    %95 = vector.broadcast %94 : vector<16x1xf32> to vector<16x16xf32>
    %96 = arith.divf %92, %95 : vector<16x16xf32>
    %cst_35 = arith.constant dense<0.000000e+00> : vector<16x16xf32>
    %97 = tpu.matmul %96, %84, %cst_35 {dimension_numbers = #tpu.dot_dimension_numbers<[1], [0], [0], [1], [0, 0, 1, 1], [], []>} : vector<16x16xf32>, vector<16x16xf32>, vector<16x16xf32> -> vector<16x16xf32>
    %98 = vector.extract_strided_slice %63 {offsets = [0, 32], sizes = [16, 16], strides = [1, 1]} : vector<16x128xf32> to vector<16x16xf32>
    %99 = vector.extract_strided_slice %64 {offsets = [0, 32], sizes = [16, 16], strides = [1, 1]} : vector<16x128xf32> to vector<16x16xf32>
    %100 = vector.extract_strided_slice %65 {offsets = [0, 32], sizes = [16, 16], strides = [1, 1]} : vector<16x128xf32> to vector<16x16xf32>
    %cst_36 = arith.constant dense<0.000000e+00> : vector<16x16xf32>
    %101 = tpu.matmul %98, %99, %cst_36 {dimension_numbers = #tpu.dot_dimension_numbers<[1], [1], [0], [0], [0, 0, 1, 0], [], []>} : vector<16x16xf32>, vector<16x16xf32>, vector<16x16xf32> -> vector<16x16xf32>
    %cst_37 = arith.constant 2.500000e-01 : f32
    %102 = vector.broadcast %cst_37 : f32 to vector<16x16xf32>
    %103 = arith.mulf %101, %102 : vector<16x16xf32>
    %cst_38 = arith.constant dense<0xFF800000> : vector<16xf32>
    %104 = vector.multi_reduction <maximumf>, %103, %cst_38 [1] : vector<16x16xf32> to vector<16xf32>
    %105 = vector.shape_cast %104 : vector<16xf32> to vector<16x1xf32>
    %106 = vector.broadcast %105 : vector<16x1xf32> to vector<16x16xf32>
    %107 = arith.subf %103, %106 : vector<16x16xf32>
    %108 = math.exp %107 : vector<16x16xf32>
    %cst_39 = arith.constant dense<0.000000e+00> : vector<16xf32>
    %109 = vector.multi_reduction <add>, %108, %cst_39 [1] : vector<16x16xf32> to vector<16xf32>
    %110 = vector.shape_cast %109 : vector<16xf32> to vector<16x1xf32>
    %111 = vector.broadcast %110 : vector<16x1xf32> to vector<16x16xf32>
    %112 = arith.divf %108, %111 : vector<16x16xf32>
    %cst_40 = arith.constant dense<0.000000e+00> : vector<16x16xf32>
    %113 = tpu.matmul %112, %100, %cst_40 {dimension_numbers = #tpu.dot_dimension_numbers<[1], [0], [0], [1], [0, 0, 1, 1], [], []>} : vector<16x16xf32>, vector<16x16xf32>, vector<16x16xf32> -> vector<16x16xf32>
    %114 = vector.extract_strided_slice %63 {offsets = [0, 48], sizes = [16, 16], strides = [1, 1]} : vector<16x128xf32> to vector<16x16xf32>
    %115 = vector.extract_strided_slice %64 {offsets = [0, 48], sizes = [16, 16], strides = [1, 1]} : vector<16x128xf32> to vector<16x16xf32>
    %116 = vector.extract_strided_slice %65 {offsets = [0, 48], sizes = [16, 16], strides = [1, 1]} : vector<16x128xf32> to vector<16x16xf32>
    %cst_41 = arith.constant dense<0.000000e+00> : vector<16x16xf32>
    %117 = tpu.matmul %114, %115, %cst_41 {dimension_numbers = #tpu.dot_dimension_numbers<[1], [1], [0], [0], [0, 0, 1, 0], [], []>} : vector<16x16xf32>, vector<16x16xf32>, vector<16x16xf32> -> vector<16x16xf32>
    %cst_42 = arith.constant 2.500000e-01 : f32
    %118 = vector.broadcast %cst_42 : f32 to vector<16x16xf32>
    %119 = arith.mulf %117, %118 : vector<16x16xf32>
    %cst_43 = arith.constant dense<0xFF800000> : vector<16xf32>
    %120 = vector.multi_reduction <maximumf>, %119, %cst_43 [1] : vector<16x16xf32> to vector<16xf32>
    %121 = vector.shape_cast %120 : vector<16xf32> to vector<16x1xf32>
    %122 = vector.broadcast %121 : vector<16x1xf32> to vector<16x16xf32>
    %123 = arith.subf %119, %122 : vector<16x16xf32>
    %124 = math.exp %123 : vector<16x16xf32>
    %cst_44 = arith.constant dense<0.000000e+00> : vector<16xf32>
    %125 = vector.multi_reduction <add>, %124, %cst_44 [1] : vector<16x16xf32> to vector<16xf32>
    %126 = vector.shape_cast %125 : vector<16xf32> to vector<16x1xf32>
    %127 = vector.broadcast %126 : vector<16x1xf32> to vector<16x16xf32>
    %128 = arith.divf %124, %127 : vector<16x16xf32>
    %cst_45 = arith.constant dense<0.000000e+00> : vector<16x16xf32>
    %129 = tpu.matmul %128, %116, %cst_45 {dimension_numbers = #tpu.dot_dimension_numbers<[1], [0], [0], [1], [0, 0, 1, 1], [], []>} : vector<16x16xf32>, vector<16x16xf32>, vector<16x16xf32> -> vector<16x16xf32>
    %130 = vector.extract_strided_slice %63 {offsets = [0, 64], sizes = [16, 16], strides = [1, 1]} : vector<16x128xf32> to vector<16x16xf32>
    %131 = vector.extract_strided_slice %64 {offsets = [0, 64], sizes = [16, 16], strides = [1, 1]} : vector<16x128xf32> to vector<16x16xf32>
    %132 = vector.extract_strided_slice %65 {offsets = [0, 64], sizes = [16, 16], strides = [1, 1]} : vector<16x128xf32> to vector<16x16xf32>
    %cst_46 = arith.constant dense<0.000000e+00> : vector<16x16xf32>
    %133 = tpu.matmul %130, %131, %cst_46 {dimension_numbers = #tpu.dot_dimension_numbers<[1], [1], [0], [0], [0, 0, 1, 0], [], []>} : vector<16x16xf32>, vector<16x16xf32>, vector<16x16xf32> -> vector<16x16xf32>
    %cst_47 = arith.constant 2.500000e-01 : f32
    %134 = vector.broadcast %cst_47 : f32 to vector<16x16xf32>
    %135 = arith.mulf %133, %134 : vector<16x16xf32>
    %cst_48 = arith.constant dense<0xFF800000> : vector<16xf32>
    %136 = vector.multi_reduction <maximumf>, %135, %cst_48 [1] : vector<16x16xf32> to vector<16xf32>
    %137 = vector.shape_cast %136 : vector<16xf32> to vector<16x1xf32>
    %138 = vector.broadcast %137 : vector<16x1xf32> to vector<16x16xf32>
    %139 = arith.subf %135, %138 : vector<16x16xf32>
    %140 = math.exp %139 : vector<16x16xf32>
    %cst_49 = arith.constant dense<0.000000e+00> : vector<16xf32>
    %141 = vector.multi_reduction <add>, %140, %cst_49 [1] : vector<16x16xf32> to vector<16xf32>
    %142 = vector.shape_cast %141 : vector<16xf32> to vector<16x1xf32>
    %143 = vector.broadcast %142 : vector<16x1xf32> to vector<16x16xf32>
    %144 = arith.divf %140, %143 : vector<16x16xf32>
    %cst_50 = arith.constant dense<0.000000e+00> : vector<16x16xf32>
    %145 = tpu.matmul %144, %132, %cst_50 {dimension_numbers = #tpu.dot_dimension_numbers<[1], [0], [0], [1], [0, 0, 1, 1], [], []>} : vector<16x16xf32>, vector<16x16xf32>, vector<16x16xf32> -> vector<16x16xf32>
    %146 = vector.extract_strided_slice %63 {offsets = [0, 80], sizes = [16, 16], strides = [1, 1]} : vector<16x128xf32> to vector<16x16xf32>
    %147 = vector.extract_strided_slice %64 {offsets = [0, 80], sizes = [16, 16], strides = [1, 1]} : vector<16x128xf32> to vector<16x16xf32>
    %148 = vector.extract_strided_slice %65 {offsets = [0, 80], sizes = [16, 16], strides = [1, 1]} : vector<16x128xf32> to vector<16x16xf32>
    %cst_51 = arith.constant dense<0.000000e+00> : vector<16x16xf32>
    %149 = tpu.matmul %146, %147, %cst_51 {dimension_numbers = #tpu.dot_dimension_numbers<[1], [1], [0], [0], [0, 0, 1, 0], [], []>} : vector<16x16xf32>, vector<16x16xf32>, vector<16x16xf32> -> vector<16x16xf32>
    %cst_52 = arith.constant 2.500000e-01 : f32
    %150 = vector.broadcast %cst_52 : f32 to vector<16x16xf32>
    %151 = arith.mulf %149, %150 : vector<16x16xf32>
    %cst_53 = arith.constant dense<0xFF800000> : vector<16xf32>
    %152 = vector.multi_reduction <maximumf>, %151, %cst_53 [1] : vector<16x16xf32> to vector<16xf32>
    %153 = vector.shape_cast %152 : vector<16xf32> to vector<16x1xf32>
    %154 = vector.broadcast %153 : vector<16x1xf32> to vector<16x16xf32>
    %155 = arith.subf %151, %154 : vector<16x16xf32>
    %156 = math.exp %155 : vector<16x16xf32>
    %cst_54 = arith.constant dense<0.000000e+00> : vector<16xf32>
    %157 = vector.multi_reduction <add>, %156, %cst_54 [1] : vector<16x16xf32> to vector<16xf32>
    %158 = vector.shape_cast %157 : vector<16xf32> to vector<16x1xf32>
    %159 = vector.broadcast %158 : vector<16x1xf32> to vector<16x16xf32>
    %160 = arith.divf %156, %159 : vector<16x16xf32>
    %cst_55 = arith.constant dense<0.000000e+00> : vector<16x16xf32>
    %161 = tpu.matmul %160, %148, %cst_55 {dimension_numbers = #tpu.dot_dimension_numbers<[1], [0], [0], [1], [0, 0, 1, 1], [], []>} : vector<16x16xf32>, vector<16x16xf32>, vector<16x16xf32> -> vector<16x16xf32>
    %162 = vector.extract_strided_slice %63 {offsets = [0, 96], sizes = [16, 16], strides = [1, 1]} : vector<16x128xf32> to vector<16x16xf32>
    %163 = vector.extract_strided_slice %64 {offsets = [0, 96], sizes = [16, 16], strides = [1, 1]} : vector<16x128xf32> to vector<16x16xf32>
    %164 = vector.extract_strided_slice %65 {offsets = [0, 96], sizes = [16, 16], strides = [1, 1]} : vector<16x128xf32> to vector<16x16xf32>
    %cst_56 = arith.constant dense<0.000000e+00> : vector<16x16xf32>
    %165 = tpu.matmul %162, %163, %cst_56 {dimension_numbers = #tpu.dot_dimension_numbers<[1], [1], [0], [0], [0, 0, 1, 0], [], []>} : vector<16x16xf32>, vector<16x16xf32>, vector<16x16xf32> -> vector<16x16xf32>
    %cst_57 = arith.constant 2.500000e-01 : f32
    %166 = vector.broadcast %cst_57 : f32 to vector<16x16xf32>
    %167 = arith.mulf %165, %166 : vector<16x16xf32>
    %cst_58 = arith.constant dense<0xFF800000> : vector<16xf32>
    %168 = vector.multi_reduction <maximumf>, %167, %cst_58 [1] : vector<16x16xf32> to vector<16xf32>
    %169 = vector.shape_cast %168 : vector<16xf32> to vector<16x1xf32>
    %170 = vector.broadcast %169 : vector<16x1xf32> to vector<16x16xf32>
    %171 = arith.subf %167, %170 : vector<16x16xf32>
    %172 = math.exp %171 : vector<16x16xf32>
    %cst_59 = arith.constant dense<0.000000e+00> : vector<16xf32>
    %173 = vector.multi_reduction <add>, %172, %cst_59 [1] : vector<16x16xf32> to vector<16xf32>
    %174 = vector.shape_cast %173 : vector<16xf32> to vector<16x1xf32>
    %175 = vector.broadcast %174 : vector<16x1xf32> to vector<16x16xf32>
    %176 = arith.divf %172, %175 : vector<16x16xf32>
    %cst_60 = arith.constant dense<0.000000e+00> : vector<16x16xf32>
    %177 = tpu.matmul %176, %164, %cst_60 {dimension_numbers = #tpu.dot_dimension_numbers<[1], [0], [0], [1], [0, 0, 1, 1], [], []>} : vector<16x16xf32>, vector<16x16xf32>, vector<16x16xf32> -> vector<16x16xf32>
    %178 = vector.extract_strided_slice %63 {offsets = [0, 112], sizes = [16, 16], strides = [1, 1]} : vector<16x128xf32> to vector<16x16xf32>
    %179 = vector.extract_strided_slice %64 {offsets = [0, 112], sizes = [16, 16], strides = [1, 1]} : vector<16x128xf32> to vector<16x16xf32>
    %180 = vector.extract_strided_slice %65 {offsets = [0, 112], sizes = [16, 16], strides = [1, 1]} : vector<16x128xf32> to vector<16x16xf32>
    %cst_61 = arith.constant dense<0.000000e+00> : vector<16x16xf32>
    %181 = tpu.matmul %178, %179, %cst_61 {dimension_numbers = #tpu.dot_dimension_numbers<[1], [1], [0], [0], [0, 0, 1, 0], [], []>} : vector<16x16xf32>, vector<16x16xf32>, vector<16x16xf32> -> vector<16x16xf32>
    %cst_62 = arith.constant 2.500000e-01 : f32
    %182 = vector.broadcast %cst_62 : f32 to vector<16x16xf32>
    %183 = arith.mulf %181, %182 : vector<16x16xf32>
    %cst_63 = arith.constant dense<0xFF800000> : vector<16xf32>
    %184 = vector.multi_reduction <maximumf>, %183, %cst_63 [1] : vector<16x16xf32> to vector<16xf32>
    %185 = vector.shape_cast %184 : vector<16xf32> to vector<16x1xf32>
    %186 = vector.broadcast %185 : vector<16x1xf32> to vector<16x16xf32>
    %187 = arith.subf %183, %186 : vector<16x16xf32>
    %188 = math.exp %187 : vector<16x16xf32>
    %cst_64 = arith.constant dense<0.000000e+00> : vector<16xf32>
    %189 = vector.multi_reduction <add>, %188, %cst_64 [1] : vector<16x16xf32> to vector<16xf32>
    %190 = vector.shape_cast %189 : vector<16xf32> to vector<16x1xf32>
    %191 = vector.broadcast %190 : vector<16x1xf32> to vector<16x16xf32>
    %192 = arith.divf %188, %191 : vector<16x16xf32>
    %cst_65 = arith.constant dense<0.000000e+00> : vector<16x16xf32>
    %193 = tpu.matmul %192, %180, %cst_65 {dimension_numbers = #tpu.dot_dimension_numbers<[1], [0], [0], [1], [0, 0, 1, 1], [], []>} : vector<16x16xf32>, vector<16x16xf32>, vector<16x16xf32> -> vector<16x16xf32>
    %194 = tpu.concatenate %81, %97, %113, %129, %145, %161, %177, %193 in 1 : vector<16x16xf32>, vector<16x16xf32>, vector<16x16xf32>, vector<16x16xf32>, vector<16x16xf32>, vector<16x16xf32>, vector<16x16xf32>, vector<16x16xf32> -> vector<16x128xf32>
    %195 = vector.extract_strided_slice %60 {offsets = [16, 0], sizes = [16, 128], strides = [1, 1]} : vector<32x128xf32> to vector<16x128xf32>
    %196 = vector.extract_strided_slice %61 {offsets = [16, 0], sizes = [16, 128], strides = [1, 1]} : vector<32x128xf32> to vector<16x128xf32>
    %197 = vector.extract_strided_slice %62 {offsets = [16, 0], sizes = [16, 128], strides = [1, 1]} : vector<32x128xf32> to vector<16x128xf32>
    %198 = vector.extract_strided_slice %195 {offsets = [0, 0], sizes = [16, 16], strides = [1, 1]} : vector<16x128xf32> to vector<16x16xf32>
    %199 = vector.extract_strided_slice %196 {offsets = [0, 0], sizes = [16, 16], strides = [1, 1]} : vector<16x128xf32> to vector<16x16xf32>
    %200 = vector.extract_strided_slice %197 {offsets = [0, 0], sizes = [16, 16], strides = [1, 1]} : vector<16x128xf32> to vector<16x16xf32>
    %cst_66 = arith.constant dense<0.000000e+00> : vector<16x16xf32>
    %201 = tpu.matmul %198, %199, %cst_66 {dimension_numbers = #tpu.dot_dimension_numbers<[1], [1], [0], [0], [0, 0, 1, 0], [], []>} : vector<16x16xf32>, vector<16x16xf32>, vector<16x16xf32> -> vector<16x16xf32>
    %cst_67 = arith.constant 2.500000e-01 : f32
    %202 = vector.broadcast %cst_67 : f32 to vector<16x16xf32>
    %203 = arith.mulf %201, %202 : vector<16x16xf32>
    %cst_68 = arith.constant dense<0xFF800000> : vector<16xf32>
    %204 = vector.multi_reduction <maximumf>, %203, %cst_68 [1] : vector<16x16xf32> to vector<16xf32>
    %205 = vector.shape_cast %204 : vector<16xf32> to vector<16x1xf32>
    %206 = vector.broadcast %205 : vector<16x1xf32> to vector<16x16xf32>
    %207 = arith.subf %203, %206 : vector<16x16xf32>
    %208 = math.exp %207 : vector<16x16xf32>
    %cst_69 = arith.constant dense<0.000000e+00> : vector<16xf32>
    %209 = vector.multi_reduction <add>, %208, %cst_69 [1] : vector<16x16xf32> to vector<16xf32>
    %210 = vector.shape_cast %209 : vector<16xf32> to vector<16x1xf32>
    %211 = vector.broadcast %210 : vector<16x1xf32> to vector<16x16xf32>
    %212 = arith.divf %208, %211 : vector<16x16xf32>
    %cst_70 = arith.constant dense<0.000000e+00> : vector<16x16xf32>
    %213 = tpu.matmul %212, %200, %cst_70 {dimension_numbers = #tpu.dot_dimension_numbers<[1], [0], [0], [1], [0, 0, 1, 1], [], []>} : vector<16x16xf32>, vector<16x16xf32>, vector<16x16xf32> -> vector<16x16xf32>
    %214 = vector.extract_strided_slice %195 {offsets = [0, 16], sizes = [16, 16], strides = [1, 1]} : vector<16x128xf32> to vector<16x16xf32>
    %215 = vector.extract_strided_slice %196 {offsets = [0, 16], sizes = [16, 16], strides = [1, 1]} : vector<16x128xf32> to vector<16x16xf32>
    %216 = vector.extract_strided_slice %197 {offsets = [0, 16], sizes = [16, 16], strides = [1, 1]} : vector<16x128xf32> to vector<16x16xf32>
    %cst_71 = arith.constant dense<0.000000e+00> : vector<16x16xf32>
    %217 = tpu.matmul %214, %215, %cst_71 {dimension_numbers = #tpu.dot_dimension_numbers<[1], [1], [0], [0], [0, 0, 1, 0], [], []>} : vector<16x16xf32>, vector<16x16xf32>, vector<16x16xf32> -> vector<16x16xf32>
    %cst_72 = arith.constant 2.500000e-01 : f32
    %218 = vector.broadcast %cst_72 : f32 to vector<16x16xf32>
    %219 = arith.mulf %217, %218 : vector<16x16xf32>
    %cst_73 = arith.constant dense<0xFF800000> : vector<16xf32>
    %220 = vector.multi_reduction <maximumf>, %219, %cst_73 [1] : vector<16x16xf32> to vector<16xf32>
    %221 = vector.shape_cast %220 : vector<16xf32> to vector<16x1xf32>
    %222 = vector.broadcast %221 : vector<16x1xf32> to vector<16x16xf32>
    %223 = arith.subf %219, %222 : vector<16x16xf32>
    %224 = math.exp %223 : vector<16x16xf32>
    %cst_74 = arith.constant dense<0.000000e+00> : vector<16xf32>
    %225 = vector.multi_reduction <add>, %224, %cst_74 [1] : vector<16x16xf32> to vector<16xf32>
    %226 = vector.shape_cast %225 : vector<16xf32> to vector<16x1xf32>
    %227 = vector.broadcast %226 : vector<16x1xf32> to vector<16x16xf32>
    %228 = arith.divf %224, %227 : vector<16x16xf32>
    %cst_75 = arith.constant dense<0.000000e+00> : vector<16x16xf32>
    %229 = tpu.matmul %228, %216, %cst_75 {dimension_numbers = #tpu.dot_dimension_numbers<[1], [0], [0], [1], [0, 0, 1, 1], [], []>} : vector<16x16xf32>, vector<16x16xf32>, vector<16x16xf32> -> vector<16x16xf32>
    %230 = vector.extract_strided_slice %195 {offsets = [0, 32], sizes = [16, 16], strides = [1, 1]} : vector<16x128xf32> to vector<16x16xf32>
    %231 = vector.extract_strided_slice %196 {offsets = [0, 32], sizes = [16, 16], strides = [1, 1]} : vector<16x128xf32> to vector<16x16xf32>
    %232 = vector.extract_strided_slice %197 {offsets = [0, 32], sizes = [16, 16], strides = [1, 1]} : vector<16x128xf32> to vector<16x16xf32>
    %cst_76 = arith.constant dense<0.000000e+00> : vector<16x16xf32>
    %233 = tpu.matmul %230, %231, %cst_76 {dimension_numbers = #tpu.dot_dimension_numbers<[1], [1], [0], [0], [0, 0, 1, 0], [], []>} : vector<16x16xf32>, vector<16x16xf32>, vector<16x16xf32> -> vector<16x16xf32>
    %cst_77 = arith.constant 2.500000e-01 : f32
    %234 = vector.broadcast %cst_77 : f32 to vector<16x16xf32>
    %235 = arith.mulf %233, %234 : vector<16x16xf32>
    %cst_78 = arith.constant dense<0xFF800000> : vector<16xf32>
    %236 = vector.multi_reduction <maximumf>, %235, %cst_78 [1] : vector<16x16xf32> to vector<16xf32>
    %237 = vector.shape_cast %236 : vector<16xf32> to vector<16x1xf32>
    %238 = vector.broadcast %237 : vector<16x1xf32> to vector<16x16xf32>
    %239 = arith.subf %235, %238 : vector<16x16xf32>
    %240 = math.exp %239 : vector<16x16xf32>
    %cst_79 = arith.constant dense<0.000000e+00> : vector<16xf32>
    %241 = vector.multi_reduction <add>, %240, %cst_79 [1] : vector<16x16xf32> to vector<16xf32>
    %242 = vector.shape_cast %241 : vector<16xf32> to vector<16x1xf32>
    %243 = vector.broadcast %242 : vector<16x1xf32> to vector<16x16xf32>
    %244 = arith.divf %240, %243 : vector<16x16xf32>
    %cst_80 = arith.constant dense<0.000000e+00> : vector<16x16xf32>
    %245 = tpu.matmul %244, %232, %cst_80 {dimension_numbers = #tpu.dot_dimension_numbers<[1], [0], [0], [1], [0, 0, 1, 1], [], []>} : vector<16x16xf32>, vector<16x16xf32>, vector<16x16xf32> -> vector<16x16xf32>
    %246 = vector.extract_strided_slice %195 {offsets = [0, 48], sizes = [16, 16], strides = [1, 1]} : vector<16x128xf32> to vector<16x16xf32>
    %247 = vector.extract_strided_slice %196 {offsets = [0, 48], sizes = [16, 16], strides = [1, 1]} : vector<16x128xf32> to vector<16x16xf32>
    %248 = vector.extract_strided_slice %197 {offsets = [0, 48], sizes = [16, 16], strides = [1, 1]} : vector<16x128xf32> to vector<16x16xf32>
    %cst_81 = arith.constant dense<0.000000e+00> : vector<16x16xf32>
    %249 = tpu.matmul %246, %247, %cst_81 {dimension_numbers = #tpu.dot_dimension_numbers<[1], [1], [0], [0], [0, 0, 1, 0], [], []>} : vector<16x16xf32>, vector<16x16xf32>, vector<16x16xf32> -> vector<16x16xf32>
    %cst_82 = arith.constant 2.500000e-01 : f32
    %250 = vector.broadcast %cst_82 : f32 to vector<16x16xf32>
    %251 = arith.mulf %249, %250 : vector<16x16xf32>
    %cst_83 = arith.constant dense<0xFF800000> : vector<16xf32>
    %252 = vector.multi_reduction <maximumf>, %251, %cst_83 [1] : vector<16x16xf32> to vector<16xf32>
    %253 = vector.shape_cast %252 : vector<16xf32> to vector<16x1xf32>
    %254 = vector.broadcast %253 : vector<16x1xf32> to vector<16x16xf32>
    %255 = arith.subf %251, %254 : vector<16x16xf32>
    %256 = math.exp %255 : vector<16x16xf32>
    %cst_84 = arith.constant dense<0.000000e+00> : vector<16xf32>
    %257 = vector.multi_reduction <add>, %256, %cst_84 [1] : vector<16x16xf32> to vector<16xf32>
    %258 = vector.shape_cast %257 : vector<16xf32> to vector<16x1xf32>
    %259 = vector.broadcast %258 : vector<16x1xf32> to vector<16x16xf32>
    %260 = arith.divf %256, %259 : vector<16x16xf32>
    %cst_85 = arith.constant dense<0.000000e+00> : vector<16x16xf32>
    %261 = tpu.matmul %260, %248, %cst_85 {dimension_numbers = #tpu.dot_dimension_numbers<[1], [0], [0], [1], [0, 0, 1, 1], [], []>} : vector<16x16xf32>, vector<16x16xf32>, vector<16x16xf32> -> vector<16x16xf32>
    %262 = vector.extract_strided_slice %195 {offsets = [0, 64], sizes = [16, 16], strides = [1, 1]} : vector<16x128xf32> to vector<16x16xf32>
    %263 = vector.extract_strided_slice %196 {offsets = [0, 64], sizes = [16, 16], strides = [1, 1]} : vector<16x128xf32> to vector<16x16xf32>
    %264 = vector.extract_strided_slice %197 {offsets = [0, 64], sizes = [16, 16], strides = [1, 1]} : vector<16x128xf32> to vector<16x16xf32>
    %cst_86 = arith.constant dense<0.000000e+00> : vector<16x16xf32>
    %265 = tpu.matmul %262, %263, %cst_86 {dimension_numbers = #tpu.dot_dimension_numbers<[1], [1], [0], [0], [0, 0, 1, 0], [], []>} : vector<16x16xf32>, vector<16x16xf32>, vector<16x16xf32> -> vector<16x16xf32>
    %cst_87 = arith.constant 2.500000e-01 : f32
    %266 = vector.broadcast %cst_87 : f32 to vector<16x16xf32>
    %267 = arith.mulf %265, %266 : vector<16x16xf32>
    %cst_88 = arith.constant dense<0xFF800000> : vector<16xf32>
    %268 = vector.multi_reduction <maximumf>, %267, %cst_88 [1] : vector<16x16xf32> to vector<16xf32>
    %269 = vector.shape_cast %268 : vector<16xf32> to vector<16x1xf32>
    %270 = vector.broadcast %269 : vector<16x1xf32> to vector<16x16xf32>
    %271 = arith.subf %267, %270 : vector<16x16xf32>
    %272 = math.exp %271 : vector<16x16xf32>
    %cst_89 = arith.constant dense<0.000000e+00> : vector<16xf32>
    %273 = vector.multi_reduction <add>, %272, %cst_89 [1] : vector<16x16xf32> to vector<16xf32>
    %274 = vector.shape_cast %273 : vector<16xf32> to vector<16x1xf32>
    %275 = vector.broadcast %274 : vector<16x1xf32> to vector<16x16xf32>
    %276 = arith.divf %272, %275 : vector<16x16xf32>
    %cst_90 = arith.constant dense<0.000000e+00> : vector<16x16xf32>
    %277 = tpu.matmul %276, %264, %cst_90 {dimension_numbers = #tpu.dot_dimension_numbers<[1], [0], [0], [1], [0, 0, 1, 1], [], []>} : vector<16x16xf32>, vector<16x16xf32>, vector<16x16xf32> -> vector<16x16xf32>
    %278 = vector.extract_strided_slice %195 {offsets = [0, 80], sizes = [16, 16], strides = [1, 1]} : vector<16x128xf32> to vector<16x16xf32>
    %279 = vector.extract_strided_slice %196 {offsets = [0, 80], sizes = [16, 16], strides = [1, 1]} : vector<16x128xf32> to vector<16x16xf32>
    %280 = vector.extract_strided_slice %197 {offsets = [0, 80], sizes = [16, 16], strides = [1, 1]} : vector<16x128xf32> to vector<16x16xf32>
    %cst_91 = arith.constant dense<0.000000e+00> : vector<16x16xf32>
    %281 = tpu.matmul %278, %279, %cst_91 {dimension_numbers = #tpu.dot_dimension_numbers<[1], [1], [0], [0], [0, 0, 1, 0], [], []>} : vector<16x16xf32>, vector<16x16xf32>, vector<16x16xf32> -> vector<16x16xf32>
    %cst_92 = arith.constant 2.500000e-01 : f32
    %282 = vector.broadcast %cst_92 : f32 to vector<16x16xf32>
    %283 = arith.mulf %281, %282 : vector<16x16xf32>
    %cst_93 = arith.constant dense<0xFF800000> : vector<16xf32>
    %284 = vector.multi_reduction <maximumf>, %283, %cst_93 [1] : vector<16x16xf32> to vector<16xf32>
    %285 = vector.shape_cast %284 : vector<16xf32> to vector<16x1xf32>
    %286 = vector.broadcast %285 : vector<16x1xf32> to vector<16x16xf32>
    %287 = arith.subf %283, %286 : vector<16x16xf32>
    %288 = math.exp %287 : vector<16x16xf32>
    %cst_94 = arith.constant dense<0.000000e+00> : vector<16xf32>
    %289 = vector.multi_reduction <add>, %288, %cst_94 [1] : vector<16x16xf32> to vector<16xf32>
    %290 = vector.shape_cast %289 : vector<16xf32> to vector<16x1xf32>
    %291 = vector.broadcast %290 : vector<16x1xf32> to vector<16x16xf32>
    %292 = arith.divf %288, %291 : vector<16x16xf32>
    %cst_95 = arith.constant dense<0.000000e+00> : vector<16x16xf32>
    %293 = tpu.matmul %292, %280, %cst_95 {dimension_numbers = #tpu.dot_dimension_numbers<[1], [0], [0], [1], [0, 0, 1, 1], [], []>} : vector<16x16xf32>, vector<16x16xf32>, vector<16x16xf32> -> vector<16x16xf32>
    %294 = vector.extract_strided_slice %195 {offsets = [0, 96], sizes = [16, 16], strides = [1, 1]} : vector<16x128xf32> to vector<16x16xf32>
    %295 = vector.extract_strided_slice %196 {offsets = [0, 96], sizes = [16, 16], strides = [1, 1]} : vector<16x128xf32> to vector<16x16xf32>
    %296 = vector.extract_strided_slice %197 {offsets = [0, 96], sizes = [16, 16], strides = [1, 1]} : vector<16x128xf32> to vector<16x16xf32>
    %cst_96 = arith.constant dense<0.000000e+00> : vector<16x16xf32>
    %297 = tpu.matmul %294, %295, %cst_96 {dimension_numbers = #tpu.dot_dimension_numbers<[1], [1], [0], [0], [0, 0, 1, 0], [], []>} : vector<16x16xf32>, vector<16x16xf32>, vector<16x16xf32> -> vector<16x16xf32>
    %cst_97 = arith.constant 2.500000e-01 : f32
    %298 = vector.broadcast %cst_97 : f32 to vector<16x16xf32>
    %299 = arith.mulf %297, %298 : vector<16x16xf32>
    %cst_98 = arith.constant dense<0xFF800000> : vector<16xf32>
    %300 = vector.multi_reduction <maximumf>, %299, %cst_98 [1] : vector<16x16xf32> to vector<16xf32>
    %301 = vector.shape_cast %300 : vector<16xf32> to vector<16x1xf32>
    %302 = vector.broadcast %301 : vector<16x1xf32> to vector<16x16xf32>
    %303 = arith.subf %299, %302 : vector<16x16xf32>
    %304 = math.exp %303 : vector<16x16xf32>
    %cst_99 = arith.constant dense<0.000000e+00> : vector<16xf32>
    %305 = vector.multi_reduction <add>, %304, %cst_99 [1] : vector<16x16xf32> to vector<16xf32>
    %306 = vector.shape_cast %305 : vector<16xf32> to vector<16x1xf32>
    %307 = vector.broadcast %306 : vector<16x1xf32> to vector<16x16xf32>
    %308 = arith.divf %304, %307 : vector<16x16xf32>
    %cst_100 = arith.constant dense<0.000000e+00> : vector<16x16xf32>
    %309 = tpu.matmul %308, %296, %cst_100 {dimension_numbers = #tpu.dot_dimension_numbers<[1], [0], [0], [1], [0, 0, 1, 1], [], []>} : vector<16x16xf32>, vector<16x16xf32>, vector<16x16xf32> -> vector<16x16xf32>
    %310 = vector.extract_strided_slice %195 {offsets = [0, 112], sizes = [16, 16], strides = [1, 1]} : vector<16x128xf32> to vector<16x16xf32>
    %311 = vector.extract_strided_slice %196 {offsets = [0, 112], sizes = [16, 16], strides = [1, 1]} : vector<16x128xf32> to vector<16x16xf32>
    %312 = vector.extract_strided_slice %197 {offsets = [0, 112], sizes = [16, 16], strides = [1, 1]} : vector<16x128xf32> to vector<16x16xf32>
    %cst_101 = arith.constant dense<0.000000e+00> : vector<16x16xf32>
    %313 = tpu.matmul %310, %311, %cst_101 {dimension_numbers = #tpu.dot_dimension_numbers<[1], [1], [0], [0], [0, 0, 1, 0], [], []>} : vector<16x16xf32>, vector<16x16xf32>, vector<16x16xf32> -> vector<16x16xf32>
    %cst_102 = arith.constant 2.500000e-01 : f32
    %314 = vector.broadcast %cst_102 : f32 to vector<16x16xf32>
    %315 = arith.mulf %313, %314 : vector<16x16xf32>
    %cst_103 = arith.constant dense<0xFF800000> : vector<16xf32>
    %316 = vector.multi_reduction <maximumf>, %315, %cst_103 [1] : vector<16x16xf32> to vector<16xf32>
    %317 = vector.shape_cast %316 : vector<16xf32> to vector<16x1xf32>
    %318 = vector.broadcast %317 : vector<16x1xf32> to vector<16x16xf32>
    %319 = arith.subf %315, %318 : vector<16x16xf32>
    %320 = math.exp %319 : vector<16x16xf32>
    %cst_104 = arith.constant dense<0.000000e+00> : vector<16xf32>
    %321 = vector.multi_reduction <add>, %320, %cst_104 [1] : vector<16x16xf32> to vector<16xf32>
    %322 = vector.shape_cast %321 : vector<16xf32> to vector<16x1xf32>
    %323 = vector.broadcast %322 : vector<16x1xf32> to vector<16x16xf32>
    %324 = arith.divf %320, %323 : vector<16x16xf32>
    %cst_105 = arith.constant dense<0.000000e+00> : vector<16x16xf32>
    %325 = tpu.matmul %324, %312, %cst_105 {dimension_numbers = #tpu.dot_dimension_numbers<[1], [0], [0], [1], [0, 0, 1, 1], [], []>} : vector<16x16xf32>, vector<16x16xf32>, vector<16x16xf32> -> vector<16x16xf32>
    %326 = tpu.concatenate %213, %229, %245, %261, %277, %293, %309, %325 in 1 : vector<16x16xf32>, vector<16x16xf32>, vector<16x16xf32>, vector<16x16xf32>, vector<16x16xf32>, vector<16x16xf32>, vector<16x16xf32>, vector<16x16xf32> -> vector<16x128xf32>
    %327 = tpu.concatenate %194, %326 in 0 : vector<16x128xf32>, vector<16x128xf32> -> vector<32x128xf32>
    %328 = math.absf %327 : vector<32x128xf32>
    %cst_106 = arith.constant dense<0xFF800000> : vector<32xf32>
    %329 = vector.multi_reduction <maximumf>, %328, %cst_106 [1] : vector<32x128xf32> to vector<32xf32>
    %330 = vector.shape_cast %329 : vector<32xf32> to vector<32x1xf32>
    %cst_107 = arith.constant 0.000000e+00 : f32
    %331 = vector.broadcast %cst_107 : f32 to vector<32x1xf32>
    %332 = arith.cmpf ogt, %330, %331 : vector<32x1xf32>
    %cst_108 = arith.constant 1.000000e+00 : f32
    %333 = vector.broadcast %cst_108 : f32 to vector<32x1xf32>
    %334 = arith.select %332, %330, %333 : vector<32x1xi1>, vector<32x1xf32>
    %cst_109 = arith.constant 5.734400e+04 : f32
    %335 = vector.broadcast %cst_109 : f32 to vector<32x1xf32>
    %336 = arith.divf %335, %334 : vector<32x1xf32>
    %cst_110 = arith.constant 1.000000e+00 : f32
    %337 = vector.broadcast %cst_110 : f32 to vector<32x1xf32>
    %338 = arith.select %332, %336, %337 : vector<32x1xi1>, vector<32x1xf32>
    %cst_111 = arith.constant 1.74386169E-5 : f32
    %339 = vector.broadcast %cst_111 : f32 to vector<32x1xf32>
    %340 = arith.mulf %330, %339 : vector<32x1xf32>
    %cst_112 = arith.constant 1.000000e+00 : f32
    %341 = vector.broadcast %cst_112 : f32 to vector<32x1xf32>
    %342 = arith.select %332, %340, %341 : vector<32x1xi1>, vector<32x1xf32>
    %343 = vector.broadcast %338 : vector<32x1xf32> to vector<32x128xf32>
    %344 = arith.mulf %327, %343 : vector<32x128xf32>
    %cst_113 = arith.constant 0x4A000004 : f32
    %345 = vector.broadcast %cst_113 : f32 to vector<32x128xf32>
    %346 = arith.mulf %344, %345 : vector<32x128xf32>
    %347 = arith.subf %346, %344 : vector<32x128xf32>
    %348 = arith.subf %346, %347 : vector<32x128xf32>
    %cst_114 = arith.constant 6.553600e+04 : f32
    %349 = vector.broadcast %cst_114 : f32 to vector<32x128xf32>
    %350 = arith.mulf %344, %349 : vector<32x128xf32>
    %cst_115 = arith.constant 0x4B400000 : f32
    %351 = vector.broadcast %cst_115 : f32 to vector<32x128xf32>
    %352 = arith.addf %350, %351 : vector<32x128xf32>
    %cst_116 = arith.constant 0x4B400000 : f32
    %353 = vector.broadcast %cst_116 : f32 to vector<32x128xf32>
    %354 = arith.subf %352, %353 : vector<32x128xf32>
    %cst_117 = arith.constant 1.52587891E-5 : f32
    %355 = vector.broadcast %cst_117 : f32 to vector<32x128xf32>
    %356 = arith.mulf %354, %355 : vector<32x128xf32>
    %357 = math.absf %344 : vector<32x128xf32>
    %cst_118 = arith.constant 6.10351563E-5 : f32
    %358 = vector.broadcast %cst_118 : f32 to vector<32x128xf32>
    %359 = arith.cmpf olt, %357, %358 : vector<32x128xf32>
    %360 = arith.select %359, %356, %348 : vector<32x128xi1>, vector<32x128xf32>
    %cst_119 = arith.constant -5.734400e+04 : f32
    %cst_120 = arith.constant 5.734400e+04 : f32
    %361 = vector.broadcast %cst_119 : f32 to vector<32x128xf32>
    %362 = arith.maximumf %361, %360 : vector<32x128xf32>
    %363 = vector.broadcast %cst_120 : f32 to vector<32x128xf32>
    %364 = arith.minimumf %363, %362 : vector<32x128xf32>
    %365 = arith.truncf %364 : vector<32x128xf32> to vector<32x128xbf16>
    %cst_121 = arith.constant dense<0.000000e+00> : vector<32x128xf32>
    %366 = tpu.matmul %365, %7, %cst_121 {dimension_numbers = #tpu.dot_dimension_numbers<[1], [0], [0], [1], [0, 0, 1, 1], [], []>} : vector<32x128xbf16>, vector<128x128xbf16>, vector<32x128xf32> -> vector<32x128xf32>
    %367 = vector.broadcast %342 : vector<32x1xf32> to vector<32x128xf32>
    %368 = arith.mulf %366, %367 : vector<32x128xf32>
    %369 = arith.addf %3, %368 : vector<32x128xf32>
    %cst_122 = arith.constant dense<0.000000e+00> : vector<32xf32>
    %370 = vector.multi_reduction <add>, %369, %cst_122 [1] : vector<32x128xf32> to vector<32xf32>
    %371 = vector.shape_cast %370 : vector<32xf32> to vector<32x1xf32>
    %cst_123 = arith.constant 1.280000e+02 : f32
    %372 = vector.broadcast %cst_123 : f32 to vector<32x1xf32>
    %373 = arith.divf %371, %372 : vector<32x1xf32>
    %374 = vector.broadcast %373 : vector<32x1xf32> to vector<32x128xf32>
    %375 = arith.subf %369, %374 : vector<32x128xf32>
    %376 = arith.mulf %375, %375 : vector<32x128xf32>
    %cst_124 = arith.constant dense<0.000000e+00> : vector<32xf32>
    %377 = vector.multi_reduction <add>, %376, %cst_124 [1] : vector<32x128xf32> to vector<32xf32>
    %378 = vector.shape_cast %377 : vector<32xf32> to vector<32x1xf32>
    %cst_125 = arith.constant 1.280000e+02 : f32
    %379 = vector.broadcast %cst_125 : f32 to vector<32x1xf32>
    %380 = arith.divf %378, %379 : vector<32x1xf32>
    %cst_126 = arith.constant 9.99999974E-6 : f32
    %381 = vector.broadcast %cst_126 : f32 to vector<32x1xf32>
    %382 = arith.addf %380, %381 : vector<32x1xf32>
    %383 = math.rsqrt %382 : vector<32x1xf32>
    %384 = vector.broadcast %383 : vector<32x1xf32> to vector<32x128xf32>
    %385 = arith.mulf %375, %384 : vector<32x128xf32>
    %386 = vector.broadcast %15 : vector<1x128xf32> to vector<32x128xf32>
    %387 = arith.mulf %385, %386 : vector<32x128xf32>
    %388 = vector.broadcast %16 : vector<1x128xf32> to vector<32x128xf32>
    %389 = arith.addf %387, %388 : vector<32x128xf32>
    %390 = math.absf %389 : vector<32x128xf32>
    %cst_127 = arith.constant dense<0xFF800000> : vector<32xf32>
    %391 = vector.multi_reduction <maximumf>, %390, %cst_127 [1] : vector<32x128xf32> to vector<32xf32>
    %392 = vector.shape_cast %391 : vector<32xf32> to vector<32x1xf32>
    %cst_128 = arith.constant 0.000000e+00 : f32
    %393 = vector.broadcast %cst_128 : f32 to vector<32x1xf32>
    %394 = arith.cmpf ogt, %392, %393 : vector<32x1xf32>
    %cst_129 = arith.constant 1.000000e+00 : f32
    %395 = vector.broadcast %cst_129 : f32 to vector<32x1xf32>
    %396 = arith.select %394, %392, %395 : vector<32x1xi1>, vector<32x1xf32>
    %cst_130 = arith.constant 4.480000e+02 : f32
    %397 = vector.broadcast %cst_130 : f32 to vector<32x1xf32>
    %398 = arith.divf %397, %396 : vector<32x1xf32>
    %cst_131 = arith.constant 1.000000e+00 : f32
    %399 = vector.broadcast %cst_131 : f32 to vector<32x1xf32>
    %400 = arith.select %394, %398, %399 : vector<32x1xi1>, vector<32x1xf32>
    %cst_132 = arith.constant 0.00223214296 : f32
    %401 = vector.broadcast %cst_132 : f32 to vector<32x1xf32>
    %402 = arith.mulf %392, %401 : vector<32x1xf32>
    %cst_133 = arith.constant 1.000000e+00 : f32
    %403 = vector.broadcast %cst_133 : f32 to vector<32x1xf32>
    %404 = arith.select %394, %402, %403 : vector<32x1xi1>, vector<32x1xf32>
    %405 = vector.broadcast %400 : vector<32x1xf32> to vector<32x128xf32>
    %406 = arith.mulf %389, %405 : vector<32x128xf32>
    %cst_134 = arith.constant 0x49800008 : f32
    %407 = vector.broadcast %cst_134 : f32 to vector<32x128xf32>
    %408 = arith.mulf %406, %407 : vector<32x128xf32>
    %409 = arith.subf %408, %406 : vector<32x128xf32>
    %410 = arith.subf %408, %409 : vector<32x128xf32>
    %cst_135 = arith.constant 5.120000e+02 : f32
    %411 = vector.broadcast %cst_135 : f32 to vector<32x128xf32>
    %412 = arith.mulf %406, %411 : vector<32x128xf32>
    %cst_136 = arith.constant 0x4B400000 : f32
    %413 = vector.broadcast %cst_136 : f32 to vector<32x128xf32>
    %414 = arith.addf %412, %413 : vector<32x128xf32>
    %cst_137 = arith.constant 0x4B400000 : f32
    %415 = vector.broadcast %cst_137 : f32 to vector<32x128xf32>
    %416 = arith.subf %414, %415 : vector<32x128xf32>
    %cst_138 = arith.constant 0.001953125 : f32
    %417 = vector.broadcast %cst_138 : f32 to vector<32x128xf32>
    %418 = arith.mulf %416, %417 : vector<32x128xf32>
    %419 = math.absf %406 : vector<32x128xf32>
    %cst_139 = arith.constant 1.562500e-02 : f32
    %420 = vector.broadcast %cst_139 : f32 to vector<32x128xf32>
    %421 = arith.cmpf olt, %419, %420 : vector<32x128xf32>
    %422 = arith.select %421, %418, %410 : vector<32x128xi1>, vector<32x128xf32>
    %cst_140 = arith.constant -4.480000e+02 : f32
    %cst_141 = arith.constant 4.480000e+02 : f32
    %423 = vector.broadcast %cst_140 : f32 to vector<32x128xf32>
    %424 = arith.maximumf %423, %422 : vector<32x128xf32>
    %425 = vector.broadcast %cst_141 : f32 to vector<32x128xf32>
    %426 = arith.minimumf %425, %424 : vector<32x128xf32>
    %427 = arith.truncf %426 : vector<32x128xf32> to vector<32x128xbf16>
    %cst_142 = arith.constant dense<0.000000e+00> : vector<32x256xf32>
    %428 = tpu.matmul %427, %8, %cst_142 {dimension_numbers = #tpu.dot_dimension_numbers<[1], [0], [0], [1], [0, 0, 1, 1], [], []>} : vector<32x128xbf16>, vector<128x256xbf16>, vector<32x256xf32> -> vector<32x256xf32>
    %429 = vector.broadcast %404 : vector<32x1xf32> to vector<32x256xf32>
    %430 = arith.mulf %428, %429 : vector<32x256xf32>
    %431 = vector.broadcast %13 : vector<1x256xf32> to vector<32x256xf32>
    %432 = arith.addf %430, %431 : vector<32x256xf32>
    %cst_143 = arith.constant 5.000000e-01 : f32
    %433 = vector.broadcast %cst_143 : f32 to vector<32x256xf32>
    %434 = arith.mulf %433, %432 : vector<32x256xf32>
    %cst_144 = arith.constant 0.707106769 : f32
    %435 = vector.broadcast %cst_144 : f32 to vector<32x256xf32>
    %436 = arith.mulf %432, %435 : vector<32x256xf32>
    %437 = math.absf %436 : vector<32x256xf32>
    %cst_145 = arith.constant 0.327591091 : f32
    %438 = vector.broadcast %cst_145 : f32 to vector<32x256xf32>
    %439 = arith.mulf %438, %437 : vector<32x256xf32>
    %cst_146 = arith.constant 1.000000e+00 : f32
    %440 = vector.broadcast %cst_146 : f32 to vector<32x256xf32>
    %441 = arith.addf %440, %439 : vector<32x256xf32>
    %cst_147 = arith.constant 1.000000e+00 : f32
    %442 = vector.broadcast %cst_147 : f32 to vector<32x256xf32>
    %443 = arith.divf %442, %441 : vector<32x256xf32>
    %cst_148 = arith.constant 1.06140542 : f32
    %444 = vector.broadcast %cst_148 : f32 to vector<32x256xf32>
    %445 = arith.mulf %444, %443 : vector<32x256xf32>
    %cst_149 = arith.constant -1.45315206 : f32
    %446 = vector.broadcast %cst_149 : f32 to vector<32x256xf32>
    %447 = arith.addf %445, %446 : vector<32x256xf32>
    %448 = arith.mulf %447, %443 : vector<32x256xf32>
    %cst_150 = arith.constant 1.42141378 : f32
    %449 = vector.broadcast %cst_150 : f32 to vector<32x256xf32>
    %450 = arith.addf %448, %449 : vector<32x256xf32>
    %451 = arith.mulf %450, %443 : vector<32x256xf32>
    %cst_151 = arith.constant -0.284496725 : f32
    %452 = vector.broadcast %cst_151 : f32 to vector<32x256xf32>
    %453 = arith.addf %451, %452 : vector<32x256xf32>
    %454 = arith.mulf %453, %443 : vector<32x256xf32>
    %cst_152 = arith.constant 0.254829586 : f32
    %455 = vector.broadcast %cst_152 : f32 to vector<32x256xf32>
    %456 = arith.addf %454, %455 : vector<32x256xf32>
    %457 = arith.mulf %456, %443 : vector<32x256xf32>
    %cst_153 = arith.constant 0.000000e+00 : f32
    %458 = vector.broadcast %cst_153 : f32 to vector<32x256xf32>
    %459 = arith.subf %458, %437 : vector<32x256xf32>
    %460 = arith.mulf %459, %437 : vector<32x256xf32>
    %461 = math.exp %460 : vector<32x256xf32>
    %462 = arith.mulf %457, %461 : vector<32x256xf32>
    %cst_154 = arith.constant 1.000000e+00 : f32
    %463 = vector.broadcast %cst_154 : f32 to vector<32x256xf32>
    %464 = arith.subf %463, %462 : vector<32x256xf32>
    %cst_155 = arith.constant 0.000000e+00 : f32
    %465 = vector.broadcast %cst_155 : f32 to vector<32x256xf32>
    %466 = arith.cmpf oge, %436, %465 : vector<32x256xf32>
    %cst_156 = arith.constant 0.000000e+00 : f32
    %467 = vector.broadcast %cst_156 : f32 to vector<32x256xf32>
    %468 = arith.subf %467, %464 : vector<32x256xf32>
    %469 = arith.select %466, %464, %468 : vector<32x256xi1>, vector<32x256xf32>
    %cst_157 = arith.constant 1.000000e+00 : f32
    %470 = vector.broadcast %cst_157 : f32 to vector<32x256xf32>
    %471 = arith.addf %470, %469 : vector<32x256xf32>
    %472 = arith.mulf %434, %471 : vector<32x256xf32>
    %473 = vector.extract_strided_slice %472 {offsets = [0, 0], sizes = [32, 128], strides = [1, 1]} : vector<32x256xf32> to vector<32x128xf32>
    %474 = math.absf %473 : vector<32x128xf32>
    %cst_158 = arith.constant dense<0xFF800000> : vector<32xf32>
    %475 = vector.multi_reduction <maximumf>, %474, %cst_158 [1] : vector<32x128xf32> to vector<32xf32>
    %476 = vector.shape_cast %475 : vector<32xf32> to vector<32x1xf32>
    %cst_159 = arith.constant 0.000000e+00 : f32
    %477 = vector.broadcast %cst_159 : f32 to vector<32x1xf32>
    %478 = arith.cmpf ogt, %476, %477 : vector<32x1xf32>
    %cst_160 = arith.constant 1.000000e+00 : f32
    %479 = vector.broadcast %cst_160 : f32 to vector<32x1xf32>
    %480 = arith.select %478, %476, %479 : vector<32x1xi1>, vector<32x1xf32>
    %cst_161 = arith.constant 4.480000e+02 : f32
    %481 = vector.broadcast %cst_161 : f32 to vector<32x1xf32>
    %482 = arith.divf %481, %480 : vector<32x1xf32>
    %cst_162 = arith.constant 1.000000e+00 : f32
    %483 = vector.broadcast %cst_162 : f32 to vector<32x1xf32>
    %484 = arith.select %478, %482, %483 : vector<32x1xi1>, vector<32x1xf32>
    %cst_163 = arith.constant 0.00223214296 : f32
    %485 = vector.broadcast %cst_163 : f32 to vector<32x1xf32>
    %486 = arith.mulf %476, %485 : vector<32x1xf32>
    %cst_164 = arith.constant 1.000000e+00 : f32
    %487 = vector.broadcast %cst_164 : f32 to vector<32x1xf32>
    %488 = arith.select %478, %486, %487 : vector<32x1xi1>, vector<32x1xf32>
    %489 = vector.broadcast %484 : vector<32x1xf32> to vector<32x128xf32>
    %490 = arith.mulf %473, %489 : vector<32x128xf32>
    %cst_165 = arith.constant 0x49800008 : f32
    %491 = vector.broadcast %cst_165 : f32 to vector<32x128xf32>
    %492 = arith.mulf %490, %491 : vector<32x128xf32>
    %493 = arith.subf %492, %490 : vector<32x128xf32>
    %494 = arith.subf %492, %493 : vector<32x128xf32>
    %cst_166 = arith.constant 5.120000e+02 : f32
    %495 = vector.broadcast %cst_166 : f32 to vector<32x128xf32>
    %496 = arith.mulf %490, %495 : vector<32x128xf32>
    %cst_167 = arith.constant 0x4B400000 : f32
    %497 = vector.broadcast %cst_167 : f32 to vector<32x128xf32>
    %498 = arith.addf %496, %497 : vector<32x128xf32>
    %cst_168 = arith.constant 0x4B400000 : f32
    %499 = vector.broadcast %cst_168 : f32 to vector<32x128xf32>
    %500 = arith.subf %498, %499 : vector<32x128xf32>
    %cst_169 = arith.constant 0.001953125 : f32
    %501 = vector.broadcast %cst_169 : f32 to vector<32x128xf32>
    %502 = arith.mulf %500, %501 : vector<32x128xf32>
    %503 = math.absf %490 : vector<32x128xf32>
    %cst_170 = arith.constant 1.562500e-02 : f32
    %504 = vector.broadcast %cst_170 : f32 to vector<32x128xf32>
    %505 = arith.cmpf olt, %503, %504 : vector<32x128xf32>
    %506 = arith.select %505, %502, %494 : vector<32x128xi1>, vector<32x128xf32>
    %cst_171 = arith.constant -4.480000e+02 : f32
    %cst_172 = arith.constant 4.480000e+02 : f32
    %507 = vector.broadcast %cst_171 : f32 to vector<32x128xf32>
    %508 = arith.maximumf %507, %506 : vector<32x128xf32>
    %509 = vector.broadcast %cst_172 : f32 to vector<32x128xf32>
    %510 = arith.minimumf %509, %508 : vector<32x128xf32>
    %511 = arith.truncf %510 : vector<32x128xf32> to vector<32x128xbf16>
    %512 = vector.extract_strided_slice %10 {offsets = [0, 0], sizes = [128, 128], strides = [1, 1]} : vector<256x128xbf16> to vector<128x128xbf16>
    %cst_173 = arith.constant dense<0.000000e+00> : vector<32x128xf32>
    %513 = tpu.matmul %511, %512, %cst_173 {dimension_numbers = #tpu.dot_dimension_numbers<[1], [0], [0], [1], [0, 0, 1, 1], [], []>} : vector<32x128xbf16>, vector<128x128xbf16>, vector<32x128xf32> -> vector<32x128xf32>
    %514 = vector.broadcast %488 : vector<32x1xf32> to vector<32x128xf32>
    %515 = arith.mulf %513, %514 : vector<32x128xf32>
    %516 = vector.extract_strided_slice %472 {offsets = [0, 128], sizes = [32, 128], strides = [1, 1]} : vector<32x256xf32> to vector<32x128xf32>
    %517 = math.absf %516 : vector<32x128xf32>
    %cst_174 = arith.constant dense<0xFF800000> : vector<32xf32>
    %518 = vector.multi_reduction <maximumf>, %517, %cst_174 [1] : vector<32x128xf32> to vector<32xf32>
    %519 = vector.shape_cast %518 : vector<32xf32> to vector<32x1xf32>
    %cst_175 = arith.constant 0.000000e+00 : f32
    %520 = vector.broadcast %cst_175 : f32 to vector<32x1xf32>
    %521 = arith.cmpf ogt, %519, %520 : vector<32x1xf32>
    %cst_176 = arith.constant 1.000000e+00 : f32
    %522 = vector.broadcast %cst_176 : f32 to vector<32x1xf32>
    %523 = arith.select %521, %519, %522 : vector<32x1xi1>, vector<32x1xf32>
    %cst_177 = arith.constant 4.480000e+02 : f32
    %524 = vector.broadcast %cst_177 : f32 to vector<32x1xf32>
    %525 = arith.divf %524, %523 : vector<32x1xf32>
    %cst_178 = arith.constant 1.000000e+00 : f32
    %526 = vector.broadcast %cst_178 : f32 to vector<32x1xf32>
    %527 = arith.select %521, %525, %526 : vector<32x1xi1>, vector<32x1xf32>
    %cst_179 = arith.constant 0.00223214296 : f32
    %528 = vector.broadcast %cst_179 : f32 to vector<32x1xf32>
    %529 = arith.mulf %519, %528 : vector<32x1xf32>
    %cst_180 = arith.constant 1.000000e+00 : f32
    %530 = vector.broadcast %cst_180 : f32 to vector<32x1xf32>
    %531 = arith.select %521, %529, %530 : vector<32x1xi1>, vector<32x1xf32>
    %532 = vector.broadcast %527 : vector<32x1xf32> to vector<32x128xf32>
    %533 = arith.mulf %516, %532 : vector<32x128xf32>
    %cst_181 = arith.constant 0x49800008 : f32
    %534 = vector.broadcast %cst_181 : f32 to vector<32x128xf32>
    %535 = arith.mulf %533, %534 : vector<32x128xf32>
    %536 = arith.subf %535, %533 : vector<32x128xf32>
    %537 = arith.subf %535, %536 : vector<32x128xf32>
    %cst_182 = arith.constant 5.120000e+02 : f32
    %538 = vector.broadcast %cst_182 : f32 to vector<32x128xf32>
    %539 = arith.mulf %533, %538 : vector<32x128xf32>
    %cst_183 = arith.constant 0x4B400000 : f32
    %540 = vector.broadcast %cst_183 : f32 to vector<32x128xf32>
    %541 = arith.addf %539, %540 : vector<32x128xf32>
    %cst_184 = arith.constant 0x4B400000 : f32
    %542 = vector.broadcast %cst_184 : f32 to vector<32x128xf32>
    %543 = arith.subf %541, %542 : vector<32x128xf32>
    %cst_185 = arith.constant 0.001953125 : f32
    %544 = vector.broadcast %cst_185 : f32 to vector<32x128xf32>
    %545 = arith.mulf %543, %544 : vector<32x128xf32>
    %546 = math.absf %533 : vector<32x128xf32>
    %cst_186 = arith.constant 1.562500e-02 : f32
    %547 = vector.broadcast %cst_186 : f32 to vector<32x128xf32>
    %548 = arith.cmpf olt, %546, %547 : vector<32x128xf32>
    %549 = arith.select %548, %545, %537 : vector<32x128xi1>, vector<32x128xf32>
    %cst_187 = arith.constant -4.480000e+02 : f32
    %cst_188 = arith.constant 4.480000e+02 : f32
    %550 = vector.broadcast %cst_187 : f32 to vector<32x128xf32>
    %551 = arith.maximumf %550, %549 : vector<32x128xf32>
    %552 = vector.broadcast %cst_188 : f32 to vector<32x128xf32>
    %553 = arith.minimumf %552, %551 : vector<32x128xf32>
    %554 = arith.truncf %553 : vector<32x128xf32> to vector<32x128xbf16>
    %555 = vector.extract_strided_slice %10 {offsets = [128, 0], sizes = [128, 128], strides = [1, 1]} : vector<256x128xbf16> to vector<128x128xbf16>
    %cst_189 = arith.constant dense<0.000000e+00> : vector<32x128xf32>
    %556 = tpu.matmul %554, %555, %cst_189 {dimension_numbers = #tpu.dot_dimension_numbers<[1], [0], [0], [1], [0, 0, 1, 1], [], []>} : vector<32x128xbf16>, vector<128x128xbf16>, vector<32x128xf32> -> vector<32x128xf32>
    %557 = vector.broadcast %531 : vector<32x1xf32> to vector<32x128xf32>
    %558 = arith.mulf %556, %557 : vector<32x128xf32>
    %559 = arith.addf %515, %558 : vector<32x128xf32>
    %560 = vector.broadcast %14 : vector<1x128xf32> to vector<32x128xf32>
    %561 = arith.addf %559, %560 : vector<32x128xf32>
    %562 = arith.addf %389, %561 : vector<32x128xf32>
    %cst_190 = arith.constant dense<0.000000e+00> : vector<32xf32>
    %563 = vector.multi_reduction <add>, %562, %cst_190 [1] : vector<32x128xf32> to vector<32xf32>
    %564 = vector.shape_cast %563 : vector<32xf32> to vector<32x1xf32>
    %cst_191 = arith.constant 1.280000e+02 : f32
    %565 = vector.broadcast %cst_191 : f32 to vector<32x1xf32>
    %566 = arith.divf %564, %565 : vector<32x1xf32>
    %567 = vector.broadcast %566 : vector<32x1xf32> to vector<32x128xf32>
    %568 = arith.subf %562, %567 : vector<32x128xf32>
    %569 = arith.mulf %568, %568 : vector<32x128xf32>
    %cst_192 = arith.constant dense<0.000000e+00> : vector<32xf32>
    %570 = vector.multi_reduction <add>, %569, %cst_192 [1] : vector<32x128xf32> to vector<32xf32>
    %571 = vector.shape_cast %570 : vector<32xf32> to vector<32x1xf32>
    %cst_193 = arith.constant 1.280000e+02 : f32
    %572 = vector.broadcast %cst_193 : f32 to vector<32x1xf32>
    %573 = arith.divf %571, %572 : vector<32x1xf32>
    %cst_194 = arith.constant 9.99999974E-6 : f32
    %574 = vector.broadcast %cst_194 : f32 to vector<32x1xf32>
    %575 = arith.addf %573, %574 : vector<32x1xf32>
    %576 = math.rsqrt %575 : vector<32x1xf32>
    %577 = vector.broadcast %576 : vector<32x1xf32> to vector<32x128xf32>
    %578 = arith.mulf %568, %577 : vector<32x128xf32>
    %579 = vector.broadcast %17 : vector<1x128xf32> to vector<32x128xf32>
    %580 = arith.mulf %578, %579 : vector<32x128xf32>
    %581 = vector.broadcast %18 : vector<1x128xf32> to vector<32x128xf32>
    %582 = arith.addf %580, %581 : vector<32x128xf32>
    %c5_i32 = arith.constant 5 : i32
    %583 = arith.cmpi ne, %arg0, %c5_i32 : i32
    %584 = arith.extui %583 : i1 to i32
    %c0_i32_195 = arith.constant 0 : i32
    %585 = arith.cmpi ne, %584, %c0_i32_195 : i32
    scf.if %585 {
      %c0_198 = arith.constant 0 : index
      %c0_199 = arith.constant 0 : index
      %589 = vector.load %arg6[%c0_198, %c0_199] : memref<32x128xf32, #tpu.memory_space<vmem>>, vector<32x128xf32>
      tpu.vector_store %arg6[%c0_198, %c0_199], %582 {strides = array<i32>} : memref<32x128xf32, #tpu.memory_space<vmem>>, vector<32x128xf32>,
    } else {
    }
    %c5_i32_196 = arith.constant 5 : i32
    %586 = arith.cmpi eq, %arg0, %c5_i32_196 : i32
    %587 = arith.extui %586 : i1 to i32
    %c0_i32_197 = arith.constant 0 : i32
    %588 = arith.cmpi ne, %587, %c0_i32_197 : i32
    scf.if %588 {
      %c0_198 = arith.constant 0 : index
      %c0_199 = arith.constant 0 : index
      %589 = vector.load %arg5[%c0_198, %c0_199] : memref<8x128xf32, #tpu.memory_space<vmem>>, vector<8x128xf32>
      %590 = vector.extract_strided_slice %589 {offsets = [0, 0], sizes = [1, 128], strides = [1, 1]} : vector<8x128xf32> to vector<1x128xf32>
      %591 = vector.extract_strided_slice %589 {offsets = [1, 0], sizes = [1, 128], strides = [1, 1]} : vector<8x128xf32> to vector<1x128xf32>
      %cst_200 = arith.constant dense<0.000000e+00> : vector<32xf32>
      %592 = vector.multi_reduction <add>, %582, %cst_200 [1] : vector<32x128xf32> to vector<32xf32>
      %593 = vector.shape_cast %592 : vector<32xf32> to vector<32x1xf32>
      %cst_201 = arith.constant 1.280000e+02 : f32
      %594 = vector.broadcast %cst_201 : f32 to vector<32x1xf32>
      %595 = arith.divf %593, %594 : vector<32x1xf32>
      %596 = vector.broadcast %595 : vector<32x1xf32> to vector<32x128xf32>
      %597 = arith.subf %582, %596 : vector<32x128xf32>
      %598 = arith.mulf %597, %597 : vector<32x128xf32>
      %cst_202 = arith.constant dense<0.000000e+00> : vector<32xf32>
      %599 = vector.multi_reduction <add>, %598, %cst_202 [1] : vector<32x128xf32> to vector<32xf32>
      %600 = vector.shape_cast %599 : vector<32xf32> to vector<32x1xf32>
      %cst_203 = arith.constant 1.280000e+02 : f32
      %601 = vector.broadcast %cst_203 : f32 to vector<32x1xf32>
      %602 = arith.divf %600, %601 : vector<32x1xf32>
      %cst_204 = arith.constant 9.99999974E-6 : f32
      %603 = vector.broadcast %cst_204 : f32 to vector<32x1xf32>
      %604 = arith.addf %602, %603 : vector<32x1xf32>
      %605 = math.rsqrt %604 : vector<32x1xf32>
      %606 = vector.broadcast %605 : vector<32x1xf32> to vector<32x128xf32>
      %607 = arith.mulf %597, %606 : vector<32x128xf32>
      %608 = vector.broadcast %590 : vector<1x128xf32> to vector<32x128xf32>
      %609 = arith.mulf %607, %608 : vector<32x128xf32>
      %610 = vector.broadcast %591 : vector<1x128xf32> to vector<32x128xf32>
      %611 = arith.addf %609, %610 : vector<32x128xf32>
      %612 = vector.extract_strided_slice %589 {offsets = [2, 0], sizes = [1, 128], strides = [1, 1]} : vector<8x128xf32> to vector<1x128xf32>
      %613 = vector.extract_strided_slice %589 {offsets = [3, 0], sizes = [1, 128], strides = [1, 1]} : vector<8x128xf32> to vector<1x128xf32>
      %cst_205 = arith.constant dense<0.000000e+00> : vector<32xf32>
      %614 = vector.multi_reduction <add>, %611, %cst_205 [1] : vector<32x128xf32> to vector<32xf32>
      %615 = vector.shape_cast %614 : vector<32xf32> to vector<32x1xf32>
      %cst_206 = arith.constant 1.280000e+02 : f32
      %616 = vector.broadcast %cst_206 : f32 to vector<32x1xf32>
      %617 = arith.divf %615, %616 : vector<32x1xf32>
      %618 = vector.broadcast %617 : vector<32x1xf32> to vector<32x128xf32>
      %619 = arith.subf %611, %618 : vector<32x128xf32>
      %620 = arith.mulf %619, %619 : vector<32x128xf32>
      %cst_207 = arith.constant dense<0.000000e+00> : vector<32xf32>
      %621 = vector.multi_reduction <add>, %620, %cst_207 [1] : vector<32x128xf32> to vector<32xf32>
      %622 = vector.shape_cast %621 : vector<32xf32> to vector<32x1xf32>
      %cst_208 = arith.constant 1.280000e+02 : f32
      %623 = vector.broadcast %cst_208 : f32 to vector<32x1xf32>
      %624 = arith.divf %622, %623 : vector<32x1xf32>
      %cst_209 = arith.constant 9.99999974E-6 : f32
      %625 = vector.broadcast %cst_209 : f32 to vector<32x1xf32>
      %626 = arith.addf %624, %625 : vector<32x1xf32>
      %627 = math.rsqrt %626 : vector<32x1xf32>
      %628 = vector.broadcast %627 : vector<32x1xf32> to vector<32x128xf32>
      %629 = arith.mulf %619, %628 : vector<32x128xf32>
      %630 = vector.broadcast %612 : vector<1x128xf32> to vector<32x128xf32>
      %631 = arith.mulf %629, %630 : vector<32x128xf32>
      %632 = vector.broadcast %613 : vector<1x128xf32> to vector<32x128xf32>
      %633 = arith.addf %631, %632 : vector<32x128xf32>
      %c0_210 = arith.constant 0 : index
      %c0_211 = arith.constant 0 : index
      %634 = vector.load %arg6[%c0_210, %c0_211] : memref<32x128xf32, #tpu.memory_space<vmem>>, vector<32x128xf32>
      tpu.vector_store %arg6[%c0_210, %c0_211], %633 {strides = array<i32>} : memref<32x128xf32, #tpu.memory_space<vmem>>, vector<32x128xf32>,
    } else {
    }
    return
  }
  func.func @transform_0(%arg0: i32) -> (i32, i32) {
    %c0_i32 = arith.constant 0 : i32
    %c0_i32_0 = arith.constant 0 : i32
    %c0_i32_1 = arith.constant 0 : i32
    return %c0_i32, %c0_i32_0 : i32, i32
  }
  func.func @transform_1(%arg0: i32) -> (i32, i32, i32) {
    %c0_i32 = arith.constant 0 : i32
    %c0_i32_0 = arith.constant 0 : i32
    %c0_i32_1 = arith.constant 0 : i32
    return %arg0, %c0_i32, %c0_i32_0 : i32, i32, i32
  }
  func.func @transform_2(%arg0: i32) -> (i32, i32, i32) {
    %c0_i32 = arith.constant 0 : i32
    %c0_i32_0 = arith.constant 0 : i32
    %c0_i32_1 = arith.constant 0 : i32
    return %arg0, %c0_i32, %c0_i32_0 : i32, i32, i32
  }
  func.func @transform_3(%arg0: i32) -> (i32, i32, i32) {
    %c0_i32 = arith.constant 0 : i32
    %c0_i32_0 = arith.constant 0 : i32
    %c0_i32_1 = arith.constant 0 : i32
    return %arg0, %c0_i32, %c0_i32_0 : i32, i32, i32
  }
  func.func @transform_4(%arg0: i32) -> (i32, i32) {
    %c0_i32 = arith.constant 0 : i32
    %c0_i32_0 = arith.constant 0 : i32
    %c0_i32_1 = arith.constant 0 : i32
    return %c0_i32, %c0_i32_0 : i32, i32
  }
  func.func @transform_5(%arg0: i32) -> (i32, i32) {
    %c0_i32 = arith.constant 0 : i32
    %c0_i32_0 = arith.constant 0 : i32
    %c0_i32_1 = arith.constant 0 : i32
    return %c0_i32, %c0_i32_0 : i32, i32
  }
}

</mosaic_0001>

<llo_original>
// kernel: minilm_forward.3
$region0: #{minilm_forward.3}
  #allocation0 [shape = 'u32[]', space=smem, size = 0x4, offset = 0x4, fixed_abs, tag = 'smem constant byte address 0x4 - core index']
  #allocation1 [shape = 'u32[144,128]{1,0:T(1,128)}', space=vmem, size = 0x12000, scoped, tag = 'internal scratch']
  %s0 = inlined_call_operand.vmem [shape: f32[32,128], index: 0, kind: input, shape index: {}]
  %s1 = inlined_call_operand.vmem [shape: bf16[128,5120], index: 1, kind: input, shape index: {}]
  %s2 = inlined_call_operand.hbm [shape: f32[1,5120], index: 2, kind: input, shape index: {}]
  %s3 = inlined_call_operand.hbm [shape: f32[32,5120], index: 3, kind: output, shape index: {}]
  %s4 = sld [smem:[#allocation0]]
  $region72: #{minilm_forward.3} parent=0
    _
  %s6 = ssub.s32 1, %s4
  %s7 = scalar_select 0, %s6, %s4
  $region1: #{minilm_forward.3} parent=0
    #allocation2 [shape = 'u8[655360]{0}', space=vmem, size = 0xa0000, scoped, tag = 'input window, operand 1']
    #allocation3 [shape = 'u8[10240]{0}', space=vmem, size = 0x2800, scoped, tag = 'input window, operand 2']
    #allocation4 [shape = 's32[2]{0}', space=sflag, size = 0x8, scoped, tag = 'scoped memory for minilm_forward.3']
    #allocation5 [shape = 's32[2]{0}', space=sflag, size = 0x8, scoped, tag = 'scoped memory for minilm_forward.3']
    #allocation6 [shape = 'u8[327680]{0}', space=vmem, size = 0x50000, scoped, tag = 'output window, operand 0']
    %8 = vsyncpa [#allocation4], 0
    %s9 = scalar_lea.sflag [#allocation4], 1
    %10 = vsyncpa %s9, 0
    %11 = vsyncpa [#allocation5], 0
    %s12 = scalar_lea.sflag [#allocation5], 1
    %13 = vsyncpa %s12, 0
    loop: start=0, step=1, limit=6
    $region2: #{minilm_forward.3} parent=1 // loop_pre_header
      _
    $region3: #{minilm_forward.3} parent=1 // loop_header
      %s15 = sphi 0, %s19
      %p16 = scmp.ge.s32.totalorder %s15, 6
      %s23 = sphi 0, %s23
      %s25 = sphi 0, %s23
      %s26 = sphi 0, %s25
      %s40 = sphi 0, %s26
      %s46 = sphi 0, %s48
      %s49 = sphi 0, %s46
      %s50 = sphi 0, %s49
      %s66 = sphi 0, %s50
      %s72 = sphi 0, %s74
      %s75 = sphi 0, %s72
      %s76 = sphi 0, %s75
      %s92 = sphi 0, %s76
      %s98 = sphi 0, %s100
      %s101 = sphi 0, %s98
      %s102 = sphi 0, %s101
      %s118 = sphi 0, %s102
    $region4: #{minilm_forward.3} parent=1 // loop_header_branch
      %18 = sbr.rel (%p16) target = $region8
    $region5: #{minilm_forward.3} parent=1 // loop_body
      %s20 = ssub.s32 %s15, 1
      %s21 = ssub.s32 %s15, 2
      %s22 = sadd.s32 %s15, 1
      %s24 = sadd.s32 %s23, 1
      %p27 = scmp.eq.s32.totalorder %s15, 3
      %p28 = scmp.ne.s32.totalorder %s23, %s25
      %p29 = scmp.eq.s32.totalorder %s15, 0
      %p30 = por %p28, %p29
      %p31 = scmp.ne.s32.totalorder %s23, %s25
      %p32 = scmp.eq.s32.totalorder %s20, 3
      %p33 = por %p31, %p32
      %p34 = scmp.ne.s32.totalorder %s25, %s26
      %p35 = scmp.eq.s32.totalorder %s20, 0
      %p36 = por %p34, %p35
      %p37 = scmp.ne.s32.totalorder %s25, %s26
      %p38 = scmp.eq.s32.totalorder %s21, 3
      %p39 = por %p37, %p38
      %p41 = scmp.ne.s32.totalorder %s26, %s40
      %p42 = scmp.eq.s32.totalorder %s21, 0
      %p43 = por %p41, %p42
      %s44 = ssub.s32 %s15, %s22
      %p45 = scmp.eq.s32.totalorder %s44, 0
      %s47 = sadd.s32 %s46, 1
      %s48 = scalar_select %p45, %s46, %s47
      %p51 = pneg %p45
      %p52 = scmp.eq.s32.totalorder %s15, 3
      %p53 = por %p51, %p52
      %p54 = scmp.ne.s32.totalorder %s46, %s49
      %p55 = scmp.eq.s32.totalorder %s15, 0
      %p56 = por %p54, %p55
      %p57 = scmp.ne.s32.totalorder %s46, %s49
      %p58 = scmp.eq.s32.totalorder %s20, 3
      %p59 = por %p57, %p58
      %p60 = scmp.ne.s32.totalorder %s49, %s50
      %p61 = scmp.eq.s32.totalorder %s20, 0
      %p62 = por %p60, %p61
      %p63 = scmp.ne.s32.totalorder %s49, %s50
      %p64 = scmp.eq.s32.totalorder %s21, 3
      %p65 = por %p63, %p64
      %p67 = scmp.ne.s32.totalorder %s50, %s66
      %p68 = scmp.eq.s32.totalorder %s21, 0
      %p69 = por %p67, %p68
      %s70 = ssub.s32 %s15, %s22
      %p71 = scmp.eq.s32.totalorder %s70, 0
      %s73 = sadd.s32 %s72, 1
      %s74 = scalar_select %p71, %s72, %s73
      %p77 = pneg %p71
      %p78 = scmp.eq.s32.totalorder %s15, 3
      %p79 = por %p77, %p78
      %p80 = scmp.ne.s32.totalorder %s72, %s75
      %p81 = scmp.eq.s32.totalorder %s15, 0
      %p82 = por %p80, %p81
      %p83 = scmp.ne.s32.totalorder %s72, %s75
      %p84 = scmp.eq.s32.totalorder %s20, 3
      %p85 = por %p83, %p84
      %p86 = scmp.ne.s32.totalorder %s75, %s76
      %p87 = scmp.eq.s32.totalorder %s20, 0
      %p88 = por %p86, %p87
      %p89 = scmp.ne.s32.totalorder %s75, %s76
      %p90 = scmp.eq.s32.totalorder %s21, 3
      %p91 = por %p89, %p90
      %p93 = scmp.ne.s32.totalorder %s76, %s92
      %p94 = scmp.eq.s32.totalorder %s21, 0
      %p95 = por %p93, %p94
      %s96 = ssub.s32 %s15, %s22
      %p97 = scmp.eq.s32.totalorder %s96, 0
      %s99 = sadd.s32 %s98, 1
      %s100 = scalar_select %p97, %s98, %s99
      %p103 = pneg %p97
      %p104 = scmp.eq.s32.totalorder %s15, 3
      %p105 = por %p103, %p104
      %p106 = scmp.ne.s32.totalorder %s98, %s101
      %p107 = scmp.eq.s32.totalorder %s15, 0
      %p108 = por %p106, %p107
      %p109 = scmp.ne.s32.totalorder %s98, %s101
      %p110 = scmp.eq.s32.totalorder %s20, 3
      %p111 = por %p109, %p110
      %p112 = scmp.ne.s32.totalorder %s101, %s102
      %p113 = scmp.eq.s32.totalorder %s20, 0
      %p114 = por %p112, %p113
      %p115 = scmp.ne.s32.totalorder %s101, %s102
      %p116 = scmp.eq.s32.totalorder %s21, 3
      %p117 = por %p115, %p116
      %p119 = scmp.ne.s32.totalorder %s102, %s118
      %p120 = scmp.eq.s32.totalorder %s21, 0
      %p121 = por %p119, %p120
      %p122 = scmp.le.s32.totalorder 1, %s15
      %p123 = scmp.lt.s32.totalorder %s15, 5
      %p124 = pnand %p122, %p123
      %p125 = pneg %p124
      // Predicated region
      $region9: #{minilm_forward.3} parent=5 // pred_check
        _
      $region10: #{minilm_forward.3} parent=5 // pred_check_branch
        %127 = sbr.rel (%p124) target = $region12
      $region11: #{minilm_forward.3} parent=5 // pred_region
        %s128 = ssub.s32 %s15, 1
        // Predicated region
        $region13: #{minilm_forward.3} parent=11 // pred_check
          %p129 = pneg %p36
        $region14: #{minilm_forward.3} parent=11 // pred_check_branch
          %131 = sbr.rel (%p129) target = $region16
        $region15: #{minilm_forward.3} parent=11 // pred_region
          _
        $region16: #{minilm_forward.3} parent=11 // pred_fallthru
          _
      $region12: #{minilm_forward.3} parent=5 // pred_fallthru
        _
      %p132 = scmp.lt.s32.totalorder %s15, 4
      // Predicated region
      $region17: #{minilm_forward.3} parent=5 // pred_check
        %p133 = pneg %p132
      $region18: #{minilm_forward.3} parent=5 // pred_check_branch
        %135 = sbr.rel (%p133) target = $region20
      $region19: #{minilm_forward.3} parent=5 // pred_region
        // Predicated region
        $region21: #{minilm_forward.3} parent=19 // pred_check
          %p136 = pneg %p56
        $region22: #{minilm_forward.3} parent=19 // pred_check_branch
          %138 = sbr.rel (%p136) target = $region24
        $region23: #{minilm_forward.3} parent=19 // pred_region
          %s139 = sand.u32 %s46, 1
          %s140 = sand.u32 %s46, 1
          %s141 = smul.addr %s140, 640
          %s142 = scalar_lea.vmem [#allocation2], %s141
          %s143 = smul.u32 10, %s15
          %s144 = smul.addr %s143, 4
          %s145 = scalar_lea.vmem %s1, %s144
          // Predicated region
          $region25: #{minilm_forward.3} parent=23 // pred_check
            _
          $region26: #{minilm_forward.3} parent=23 // pred_check_branch
            %147 = sbr.rel (0) target = $region28
          $region27: #{minilm_forward.3} parent=23 // pred_region
            // Predicated region
            $region29: #{minilm_forward.3} parent=27 // pred_check
              _
            $region30: #{minilm_forward.3} parent=27 // pred_check_branch
              %149 = sbr.rel (0) target = $region32
            $region31: #{minilm_forward.3} parent=27 // pred_region
              loop: start=0, step=1, limit=1
              $region33: #{minilm_forward.3} parent=31 // loop_pre_header
                _
              $region34: #{minilm_forward.3} parent=31 // loop_header
                %s151 = sphi 0, %s155
                %p152 = scmp.ge.s32.totalorder %s151, 1
                %s156 = sphi %s145, %s145
                %s157 = sphi %s142, %s142
              $region35: #{minilm_forward.3} parent=31 // loop_header_branch
                %154 = sbr.rel (%p152) target = $region39
              $region36: #{minilm_forward.3} parent=31 // loop_body
                %v158 = vld [vmem:[%s156] sm:$0xff]
                %159 = vst [vmem:[%s157] sm:$0xff] %v158
                %v160 = vld [vmem:[%s156 + $0x8] sm:$0xff]
                %161 = vst [vmem:[%s157 + $0x8] sm:$0xff] %v160
                %v162 = vld [vmem:[%s156 + $0x10] sm:$0xff]
                %163 = vst [vmem:[%s157 + $0x10] sm:$0xff] %v162
                %v164 = vld [vmem:[%s156 + $0x18] sm:$0xff]
                %165 = vst [vmem:[%s157 + $0x18] sm:$0xff] %v164
                %v166 = vld [vmem:[%s156 + $0x20] sm:$0xff]
                %167 = vst [vmem:[%s157 + $0x20] sm:$0xff] %v166
                %v168 = vld [vmem:[%s156 + $0xa0] sm:$0xff]
                %169 = vst [vmem:[%s157 + $0x28] sm:$0xff] %v168
                %v170 = vld [vmem:[%s156 + $0xa8] sm:$0xff]
                %171 = vst [vmem:[%s157 + $0x30] sm:$0xff] %v170
                %v172 = vld [vmem:[%s156 + $0xb0] sm:$0xff]
                %173 = vst [vmem:[%s157 + $0x38] sm:$0xff] %v172
                %v174 = vld [vmem:[%s156 + $0xb8] sm:$0xff]
                %175 = vst [vmem:[%s157 + $0x40] sm:$0xff] %v174
                %v176 = vld [vmem:[%s156 + $0xc0] sm:$0xff]
                %177 = vst [vmem:[%s157 + $0x48] sm:$0xff] %v176
                %v178 = vld [vmem:[%s156 + $0x140] sm:$0xff]
                %179 = vst [vmem:[%s157 + $0x50] sm:$0xff] %v178
                %v180 = vld [vmem:[%s156 + $0x148] sm:$0xff]
                %181 = vst [vmem:[%s157 + $0x58] sm:$0xff] %v180
                %v182 = vld [vmem:[%s156 + $0x150] sm:$0xff]
                %183 = vst [vmem:[%s157 + $0x60] sm:$0xff] %v182
                %v184 = vld [vmem:[%s156 + $0x158] sm:$0xff]
                %185 = vst [vmem:[%s157 + $0x68] sm:$0xff] %v184
                %v186 = vld [vmem:[%s156 + $0x160] sm:$0xff]
                %187 = vst [vmem:[%s157 + $0x70] sm:$0xff] %v186
                %v188 = vld [vmem:[%s156 + $0x1e0] sm:$0xff]
                %189 = vst [vmem:[%s157 + $0x78] sm:$0xff] %v188
                %v190 = vld [vmem:[%s156 + $0x1e8] sm:$0xff]
                %191 = vst [vmem:[%s157 + $0x80] sm:$0xff] %v190
                %v192 = vld [vmem:[%s156 + $0x1f0] sm:$0xff]
                %193 = vst [vmem:[%s157 + $0x88] sm:$0xff] %v192
                %v194 = vld [vmem:[%s156 + $0x1f8] sm:$0xff]
                %195 = vst [vmem:[%s157 + $0x90] sm:$0xff] %v194
                %v196 = vld [vmem:[%s156 + $0x200] sm:$0xff]
                %197 = vst [vmem:[%s157 + $0x98] sm:$0xff] %v196
                %v198 = vld [vmem:[%s156 + $0x280] sm:$0xff]
                %199 = vst [vmem:[%s157 + $0xa0] sm:$0xff] %v198
                %v200 = vld [vmem:[%s156 + $0x288] sm:$0xff]
                %201 = vst [vmem:[%s157 + $0xa8] sm:$0xff] %v200
                %v202 = vld [vmem:[%s156 + $0x290] sm:$0xff]
                %203 = vst [vmem:[%s157 + $0xb0] sm:$0xff] %v202
                %v204 = vld [vmem:[%s156 + $0x298] sm:$0xff]
                %205 = vst [vmem:[%s157 + $0xb8] sm:$0xff] %v204
                %v206 = vld [vmem:[%s156 + $0x2a0] sm:$0xff]
                %207 = vst [vmem:[%s157 + $0xc0] sm:$0xff] %v206
                %v208 = vld [vmem:[%s156 + $0x320] sm:$0xff]
                %209 = vst [vmem:[%s157 + $0xc8] sm:$0xff] %v208
                %v210 = vld [vmem:[%s156 + $0x328] sm:$0xff]
                %211 = vst [vmem:[%s157 + $0xd0] sm:$0xff] %v210
                %v212 = vld [vmem:[%s156 + $0x330] sm:$0xff]
                %213 = vst [vmem:[%s157 + $0xd8] sm:$0xff] %v212
                %v214 = vld [vmem:[%s156 + $0x338] sm:$0xff]
                %215 = vst [vmem:[%s157 + $0xe0] sm:$0xff] %v214
                %v216 = vld [vmem:[%s156 + $0x340] sm:$0xff]
                %217 = vst [vmem:[%s157 + $0xe8] sm:$0xff] %v216
                %v218 = vld [vmem:[%s156 + $0x3c0] sm:$0xff]
                %219 = vst [vmem:[%s157 + $0xf0] sm:$0xff] %v218
                %v220 = vld [vmem:[%s156 + $0x3c8] sm:$0xff]
                %221 = vst [vmem:[%s157 + $0xf8] sm:$0xff] %v220
                %v222 = vld [vmem:[%s156 + $0x3d0] sm:$0xff]
                %223 = vst [vmem:[%s157 + $0x100] sm:$0xff] %v222
                %v224 = vld [vmem:[%s156 + $0x3d8] sm:$0xff]
                %225 = vst [vmem:[%s157 + $0x108] sm:$0xff] %v224
                %v226 = vld [vmem:[%s156 + $0x3e0] sm:$0xff]
                %227 = vst [vmem:[%s157 + $0x110] sm:$0xff] %v226
                %v228 = vld [vmem:[%s156 + $0x460] sm:$0xff]
                %229 = vst [vmem:[%s157 + $0x118] sm:$0xff] %v228
                %v230 = vld [vmem:[%s156 + $0x468] sm:$0xff]
                %231 = vst [vmem:[%s157 + $0x120] sm:$0xff] %v230
                %v232 = vld [vmem:[%s156 + $0x470] sm:$0xff]
                %233 = vst [vmem:[%s157 + $0x128] sm:$0xff] %v232
                %v234 = vld [vmem:[%s156 + $0x478] sm:$0xff]
                %235 = vst [vmem:[%s157 + $0x130] sm:$0xff] %v234
                %v236 = vld [vmem:[%s156 + $0x480] sm:$0xff]
                %237 = vst [vmem:[%s157 + $0x138] sm:$0xff] %v236
                %v238 = vld [vmem:[%s156 + $0x500] sm:$0xff]
                %239 = vst [vmem:[%s157 + $0x140] sm:$0xff] %v238
                %v240 = vld [vmem:[%s156 + $0x508] sm:$0xff]
                %241 = vst [vmem:[%s157 + $0x148] sm:$0xff] %v240
                %v242 = vld [vmem:[%s156 + $0x510] sm:$0xff]
                %243 = vst [vmem:[%s157 + $0x150] sm:$0xff] %v242
                %v244 = vld [vmem:[%s156 + $0x518] sm:$0xff]
                %245 = vst [vmem:[%s157 + $0x158] sm:$0xff] %v244
                %v246 = vld [vmem:[%s156 + $0x520] sm:$0xff]
                %247 = vst [vmem:[%s157 + $0x160] sm:$0xff] %v246
                %v248 = vld [vmem:[%s156 + $0x5a0] sm:$0xff]
                %249 = vst [vmem:[%s157 + $0x168] sm:$0xff] %v248
                %v250 = vld [vmem:[%s156 + $0x5a8] sm:$0xff]
                %251 = vst [vmem:[%s157 + $0x170] sm:$0xff] %v250
                %v252 = vld [vmem:[%s156 + $0x5b0] sm:$0xff]
                %253 = vst [vmem:[%s157 + $0x178] sm:$0xff] %v252
                %v254 = vld [vmem:[%s156 + $0x5b8] sm:$0xff]
                %255 = vst [vmem:[%s157 + $0x180] sm:$0xff] %v254
                %v256 = vld [vmem:[%s156 + $0x5c0] sm:$0xff]
                %257 = vst [vmem:[%s157 + $0x188] sm:$0xff] %v256
                %v258 = vld [vmem:[%s156 + $0x640] sm:$0xff]
                %259 = vst [vmem:[%s157 + $0x190] sm:$0xff] %v258
                %v260 = vld [vmem:[%s156 + $0x648] sm:$0xff]
                %261 = vst [vmem:[%s157 + $0x198] sm:$0xff] %v260
                %v262 = vld [vmem:[%s156 + $0x650] sm:$0xff]
                %263 = vst [vmem:[%s157 + $0x1a0] sm:$0xff] %v262
                %v264 = vld [vmem:[%s156 + $0x658] sm:$0xff]
                %265 = vst [vmem:[%s157 + $0x1a8] sm:$0xff] %v264
                %v266 = vld [vmem:[%s156 + $0x660] sm:$0xff]
                %267 = vst [vmem:[%s157 + $0x1b0] sm:$0xff] %v266
                %v268 = vld [vmem:[%s156 + $0x6e0] sm:$0xff]
                %269 = vst [vmem:[%s157 + $0x1b8] sm:$0xff] %v268
                %v270 = vld [vmem:[%s156 + $0x6e8] sm:$0xff]
                %271 = vst [vmem:[%s157 + $0x1c0] sm:$0xff] %v270
                %v272 = vld [vmem:[%s156 + $0x6f0] sm:$0xff]
                %273 = vst [vmem:[%s157 + $0x1c8] sm:$0xff] %v272
                %v274 = vld [vmem:[%s156 + $0x6f8] sm:$0xff]
                %275 = vst [vmem:[%s157 + $0x1d0] sm:$0xff] %v274
                %v276 = vld [vmem:[%s156 + $0x700] sm:$0xff]
                %277 = vst [vmem:[%s157 + $0x1d8] sm:$0xff] %v276
                %v278 = vld [vmem:[%s156 + $0x780] sm:$0xff]
                %279 = vst [vmem:[%s157 + $0x1e0] sm:$0xff] %v278
                %v280 = vld [vmem:[%s156 + $0x788] sm:$0xff]
                %281 = vst [vmem:[%s157 + $0x1e8] sm:$0xff] %v280
                %v282 = vld [vmem:[%s156 + $0x790] sm:$0xff]
                %283 = vst [vmem:[%s157 + $0x1f0] sm:$0xff] %v282
                %v284 = vld [vmem:[%s156 + $0x798] sm:$0xff]
                %285 = vst [vmem:[%s157 + $0x1f8] sm:$0xff] %v284
                %v286 = vld [vmem:[%s156 + $0x7a0] sm:$0xff]
                %287 = vst [vmem:[%s157 + $0x200] sm:$0xff] %v286
                %v288 = vld [vmem:[%s156 + $0x820] sm:$0xff]
                %289 = vst [vmem:[%s157 + $0x208] sm:$0xff] %v288
                %v290 = vld [vmem:[%s156 + $0x828] sm:$0xff]
                %291 = vst [vmem:[%s157 + $0x210] sm:$0xff] %v290
                %v292 = vld [vmem:[%s156 + $0x830] sm:$0xff]
                %293 = vst [vmem:[%s157 + $0x218] sm:$0xff] %v292
                %v294 = vld [vmem:[%s156 + $0x838] sm:$0xff]
                %295 = vst [vmem:[%s157 + $0x220] sm:$0xff] %v294
                %v296 = vld [vmem:[%s156 + $0x840] sm:$0xff]
                %297 = vst [vmem:[%s157 + $0x228] sm:$0xff] %v296
                %v298 = vld [vmem:[%s156 + $0x8c0] sm:$0xff]
                %299 = vst [vmem:[%s157 + $0x230] sm:$0xff] %v298
                %v300 = vld [vmem:[%s156 + $0x8c8] sm:$0xff]
                %301 = vst [vmem:[%s157 + $0x238] sm:$0xff] %v300
                %v302 = vld [vmem:[%s156 + $0x8d0] sm:$0xff]
                %303 = vst [vmem:[%s157 + $0x240] sm:$0xff] %v302
                %v304 = vld [vmem:[%s156 + $0x8d8] sm:$0xff]
                %305 = vst [vmem:[%s157 + $0x248] sm:$0xff] %v304
                %v306 = vld [vmem:[%s156 + $0x8e0] sm:$0xff]
                %307 = vst [vmem:[%s157 + $0x250] sm:$0xff] %v306
                %v308 = vld [vmem:[%s156 + $0x960] sm:$0xff]
                %309 = vst [vmem:[%s157 + $0x258] sm:$0xff] %v308
                %v310 = vld [vmem:[%s156 + $0x968] sm:$0xff]
                %311 = vst [vmem:[%s157 + $0x260] sm:$0xff] %v310
                %v312 = vld [vmem:[%s156 + $0x970] sm:$0xff]
                %313 = vst [vmem:[%s157 + $0x268] sm:$0xff] %v312
                %v314 = vld [vmem:[%s156 + $0x978] sm:$0xff]
                %315 = vst [vmem:[%s157 + $0x270] sm:$0xff] %v314
                %v316 = vld [vmem:[%s156 + $0x980] sm:$0xff]
                %317 = vst [vmem:[%s157 + $0x278] sm:$0xff] %v316
              $region37: #{minilm_forward.3} parent=31 // loop_footer
                %s155 = sadd.s32 1, %s151
              $region38: #{minilm_forward.3} parent=31 // loop_footer_branch
                %150 = sbr.rel target = $region34
              $region39: #{minilm_forward.3} parent=31 // loop_exit
                _
            $region32: #{minilm_forward.3} parent=27 // pred_fallthru
              _
            // Predicated region
            $region40: #{minilm_forward.3} parent=27 // pred_check
              _
            $region41: #{minilm_forward.3} parent=27 // pred_check_branch
              %319 = sbr.rel target = $region43
            $region42: #{minilm_forward.3} parent=27 // pred_region
              _
            $region43: #{minilm_forward.3} parent=27 // pred_fallthru
              _
          $region28: #{minilm_forward.3} parent=23 // pred_fallthru
            _
          %320 = vnop
        $region24: #{minilm_forward.3} parent=19 // pred_fallthru
          _
        // Predicated region
        $region44: #{minilm_forward.3} parent=19 // pred_check
          %p321 = pneg %p82
        $region45: #{minilm_forward.3} parent=19 // pred_check_branch
          %323 = sbr.rel (%p321) target = $region47
        $region46: #{minilm_forward.3} parent=19 // pred_region
          %s324 = sand.u32 %s72, 1
          %s325 = scalar_lea.sflag [#allocation4], %s324
          %s326 = sand.u32 %s72, 1
          %s327 = smul.addr %s326, 10
          %s328 = scalar_lea.vmem [#allocation3], %s327
          %s329 = smul.u32 10, %s15
          %s331 = ssub.s32 160, 160
          %332 = vsyncadd %s325, %s331
          %s333 = smul.addr %s329, 16
          %s334 = scalar_lea.hbm %s2, %s333
          %s336 = sshll.u32 %s328, 4
          %s337 = int_to_ptr.vmem [resolvable:$true] %s336
          %339 = dma.hbm_to_vmem [thread:$0]  %s334, 160, %s337, %s325
        $region47: #{minilm_forward.3} parent=19 // pred_fallthru
          _
      $region20: #{minilm_forward.3} parent=5 // pred_fallthru
        _
      %p340 = scmp.le.s32.totalorder 1, %s15
      %p341 = scmp.lt.s32.totalorder %s15, 5
      %p342 = pnand %p340, %p341
      %p343 = pneg %p342
      // Predicated region
      $region48: #{minilm_forward.3} parent=5 // pred_check
        _
      $region49: #{minilm_forward.3} parent=5 // pred_check_branch
        %345 = sbr.rel (%p342) target = $region51
      $region50: #{minilm_forward.3} parent=5 // pred_region
        %s346 = ssub.s32 %s15, 1
        %s347 = sand.u32 %s49, 1
        %s348 = sand.u32 %s49, 1
        %s349 = smul.addr %s348, 640
        %s350 = scalar_lea.vmem [#allocation2], %s349
        // Predicated region
        $region52: #{minilm_forward.3} parent=50 // pred_check
          %p351 = pneg %p62
        $region53: #{minilm_forward.3} parent=50 // pred_check_branch
          %353 = sbr.rel (%p351) target = $region55
        $region54: #{minilm_forward.3} parent=50 // pred_region
          _
        $region55: #{minilm_forward.3} parent=50 // pred_fallthru
          _
        %s354 = sand.u32 %s75, 1
        %s355 = scalar_lea.sflag [#allocation4], %s354
        %s356 = sand.u32 %s75, 1
        %s357 = smul.addr %s356, 10
        %s358 = scalar_lea.vmem [#allocation3], %s357
        // Predicated region
        $region56: #{minilm_forward.3} parent=50 // pred_check
          %p359 = pneg %p88
        $region57: #{minilm_forward.3} parent=50 // pred_check_branch
          %361 = sbr.rel (%p359) target = $region59
        $region58: #{minilm_forward.3} parent=50 // pred_region
          %362 = dma.done %s355, 160
        $region59: #{minilm_forward.3} parent=50 // pred_fallthru
          _
        %p363 = pneg %p36
        %p364 = pneg %p33
        %s365 = sand.u32 %s49, 1
        %s366 = sand.u32 %s49, 1
        %s367 = smul.addr %s366, 640
        %s368 = scalar_lea.vmem [#allocation2], %s367
        %p369 = pneg %p62
        %p370 = pneg %p59
        %s371 = sand.u32 %s75, 1
        %s372 = scalar_lea.sflag [#allocation4], %s371
        %s373 = sand.u32 %s75, 1
        %s374 = smul.addr %s373, 10
        %s375 = scalar_lea.vmem [#allocation3], %s374
        %p376 = pneg %p88
        %p377 = pneg %p85
        %p378 = pneg %p114
        %p379 = pneg %p111
        %s380 = sand.u32 %s101, 1
        %s381 = scalar_lea.sflag [#allocation5], %s380
        %s382 = sand.u32 %s101, 1
        %s383 = smul.addr %s382, 320
        %s384 = scalar_lea.vmem [#allocation6], %s383
        %s385 = smul.u32 10, %s20
        %s386 = smul.u32 10, %s20
        %s387 = smul.u32 10, %s20
        %v389 = vld [vmem:[%s0] sm:$0xff]
        %v390 = vld [vmem:[%s0 + $0x8] sm:$0xff]
        %v391 = vld [vmem:[%s0 + $0x10] sm:$0xff]
        %v392 = vld [vmem:[%s0 + $0x18] sm:$0xff]
        %v393 = vld [vmem:[%s350] sm:$0xff]
        %v394 = vld [vmem:[%s350 + $0x8] sm:$0xff]
        %v395 = vld [vmem:[%s350 + $0x10] sm:$0xff]
        %v396 = vld [vmem:[%s350 + $0x18] sm:$0xff]
        %v397 = vld [vmem:[%s350 + $0x20] sm:$0xff]
        %v398 = vld [vmem:[%s350 + $0x28] sm:$0xff]
        %v399 = vld [vmem:[%s350 + $0x30] sm:$0xff]
        %v400 = vld [vmem:[%s350 + $0x38] sm:$0xff]
        %v401 = vld [vmem:[%s350 + $0x40] sm:$0xff]
        %v402 = vld [vmem:[%s350 + $0x48] sm:$0xff]
        %v403 = vld [vmem:[%s350 + $0x50] sm:$0xff]
        %v404 = vld [vmem:[%s350 + $0x58] sm:$0xff]
        %v405 = vld [vmem:[%s350 + $0x60] sm:$0xff]
        %v406 = vld [vmem:[%s350 + $0x68] sm:$0xff]
        %v407 = vld [vmem:[%s350 + $0x70] sm:$0xff]
        %v408 = vld [vmem:[%s350 + $0x78] sm:$0xff]
        %v409 = vld [vmem:[%s350 + $0x80] sm:$0xff]
        %v410 = vld [vmem:[%s350 + $0x88] sm:$0xff]
        %v411 = vld [vmem:[%s350 + $0x90] sm:$0xff]
        %v412 = vld [vmem:[%s350 + $0x98] sm:$0xff]
        %v413 = vld [vmem:[%s350 + $0xa0] sm:$0xff]
        %v414 = vld [vmem:[%s350 + $0xa8] sm:$0xff]
        %v415 = vld [vmem:[%s350 + $0xb0] sm:$0xff]
        %v416 = vld [vmem:[%s350 + $0xb8] sm:$0xff]
        %v417 = vld [vmem:[%s350 + $0xc0] sm:$0xff]
        %v418 = vld [vmem:[%s350 + $0xc8] sm:$0xff]
        %v419 = vld [vmem:[%s350 + $0xd0] sm:$0xff]
        %v420 = vld [vmem:[%s350 + $0xd8] sm:$0xff]
        %v421 = vld [vmem:[%s350 + $0xe0] sm:$0xff]
        %v422 = vld [vmem:[%s350 + $0xe8] sm:$0xff]
        %v423 = vld [vmem:[%s350 + $0xf0] sm:$0xff]
        %v424 = vld [vmem:[%s350 + $0xf8] sm:$0xff]
        %v425 = vld [vmem:[%s350 + $0x100] sm:$0xff]
        %v426 = vld [vmem:[%s350 + $0x108] sm:$0xff]
        %v427 = vld [vmem:[%s350 + $0x110] sm:$0xff]
        %v428 = vld [vmem:[%s350 + $0x118] sm:$0xff]
        %v429 = vld [vmem:[%s350 + $0x120] sm:$0xff]
        %v430 = vld [vmem:[%s350 + $0x128] sm:$0xff]
        %v431 = vld [vmem:[%s350 + $0x130] sm:$0xff]
        %v432 = vld [vmem:[%s350 + $0x138] sm:$0xff]
        %v433 = vld [vmem:[%s350 + $0x140] sm:$0xff]
        %v434 = vld [vmem:[%s350 + $0x148] sm:$0xff]
        %v435 = vld [vmem:[%s350 + $0x150] sm:$0xff]
        %v436 = vld [vmem:[%s350 + $0x158] sm:$0xff]
        %v437 = vld [vmem:[%s350 + $0x160] sm:$0xff]
        %v438 = vld [vmem:[%s350 + $0x168] sm:$0xff]
        %v439 = vld [vmem:[%s350 + $0x170] sm:$0xff]
        %v440 = vld [vmem:[%s350 + $0x178] sm:$0xff]
        %v441 = vld [vmem:[%s350 + $0x180] sm:$0xff]
        %v442 = vld [vmem:[%s350 + $0x188] sm:$0xff]
        %v443 = vld [vmem:[%s350 + $0x190] sm:$0xff]
        %v444 = vld [vmem:[%s350 + $0x198] sm:$0xff]
        %v445 = vld [vmem:[%s350 + $0x1a0] sm:$0xff]
        %v446 = vld [vmem:[%s350 + $0x1a8] sm:$0xff]
        %v447 = vld [vmem:[%s350 + $0x1b0] sm:$0xff]
        %v448 = vld [vmem:[%s350 + $0x1b8] sm:$0xff]
        %v449 = vld [vmem:[%s350 + $0x1c0] sm:$0xff]
        %v450 = vld [vmem:[%s350 + $0x1c8] sm:$0xff]
        %v451 = vld [vmem:[%s350 + $0x1d0] sm:$0xff]
        %v452 = vld [vmem:[%s350 + $0x1d8] sm:$0xff]
        %v453 = vld [vmem:[%s350 + $0x1e0] sm:$0xff]
        %v454 = vld [vmem:[%s350 + $0x1e8] sm:$0xff]
        %v455 = vld [vmem:[%s350 + $0x1f0] sm:$0xff]
        %v456 = vld [vmem:[%s350 + $0x1f8] sm:$0xff]
        %v457 = vld [vmem:[%s350 + $0x200] sm:$0xff]
        %v458 = vld [vmem:[%s350 + $0x208] sm:$0xff]
        %v459 = vld [vmem:[%s350 + $0x210] sm:$0xff]
        %v460 = vld [vmem:[%s350 + $0x218] sm:$0xff]
        %v461 = vld [vmem:[%s350 + $0x220] sm:$0xff]
        %v462 = vld [vmem:[%s350 + $0x228] sm:$0xff]
        %v463 = vld [vmem:[%s350 + $0x230] sm:$0xff]
        %v464 = vld [vmem:[%s350 + $0x238] sm:$0xff]
        %v465 = vld [vmem:[%s350 + $0x240] sm:$0xff]
        %v466 = vld [vmem:[%s350 + $0x248] sm:$0xff]
        %v467 = vld [vmem:[%s350 + $0x250] sm:$0xff]
        %v468 = vld [vmem:[%s350 + $0x258] sm:$0xff]
        %v469 = vld [vmem:[%s350 + $0x260] sm:$0xff]
        %v470 = vld [vmem:[%s350 + $0x268] sm:$0xff]
        %v471 = vld [vmem:[%s350 + $0x270] sm:$0xff]
        %v472 = vld [vmem:[%s350 + $0x278] sm:$0xff]
        %v473 = vand.u32 2147483647, %v389
        %v474 = vand.u32 2147483647, %v390
        %v475 = vand.u32 2147483647, %v391
        %v476 = vand.u32 2147483647, %v392
        %477 = vmax.xlane.f32.xlu0 %v473
        %v478 = vpop.xlane.xlu0 %477
        %479 = vmax.xlane.f32.xlu0 %v474
        %v480 = vpop.xlane.xlu0 %479
        %481 = vmax.xlane.f32.xlu0 %v475
        %v482 = vpop.xlane.xlu0 %481
        %483 = vmax.xlane.f32.xlu0 %v476
        %v484 = vpop.xlane.xlu0 %483
        %vm485 = vcmp.gt.f32.partialorder %v478, 0.0
        %vm486 = vcmp.gt.f32.partialorder %v480, 0.0
        %vm487 = vcmp.gt.f32.partialorder %v482, 0.0
        %vm488 = vcmp.gt.f32.partialorder %v484, 0.0
        %v489 = vsel %vm485, %v478, 1.0
        %v490 = vsel %vm486, %v480, 1.0
        %v491 = vsel %vm487, %v482, 1.0
        %v492 = vsel %vm488, %v484, 1.0
        %v493 = vrcp.pop %v489
        %v494 = vmul.f32 448.0, %v493
        %v495 = vrcp.pop %v490
        %v496 = vmul.f32 448.0, %v495
        %v497 = vrcp.pop %v491
        %v498 = vmul.f32 448.0, %v497
        %v499 = vrcp.pop %v492
        %v500 = vmul.f32 448.0, %v499
        %v501 = vsel %vm485, %v494, 1.0
        %v502 = vsel %vm486, %v496, 1.0
        %v503 = vsel %vm487, %v498, 1.0
        %v504 = vsel %vm488, %v500, 1.0
        %v505 = vmul.f32 %v478, 0.002232143
        %v506 = vmul.f32 %v480, 0.002232143
        %v507 = vmul.f32 %v482, 0.002232143
        %v508 = vmul.f32 %v484, 0.002232143
        %v509 = vsel %vm485, %v505, 1.0
        %v510 = vsel %vm486, %v506, 1.0
        %v511 = vsel %vm487, %v507, 1.0
        %v512 = vsel %vm488, %v508, 1.0
        %v513 = vmul.f32 %v389, %v501
        %v514 = vmul.f32 %v390, %v502
        %v515 = vmul.f32 %v391, %v503
        %v516 = vmul.f32 %v392, %v504
        %v517 = vmul.f32 %v513, 1048577.0
        %v518 = vmul.f32 %v514, 1048577.0
        %v519 = vmul.f32 %v515, 1048577.0
        %v520 = vmul.f32 %v516, 1048577.0
        %v521 = vsub.f32 %v517, %v513
        %v522 = vsub.f32 %v518, %v514
        %v523 = vsub.f32 %v519, %v515
        %v524 = vsub.f32 %v520, %v516
        %v525 = vsub.f32 %v517, %v521
        %v526 = vsub.f32 %v518, %v522
        %v527 = vsub.f32 %v519, %v523
        %v528 = vsub.f32 %v520, %v524
        %v529 = vmul.f32 %v513, 512.0
        %v530 = vmul.f32 %v514, 512.0
        %v531 = vmul.f32 %v515, 512.0
        %v532 = vmul.f32 %v516, 512.0
        %v533 = vadd.f32 %v529, 12582912.0
        %v534 = vadd.f32 %v530, 12582912.0
        %v535 = vadd.f32 %v531, 12582912.0
        %v536 = vadd.f32 %v532, 12582912.0
        %v537 = vsub.f32 %v533, 12582912.0
        %v538 = vsub.f32 %v534, 12582912.0
        %v539 = vsub.f32 %v535, 12582912.0
        %v540 = vsub.f32 %v536, 12582912.0
        %v541 = vmul.f32 %v537, 0.001953125
        %v542 = vmul.f32 %v538, 0.001953125
        %v543 = vmul.f32 %v539, 0.001953125
        %v544 = vmul.f32 %v540, 0.001953125
        %v545 = vand.u32 2147483647, %v513
        %v546 = vand.u32 2147483647, %v514
        %v547 = vand.u32 2147483647, %v515
        %v548 = vand.u32 2147483647, %v516
        %vm549 = vcmp.lt.f32.partialorder %v545, 0.015625
        %vm550 = vcmp.lt.f32.partialorder %v546, 0.015625
        %vm551 = vcmp.lt.f32.partialorder %v547, 0.015625
        %vm552 = vcmp.lt.f32.partialorder %v548, 0.015625
        %v553 = vsel %vm549, %v541, %v525
        %v554 = vsel %vm550, %v542, %v526
        %v555 = vsel %vm551, %v543, %v527
        %v556 = vsel %vm552, %v544, %v528
        %v557 = vmax.f32 %v553, -448.0
        %v558 = vmax.f32 %v554, -448.0
        %v559 = vmax.f32 %v555, -448.0
        %v560 = vmax.f32 %v556, -448.0
        %v561 = vmin.f32 %v557, 448.0
        %v562 = vmin.f32 %v558, 448.0
        %v563 = vmin.f32 %v559, 448.0
        %v564 = vmin.f32 %v560, 448.0
        %v565 = vpack.c.bf16 %v562, %v561
        %v566 = vpack.c.bf16 %v564, %v563
        %v647 = vunpack.c.l.b16 %v393
        %v648 = vunpack.c.h.b16 %v393
        %v649 = vunpack.c.l.b16 %v394
        %v650 = vunpack.c.h.b16 %v394
        %v651 = vunpack.c.l.b16 %v395
        %v652 = vunpack.c.h.b16 %v395
        %v653 = vunpack.c.l.b16 %v396
        %v654 = vunpack.c.h.b16 %v396
        %v655 = vunpack.c.l.b16 %v397
        %v656 = vunpack.c.h.b16 %v397
        %v657 = vunpack.c.l.b16 %v398
        %v658 = vunpack.c.h.b16 %v398
        %v659 = vunpack.c.l.b16 %v399
        %v660 = vunpack.c.h.b16 %v399
        %v661 = vunpack.c.l.b16 %v400
        %v662 = vunpack.c.h.b16 %v400
        %v663 = vunpack.c.l.b16 %v401
        %v664 = vunpack.c.h.b16 %v401
        %v665 = vunpack.c.l.b16 %v402
        %v666 = vunpack.c.h.b16 %v402
        %v667 = vunpack.c.l.b16 %v403
        %v668 = vunpack.c.h.b16 %v403
        %v669 = vunpack.c.l.b16 %v404
        %v670 = vunpack.c.h.b16 %v404
        %v671 = vunpack.c.l.b16 %v405
        %v672 = vunpack.c.h.b16 %v405
        %v673 = vunpack.c.l.b16 %v406
        %v674 = vunpack.c.h.b16 %v406
        %v675 = vunpack.c.l.b16 %v407
        %v676 = vunpack.c.h.b16 %v407
        %v677 = vunpack.c.l.b16 %v408
        %v678 = vunpack.c.h.b16 %v408
        %v679 = vunpack.c.l.b16 %v409
        %v680 = vunpack.c.h.b16 %v409
        %v681 = vunpack.c.l.b16 %v410
        %v682 = vunpack.c.h.b16 %v410
        %v683 = vunpack.c.l.b16 %v411
        %v684 = vunpack.c.h.b16 %v411
        %v685 = vunpack.c.l.b16 %v412
        %v686 = vunpack.c.h.b16 %v412
        %v687 = vunpack.c.l.b16 %v413
        %v688 = vunpack.c.h.b16 %v413
        %v689 = vunpack.c.l.b16 %v414
        %v690 = vunpack.c.h.b16 %v414
        %v691 = vunpack.c.l.b16 %v415
        %v692 = vunpack.c.h.b16 %v415
        %v693 = vunpack.c.l.b16 %v416
        %v694 = vunpack.c.h.b16 %v416
        %v695 = vunpack.c.l.b16 %v417
        %v696 = vunpack.c.h.b16 %v417
        %v697 = vunpack.c.l.b16 %v418
        %v698 = vunpack.c.h.b16 %v418
        %v699 = vunpack.c.l.b16 %v419
        %v700 = vunpack.c.h.b16 %v419
        %v701 = vunpack.c.l.b16 %v420
        %v702 = vunpack.c.h.b16 %v420
        %v703 = vunpack.c.l.b16 %v421
        %v704 = vunpack.c.h.b16 %v421
        %v705 = vunpack.c.l.b16 %v422
        %v706 = vunpack.c.h.b16 %v422
        %v707 = vunpack.c.l.b16 %v423
        %v708 = vunpack.c.h.b16 %v423
        %v709 = vunpack.c.l.b16 %v424
        %v710 = vunpack.c.h.b16 %v424
        %v711 = vunpack.c.l.b16 %v425
        %v712 = vunpack.c.h.b16 %v425
        %v713 = vunpack.c.l.b16 %v426
        %v714 = vunpack.c.h.b16 %v426
        %v715 = vunpack.c.l.b16 %v427
        %v716 = vunpack.c.h.b16 %v427
        %v717 = vunpack.c.l.b16 %v428
        %v718 = vunpack.c.h.b16 %v428
        %v719 = vunpack.c.l.b16 %v429
        %v720 = vunpack.c.h.b16 %v429
        %v721 = vunpack.c.l.b16 %v430
        %v722 = vunpack.c.h.b16 %v430
        %v723 = vunpack.c.l.b16 %v431
        %v724 = vunpack.c.h.b16 %v431
        %v725 = vunpack.c.l.b16 %v432
        %v726 = vunpack.c.h.b16 %v432
        %v727 = vunpack.c.l.b16 %v433
        %v728 = vunpack.c.h.b16 %v433
        %v729 = vunpack.c.l.b16 %v434
        %v730 = vunpack.c.h.b16 %v434
        %v731 = vunpack.c.l.b16 %v435
        %v732 = vunpack.c.h.b16 %v435
        %v733 = vunpack.c.l.b16 %v436
        %v734 = vunpack.c.h.b16 %v436
        %v735 = vunpack.c.l.b16 %v437
        %v736 = vunpack.c.h.b16 %v437
        %v737 = vunpack.c.l.b16 %v438
        %v738 = vunpack.c.h.b16 %v438
        %v739 = vunpack.c.l.b16 %v439
        %v740 = vunpack.c.h.b16 %v439
        %v741 = vunpack.c.l.b16 %v440
        %v742 = vunpack.c.h.b16 %v440
        %v743 = vunpack.c.l.b16 %v441
        %v744 = vunpack.c.h.b16 %v441
        %v745 = vunpack.c.l.b16 %v442
        %v746 = vunpack.c.h.b16 %v442
        %v747 = vunpack.c.l.b16 %v443
        %v748 = vunpack.c.h.b16 %v443
        %v749 = vunpack.c.l.b16 %v444
        %v750 = vunpack.c.h.b16 %v444
        %v751 = vunpack.c.l.b16 %v445
        %v752 = vunpack.c.h.b16 %v445
        %v753 = vunpack.c.l.b16 %v446
        %v754 = vunpack.c.h.b16 %v446
        %v755 = vunpack.c.l.b16 %v447
        %v756 = vunpack.c.h.b16 %v447
        %v757 = vunpack.c.l.b16 %v448
        %v758 = vunpack.c.h.b16 %v448
        %v759 = vunpack.c.l.b16 %v449
        %v760 = vunpack.c.h.b16 %v449
        %v761 = vunpack.c.l.b16 %v450
        %v762 = vunpack.c.h.b16 %v450
        %v763 = vunpack.c.l.b16 %v451
        %v764 = vunpack.c.h.b16 %v451
        %v765 = vunpack.c.l.b16 %v452
        %v766 = vunpack.c.h.b16 %v452
        %v767 = vunpack.c.l.b16 %v453
        %v768 = vunpack.c.h.b16 %v453
        %v769 = vunpack.c.l.b16 %v454
        %v770 = vunpack.c.h.b16 %v454
        %v771 = vunpack.c.l.b16 %v455
        %v772 = vunpack.c.h.b16 %v455
        %v773 = vunpack.c.l.b16 %v456
        %v774 = vunpack.c.h.b16 %v456
        %v775 = vunpack.c.l.b16 %v457
        %v776 = vunpack.c.h.b16 %v457
        %v777 = vunpack.c.l.b16 %v458
        %v778 = vunpack.c.h.b16 %v458
        %v779 = vunpack.c.l.b16 %v459
        %v780 = vunpack.c.h.b16 %v459
        %v781 = vunpack.c.l.b16 %v460
        %v782 = vunpack.c.h.b16 %v460
        %v783 = vunpack.c.l.b16 %v461
        %v784 = vunpack.c.h.b16 %v461
        %v785 = vunpack.c.l.b16 %v462
        %v786 = vunpack.c.h.b16 %v462
        %v787 = vunpack.c.l.b16 %v463
        %v788 = vunpack.c.h.b16 %v463
        %v789 = vunpack.c.l.b16 %v464
        %v790 = vunpack.c.h.b16 %v464
        %v791 = vunpack.c.l.b16 %v465
        %v792 = vunpack.c.h.b16 %v465
        %v793 = vunpack.c.l.b16 %v466
        %v794 = vunpack.c.h.b16 %v466
        %v795 = vunpack.c.l.b16 %v467
        %v796 = vunpack.c.h.b16 %v467
        %v797 = vunpack.c.l.b16 %v468
        %v798 = vunpack.c.h.b16 %v468
        %v799 = vunpack.c.l.b16 %v469
        %v800 = vunpack.c.h.b16 %v469
        %v801 = vunpack.c.l.b16 %v470
        %v802 = vunpack.c.h.b16 %v470
        %v803 = vunpack.c.l.b16 %v471
        %v804 = vunpack.c.h.b16 %v471
        %v805 = vunpack.c.l.b16 %v472
        %v806 = vunpack.c.h.b16 %v472
        %v807 = vpack.c.b16 %v657, %v647
        %v808 = vpack.c.b16 %v658, %v648
        %v809 = vpack.c.b16 %v659, %v649
        %v810 = vpack.c.b16 %v660, %v650
        %v811 = vpack.c.b16 %v661, %v651
        %v812 = vpack.c.b16 %v662, %v652
        %v813 = vpack.c.b16 %v663, %v653
        %v814 = vpack.c.b16 %v664, %v654
        %v815 = vpack.c.b16 %v665, %v655
        %v816 = vpack.c.b16 %v666, %v656
        %v817 = vpack.c.b16 %v677, %v667
        %v818 = vpack.c.b16 %v678, %v668
        %v819 = vpack.c.b16 %v679, %v669
        %v820 = vpack.c.b16 %v680, %v670
        %v821 = vpack.c.b16 %v681, %v671
        %v822 = vpack.c.b16 %v682, %v672
        %v823 = vpack.c.b16 %v683, %v673
        %v824 = vpack.c.b16 %v684, %v674
        %v825 = vpack.c.b16 %v685, %v675
        %v826 = vpack.c.b16 %v686, %v676
        %v827 = vpack.c.b16 %v697, %v687
        %v828 = vpack.c.b16 %v698, %v688
        %v829 = vpack.c.b16 %v699, %v689
        %v830 = vpack.c.b16 %v700, %v690
        %v831 = vpack.c.b16 %v701, %v691
        %v832 = vpack.c.b16 %v702, %v692
        %v833 = vpack.c.b16 %v703, %v693
        %v834 = vpack.c.b16 %v704, %v694
        %v835 = vpack.c.b16 %v705, %v695
        %v836 = vpack.c.b16 %v706, %v696
        %v837 = vpack.c.b16 %v717, %v707
        %v838 = vpack.c.b16 %v718, %v708
        %v839 = vpack.c.b16 %v719, %v709
        %v840 = vpack.c.b16 %v720, %v710
        %v841 = vpack.c.b16 %v721, %v711
        %v842 = vpack.c.b16 %v722, %v712
        %v843 = vpack.c.b16 %v723, %v713
        %v844 = vpack.c.b16 %v724, %v714
        %v845 = vpack.c.b16 %v725, %v715
        %v846 = vpack.c.b16 %v726, %v716
        %v847 = vpack.c.b16 %v737, %v727
        %v848 = vpack.c.b16 %v738, %v728
        %v849 = vpack.c.b16 %v739, %v729
        %v850 = vpack.c.b16 %v740, %v730
        %v851 = vpack.c.b16 %v741, %v731
        %v852 = vpack.c.b16 %v742, %v732
        %v853 = vpack.c.b16 %v743, %v733
        %v854 = vpack.c.b16 %v744, %v734
        %v855 = vpack.c.b16 %v745, %v735
        %v856 = vpack.c.b16 %v746, %v736
        %v857 = vpack.c.b16 %v757, %v747
        %v858 = vpack.c.b16 %v758, %v748
        %v859 = vpack.c.b16 %v759, %v749
        %v860 = vpack.c.b16 %v760, %v750
        %v861 = vpack.c.b16 %v761, %v751
        %v862 = vpack.c.b16 %v762, %v752
        %v863 = vpack.c.b16 %v763, %v753
        %v864 = vpack.c.b16 %v764, %v754
        %v865 = vpack.c.b16 %v765, %v755
        %v866 = vpack.c.b16 %v766, %v756
        %v867 = vpack.c.b16 %v777, %v767
        %v868 = vpack.c.b16 %v778, %v768
        %v869 = vpack.c.b16 %v779, %v769
        %v870 = vpack.c.b16 %v780, %v770
        %v871 = vpack.c.b16 %v781, %v771
        %v872 = vpack.c.b16 %v782, %v772
        %v873 = vpack.c.b16 %v783, %v773
        %v874 = vpack.c.b16 %v784, %v774
        %v875 = vpack.c.b16 %v785, %v775
        %v876 = vpack.c.b16 %v786, %v776
        %v877 = vpack.c.b16 %v797, %v787
        %v878 = vpack.c.b16 %v798, %v788
        %v879 = vpack.c.b16 %v799, %v789
        %v880 = vpack.c.b16 %v800, %v790
        %v881 = vpack.c.b16 %v801, %v791
        %v882 = vpack.c.b16 %v802, %v792
        %v883 = vpack.c.b16 %v803, %v793
        %v884 = vpack.c.b16 %v804, %v794
        %v885 = vpack.c.b16 %v805, %v795
        %v886 = vpack.c.b16 %v806, %v796
        %967 = vmatprep.subr.bf16.mxu0 %v808
        %968 = vmatpush1.bf16.msra.mxu0 %v807
        %969 = vmatprep.subr.bf16.mxu0 %v818
        %970 = vmatpush1.bf16.msra.mxu0 %v817
        %971 = vmatprep.subr.bf16.mxu0 %v828
        %972 = vmatpush1.bf16.msra.mxu0 %v827
        %973 = vmatprep.subr.bf16.mxu0 %v838
        %974 = vmatpush1.bf16.msra.mxu0 %v837
        %975 = vmatprep.subr.bf16.mxu0 %v848
        %976 = vmatpush1.bf16.msra.mxu0 %v847
        %977 = vmatprep.subr.bf16.mxu0 %v858
        %978 = vmatpush1.bf16.msra.mxu0 %v857
        %979 = vmatprep.subr.bf16.mxu0 %v868
        %980 = vmatpush1.bf16.msra.mxu0 %v867
        %981 = vmatprep.subr.bf16.mxu0 %v878
        %982 = vmatpush1.bf16.msra.mxu0 %v877
        %983 = vmatprep.subr.bf16.mxu0 0
        %984 = vmatpush1.bf16.msra.mxu0 0
        %985 = vmatprep.subr.bf16.mxu0 0
        %986 = vmatpush1.bf16.msra.mxu0 0
        %987 = vmatprep.subr.bf16.mxu0 0
        %988 = vmatpush1.bf16.msra.mxu0 0
        %989 = vmatprep.subr.bf16.mxu0 0
        %990 = vmatpush1.bf16.msra.mxu0 0
        %991 = vmatprep.subr.bf16.mxu0 0
        %992 = vmatpush1.bf16.msra.mxu0 0
        %993 = vmatprep.subr.bf16.mxu0 0
        %994 = vmatpush1.bf16.msra.mxu0 0
        %995 = vmatprep.subr.bf16.mxu0 0
        %996 = vmatpush1.bf16.msra.mxu0 0
        %997 = vmatprep.subr.bf16.mxu0 0
        %998 = vmatpush1.bf16.msra.mxu0 0
        %999 = vmatprep.mubr.bf16.mxu0 0
        %1000 = vmatmul.mubr.bf16.gmra.mrb[0].mxu0 %v565
        %v1001 = vpop.f32.mrb[0].mxu0
        %v1002 = vadd.f32 0.0, %v1001
        %v1003 = vpop.f32.mrb[0].mxu0
        %v1004 = vadd.f32 0.0, %v1003
        %v1005 = vpop.f32.mrb[0].mxu0
        %v1006 = vadd.f32 0.0, %v1005
        %v1007 = vpop.f32.mrb[0].mxu0
        %v1008 = vadd.f32 0.0, %v1007
        %1009 = vmatprep.mubr.bf16.mxu0 0
        %1010 = vmatmul.mubr.bf16.gmra.mrb[0].mxu0 %v566
        %v1011 = vpop.f32.mrb[0].mxu0
        %v1012 = vadd.f32 0.0, %v1011
        %v1013 = vpop.f32.mrb[0].mxu0
        %v1014 = vadd.f32 0.0, %v1013
        %v1015 = vpop.f32.mrb[0].mxu0
        %v1016 = vadd.f32 0.0, %v1015
        %v1017 = vpop.f32.mrb[0].mxu0
        %v1018 = vadd.f32 0.0, %v1017
        %1019 = vdwg.mxu0
        %1020 = vmatprep.subr.bf16.mxu0 %v810
        %1021 = vmatpush1.bf16.msra.mxu0 %v809
        %1022 = vmatprep.subr.bf16.mxu0 %v820
        %1023 = vmatpush1.bf16.msra.mxu0 %v819
        %1024 = vmatprep.subr.bf16.mxu0 %v830
        %1025 = vmatpush1.bf16.msra.mxu0 %v829
        %1026 = vmatprep.subr.bf16.mxu0 %v840
        %1027 = vmatpush1.bf16.msra.mxu0 %v839
        %1028 = vmatprep.subr.bf16.mxu0 %v850
        %1029 = vmatpush1.bf16.msra.mxu0 %v849
        %1030 = vmatprep.subr.bf16.mxu0 %v860
        %1031 = vmatpush1.bf16.msra.mxu0 %v859
        %1032 = vmatprep.subr.bf16.mxu0 %v870
        %1033 = vmatpush1.bf16.msra.mxu0 %v869
        %1034 = vmatprep.subr.bf16.mxu0 %v880
        %1035 = vmatpush1.bf16.msra.mxu0 %v879
        %1036 = vmatprep.subr.bf16.mxu0 0
        %1037 = vmatpush1.bf16.msra.mxu0 0
        %1038 = vmatprep.subr.bf16.mxu0 0
        %1039 = vmatpush1.bf16.msra.mxu0 0
        %1040 = vmatprep.subr.bf16.mxu0 0
        %1041 = vmatpush1.bf16.msra.mxu0 0
        %1042 = vmatprep.subr.bf16.mxu0 0
        %1043 = vmatpush1.bf16.msra.mxu0 0
        %1044 = vmatprep.subr.bf16.mxu0 0
        %1045 = vmatpush1.bf16.msra.mxu0 0
        %1046 = vmatprep.subr.bf16.mxu0 0
        %1047 = vmatpush1.bf16.msra.mxu0 0
        %1048 = vmatprep.subr.bf16.mxu0 0
        %1049 = vmatpush1.bf16.msra.mxu0 0
        %1050 = vmatprep.subr.bf16.mxu0 0
        %1051 = vmatpush1.bf16.msra.mxu0 0
        %1052 = vmatprep.mubr.bf16.mxu0 0
        %1053 = vmatmul.mubr.bf16.gmra.mrb[0].mxu0 %v565
        %v1054 = vpop.f32.mrb[0].mxu0
        %v1055 = vadd.f32 0.0, %v1054
        %v1056 = vpop.f32.mrb[0].mxu0
        %v1057 = vadd.f32 0.0, %v1056
        %v1058 = vpop.f32.mrb[0].mxu0
        %v1059 = vadd.f32 0.0, %v1058
        %v1060 = vpop.f32.mrb[0].mxu0
        %v1061 = vadd.f32 0.0, %v1060
        %1062 = vmatprep.mubr.bf16.mxu0 0
        %1063 = vmatmul.mubr.bf16.gmra.mrb[0].mxu0 %v566
        %v1064 = vpop.f32.mrb[0].mxu0
        %v1065 = vadd.f32 0.0, %v1064
        %v1066 = vpop.f32.mrb[0].mxu0
        %v1067 = vadd.f32 0.0, %v1066
        %v1068 = vpop.f32.mrb[0].mxu0
        %v1069 = vadd.f32 0.0, %v1068
        %v1070 = vpop.f32.mrb[0].mxu0
        %v1071 = vadd.f32 0.0, %v1070
        %1072 = vdwg.mxu0
        %1073 = vmatprep.subr.bf16.mxu0 %v812
        %1074 = vmatpush1.bf16.msra.mxu0 %v811
        %1075 = vmatprep.subr.bf16.mxu0 %v822
        %1076 = vmatpush1.bf16.msra.mxu0 %v821
        %1077 = vmatprep.subr.bf16.mxu0 %v832
        %1078 = vmatpush1.bf16.msra.mxu0 %v831
        %1079 = vmatprep.subr.bf16.mxu0 %v842
        %1080 = vmatpush1.bf16.msra.mxu0 %v841
        %1081 = vmatprep.subr.bf16.mxu0 %v852
        %1082 = vmatpush1.bf16.msra.mxu0 %v851
        %1083 = vmatprep.subr.bf16.mxu0 %v862
        %1084 = vmatpush1.bf16.msra.mxu0 %v861
        %1085 = vmatprep.subr.bf16.mxu0 %v872
        %1086 = vmatpush1.bf16.msra.mxu0 %v871
        %1087 = vmatprep.subr.bf16.mxu0 %v882
        %1088 = vmatpush1.bf16.msra.mxu0 %v881
        %1089 = vmatprep.subr.bf16.mxu0 0
        %1090 = vmatpush1.bf16.msra.mxu0 0
        %1091 = vmatprep.subr.bf16.mxu0 0
        %1092 = vmatpush1.bf16.msra.mxu0 0
        %1093 = vmatprep.subr.bf16.mxu0 0
        %1094 = vmatpush1.bf16.msra.mxu0 0
        %1095 = vmatprep.subr.bf16.mxu0 0
        %1096 = vmatpush1.bf16.msra.mxu0 0
        %1097 = vmatprep.subr.bf16.mxu0 0
        %1098 = vmatpush1.bf16.msra.mxu0 0
        %1099 = vmatprep.subr.bf16.mxu0 0
        %1100 = vmatpush1.bf16.msra.mxu0 0
        %1101 = vmatprep.subr.bf16.mxu0 0
        %1102 = vmatpush1.bf16.msra.mxu0 0
        %1103 = vmatprep.subr.bf16.mxu0 0
        %1104 = vmatpush1.bf16.msra.mxu0 0
        %1105 = vmatprep.mubr.bf16.mxu0 0
        %1106 = vmatmul.mubr.bf16.gmra.mrb[0].mxu0 %v565
        %v1107 = vpop.f32.mrb[0].mxu0
        %v1108 = vadd.f32 0.0, %v1107
        %v1109 = vpop.f32.mrb[0].mxu0
        %v1110 = vadd.f32 0.0, %v1109
        %v1111 = vpop.f32.mrb[0].mxu0
        %v1112 = vadd.f32 0.0, %v1111
        %v1113 = vpop.f32.mrb[0].mxu0
        %v1114 = vadd.f32 0.0, %v1113
        %1115 = vmatprep.mubr.bf16.mxu0 0
        %1116 = vmatmul.mubr.bf16.gmra.mrb[0].mxu0 %v566
        %v1117 = vpop.f32.mrb[0].mxu0
        %v1118 = vadd.f32 0.0, %v1117
        %v1119 = vpop.f32.mrb[0].mxu0
        %v1120 = vadd.f32 0.0, %v1119
        %v1121 = vpop.f32.mrb[0].mxu0
        %v1122 = vadd.f32 0.0, %v1121
        %v1123 = vpop.f32.mrb[0].mxu0
        %v1124 = vadd.f32 0.0, %v1123
        %1125 = vdwg.mxu0
        %1126 = vmatprep.subr.bf16.mxu0 %v814
        %1127 = vmatpush1.bf16.msra.mxu0 %v813
        %1128 = vmatprep.subr.bf16.mxu0 %v824
        %1129 = vmatpush1.bf16.msra.mxu0 %v823
        %1130 = vmatprep.subr.bf16.mxu0 %v834
        %1131 = vmatpush1.bf16.msra.mxu0 %v833
        %1132 = vmatprep.subr.bf16.mxu0 %v844
        %1133 = vmatpush1.bf16.msra.mxu0 %v843
        %1134 = vmatprep.subr.bf16.mxu0 %v854
        %1135 = vmatpush1.bf16.msra.mxu0 %v853
        %1136 = vmatprep.subr.bf16.mxu0 %v864
        %1137 = vmatpush1.bf16.msra.mxu0 %v863
        %1138 = vmatprep.subr.bf16.mxu0 %v874
        %1139 = vmatpush1.bf16.msra.mxu0 %v873
        %1140 = vmatprep.subr.bf16.mxu0 %v884
        %1141 = vmatpush1.bf16.msra.mxu0 %v883
        %1142 = vmatprep.subr.bf16.mxu0 0
        %1143 = vmatpush1.bf16.msra.mxu0 0
        %1144 = vmatprep.subr.bf16.mxu0 0
        %1145 = vmatpush1.bf16.msra.mxu0 0
        %1146 = vmatprep.subr.bf16.mxu0 0
        %1147 = vmatpush1.bf16.msra.mxu0 0
        %1148 = vmatprep.subr.bf16.mxu0 0
        %1149 = vmatpush1.bf16.msra.mxu0 0
        %1150 = vmatprep.subr.bf16.mxu0 0
        %1151 = vmatpush1.bf16.msra.mxu0 0
        %1152 = vmatprep.subr.bf16.mxu0 0
        %1153 = vmatpush1.bf16.msra.mxu0 0
        %1154 = vmatprep.subr.bf16.mxu0 0
        %1155 = vmatpush1.bf16.msra.mxu0 0
        %1156 = vmatprep.subr.bf16.mxu0 0
        %1157 = vmatpush1.bf16.msra.mxu0 0
        %1158 = vmatprep.mubr.bf16.mxu0 0
        %1159 = vmatmul.mubr.bf16.gmra.mrb[0].mxu0 %v565
        %v1160 = vpop.f32.mrb[0].mxu0
        %v1161 = vadd.f32 0.0, %v1160
        %v1162 = vpop.f32.mrb[0].mxu0
        %v1163 = vadd.f32 0.0, %v1162
        %v1164 = vpop.f32.mrb[0].mxu0
        %v1165 = vadd.f32 0.0, %v1164
        %v1166 = vpop.f32.mrb[0].mxu0
        %v1167 = vadd.f32 0.0, %v1166
        %1168 = vmatprep.mubr.bf16.mxu0 0
        %1169 = vmatmul.mubr.bf16.gmra.mrb[0].mxu0 %v566
        %v1170 = vpop.f32.mrb[0].mxu0
        %v1171 = vadd.f32 0.0, %v1170
        %v1172 = vpop.f32.mrb[0].mxu0
        %v1173 = vadd.f32 0.0, %v1172
        %v1174 = vpop.f32.mrb[0].mxu0
        %v1175 = vadd.f32 0.0, %v1174
        %v1176 = vpop.f32.mrb[0].mxu0
        %v1177 = vadd.f32 0.0, %v1176
        %1178 = vdwg.mxu0
        %1179 = vmatprep.subr.bf16.mxu0 %v816
        %1180 = vmatpush1.bf16.msra.mxu0 %v815
        %1181 = vmatprep.subr.bf16.mxu0 %v826
        %1182 = vmatpush1.bf16.msra.mxu0 %v825
        %1183 = vmatprep.subr.bf16.mxu0 %v836
        %1184 = vmatpush1.bf16.msra.mxu0 %v835
        %1185 = vmatprep.subr.bf16.mxu0 %v846
        %1186 = vmatpush1.bf16.msra.mxu0 %v845
        %1187 = vmatprep.subr.bf16.mxu0 %v856
        %1188 = vmatpush1.bf16.msra.mxu0 %v855
        %1189 = vmatprep.subr.bf16.mxu0 %v866
        %1190 = vmatpush1.bf16.msra.mxu0 %v865
        %1191 = vmatprep.subr.bf16.mxu0 %v876
        %1192 = vmatpush1.bf16.msra.mxu0 %v875
        %1193 = vmatprep.subr.bf16.mxu0 %v886
        %1194 = vmatpush1.bf16.msra.mxu0 %v885
        %1195 = vmatprep.subr.bf16.mxu0 0
        %1196 = vmatpush1.bf16.msra.mxu0 0
        %1197 = vmatprep.subr.bf16.mxu0 0
        %1198 = vmatpush1.bf16.msra.mxu0 0
        %1199 = vmatprep.subr.bf16.mxu0 0
        %1200 = vmatpush1.bf16.msra.mxu0 0
        %1201 = vmatprep.subr.bf16.mxu0 0
        %1202 = vmatpush1.bf16.msra.mxu0 0
        %1203 = vmatprep.subr.bf16.mxu0 0
        %1204 = vmatpush1.bf16.msra.mxu0 0
        %1205 = vmatprep.subr.bf16.mxu0 0
        %1206 = vmatpush1.bf16.msra.mxu0 0
        %1207 = vmatprep.subr.bf16.mxu0 0
        %1208 = vmatpush1.bf16.msra.mxu0 0
        %1209 = vmatprep.subr.bf16.mxu0 0
        %1210 = vmatpush1.bf16.msra.mxu0 0
        %1211 = vmatprep.mubr.bf16.mxu0 0
        %1212 = vmatmul.mubr.bf16.gmra.mrb[0].mxu0 %v565
        %v1213 = vpop.f32.mrb[0].mxu0
        %v1214 = vadd.f32 0.0, %v1213
        %v1215 = vpop.f32.mrb[0].mxu0
        %v1216 = vadd.f32 0.0, %v1215
        %v1217 = vpop.f32.mrb[0].mxu0
        %v1218 = vadd.f32 0.0, %v1217
        %v1219 = vpop.f32.mrb[0].mxu0
        %v1220 = vadd.f32 0.0, %v1219
        %1221 = vmatprep.mubr.bf16.mxu0 0
        %1222 = vmatmul.mubr.bf16.gmra.mrb[0].mxu0 %v566
        %v1223 = vpop.f32.mrb[0].mxu0
        %v1224 = vadd.f32 0.0, %v1223
        %v1225 = vpop.f32.mrb[0].mxu0
        %v1226 = vadd.f32 0.0, %v1225
        %v1227 = vpop.f32.mrb[0].mxu0
        %v1228 = vadd.f32 0.0, %v1227
        %v1229 = vpop.f32.mrb[0].mxu0
        %v1230 = vadd.f32 0.0, %v1229
        %1231 = vdwg.mxu0
        %v1232 = vmul.f32 %v1002, %v509
        %v1233 = vmul.f32 %v1004, %v509
        %v1234 = vmul.f32 %v1055, %v509
        %v1235 = vmul.f32 %v1057, %v509
        %v1236 = vmul.f32 %v1108, %v509
        %v1237 = vmul.f32 %v1110, %v509
        %v1238 = vmul.f32 %v1161, %v509
        %v1239 = vmul.f32 %v1163, %v509
        %v1240 = vmul.f32 %v1214, %v509
        %v1241 = vmul.f32 %v1216, %v509
        %v1242 = vmul.f32 %v1006, %v510
        %v1243 = vmul.f32 %v1008, %v510
        %v1244 = vmul.f32 %v1059, %v510
        %v1245 = vmul.f32 %v1061, %v510
        %v1246 = vmul.f32 %v1112, %v510
        %v1247 = vmul.f32 %v1114, %v510
        %v1248 = vmul.f32 %v1165, %v510
        %v1249 = vmul.f32 %v1167, %v510
        %v1250 = vmul.f32 %v1218, %v510
        %v1251 = vmul.f32 %v1220, %v510
        %v1252 = vmul.f32 %v1012, %v511
        %v1253 = vmul.f32 %v1014, %v511
        %v1254 = vmul.f32 %v1065, %v511
        %v1255 = vmul.f32 %v1067, %v511
        %v1256 = vmul.f32 %v1118, %v511
        %v1257 = vmul.f32 %v1120, %v511
        %v1258 = vmul.f32 %v1171, %v511
        %v1259 = vmul.f32 %v1173, %v511
        %v1260 = vmul.f32 %v1224, %v511
        %v1261 = vmul.f32 %v1226, %v511
        %v1262 = vmul.f32 %v1016, %v512
        %v1263 = vmul.f32 %v1018, %v512
        %v1264 = vmul.f32 %v1069, %v512
        %v1265 = vmul.f32 %v1071, %v512
        %v1266 = vmul.f32 %v1122, %v512
        %v1267 = vmul.f32 %v1124, %v512
        %v1268 = vmul.f32 %v1175, %v512
        %v1269 = vmul.f32 %v1177, %v512
        %v1270 = vmul.f32 %v1228, %v512
        %v1271 = vmul.f32 %v1230, %v512
        %v1272 = vld [vmem:[%s358] sm:$0xff]
        %v1273 = vld [vmem:[%s358 + $0x8] sm:$0x3]
        %v1276 = vlaneseq
        %v1277 = vshrl.u32 %v1276, 7
        %v1278 = vsub.s32 0, %v1277
        %v1279 = vrot.slane %v1272, %v1278
        %v1280 = vlaneseq
        %v1281 = vshrl.u32 %v1280, 7
        %v1282 = vsub.s32 1, %v1281
        %v1283 = vrot.slane %v1272, %v1282
        %v1284 = vlaneseq
        %v1285 = vshrl.u32 %v1284, 7
        %v1286 = vsub.s32 2, %v1285
        %v1287 = vrot.slane %v1272, %v1286
        %v1288 = vlaneseq
        %v1289 = vshrl.u32 %v1288, 7
        %v1290 = vsub.s32 3, %v1289
        %v1291 = vrot.slane %v1272, %v1290
        %v1292 = vlaneseq
        %v1293 = vshrl.u32 %v1292, 7
        %v1294 = vsub.s32 4, %v1293
        %v1295 = vrot.slane %v1272, %v1294
        %v1296 = vlaneseq
        %v1297 = vshrl.u32 %v1296, 7
        %v1298 = vsub.s32 5, %v1297
        %v1299 = vrot.slane %v1272, %v1298
        %v1300 = vlaneseq
        %v1301 = vshrl.u32 %v1300, 7
        %v1302 = vsub.s32 6, %v1301
        %v1303 = vrot.slane %v1272, %v1302
        %v1304 = vlaneseq
        %v1305 = vshrl.u32 %v1304, 7
        %v1306 = vsub.s32 7, %v1305
        %v1307 = vrot.slane %v1272, %v1306
        %v1308 = vlaneseq
        %v1309 = vshrl.u32 %v1308, 7
        %v1310 = vsub.s32 0, %v1309
        %v1311 = vrot.slane %v1273, %v1310
        %v1312 = vlaneseq
        %v1313 = vshrl.u32 %v1312, 7
        %v1314 = vsub.s32 1, %v1313
        %v1315 = vrot.slane %v1273, %v1314
        %v1326 = vadd.f32 %v1232, %v1279
        %v1327 = vadd.f32 %v1233, %v1283
        %v1328 = vadd.f32 %v1234, %v1287
        %v1329 = vadd.f32 %v1235, %v1291
        %v1330 = vadd.f32 %v1236, %v1295
        %v1331 = vadd.f32 %v1237, %v1299
        %v1332 = vadd.f32 %v1238, %v1303
        %v1333 = vadd.f32 %v1239, %v1307
        %v1334 = vadd.f32 %v1240, %v1311
        %v1335 = vadd.f32 %v1241, %v1315
        %v1336 = vadd.f32 %v1242, %v1279
        %v1337 = vadd.f32 %v1243, %v1283
        %v1338 = vadd.f32 %v1244, %v1287
        %v1339 = vadd.f32 %v1245, %v1291
        %v1340 = vadd.f32 %v1246, %v1295
        %v1341 = vadd.f32 %v1247, %v1299
        %v1342 = vadd.f32 %v1248, %v1303
        %v1343 = vadd.f32 %v1249, %v1307
        %v1344 = vadd.f32 %v1250, %v1311
        %v1345 = vadd.f32 %v1251, %v1315
        %v1346 = vadd.f32 %v1252, %v1279
        %v1347 = vadd.f32 %v1253, %v1283
        %v1348 = vadd.f32 %v1254, %v1287
        %v1349 = vadd.f32 %v1255, %v1291
        %v1350 = vadd.f32 %v1256, %v1295
        %v1351 = vadd.f32 %v1257, %v1299
        %v1352 = vadd.f32 %v1258, %v1303
        %v1353 = vadd.f32 %v1259, %v1307
        %v1354 = vadd.f32 %v1260, %v1311
        %v1355 = vadd.f32 %v1261, %v1315
        %v1356 = vadd.f32 %v1262, %v1279
        %v1357 = vadd.f32 %v1263, %v1283
        %v1358 = vadd.f32 %v1264, %v1287
        %v1359 = vadd.f32 %v1265, %v1291
        %v1360 = vadd.f32 %v1266, %v1295
        %v1361 = vadd.f32 %v1267, %v1299
        %v1362 = vadd.f32 %v1268, %v1303
        %v1363 = vadd.f32 %v1269, %v1307
        %v1364 = vadd.f32 %v1270, %v1311
        %v1365 = vadd.f32 %v1271, %v1315
        %1366 = vst [vmem:[%s384] sm:$0xff] %v1326
        %1367 = vst [vmem:[%s384 + $0x8] sm:$0xff] %v1327
        %1368 = vst [vmem:[%s384 + $0x10] sm:$0xff] %v1328
        %1369 = vst [vmem:[%s384 + $0x18] sm:$0xff] %v1329
        %1370 = vst [vmem:[%s384 + $0x20] sm:$0xff] %v1330
        %1371 = vst [vmem:[%s384 + $0x28] sm:$0xff] %v1331
        %1372 = vst [vmem:[%s384 + $0x30] sm:$0xff] %v1332
        %1373 = vst [vmem:[%s384 + $0x38] sm:$0xff] %v1333
        %1374 = vst [vmem:[%s384 + $0x40] sm:$0xff] %v1334
        %1375 = vst [vmem:[%s384 + $0x48] sm:$0xff] %v1335
        %1376 = vst [vmem:[%s384 + $0x50] sm:$0xff] %v1336
        %1377 = vst [vmem:[%s384 + $0x58] sm:$0xff] %v1337
        %1378 = vst [vmem:[%s384 + $0x60] sm:$0xff] %v1338
        %1379 = vst [vmem:[%s384 + $0x68] sm:$0xff] %v1339
        %1380 = vst [vmem:[%s384 + $0x70] sm:$0xff] %v1340
        %1381 = vst [vmem:[%s384 + $0x78] sm:$0xff] %v1341
        %1382 = vst [vmem:[%s384 + $0x80] sm:$0xff] %v1342
        %1383 = vst [vmem:[%s384 + $0x88] sm:$0xff] %v1343
        %1384 = vst [vmem:[%s384 + $0x90] sm:$0xff] %v1344
        %1385 = vst [vmem:[%s384 + $0x98] sm:$0xff] %v1345
        %1386 = vst [vmem:[%s384 + $0xa0] sm:$0xff] %v1346
        %1387 = vst [vmem:[%s384 + $0xa8] sm:$0xff] %v1347
        %1388 = vst [vmem:[%s384 + $0xb0] sm:$0xff] %v1348
        %1389 = vst [vmem:[%s384 + $0xb8] sm:$0xff] %v1349
        %1390 = vst [vmem:[%s384 + $0xc0] sm:$0xff] %v1350
        %1391 = vst [vmem:[%s384 + $0xc8] sm:$0xff] %v1351
        %1392 = vst [vmem:[%s384 + $0xd0] sm:$0xff] %v1352
        %1393 = vst [vmem:[%s384 + $0xd8] sm:$0xff] %v1353
        %1394 = vst [vmem:[%s384 + $0xe0] sm:$0xff] %v1354
        %1395 = vst [vmem:[%s384 + $0xe8] sm:$0xff] %v1355
        %1396 = vst [vmem:[%s384 + $0xf0] sm:$0xff] %v1356
        %1397 = vst [vmem:[%s384 + $0xf8] sm:$0xff] %v1357
        %1398 = vst [vmem:[%s384 + $0x100] sm:$0xff] %v1358
        %1399 = vst [vmem:[%s384 + $0x108] sm:$0xff] %v1359
        %1400 = vst [vmem:[%s384 + $0x110] sm:$0xff] %v1360
        %1401 = vst [vmem:[%s384 + $0x118] sm:$0xff] %v1361
        %1402 = vst [vmem:[%s384 + $0x120] sm:$0xff] %v1362
        %1403 = vst [vmem:[%s384 + $0x128] sm:$0xff] %v1363
        %1404 = vst [vmem:[%s384 + $0x130] sm:$0xff] %v1364
        %1405 = vst [vmem:[%s384 + $0x138] sm:$0xff] %v1365
        %s1406 = sand.u32 %s101, 1
        %s1407 = scalar_lea.sflag [#allocation5], %s1406
        %s1408 = sand.u32 %s101, 1
        %s1409 = smul.addr %s1408, 320
        %s1410 = scalar_lea.vmem [#allocation6], %s1409
        // Predicated region
        $region60: #{minilm_forward.3} parent=50 // pred_check
          %p1411 = pneg %p111
        $region61: #{minilm_forward.3} parent=50 // pred_check_branch
          %1413 = sbr.rel (%p1411) target = $region63
        $region62: #{minilm_forward.3} parent=50 // pred_region
          %s1414 = smul.u32 10, %s20
          %s1416 = ssub.s32 5120, 5120
          %1417 = vsyncadd %s1407, %s1416
          %s1418 = smul.addr %s1414, 128
          %s1419 = scalar_lea.hbm %s3, %s1418
          %s1420 = sshll.u32 %s1410, 4
          %s1421 = int_to_ptr.vmem [resolvable:$true] %s1420
          %1426 = dma.vmem_to_hbm [thread:$0]  %s1421, 5120, %s1419, %s1407, 1280, 5120, 80
        $region63: #{minilm_forward.3} parent=50 // pred_fallthru
          _
      $region51: #{minilm_forward.3} parent=5 // pred_fallthru
        _
      %p1427 = scmp.le.s32.totalorder 2, %s15
      // Predicated region
      $region64: #{minilm_forward.3} parent=5 // pred_check
        %p1428 = pneg %p1427
      $region65: #{minilm_forward.3} parent=5 // pred_check_branch
        %1430 = sbr.rel (%p1428) target = $region67
      $region66: #{minilm_forward.3} parent=5 // pred_region
        %s1431 = ssub.s32 %s15, 2
        // Predicated region
        $region68: #{minilm_forward.3} parent=66 // pred_check
          %p1432 = pneg %p117
        $region69: #{minilm_forward.3} parent=66 // pred_check_branch
          %1434 = sbr.rel (%p1432) target = $region71
        $region70: #{minilm_forward.3} parent=66 // pred_region
          %s1435 = sand.u32 %s102, 1
          %s1436 = scalar_lea.sflag [#allocation5], %s1435
          %s1437 = sand.u32 %s102, 1
          %s1438 = smul.addr %s1437, 320
          %s1439 = scalar_lea.vmem [#allocation6], %s1438
          %1440 = dma.done %s1436, 5120
        $region71: #{minilm_forward.3} parent=66 // pred_fallthru
          _
      $region67: #{minilm_forward.3} parent=5 // pred_fallthru
        _
    $region6: #{minilm_forward.3} parent=1 // loop_footer
      %s19 = sadd.s32 1, %s15
    $region7: #{minilm_forward.3} parent=1 // loop_footer_branch
      %14 = sbr.rel target = $region3
    $region8: #{minilm_forward.3} parent=1 // loop_exit
      _
    %1441 = vsyncpa [#allocation4], 1
    %s1442 = scalar_lea.sflag [#allocation4], 1
    %1443 = vsyncpa %s1442, 1
    %1444 = vsyncpa [#allocation5], 1
    %s1445 = scalar_lea.sflag [#allocation5], 1
    %1446 = vsyncpa %s1445, 1

// kernel: minilm_forward.2
$region0: #{minilm_forward.2}
  #allocation0 [shape = 'u32[]', space=smem, size = 0x4, offset = 0x4, fixed_abs, tag = 'smem constant byte address 0x4 - core index']
  #allocation1 [shape = 'u32[144,128]{1,0:T(1,128)}', space=vmem, size = 0x12000, scoped, tag = 'internal scratch']
  %s0 = inlined_call_operand.vmem [shape: f32[32,128], index: 0, kind: input, shape index: {}]
  %s1 = inlined_call_operand.hbm [shape: bf16[6,128,768], index: 1, kind: input, shape index: {}]
  %s2 = inlined_call_operand.hbm [shape: bf16[6,256,128], index: 2, kind: input, shape index: {}]
  %s3 = inlined_call_operand.hbm [shape: f32[6,8,256], index: 3, kind: input, shape index: {}]
  %s4 = inlined_call_operand.hbm [shape: f32[8,128], index: 4, kind: input, shape index: {}]
  %s5 = inlined_call_operand.vmem [shape: f32[32,128], index: 5, kind: output, shape index: {}]
  %s6 = sld [smem:[#allocation0]]
  $region81: #{minilm_forward.2} parent=0
    _
  %s8 = ssub.s32 1, %s6
  %s9 = scalar_select 0, %s8, %s6
  $region1: #{minilm_forward.2} parent=0
    #allocation2 [shape = 'u8[393216]{0}', space=vmem, size = 0x60000, scoped, tag = 'input window, operand 1']
    #allocation3 [shape = 's32[2]{0}', space=sflag, size = 0x8, scoped, tag = 'scoped memory for minilm_forward.2']
    #allocation4 [shape = 'u8[131072]{0}', space=vmem, size = 0x20000, scoped, tag = 'input window, operand 2']
    #allocation5 [shape = 's32[2]{0}', space=sflag, size = 0x8, scoped, tag = 'scoped memory for minilm_forward.2']
    #allocation6 [shape = 'u8[16384]{0}', space=vmem, size = 0x4000, scoped, tag = 'input window, operand 3']
    #allocation7 [shape = 'u8[4096]{0}', space=vmem, size = 0x1000, scoped, tag = 'input window, operand 4, single buffered']
    #allocation8 [shape = 's32[1]{0}', space=sflag, size = 0x4, scoped, tag = 'scoped memory for minilm_forward.2']
    %10 = vsyncpa [#allocation3], 0
    %s11 = scalar_lea.sflag [#allocation3], 1
    %12 = vsyncpa %s11, 0
    %13 = vsyncpa [#allocation5], 0
    %s14 = scalar_lea.sflag [#allocation5], 1
    %15 = vsyncpa %s14, 0
    %16 = vsyncpa [#allocation8], 0
    loop: start=0, step=1, limit=8
    $region2: #{minilm_forward.2} parent=1 // loop_pre_header
      _
    $region3: #{minilm_forward.2} parent=1 // loop_header
      %s18 = sphi 0, %s22
      %p19 = scmp.ge.s32.totalorder %s18, 8
      %s26 = sphi 0, %s26
      %s28 = sphi 0, %s26
      %s29 = sphi 0, %s28
      %s43 = sphi 0, %s29
      %s49 = sphi 0, %s51
      %s52 = sphi 0, %s49
      %s53 = sphi 0, %s52
      %s69 = sphi 0, %s53
      %s75 = sphi 0, %s77
      %s78 = sphi 0, %s75
      %s79 = sphi 0, %s78
      %s95 = sphi 0, %s79
      %s101 = sphi 0, %s103
      %s104 = sphi 0, %s101
      %s105 = sphi 0, %s104
      %s121 = sphi 0, %s105
      %s125 = sphi 0, %s125
      %s127 = sphi 0, %s125
      %s128 = sphi 0, %s127
      %s142 = sphi 0, %s128
      %s146 = sphi 0, %s146
      %s148 = sphi 0, %s146
      %s149 = sphi 0, %s148
      %s163 = sphi 0, %s149
    $region4: #{minilm_forward.2} parent=1 // loop_header_branch
      %21 = sbr.rel (%p19) target = $region8
    $region5: #{minilm_forward.2} parent=1 // loop_body
      %s23 = ssub.s32 %s18, 1
      %s24 = ssub.s32 %s18, 2
      %s25 = sadd.s32 %s18, 1
      %s27 = sadd.s32 %s26, 1
      %p30 = scmp.eq.s32.totalorder %s18, 5
      %p31 = scmp.ne.s32.totalorder %s26, %s28
      %p32 = scmp.eq.s32.totalorder %s18, 0
      %p33 = por %p31, %p32
      %p34 = scmp.ne.s32.totalorder %s26, %s28
      %p35 = scmp.eq.s32.totalorder %s23, 5
      %p36 = por %p34, %p35
      %p37 = scmp.ne.s32.totalorder %s28, %s29
      %p38 = scmp.eq.s32.totalorder %s23, 0
      %p39 = por %p37, %p38
      %p40 = scmp.ne.s32.totalorder %s28, %s29
      %p41 = scmp.eq.s32.totalorder %s24, 5
      %p42 = por %p40, %p41
      %p44 = scmp.ne.s32.totalorder %s29, %s43
      %p45 = scmp.eq.s32.totalorder %s24, 0
      %p46 = por %p44, %p45
      %s47 = ssub.s32 %s18, %s25
      %p48 = scmp.eq.s32.totalorder %s47, 0
      %s50 = sadd.s32 %s49, 1
      %s51 = scalar_select %p48, %s49, %s50
      %p54 = pneg %p48
      %p55 = scmp.eq.s32.totalorder %s18, 5
      %p56 = por %p54, %p55
      %p57 = scmp.ne.s32.totalorder %s49, %s52
      %p58 = scmp.eq.s32.totalorder %s18, 0
      %p59 = por %p57, %p58
      %p60 = scmp.ne.s32.totalorder %s49, %s52
      %p61 = scmp.eq.s32.totalorder %s23, 5
      %p62 = por %p60, %p61
      %p63 = scmp.ne.s32.totalorder %s52, %s53
      %p64 = scmp.eq.s32.totalorder %s23, 0
      %p65 = por %p63, %p64
      %p66 = scmp.ne.s32.totalorder %s52, %s53
      %p67 = scmp.eq.s32.totalorder %s24, 5
      %p68 = por %p66, %p67
      %p70 = scmp.ne.s32.totalorder %s53, %s69
      %p71 = scmp.eq.s32.totalorder %s24, 0
      %p72 = por %p70, %p71
      %s73 = ssub.s32 %s18, %s25
      %p74 = scmp.eq.s32.totalorder %s73, 0
      %s76 = sadd.s32 %s75, 1
      %s77 = scalar_select %p74, %s75, %s76
      %p80 = pneg %p74
      %p81 = scmp.eq.s32.totalorder %s18, 5
      %p82 = por %p80, %p81
      %p83 = scmp.ne.s32.totalorder %s75, %s78
      %p84 = scmp.eq.s32.totalorder %s18, 0
      %p85 = por %p83, %p84
      %p86 = scmp.ne.s32.totalorder %s75, %s78
      %p87 = scmp.eq.s32.totalorder %s23, 5
      %p88 = por %p86, %p87
      %p89 = scmp.ne.s32.totalorder %s78, %s79
      %p90 = scmp.eq.s32.totalorder %s23, 0
      %p91 = por %p89, %p90
      %p92 = scmp.ne.s32.totalorder %s78, %s79
      %p93 = scmp.eq.s32.totalorder %s24, 5
      %p94 = por %p92, %p93
      %p96 = scmp.ne.s32.totalorder %s79, %s95
      %p97 = scmp.eq.s32.totalorder %s24, 0
      %p98 = por %p96, %p97
      %s99 = ssub.s32 %s18, %s25
      %p100 = scmp.eq.s32.totalorder %s99, 0
      %s102 = sadd.s32 %s101, 1
      %s103 = scalar_select %p100, %s101, %s102
      %p106 = pneg %p100
      %p107 = scmp.eq.s32.totalorder %s18, 5
      %p108 = por %p106, %p107
      %p109 = scmp.ne.s32.totalorder %s101, %s104
      %p110 = scmp.eq.s32.totalorder %s18, 0
      %p111 = por %p109, %p110
      %p112 = scmp.ne.s32.totalorder %s101, %s104
      %p113 = scmp.eq.s32.totalorder %s23, 5
      %p114 = por %p112, %p113
      %p115 = scmp.ne.s32.totalorder %s104, %s105
      %p116 = scmp.eq.s32.totalorder %s23, 0
      %p117 = por %p115, %p116
      %p118 = scmp.ne.s32.totalorder %s104, %s105
      %p119 = scmp.eq.s32.totalorder %s24, 5
      %p120 = por %p118, %p119
      %p122 = scmp.ne.s32.totalorder %s105, %s121
      %p123 = scmp.eq.s32.totalorder %s24, 0
      %p124 = por %p122, %p123
      %s126 = sadd.s32 %s125, 1
      %p129 = scmp.eq.s32.totalorder %s18, 5
      %p130 = scmp.ne.s32.totalorder %s125, %s127
      %p131 = scmp.eq.s32.totalorder %s18, 0
      %p132 = por %p130, %p131
      %p133 = scmp.ne.s32.totalorder %s125, %s127
      %p134 = scmp.eq.s32.totalorder %s23, 5
      %p135 = por %p133, %p134
      %p136 = scmp.ne.s32.totalorder %s127, %s128
      %p137 = scmp.eq.s32.totalorder %s23, 0
      %p138 = por %p136, %p137
      %p139 = scmp.ne.s32.totalorder %s127, %s128
      %p140 = scmp.eq.s32.totalorder %s24, 5
      %p141 = por %p139, %p140
      %p143 = scmp.ne.s32.totalorder %s128, %s142
      %p144 = scmp.eq.s32.totalorder %s24, 0
      %p145 = por %p143, %p144
      %s147 = sadd.s32 %s146, 1
      %p150 = scmp.eq.s32.totalorder %s18, 5
      %p151 = scmp.ne.s32.totalorder %s146, %s148
      %p152 = scmp.eq.s32.totalorder %s18, 0
      %p153 = por %p151, %p152
      %p154 = scmp.ne.s32.totalorder %s146, %s148
      %p155 = scmp.eq.s32.totalorder %s23, 5
      %p156 = por %p154, %p155
      %p157 = scmp.ne.s32.totalorder %s148, %s149
      %p158 = scmp.eq.s32.totalorder %s23, 0
      %p159 = por %p157, %p158
      %p160 = scmp.ne.s32.totalorder %s148, %s149
      %p161 = scmp.eq.s32.totalorder %s24, 5
      %p162 = por %p160, %p161
      %p164 = scmp.ne.s32.totalorder %s149, %s163
      %p165 = scmp.eq.s32.totalorder %s24, 0
      %p166 = por %p164, %p165
      %p167 = scmp.le.s32.totalorder 1, %s18
      %p168 = scmp.lt.s32.totalorder %s18, 7
      %p169 = pnand %p167, %p168
      %p170 = pneg %p169
      // Predicated region
      $region9: #{minilm_forward.2} parent=5 // pred_check
        _
      $region10: #{minilm_forward.2} parent=5 // pred_check_branch
        %172 = sbr.rel (%p169) target = $region12
      $region11: #{minilm_forward.2} parent=5 // pred_region
        %s173 = ssub.s32 %s18, 1
        // Predicated region
        $region13: #{minilm_forward.2} parent=11 // pred_check
          %p174 = pneg %p39
        $region14: #{minilm_forward.2} parent=11 // pred_check_branch
          %176 = sbr.rel (%p174) target = $region16
        $region15: #{minilm_forward.2} parent=11 // pred_region
          _
        $region16: #{minilm_forward.2} parent=11 // pred_fallthru
          _
        // Predicated region
        $region17: #{minilm_forward.2} parent=11 // pred_check
          %p177 = pneg %p138
        $region18: #{minilm_forward.2} parent=11 // pred_check_branch
          %179 = sbr.rel (%p177) target = $region20
        $region19: #{minilm_forward.2} parent=11 // pred_region
          %s181 = ssub.s32 128, 128
          %182 = vsyncadd [#allocation8], %s181
          %s184 = sshll.u32 [#allocation7], 4
          %s185 = int_to_ptr.vmem [resolvable:$true] %s184
          %187 = dma.hbm_to_vmem [thread:$0]  %s4, 128, %s185, [#allocation8]
        $region20: #{minilm_forward.2} parent=11 // pred_fallthru
          _
      $region12: #{minilm_forward.2} parent=5 // pred_fallthru
        _
      %p188 = scmp.lt.s32.totalorder %s18, 6
      // Predicated region
      $region21: #{minilm_forward.2} parent=5 // pred_check
        %p189 = pneg %p188
      $region22: #{minilm_forward.2} parent=5 // pred_check_branch
        %191 = sbr.rel (%p189) target = $region24
      $region23: #{minilm_forward.2} parent=5 // pred_region
        // Predicated region
        $region25: #{minilm_forward.2} parent=23 // pred_check
          %p192 = pneg %p59
        $region26: #{minilm_forward.2} parent=23 // pred_check_branch
          %194 = sbr.rel (%p192) target = $region28
        $region27: #{minilm_forward.2} parent=23 // pred_region
          %s195 = sand.u32 %s49, 1
          %s196 = scalar_lea.sflag [#allocation3], %s195
          %s197 = sand.u32 %s49, 1
          %s198 = smul.addr %s197, 384
          %s199 = scalar_lea.vmem [#allocation2], %s198
          %s201 = ssub.s32 6144, 6144
          %202 = vsyncadd %s196, %s201
          %s203 = smul.addr %s18, 96
          %s204 = smul.addr %s203, 64
          %s205 = scalar_lea.hbm %s1, %s204
          %s206 = sshll.u32 %s199, 4
          %s207 = int_to_ptr.vmem [resolvable:$true] %s206
          %212 = dma.hbm_to_vmem [thread:$0]  %s205, 6144, %s207, %s196, 384, 384, 24
        $region28: #{minilm_forward.2} parent=23 // pred_fallthru
          _
        // Predicated region
        $region29: #{minilm_forward.2} parent=23 // pred_check
          %p213 = pneg %p85
        $region30: #{minilm_forward.2} parent=23 // pred_check_branch
          %215 = sbr.rel (%p213) target = $region32
        $region31: #{minilm_forward.2} parent=23 // pred_region
          %s216 = sand.u32 %s18, 1
          %s217 = scalar_lea.sflag [#allocation5], %s216
          %s218 = sand.u32 %s75, 1
          %s219 = smul.addr %s218, 128
          %s220 = scalar_lea.vmem [#allocation4], %s219
          %s222 = ssub.s32 2048, 2048
          %223 = vsyncadd %s217, %s222
          %s224 = smul.addr %s18, 32
          %s225 = smul.addr %s224, 64
          %s226 = scalar_lea.hbm %s2, %s225
          %s227 = sshll.u32 %s220, 4
          %s228 = int_to_ptr.vmem [resolvable:$true] %s227
          %233 = dma.hbm_to_vmem [thread:$0]  %s226, 2048, %s228, %s217, 64, 64, 4
        $region32: #{minilm_forward.2} parent=23 // pred_fallthru
          _
        // Predicated region
        $region33: #{minilm_forward.2} parent=23 // pred_check
          %p234 = pneg %p111
        $region34: #{minilm_forward.2} parent=23 // pred_check_branch
          %236 = sbr.rel (%p234) target = $region36
        $region35: #{minilm_forward.2} parent=23 // pred_region
          %s237 = sand.u32 %s18, 1
          %s238 = scalar_lea.sflag [#allocation5], %s237
          %s239 = sand.u32 %s101, 1
          %s240 = smul.addr %s239, 16
          %s241 = scalar_lea.vmem [#allocation6], %s240
          %s243 = ssub.s32 256, 256
          %244 = vsyncadd %s238, %s243
          %s245 = smul.addr %s18, 2
          %s246 = smul.addr %s245, 128
          %s247 = scalar_lea.hbm %s3, %s246
          %s249 = sshll.u32 %s241, 4
          %s250 = int_to_ptr.vmem [resolvable:$true] %s249
          %252 = dma.hbm_to_vmem [thread:$0]  %s247, 256, %s250, %s238
        $region36: #{minilm_forward.2} parent=23 // pred_fallthru
          _
      $region24: #{minilm_forward.2} parent=5 // pred_fallthru
        _
      %p253 = scmp.le.s32.totalorder 1, %s18
      %p254 = scmp.lt.s32.totalorder %s18, 7
      %p255 = pnand %p253, %p254
      %p256 = pneg %p255
      // Predicated region
      $region37: #{minilm_forward.2} parent=5 // pred_check
        _
      $region38: #{minilm_forward.2} parent=5 // pred_check_branch
        %258 = sbr.rel (%p255) target = $region40
      $region39: #{minilm_forward.2} parent=5 // pred_region
        %s259 = ssub.s32 %s18, 1
        %s260 = sand.u32 %s52, 1
        %s261 = scalar_lea.sflag [#allocation3], %s260
        %s262 = sand.u32 %s52, 1
        %s263 = smul.addr %s262, 384
        %s264 = scalar_lea.vmem [#allocation2], %s263
        // Predicated region
        $region41: #{minilm_forward.2} parent=39 // pred_check
          %p265 = pneg %p65
        $region42: #{minilm_forward.2} parent=39 // pred_check_branch
          %267 = sbr.rel (%p265) target = $region44
        $region43: #{minilm_forward.2} parent=39 // pred_region
          %268 = dma.done %s261, 6144
        $region44: #{minilm_forward.2} parent=39 // pred_fallthru
          _
        %s269 = sand.u32 %s23, 1
        %s270 = scalar_lea.sflag [#allocation5], %s269
        %s271 = sand.u32 %s78, 1
        %s272 = smul.addr %s271, 128
        %s273 = scalar_lea.vmem [#allocation4], %s272
        // Predicated region
        $region45: #{minilm_forward.2} parent=39 // pred_check
          %p274 = pneg %p91
        $region46: #{minilm_forward.2} parent=39 // pred_check_branch
          %276 = sbr.rel (%p274) target = $region48
        $region47: #{minilm_forward.2} parent=39 // pred_region
          %277 = dma.done %s270, 2048
        $region48: #{minilm_forward.2} parent=39 // pred_fallthru
          _
        %s278 = sand.u32 %s23, 1
        %s279 = scalar_lea.sflag [#allocation5], %s278
        %s280 = sand.u32 %s104, 1
        %s281 = smul.addr %s280, 16
        %s282 = scalar_lea.vmem [#allocation6], %s281
        // Predicated region
        $region49: #{minilm_forward.2} parent=39 // pred_check
          %p283 = pneg %p117
        $region50: #{minilm_forward.2} parent=39 // pred_check_branch
          %285 = sbr.rel (%p283) target = $region52
        $region51: #{minilm_forward.2} parent=39 // pred_region
          %286 = dma.done %s279, 256
        $region52: #{minilm_forward.2} parent=39 // pred_fallthru
          _
        // Predicated region
        $region53: #{minilm_forward.2} parent=39 // pred_check
          %p287 = pneg %p138
        $region54: #{minilm_forward.2} parent=39 // pred_check_branch
          %289 = sbr.rel (%p287) target = $region56
        $region55: #{minilm_forward.2} parent=39 // pred_region
          %290 = dma.done [#allocation8], 128
        $region56: #{minilm_forward.2} parent=39 // pred_fallthru
          _
        %p291 = pneg %p39
        %p292 = pneg %p36
        %s293 = sand.u32 %s52, 1
        %s294 = scalar_lea.sflag [#allocation3], %s293
        %s295 = sand.u32 %s52, 1
        %s296 = smul.addr %s295, 384
        %s297 = scalar_lea.vmem [#allocation2], %s296
        %p298 = pneg %p65
        %p299 = pneg %p62
        %s300 = sand.u32 %s23, 1
        %s301 = scalar_lea.sflag [#allocation5], %s300
        %s302 = sand.u32 %s78, 1
        %s303 = smul.addr %s302, 128
        %s304 = scalar_lea.vmem [#allocation4], %s303
        %p305 = pneg %p91
        %p306 = pneg %p88
        %s307 = sand.u32 %s23, 1
        %s308 = scalar_lea.sflag [#allocation5], %s307
        %s309 = sand.u32 %s104, 1
        %s310 = smul.addr %s309, 16
        %s311 = scalar_lea.vmem [#allocation6], %s310
        %p312 = pneg %p117
        %p313 = pneg %p114
        %p314 = pneg %p138
        %p315 = pneg %p135
        %p316 = pneg %p159
        %p317 = pneg %p156
        %p319 = scmp.eq.s32.totalorder %s23, 0
        // Predicated region
        $region57: #{minilm_forward.2} parent=39 // pred_check
          %p320 = pneg %p319
        $region58: #{minilm_forward.2} parent=39 // pred_check_branch
          %322 = sbr.rel (%p320) target = $region60
        $region59: #{minilm_forward.2} parent=39 // pred_region
          %v323 = vld [vmem:[%s0] sm:$0xff]
          %v324 = vld [vmem:[%s0 + $0x8] sm:$0xff]
          %v325 = vld [vmem:[%s0 + $0x10] sm:$0xff]
          %v326 = vld [vmem:[%s0 + $0x18] sm:$0xff]
          %327 = vst [vmem:[%s5] sm:$0xff] %v323
          %328 = vst [vmem:[%s5 + $0x8] sm:$0xff] %v324
          %329 = vst [vmem:[%s5 + $0x10] sm:$0xff] %v325
          %330 = vst [vmem:[%s5 + $0x18] sm:$0xff] %v326
        $region60: #{minilm_forward.2} parent=39 // pred_fallthru
          _
        %v331 = vld [vmem:[%s5] sm:$0xff]
        %v332 = vld [vmem:[%s5 + $0x8] sm:$0xff]
        %v333 = vld [vmem:[%s5 + $0x10] sm:$0xff]
        %v334 = vld [vmem:[%s5 + $0x18] sm:$0xff]
        %v335 = vld [vmem:[%s264] sm:$0xff]
        %v336 = vld [vmem:[%s264 + $0x8] sm:$0xff]
        %v337 = vld [vmem:[%s264 + $0x10] sm:$0xff]
        %v338 = vld [vmem:[%s264 + $0x18] sm:$0xff]
        %v339 = vld [vmem:[%s264 + $0x20] sm:$0xff]
        %v340 = vld [vmem:[%s264 + $0x28] sm:$0xff]
        %v341 = vld [vmem:[%s264 + $0x30] sm:$0xff]
        %v342 = vld [vmem:[%s264 + $0x38] sm:$0xff]
        %v343 = vld [vmem:[%s264 + $0x40] sm:$0xff]
        %v344 = vld [vmem:[%s264 + $0x48] sm:$0xff]
        %v345 = vld [vmem:[%s264 + $0x50] sm:$0xff]
        %v346 = vld [vmem:[%s264 + $0x58] sm:$0xff]
        %v347 = vld [vmem:[%s264 + $0x60] sm:$0xff]
        %v348 = vld [vmem:[%s264 + $0x68] sm:$0xff]
        %v349 = vld [vmem:[%s264 + $0x70] sm:$0xff]
        %v350 = vld [vmem:[%s264 + $0x78] sm:$0xff]
        %v351 = vld [vmem:[%s264 + $0x80] sm:$0xff]
        %v352 = vld [vmem:[%s264 + $0x88] sm:$0xff]
        %v353 = vld [vmem:[%s264 + $0x90] sm:$0xff]
        %v354 = vld [vmem:[%s264 + $0x98] sm:$0xff]
        %v355 = vld [vmem:[%s264 + $0xa0] sm:$0xff]
        %v356 = vld [vmem:[%s264 + $0xa8] sm:$0xff]
        %v357 = vld [vmem:[%s264 + $0xb0] sm:$0xff]
        %v358 = vld [vmem:[%s264 + $0xb8] sm:$0xff]
        %v359 = vld [vmem:[%s264 + $0xc0] sm:$0xff]
        %v360 = vld [vmem:[%s264 + $0xc8] sm:$0xff]
        %v361 = vld [vmem:[%s264 + $0xd0] sm:$0xff]
        %v362 = vld [vmem:[%s264 + $0xd8] sm:$0xff]
        %v363 = vld [vmem:[%s264 + $0xe0] sm:$0xff]
        %v364 = vld [vmem:[%s264 + $0xe8] sm:$0xff]
        %v365 = vld [vmem:[%s264 + $0xf0] sm:$0xff]
        %v366 = vld [vmem:[%s264 + $0xf8] sm:$0xff]
        %v367 = vld [vmem:[%s264 + $0x100] sm:$0xff]
        %v368 = vld [vmem:[%s264 + $0x108] sm:$0xff]
        %v369 = vld [vmem:[%s264 + $0x110] sm:$0xff]
        %v370 = vld [vmem:[%s264 + $0x118] sm:$0xff]
        %v371 = vld [vmem:[%s264 + $0x120] sm:$0xff]
        %v372 = vld [vmem:[%s264 + $0x128] sm:$0xff]
        %v373 = vld [vmem:[%s264 + $0x130] sm:$0xff]
        %v374 = vld [vmem:[%s264 + $0x138] sm:$0xff]
        %v375 = vld [vmem:[%s264 + $0x140] sm:$0xff]
        %v376 = vld [vmem:[%s264 + $0x148] sm:$0xff]
        %v377 = vld [vmem:[%s264 + $0x150] sm:$0xff]
        %v378 = vld [vmem:[%s264 + $0x158] sm:$0xff]
        %v379 = vld [vmem:[%s264 + $0x160] sm:$0xff]
        %v380 = vld [vmem:[%s264 + $0x168] sm:$0xff]
        %v381 = vld [vmem:[%s264 + $0x170] sm:$0xff]
        %v382 = vld [vmem:[%s264 + $0x178] sm:$0xff]
        %v383 = vld [vmem:[%s273] sm:$0xf]
        %v384 = vld [vmem:[%s273 + $0x4] sm:$0xf]
        %v385 = vld [vmem:[%s273 + $0x8] sm:$0xf]
        %v386 = vld [vmem:[%s273 + $0xc] sm:$0xf]
        %v387 = vld [vmem:[%s273 + $0x10] sm:$0xf]
        %v388 = vld [vmem:[%s273 + $0x14] sm:$0xf]
        %v389 = vld [vmem:[%s273 + $0x18] sm:$0xf]
        %v390 = vld [vmem:[%s273 + $0x1c] sm:$0xf]
        %v391 = vld [vmem:[%s273 + $0x20] sm:$0xf]
        %v392 = vld [vmem:[%s273 + $0x24] sm:$0xf]
        %v393 = vld [vmem:[%s273 + $0x28] sm:$0xf]
        %v394 = vld [vmem:[%s273 + $0x2c] sm:$0xf]
        %v395 = vld [vmem:[%s273 + $0x30] sm:$0xf]
        %v396 = vld [vmem:[%s273 + $0x34] sm:$0xf]
        %v397 = vld [vmem:[%s273 + $0x38] sm:$0xf]
        %v398 = vld [vmem:[%s273 + $0x3c] sm:$0xf]
        %v399 = vld [vmem:[%s273 + $0x40] sm:$0xf]
        %v400 = vld [vmem:[%s273 + $0x44] sm:$0xf]
        %v401 = vld [vmem:[%s273 + $0x48] sm:$0xf]
        %v402 = vld [vmem:[%s273 + $0x4c] sm:$0xf]
        %v403 = vld [vmem:[%s273 + $0x50] sm:$0xf]
        %v404 = vld [vmem:[%s273 + $0x54] sm:$0xf]
        %v405 = vld [vmem:[%s273 + $0x58] sm:$0xf]
        %v406 = vld [vmem:[%s273 + $0x5c] sm:$0xf]
        %v407 = vld [vmem:[%s273 + $0x60] sm:$0xf]
        %v408 = vld [vmem:[%s273 + $0x64] sm:$0xf]
        %v409 = vld [vmem:[%s273 + $0x68] sm:$0xf]
        %v410 = vld [vmem:[%s273 + $0x6c] sm:$0xf]
        %v411 = vld [vmem:[%s273 + $0x70] sm:$0xf]
        %v412 = vld [vmem:[%s273 + $0x74] sm:$0xf]
        %v413 = vld [vmem:[%s273 + $0x78] sm:$0xf]
        %v414 = vld [vmem:[%s273 + $0x7c] sm:$0xf]
        %v415 = vld [vmem:[%s282] sm:$0xff]
        %v416 = vld [vmem:[%s282 + $0x8] sm:$0xff]
        %v417 = vand.u32 2147483647, %v331
        %v418 = vand.u32 2147483647, %v332
        %v419 = vand.u32 2147483647, %v333
        %v420 = vand.u32 2147483647, %v334
        %421 = vmax.xlane.f32.xlu0 %v417
        %v422 = vpop.xlane.xlu0 %421
        %423 = vmax.xlane.f32.xlu0 %v418
        %v424 = vpop.xlane.xlu0 %423
        %425 = vmax.xlane.f32.xlu0 %v419
        %v426 = vpop.xlane.xlu0 %425
        %427 = vmax.xlane.f32.xlu0 %v420
        %v428 = vpop.xlane.xlu0 %427
        %vm429 = vcmp.gt.f32.partialorder %v422, 0.0
        %vm430 = vcmp.gt.f32.partialorder %v424, 0.0
        %vm431 = vcmp.gt.f32.partialorder %v426, 0.0
        %vm432 = vcmp.gt.f32.partialorder %v428, 0.0
        %v433 = vsel %vm429, %v422, 1.0
        %v434 = vsel %vm430, %v424, 1.0
        %v435 = vsel %vm431, %v426, 1.0
        %v436 = vsel %vm432, %v428, 1.0
        %v437 = vrcp.pop %v433
        %v438 = vmul.f32 57344.0, %v437
        %v439 = vrcp.pop %v434
        %v440 = vmul.f32 57344.0, %v439
        %v441 = vrcp.pop %v435
        %v442 = vmul.f32 57344.0, %v441
        %v443 = vrcp.pop %v436
        %v444 = vmul.f32 57344.0, %v443
        %v445 = vsel %vm429, %v438, 1.0
        %v446 = vsel %vm430, %v440, 1.0
        %v447 = vsel %vm431, %v442, 1.0
        %v448 = vsel %vm432, %v444, 1.0
        %v449 = vmul.f32 %v422, 1.7438617e-05
        %v450 = vmul.f32 %v424, 1.7438617e-05
        %v451 = vmul.f32 %v426, 1.7438617e-05
        %v452 = vmul.f32 %v428, 1.7438617e-05
        %v453 = vsel %vm429, %v449, 1.0
        %v454 = vsel %vm430, %v450, 1.0
        %v455 = vsel %vm431, %v451, 1.0
        %v456 = vsel %vm432, %v452, 1.0
        %v457 = vmul.f32 %v331, %v445
        %v458 = vmul.f32 %v332, %v446
        %v459 = vmul.f32 %v333, %v447
        %v460 = vmul.f32 %v334, %v448
        %v461 = vmul.f32 %v457, 2097153.0
        %v462 = vmul.f32 %v458, 2097153.0
        %v463 = vmul.f32 %v459, 2097153.0
        %v464 = vmul.f32 %v460, 2097153.0
        %v465 = vsub.f32 %v461, %v457
        %v466 = vsub.f32 %v462, %v458
        %v467 = vsub.f32 %v463, %v459
        %v468 = vsub.f32 %v464, %v460
        %v469 = vsub.f32 %v461, %v465
        %v470 = vsub.f32 %v462, %v466
        %v471 = vsub.f32 %v463, %v467
        %v472 = vsub.f32 %v464, %v468
        %v473 = vmul.f32 %v457, 65536.0
        %v474 = vmul.f32 %v458, 65536.0
        %v475 = vmul.f32 %v459, 65536.0
        %v476 = vmul.f32 %v460, 65536.0
        %v477 = vadd.f32 %v473, 12582912.0
        %v478 = vadd.f32 %v474, 12582912.0
        %v479 = vadd.f32 %v475, 12582912.0
        %v480 = vadd.f32 %v476, 12582912.0
        %v481 = vsub.f32 %v477, 12582912.0
        %v482 = vsub.f32 %v478, 12582912.0
        %v483 = vsub.f32 %v479, 12582912.0
        %v484 = vsub.f32 %v480, 12582912.0
        %v485 = vmul.f32 %v481, 1.5258789e-05
        %v486 = vmul.f32 %v482, 1.5258789e-05
        %v487 = vmul.f32 %v483, 1.5258789e-05
        %v488 = vmul.f32 %v484, 1.5258789e-05
        %v489 = vand.u32 2147483647, %v457
        %v490 = vand.u32 2147483647, %v458
        %v491 = vand.u32 2147483647, %v459
        %v492 = vand.u32 2147483647, %v460
        %vm493 = vcmp.lt.f32.partialorder %v489, 6.1035156e-05
        %vm494 = vcmp.lt.f32.partialorder %v490, 6.1035156e-05
        %vm495 = vcmp.lt.f32.partialorder %v491, 6.1035156e-05
        %vm496 = vcmp.lt.f32.partialorder %v492, 6.1035156e-05
        %v497 = vsel %vm493, %v485, %v469
        %v498 = vsel %vm494, %v486, %v470
        %v499 = vsel %vm495, %v487, %v471
        %v500 = vsel %vm496, %v488, %v472
        %v501 = vmax.f32 %v497, -57344.0
        %v502 = vmax.f32 %v498, -57344.0
        %v503 = vmax.f32 %v499, -57344.0
        %v504 = vmax.f32 %v500, -57344.0
        %v505 = vmin.f32 %v501, 57344.0
        %v506 = vmin.f32 %v502, 57344.0
        %v507 = vmin.f32 %v503, 57344.0
        %v508 = vmin.f32 %v504, 57344.0
        %v509 = vpack.c.bf16 %v506, %v505
        %v510 = vpack.c.bf16 %v508, %v507
        %v543 = vunpack.c.l.b16 %v335
        %v544 = vunpack.c.h.b16 %v335
        %v545 = vunpack.c.l.b16 %v336
        %v546 = vunpack.c.l.b16 %v338
        %v547 = vunpack.c.h.b16 %v338
        %v548 = vunpack.c.l.b16 %v339
        %v549 = vunpack.c.l.b16 %v341
        %v550 = vunpack.c.h.b16 %v341
        %v551 = vunpack.c.l.b16 %v342
        %v552 = vunpack.c.l.b16 %v344
        %v553 = vunpack.c.h.b16 %v344
        %v554 = vunpack.c.l.b16 %v345
        %v555 = vunpack.c.l.b16 %v347
        %v556 = vunpack.c.h.b16 %v347
        %v557 = vunpack.c.l.b16 %v348
        %v558 = vunpack.c.l.b16 %v350
        %v559 = vunpack.c.h.b16 %v350
        %v560 = vunpack.c.l.b16 %v351
        %v561 = vunpack.c.l.b16 %v353
        %v562 = vunpack.c.h.b16 %v353
        %v563 = vunpack.c.l.b16 %v354
        %v564 = vunpack.c.l.b16 %v356
        %v565 = vunpack.c.h.b16 %v356
        %v566 = vunpack.c.l.b16 %v357
        %v567 = vunpack.c.l.b16 %v359
        %v568 = vunpack.c.h.b16 %v359
        %v569 = vunpack.c.l.b16 %v360
        %v570 = vunpack.c.l.b16 %v362
        %v571 = vunpack.c.h.b16 %v362
        %v572 = vunpack.c.l.b16 %v363
        %v573 = vunpack.c.l.b16 %v365
        %v574 = vunpack.c.h.b16 %v365
        %v575 = vunpack.c.l.b16 %v366
        %v576 = vunpack.c.l.b16 %v368
        %v577 = vunpack.c.h.b16 %v368
        %v578 = vunpack.c.l.b16 %v369
        %v579 = vunpack.c.l.b16 %v371
        %v580 = vunpack.c.h.b16 %v371
        %v581 = vunpack.c.l.b16 %v372
        %v582 = vunpack.c.l.b16 %v374
        %v583 = vunpack.c.h.b16 %v374
        %v584 = vunpack.c.l.b16 %v375
        %v585 = vunpack.c.l.b16 %v377
        %v586 = vunpack.c.h.b16 %v377
        %v587 = vunpack.c.l.b16 %v378
        %v588 = vunpack.c.l.b16 %v380
        %v589 = vunpack.c.h.b16 %v380
        %v590 = vunpack.c.l.b16 %v381
        %v591 = vpack.c.b16 %v546, %v543
        %v592 = vpack.c.b16 %v547, %v544
        %v593 = vpack.c.b16 %v548, %v545
        %v594 = vpack.c.b16 %v552, %v549
        %v595 = vpack.c.b16 %v553, %v550
        %v596 = vpack.c.b16 %v554, %v551
        %v597 = vpack.c.b16 %v558, %v555
        %v598 = vpack.c.b16 %v559, %v556
        %v599 = vpack.c.b16 %v560, %v557
        %v600 = vpack.c.b16 %v564, %v561
        %v601 = vpack.c.b16 %v565, %v562
        %v602 = vpack.c.b16 %v566, %v563
        %v603 = vpack.c.b16 %v570, %v567
        %v604 = vpack.c.b16 %v571, %v568
        %v605 = vpack.c.b16 %v572, %v569
        %v606 = vpack.c.b16 %v576, %v573
        %v607 = vpack.c.b16 %v577, %v574
        %v608 = vpack.c.b16 %v578, %v575
        %v609 = vpack.c.b16 %v582, %v579
        %v610 = vpack.c.b16 %v583, %v580
        %v611 = vpack.c.b16 %v584, %v581
        %v612 = vpack.c.b16 %v588, %v585
        %v613 = vpack.c.b16 %v589, %v586
        %v614 = vpack.c.b16 %v590, %v587
        %639 = vmatprep.subr.bf16.mxu0 %v592
        %640 = vmatpush1.bf16.msra.mxu0 %v591
        %641 = vmatprep.subr.bf16.mxu0 %v595
        %642 = vmatpush1.bf16.msra.mxu0 %v594
        %643 = vmatprep.subr.bf16.mxu0 %v598
        %644 = vmatpush1.bf16.msra.mxu0 %v597
        %645 = vmatprep.subr.bf16.mxu0 %v601
        %646 = vmatpush1.bf16.msra.mxu0 %v600
        %647 = vmatprep.subr.bf16.mxu0 %v604
        %648 = vmatpush1.bf16.msra.mxu0 %v603
        %649 = vmatprep.subr.bf16.mxu0 %v607
        %650 = vmatpush1.bf16.msra.mxu0 %v606
        %651 = vmatprep.subr.bf16.mxu0 %v610
        %652 = vmatpush1.bf16.msra.mxu0 %v609
        %653 = vmatprep.subr.bf16.mxu0 %v613
        %654 = vmatpush1.bf16.msra.mxu0 %v612
        %655 = vmatprep.subr.bf16.mxu0 0
        %656 = vmatpush1.bf16.msra.mxu0 0
        %657 = vmatprep.subr.bf16.mxu0 0
        %658 = vmatpush1.bf16.msra.mxu0 0
        %659 = vmatprep.subr.bf16.mxu0 0
        %660 = vmatpush1.bf16.msra.mxu0 0
        %661 = vmatprep.subr.bf16.mxu0 0
        %662 = vmatpush1.bf16.msra.mxu0 0
        %663 = vmatprep.subr.bf16.mxu0 0
        %664 = vmatpush1.bf16.msra.mxu0 0
        %665 = vmatprep.subr.bf16.mxu0 0
        %666 = vmatpush1.bf16.msra.mxu0 0
        %667 = vmatprep.subr.bf16.mxu0 0
        %668 = vmatpush1.bf16.msra.mxu0 0
        %669 = vmatprep.subr.bf16.mxu0 0
        %670 = vmatpush1.bf16.msra.mxu0 0
        %671 = vmatprep.mubr.bf16.mxu0 0
        %672 = vmatmul.mubr.bf16.gmra.mrb[0].mxu0 %v509
        %v673 = vpop.f32.mrb[0].mxu0
        %v674 = vadd.f32 0.0, %v673
        %v675 = vpop.f32.mrb[0].mxu0
        %v676 = vadd.f32 0.0, %v675
        %v677 = vpop.f32.mrb[0].mxu0
        %v678 = vadd.f32 0.0, %v677
        %v679 = vpop.f32.mrb[0].mxu0
        %v680 = vadd.f32 0.0, %v679
        %681 = vmatprep.mubr.bf16.mxu0 0
        %682 = vmatmul.mubr.bf16.gmra.mrb[0].mxu0 %v510
        %v683 = vpop.f32.mrb[0].mxu0
        %v684 = vadd.f32 0.0, %v683
        %v685 = vpop.f32.mrb[0].mxu0
        %v686 = vadd.f32 0.0, %v685
        %v687 = vpop.f32.mrb[0].mxu0
        %v688 = vadd.f32 0.0, %v687
        %v689 = vpop.f32.mrb[0].mxu0
        %v690 = vadd.f32 0.0, %v689
        %691 = vdwg.mxu0
        %692 = vmatprep.subr.bf16.mxu0 0
        %693 = vmatpush1.bf16.msra.mxu0 %v593
        %694 = vmatprep.subr.bf16.mxu0 0
        %695 = vmatpush1.bf16.msra.mxu0 %v596
        %696 = vmatprep.subr.bf16.mxu0 0
        %697 = vmatpush1.bf16.msra.mxu0 %v599
        %698 = vmatprep.subr.bf16.mxu0 0
        %699 = vmatpush1.bf16.msra.mxu0 %v602
        %700 = vmatprep.subr.bf16.mxu0 0
        %701 = vmatpush1.bf16.msra.mxu0 %v605
        %702 = vmatprep.subr.bf16.mxu0 0
        %703 = vmatpush1.bf16.msra.mxu0 %v608
        %704 = vmatprep.subr.bf16.mxu0 0
        %705 = vmatpush1.bf16.msra.mxu0 %v611
        %706 = vmatprep.subr.bf16.mxu0 0
        %707 = vmatpush1.bf16.msra.mxu0 %v614
        %708 = vmatprep.subr.bf16.mxu0 0
        %709 = vmatpush1.bf16.msra.mxu0 0
        %710 = vmatprep.subr.bf16.mxu0 0
        %711 = vmatpush1.bf16.msra.mxu0 0
        %712 = vmatprep.subr.bf16.mxu0 0
        %713 = vmatpush1.bf16.msra.mxu0 0
        %714 = vmatprep.subr.bf16.mxu0 0
        %715 = vmatpush1.bf16.msra.mxu0 0
        %716 = vmatprep.subr.bf16.mxu0 0
        %717 = vmatpush1.bf16.msra.mxu0 0
        %718 = vmatprep.subr.bf16.mxu0 0
        %719 = vmatpush1.bf16.msra.mxu0 0
        %720 = vmatprep.subr.bf16.mxu0 0
        %721 = vmatpush1.bf16.msra.mxu0 0
        %722 = vmatprep.subr.bf16.mxu0 0
        %723 = vmatpush1.bf16.msra.mxu0 0
        %724 = vmatprep.mubr.bf16.mxu0 0
        %725 = vmatmul.mubr.bf16.gmra.mrb[0].mxu0 %v509
        %v726 = vpop.f32.mrb[0].mxu0
        %v727 = vadd.f32 0.0, %v726
        %v728 = vpop.f32.mrb[0].mxu0
        %v729 = vpop.f32.mrb[0].mxu0
        %v730 = vadd.f32 0.0, %v729
        %v731 = vpop.f32.mrb[0].mxu0
        %732 = vmatprep.mubr.bf16.mxu0 0
        %733 = vmatmul.mubr.bf16.gmra.mrb[0].mxu0 %v510
        %v734 = vpop.f32.mrb[0].mxu0
        %v735 = vadd.f32 0.0, %v734
        %v736 = vpop.f32.mrb[0].mxu0
        %v737 = vpop.f32.mrb[0].mxu0
        %v738 = vadd.f32 0.0, %v737
        %v739 = vpop.f32.mrb[0].mxu0
        %740 = vdwg.mxu0
        %v741 = vmul.f32 %v674, %v453
        %v742 = vmul.f32 %v676, %v453
        %v743 = vmul.f32 %v727, %v453
        %v744 = vmul.f32 %v678, %v454
        %v745 = vmul.f32 %v680, %v454
        %v746 = vmul.f32 %v730, %v454
        %v747 = vmul.f32 %v684, %v455
        %v748 = vmul.f32 %v686, %v455
        %v749 = vmul.f32 %v735, %v455
        %v750 = vmul.f32 %v688, %v456
        %v751 = vmul.f32 %v690, %v456
        %v752 = vmul.f32 %v738, %v456
        %vm753 = vcmask 130048
        %v755 = vsel %vm753, %v741, 0
        %v758 = vsel %vm753, %v744, 0
        %v761 = vsel %vm753, %v742, 0
        %v764 = vsel %vm753, %v745, 0
        %766 = vmatprep.subr.mxu0 0.0
        %767 = vmatpush1.xpose.msra.mxu0 %v761
        %768 = vmatprep.subr.mxu0 0.0
        %769 = vmatpush1.xpose.msra.mxu0 %v764
        %770 = vmatprep.subr.mxu0 0.0
        %771 = vmatpush1.xpose.msra.mxu0 0.0
        %772 = vmatprep.subr.mxu0 0.0
        %773 = vmatpush1.xpose.msra.mxu0 0.0
        %774 = vmatprep.subr.mxu0 0.0
        %775 = vmatpush1.xpose.msra.mxu0 0.0
        %776 = vmatprep.subr.mxu0 0.0
        %777 = vmatpush1.xpose.msra.mxu0 0.0
        %778 = vmatprep.subr.mxu0 0.0
        %779 = vmatpush1.xpose.msra.mxu0 0.0
        %780 = vmatprep.subr.mxu0 0.0
        %781 = vmatpush1.xpose.msra.mxu0 0.0
        %782 = vmatprep.subr.mxu0 0.0
        %783 = vmatpush1.xpose.msra.mxu0 0.0
        %784 = vmatprep.subr.mxu0 0.0
        %785 = vmatpush1.xpose.msra.mxu0 0.0
        %786 = vmatprep.subr.mxu0 0.0
        %787 = vmatpush1.xpose.msra.mxu0 0.0
        %788 = vmatprep.subr.mxu0 0.0
        %789 = vmatpush1.xpose.msra.mxu0 0.0
        %790 = vmatprep.subr.mxu0 0.0
        %791 = vmatpush1.xpose.msra.mxu0 0.0
        %792 = vmatprep.subr.mxu0 0.0
        %793 = vmatpush1.xpose.msra.mxu0 0.0
        %794 = vmatprep.subr.mxu0 0.0
        %795 = vmatpush1.xpose.msra.mxu0 0.0
        %796 = vmatprep.subr.mxu0 0.0
        %797 = vmatpush1.xpose.msra.mxu0 0.0
        %798 = vmatprep.subr.mxu0 0.0
        %799 = vmatpush1.xpose.msra.mxu0 0.0
        %800 = vmatprep.subr.mxu0 0.0
        %801 = vmatpush1.xpose.msra.mxu0 0.0
        %802 = vmatprep.subr.mxu0 0.0
        %803 = vmatpush1.xpose.msra.mxu0 0.0
        %804 = vmatprep.subr.mxu0 0.0
        %805 = vmatpush1.xpose.msra.mxu0 0.0
        %806 = vmatprep.subr.mxu0 0.0
        %807 = vmatpush1.xpose.msra.mxu0 0.0
        %808 = vmatprep.subr.mxu0 0.0
        %809 = vmatpush1.xpose.msra.mxu0 0.0
        %810 = vmatprep.subr.mxu0 0.0
        %811 = vmatpush1.xpose.msra.mxu0 0.0
        %812 = vmatprep.subr.mxu0 0.0
        %813 = vmatpush1.xpose.msra.mxu0 0.0
        %814 = vmatprep.subr.mxu0 0.0
        %815 = vmatpush1.xpose.msra.mxu0 0.0
        %816 = vmatprep.subr.mxu0 0.0
        %817 = vmatpush1.xpose.msra.mxu0 0.0
        %818 = vmatprep.subr.mxu0 0.0
        %819 = vmatpush1.xpose.msra.mxu0 0.0
        %820 = vmatprep.subr.mxu0 0.0
        %821 = vmatpush1.xpose.msra.mxu0 0.0
        %822 = vmatprep.subr.mxu0 0.0
        %823 = vmatpush1.xpose.msra.mxu0 0.0
        %824 = vmatprep.subr.mxu0 0.0
        %825 = vmatpush1.xpose.msra.mxu0 0.0
        %826 = vmatprep.subr.mxu0 0.0
        %827 = vmatpush1.xpose.msra.mxu0 0.0
        %828 = vmatprep.subr.mxu0 0.0
        %829 = vmatpush1.xpose.msra.mxu0 0.0
        %830 = vmatprep.mubr.f32.mxu0 0.0
        %831 = vmatmul.mubr.f32.gmra.mrb[0].mxu0 %v755
        %v832 = vpop.f32.mrb[0].mxu0
        %v833 = vadd.f32 0.0, %v832
        %v834 = vpop.f32.mrb[0].mxu0
        %835 = vmatprep.mubr.f32.mxu0 0.0
        %836 = vmatmul.mubr.f32.gmra.mrb[0].mxu0 %v758
        %v837 = vpop.f32.mrb[0].mxu0
        %v838 = vadd.f32 0.0, %v837
        %v839 = vpop.f32.mrb[0].mxu0
        %840 = vdwg.mxu0
        %v841 = vmul.f32 %v833, 0.25
        %v842 = vmul.f32 %v838, 0.25
        %v843 = vsel %vm753, %v841, -inf
        %844 = vmax.xlane.f32.xlu0 %v843
        %v845 = vpop.xlane.xlu0 %844
        %v846 = vsel %vm753, %v842, -inf
        %847 = vmax.xlane.f32.xlu0 %v846
        %v848 = vpop.xlane.xlu0 %847
        %v849 = vsub.f32 %v841, %v845
        %v850 = vsub.f32 %v842, %v848
        %v851 = vmul.f32 %v849, 1.442695
        %v852 = vpow.pop %v851
        %v853 = vmul.f32 %v850, 1.442695
        %v854 = vpow.pop %v853
        %v855 = vsel %vm753, %v852, 0.0
        %856 = vadd.xlane.f32.xlu0 %v855
        %v857 = vpop.xlane.xlu0 %856
        %v858 = vsel %vm753, %v854, 0.0
        %859 = vadd.xlane.f32.xlu0 %v858
        %v860 = vpop.xlane.xlu0 %859
        %v861 = vrcp.pop %v857
        %v862 = vmul.f32 %v852, %v861
        %v863 = vrcp.pop %v860
        %v864 = vmul.f32 %v854, %v863
        %v866 = vsel %vm753, %v862, 0
        %v869 = vsel %vm753, %v864, 0
        %871 = vmatprep.subr.mxu0 0.0
        %872 = vmatpush1.msra.mxu0 %v743
        %873 = vmatprep.subr.mxu0 0.0
        %874 = vmatpush1.msra.mxu0 %v746
        %875 = vmatprep.subr.mxu0 0.0
        %876 = vmatpush1.msra.mxu0 0.0
        %877 = vmatprep.subr.mxu0 0.0
        %878 = vmatpush1.msra.mxu0 0.0
        %879 = vmatprep.subr.mxu0 0.0
        %880 = vmatpush1.msra.mxu0 0.0
        %881 = vmatprep.subr.mxu0 0.0
        %882 = vmatpush1.msra.mxu0 0.0
        %883 = vmatprep.subr.mxu0 0.0
        %884 = vmatpush1.msra.mxu0 0.0
        %885 = vmatprep.subr.mxu0 0.0
        %886 = vmatpush1.msra.mxu0 0.0
        %887 = vmatprep.subr.mxu0 0.0
        %888 = vmatpush1.msra.mxu0 0.0
        %889 = vmatprep.subr.mxu0 0.0
        %890 = vmatpush1.msra.mxu0 0.0
        %891 = vmatprep.subr.mxu0 0.0
        %892 = vmatpush1.msra.mxu0 0.0
        %893 = vmatprep.subr.mxu0 0.0
        %894 = vmatpush1.msra.mxu0 0.0
        %895 = vmatprep.subr.mxu0 0.0
        %896 = vmatpush1.msra.mxu0 0.0
        %897 = vmatprep.subr.mxu0 0.0
        %898 = vmatpush1.msra.mxu0 0.0
        %899 = vmatprep.subr.mxu0 0.0
        %900 = vmatpush1.msra.mxu0 0.0
        %901 = vmatprep.subr.mxu0 0.0
        %902 = vmatpush1.msra.mxu0 0.0
        %903 = vmatprep.subr.mxu0 0.0
        %904 = vmatpush1.msra.mxu0 0.0
        %905 = vmatprep.subr.mxu0 0.0
        %906 = vmatpush1.msra.mxu0 0.0
        %907 = vmatprep.subr.mxu0 0.0
        %908 = vmatpush1.msra.mxu0 0.0
        %909 = vmatprep.subr.mxu0 0.0
        %910 = vmatpush1.msra.mxu0 0.0
        %911 = vmatprep.subr.mxu0 0.0
        %912 = vmatpush1.msra.mxu0 0.0
        %913 = vmatprep.subr.mxu0 0.0
        %914 = vmatpush1.msra.mxu0 0.0
        %915 = vmatprep.subr.mxu0 0.0
        %916 = vmatpush1.msra.mxu0 0.0
        %917 = vmatprep.subr.mxu0 0.0
        %918 = vmatpush1.msra.mxu0 0.0
        %919 = vmatprep.subr.mxu0 0.0
        %920 = vmatpush1.msra.mxu0 0.0
        %921 = vmatprep.subr.mxu0 0.0
        %922 = vmatpush1.msra.mxu0 0.0
        %923 = vmatprep.subr.mxu0 0.0
        %924 = vmatpush1.msra.mxu0 0.0
        %925 = vmatprep.subr.mxu0 0.0
        %926 = vmatpush1.msra.mxu0 0.0
        %927 = vmatprep.subr.mxu0 0.0
        %928 = vmatpush1.msra.mxu0 0.0
        %929 = vmatprep.subr.mxu0 0.0
        %930 = vmatpush1.msra.mxu0 0.0
        %931 = vmatprep.subr.mxu0 0.0
        %932 = vmatpush1.msra.mxu0 0.0
        %933 = vmatprep.subr.mxu0 0.0
        %934 = vmatpush1.msra.mxu0 0.0
        %935 = vmatprep.mubr.f32.mxu0 0.0
        %936 = vmatmul.mubr.f32.gmra.mrb[0].mxu0 %v866
        %v937 = vpop.f32.mrb[0].mxu0
        %v938 = vadd.f32 0.0, %v937
        %v939 = vpop.f32.mrb[0].mxu0
        %940 = vmatprep.mubr.f32.mxu0 0.0
        %941 = vmatmul.mubr.f32.gmra.mrb[0].mxu0 %v869
        %v942 = vpop.f32.mrb[0].mxu0
        %v943 = vadd.f32 0.0, %v942
        %v944 = vpop.f32.mrb[0].mxu0
        %945 = vdwg.mxu0
        %946 = vrot.lane.b32.xlu0 %v741, 112
        %v947 = vpop.permute.xlu0 %946
        %948 = vrot.lane.b32.xlu0 %v744, 112
        %v949 = vpop.permute.xlu0 %948
        %950 = vrot.lane.b32.xlu0 %v742, 112
        %v951 = vpop.permute.xlu0 %950
        %952 = vrot.lane.b32.xlu0 %v745, 112
        %v953 = vpop.permute.xlu0 %952
        %v954 = vsel %vm753, %v947, 0
        %v956 = vsel %vm753, %v949, 0
        %v958 = vsel %vm753, %v951, 0
        %v960 = vsel %vm753, %v953, 0
        %962 = vmatprep.subr.mxu0 0.0
        %963 = vmatpush1.xpose.msra.mxu0 %v958
        %964 = vmatprep.subr.mxu0 0.0
        %965 = vmatpush1.xpose.msra.mxu0 %v960
        %966 = vmatprep.subr.mxu0 0.0
        %967 = vmatpush1.xpose.msra.mxu0 0.0
        %968 = vmatprep.subr.mxu0 0.0
        %969 = vmatpush1.xpose.msra.mxu0 0.0
        %970 = vmatprep.subr.mxu0 0.0
        %971 = vmatpush1.xpose.msra.mxu0 0.0
        %972 = vmatprep.subr.mxu0 0.0
        %973 = vmatpush1.xpose.msra.mxu0 0.0
        %974 = vmatprep.subr.mxu0 0.0
        %975 = vmatpush1.xpose.msra.mxu0 0.0
        %976 = vmatprep.subr.mxu0 0.0
        %977 = vmatpush1.xpose.msra.mxu0 0.0
        %978 = vmatprep.subr.mxu0 0.0
        %979 = vmatpush1.xpose.msra.mxu0 0.0
        %980 = vmatprep.subr.mxu0 0.0
        %981 = vmatpush1.xpose.msra.mxu0 0.0
        %982 = vmatprep.subr.mxu0 0.0
        %983 = vmatpush1.xpose.msra.mxu0 0.0
        %984 = vmatprep.subr.mxu0 0.0
        %985 = vmatpush1.xpose.msra.mxu0 0.0
        %986 = vmatprep.subr.mxu0 0.0
        %987 = vmatpush1.xpose.msra.mxu0 0.0
        %988 = vmatprep.subr.mxu0 0.0
        %989 = vmatpush1.xpose.msra.mxu0 0.0
        %990 = vmatprep.subr.mxu0 0.0
        %991 = vmatpush1.xpose.msra.mxu0 0.0
        %992 = vmatprep.subr.mxu0 0.0
        %993 = vmatpush1.xpose.msra.mxu0 0.0
        %994 = vmatprep.subr.mxu0 0.0
        %995 = vmatpush1.xpose.msra.mxu0 0.0
        %996 = vmatprep.subr.mxu0 0.0
        %997 = vmatpush1.xpose.msra.mxu0 0.0
        %998 = vmatprep.subr.mxu0 0.0
        %999 = vmatpush1.xpose.msra.mxu0 0.0
        %1000 = vmatprep.subr.mxu0 0.0
        %1001 = vmatpush1.xpose.msra.mxu0 0.0
        %1002 = vmatprep.subr.mxu0 0.0
        %1003 = vmatpush1.xpose.msra.mxu0 0.0
        %1004 = vmatprep.subr.mxu0 0.0
        %1005 = vmatpush1.xpose.msra.mxu0 0.0
        %1006 = vmatprep.subr.mxu0 0.0
        %1007 = vmatpush1.xpose.msra.mxu0 0.0
        %1008 = vmatprep.subr.mxu0 0.0
        %1009 = vmatpush1.xpose.msra.mxu0 0.0
        %1010 = vmatprep.subr.mxu0 0.0
        %1011 = vmatpush1.xpose.msra.mxu0 0.0
        %1012 = vmatprep.subr.mxu0 0.0
        %1013 = vmatpush1.xpose.msra.mxu0 0.0
        %1014 = vmatprep.subr.mxu0 0.0
        %1015 = vmatpush1.xpose.msra.mxu0 0.0
        %1016 = vmatprep.subr.mxu0 0.0
        %1017 = vmatpush1.xpose.msra.mxu0 0.0
        %1018 = vmatprep.subr.mxu0 0.0
        %1019 = vmatpush1.xpose.msra.mxu0 0.0
        %1020 = vmatprep.subr.mxu0 0.0
        %1021 = vmatpush1.xpose.msra.mxu0 0.0
        %1022 = vmatprep.subr.mxu0 0.0
        %1023 = vmatpush1.xpose.msra.mxu0 0.0
        %1024 = vmatprep.subr.mxu0 0.0
        %1025 = vmatpush1.xpose.msra.mxu0 0.0
        %1026 = vmatprep.mubr.f32.mxu0 0.0
        %1027 = vmatmul.mubr.f32.gmra.mrb[0].mxu0 %v954
        %v1028 = vpop.f32.mrb[0].mxu0
        %v1029 = vadd.f32 0.0, %v1028
        %v1030 = vpop.f32.mrb[0].mxu0
        %1031 = vmatprep.mubr.f32.mxu0 0.0
        %1032 = vmatmul.mubr.f32.gmra.mrb[0].mxu0 %v956
        %v1033 = vpop.f32.mrb[0].mxu0
        %v1034 = vadd.f32 0.0, %v1033
        %v1035 = vpop.f32.mrb[0].mxu0
        %1036 = vdwg.mxu0
        %v1037 = vmul.f32 %v1029, 0.25
        %v1038 = vmul.f32 %v1034, 0.25
        %v1039 = vsel %vm753, %v1037, -inf
        %1040 = vmax.xlane.f32.xlu0 %v1039
        %v1041 = vpop.xlane.xlu0 %1040
        %v1042 = vsel %vm753, %v1038, -inf
        %1043 = vmax.xlane.f32.xlu0 %v1042
        %v1044 = vpop.xlane.xlu0 %1043
        %v1045 = vsub.f32 %v1037, %v1041
        %v1046 = vsub.f32 %v1038, %v1044
        %v1047 = vmul.f32 %v1045, 1.442695
        %v1048 = vpow.pop %v1047
        %v1049 = vmul.f32 %v1046, 1.442695
        %v1050 = vpow.pop %v1049
        %v1051 = vsel %vm753, %v1048, 0.0
        %1052 = vadd.xlane.f32.xlu0 %v1051
        %v1053 = vpop.xlane.xlu0 %1052
        %v1054 = vsel %vm753, %v1050, 0.0
        %1055 = vadd.xlane.f32.xlu0 %v1054
        %v1056 = vpop.xlane.xlu0 %1055
        %v1057 = vrcp.pop %v1053
        %v1058 = vmul.f32 %v1048, %v1057
        %v1059 = vrcp.pop %v1056
        %v1060 = vmul.f32 %v1050, %v1059
        %1063 = vrot.lane.b32.xlu0 %v743, 112
        %v1064 = vpop.permute.xlu0 %1063
        %1065 = vrot.lane.b32.xlu0 %v746, 112
        %v1066 = vpop.permute.xlu0 %1065
        %v1070 = vsel %vm753, %v1058, 0
        %v1073 = vsel %vm753, %v1060, 0
        %1075 = vmatprep.subr.mxu0 0.0
        %1076 = vmatpush1.msra.mxu0 %v1064
        %1077 = vmatprep.subr.mxu0 0.0
        %1078 = vmatpush1.msra.mxu0 %v1066
        %1079 = vmatprep.subr.mxu0 0.0
        %1080 = vmatpush1.msra.mxu0 0.0
        %1081 = vmatprep.subr.mxu0 0.0
        %1082 = vmatpush1.msra.mxu0 0.0
        %1083 = vmatprep.subr.mxu0 0.0
        %1084 = vmatpush1.msra.mxu0 0.0
        %1085 = vmatprep.subr.mxu0 0.0
        %1086 = vmatpush1.msra.mxu0 0.0
        %1087 = vmatprep.subr.mxu0 0.0
        %1088 = vmatpush1.msra.mxu0 0.0
        %1089 = vmatprep.subr.mxu0 0.0
        %1090 = vmatpush1.msra.mxu0 0.0
        %1091 = vmatprep.subr.mxu0 0.0
        %1092 = vmatpush1.msra.mxu0 0.0
        %1093 = vmatprep.subr.mxu0 0.0
        %1094 = vmatpush1.msra.mxu0 0.0
        %1095 = vmatprep.subr.mxu0 0.0
        %1096 = vmatpush1.msra.mxu0 0.0
        %1097 = vmatprep.subr.mxu0 0.0
        %1098 = vmatpush1.msra.mxu0 0.0
        %1099 = vmatprep.subr.mxu0 0.0
        %1100 = vmatpush1.msra.mxu0 0.0
        %1101 = vmatprep.subr.mxu0 0.0
        %1102 = vmatpush1.msra.mxu0 0.0
        %1103 = vmatprep.subr.mxu0 0.0
        %1104 = vmatpush1.msra.mxu0 0.0
        %1105 = vmatprep.subr.mxu0 0.0
        %1106 = vmatpush1.msra.mxu0 0.0
        %1107 = vmatprep.subr.mxu0 0.0
        %1108 = vmatpush1.msra.mxu0 0.0
        %1109 = vmatprep.subr.mxu0 0.0
        %1110 = vmatpush1.msra.mxu0 0.0
        %1111 = vmatprep.subr.mxu0 0.0
        %1112 = vmatpush1.msra.mxu0 0.0
        %1113 = vmatprep.subr.mxu0 0.0
        %1114 = vmatpush1.msra.mxu0 0.0
        %1115 = vmatprep.subr.mxu0 0.0
        %1116 = vmatpush1.msra.mxu0 0.0
        %1117 = vmatprep.subr.mxu0 0.0
        %1118 = vmatpush1.msra.mxu0 0.0
        %1119 = vmatprep.subr.mxu0 0.0
        %1120 = vmatpush1.msra.mxu0 0.0
        %1121 = vmatprep.subr.mxu0 0.0
        %1122 = vmatpush1.msra.mxu0 0.0
        %1123 = vmatprep.subr.mxu0 0.0
        %1124 = vmatpush1.msra.mxu0 0.0
        %1125 = vmatprep.subr.mxu0 0.0
        %1126 = vmatpush1.msra.mxu0 0.0
        %1127 = vmatprep.subr.mxu0 0.0
        %1128 = vmatpush1.msra.mxu0 0.0
        %1129 = vmatprep.subr.mxu0 0.0
        %1130 = vmatpush1.msra.mxu0 0.0
        %1131 = vmatprep.subr.mxu0 0.0
        %1132 = vmatpush1.msra.mxu0 0.0
        %1133 = vmatprep.subr.mxu0 0.0
        %1134 = vmatpush1.msra.mxu0 0.0
        %1135 = vmatprep.subr.mxu0 0.0
        %1136 = vmatpush1.msra.mxu0 0.0
        %1137 = vmatprep.subr.mxu0 0.0
        %1138 = vmatpush1.msra.mxu0 0.0
        %1139 = vmatprep.mubr.f32.mxu0 0.0
        %1140 = vmatmul.mubr.f32.gmra.mrb[0].mxu0 %v1070
        %v1141 = vpop.f32.mrb[0].mxu0
        %v1142 = vadd.f32 0.0, %v1141
        %v1143 = vpop.f32.mrb[0].mxu0
        %1144 = vmatprep.mubr.f32.mxu0 0.0
        %1145 = vmatmul.mubr.f32.gmra.mrb[0].mxu0 %v1073
        %v1146 = vpop.f32.mrb[0].mxu0
        %v1147 = vadd.f32 0.0, %v1146
        %v1148 = vpop.f32.mrb[0].mxu0
        %1149 = vdwg.mxu0
        %1150 = vrot.lane.b32.xlu0 %v741, 96
        %v1151 = vpop.permute.xlu0 %1150
        %1152 = vrot.lane.b32.xlu0 %v744, 96
        %v1153 = vpop.permute.xlu0 %1152
        %1154 = vrot.lane.b32.xlu0 %v742, 96
        %v1155 = vpop.permute.xlu0 %1154
        %1156 = vrot.lane.b32.xlu0 %v745, 96
        %v1157 = vpop.permute.xlu0 %1156
        %v1158 = vsel %vm753, %v1151, 0
        %v1160 = vsel %vm753, %v1153, 0
        %v1162 = vsel %vm753, %v1155, 0
        %v1164 = vsel %vm753, %v1157, 0
        %1166 = vmatprep.subr.mxu0 0.0
        %1167 = vmatpush1.xpose.msra.mxu0 %v1162
        %1168 = vmatprep.subr.mxu0 0.0
        %1169 = vmatpush1.xpose.msra.mxu0 %v1164
        %1170 = vmatprep.subr.mxu0 0.0
        %1171 = vmatpush1.xpose.msra.mxu0 0.0
        %1172 = vmatprep.subr.mxu0 0.0
        %1173 = vmatpush1.xpose.msra.mxu0 0.0
        %1174 = vmatprep.subr.mxu0 0.0
        %1175 = vmatpush1.xpose.msra.mxu0 0.0
        %1176 = vmatprep.subr.mxu0 0.0
        %1177 = vmatpush1.xpose.msra.mxu0 0.0
        %1178 = vmatprep.subr.mxu0 0.0
        %1179 = vmatpush1.xpose.msra.mxu0 0.0
        %1180 = vmatprep.subr.mxu0 0.0
        %1181 = vmatpush1.xpose.msra.mxu0 0.0
        %1182 = vmatprep.subr.mxu0 0.0
        %1183 = vmatpush1.xpose.msra.mxu0 0.0
        %1184 = vmatprep.subr.mxu0 0.0
        %1185 = vmatpush1.xpose.msra.mxu0 0.0
        %1186 = vmatprep.subr.mxu0 0.0
        %1187 = vmatpush1.xpose.msra.mxu0 0.0
        %1188 = vmatprep.subr.mxu0 0.0
        %1189 = vmatpush1.xpose.msra.mxu0 0.0
        %1190 = vmatprep.subr.mxu0 0.0
        %1191 = vmatpush1.xpose.msra.mxu0 0.0
        %1192 = vmatprep.subr.mxu0 0.0
        %1193 = vmatpush1.xpose.msra.mxu0 0.0
        %1194 = vmatprep.subr.mxu0 0.0
        %1195 = vmatpush1.xpose.msra.mxu0 0.0
        %1196 = vmatprep.subr.mxu0 0.0
        %1197 = vmatpush1.xpose.msra.mxu0 0.0
        %1198 = vmatprep.subr.mxu0 0.0
        %1199 = vmatpush1.xpose.msra.mxu0 0.0
        %1200 = vmatprep.subr.mxu0 0.0
        %1201 = vmatpush1.xpose.msra.mxu0 0.0
        %1202 = vmatprep.subr.mxu0 0.0
        %1203 = vmatpush1.xpose.msra.mxu0 0.0
        %1204 = vmatprep.subr.mxu0 0.0
        %1205 = vmatpush1.xpose.msra.mxu0 0.0
        %1206 = vmatprep.subr.mxu0 0.0
        %1207 = vmatpush1.xpose.msra.mxu0 0.0
        %1208 = vmatprep.subr.mxu0 0.0
        %1209 = vmatpush1.xpose.msra.mxu0 0.0
        %1210 = vmatprep.subr.mxu0 0.0
        %1211 = vmatpush1.xpose.msra.mxu0 0.0
        %1212 = vmatprep.subr.mxu0 0.0
        %1213 = vmatpush1.xpose.msra.mxu0 0.0
        %1214 = vmatprep.subr.mxu0 0.0
        %1215 = vmatpush1.xpose.msra.mxu0 0.0
        %1216 = vmatprep.subr.mxu0 0.0
        %1217 = vmatpush1.xpose.msra.mxu0 0.0
        %1218 = vmatprep.subr.mxu0 0.0
        %1219 = vmatpush1.xpose.msra.mxu0 0.0
        %1220 = vmatprep.subr.mxu0 0.0
        %1221 = vmatpush1.xpose.msra.mxu0 0.0
        %1222 = vmatprep.subr.mxu0 0.0
        %1223 = vmatpush1.xpose.msra.mxu0 0.0
        %1224 = vmatprep.subr.mxu0 0.0
        %1225 = vmatpush1.xpose.msra.mxu0 0.0
        %1226 = vmatprep.subr.mxu0 0.0
        %1227 = vmatpush1.xpose.msra.mxu0 0.0
        %1228 = vmatprep.subr.mxu0 0.0
        %1229 = vmatpush1.xpose.msra.mxu0 0.0
        %1230 = vmatprep.mubr.f32.mxu0 0.0
        %1231 = vmatmul.mubr.f32.gmra.mrb[0].mxu0 %v1158
        %v1232 = vpop.f32.mrb[0].mxu0
        %v1233 = vadd.f32 0.0, %v1232
        %v1234 = vpop.f32.mrb[0].mxu0
        %1235 = vmatprep.mubr.f32.mxu0 0.0
        %1236 = vmatmul.mubr.f32.gmra.mrb[0].mxu0 %v1160
        %v1237 = vpop.f32.mrb[0].mxu0
        %v1238 = vadd.f32 0.0, %v1237
        %v1239 = vpop.f32.mrb[0].mxu0
        %1240 = vdwg.mxu0
        %v1241 = vmul.f32 %v1233, 0.25
        %v1242 = vmul.f32 %v1238, 0.25
        %v1243 = vsel %vm753, %v1241, -inf
        %1244 = vmax.xlane.f32.xlu0 %v1243
        %v1245 = vpop.xlane.xlu0 %1244
        %v1246 = vsel %vm753, %v1242, -inf
        %1247 = vmax.xlane.f32.xlu0 %v1246
        %v1248 = vpop.xlane.xlu0 %1247
        %v1249 = vsub.f32 %v1241, %v1245
        %v1250 = vsub.f32 %v1242, %v1248
        %v1251 = vmul.f32 %v1249, 1.442695
        %v1252 = vpow.pop %v1251
        %v1253 = vmul.f32 %v1250, 1.442695
        %v1254 = vpow.pop %v1253
        %v1255 = vsel %vm753, %v1252, 0.0
        %1256 = vadd.xlane.f32.xlu0 %v1255
        %v1257 = vpop.xlane.xlu0 %1256
        %v1258 = vsel %vm753, %v1254, 0.0
        %1259 = vadd.xlane.f32.xlu0 %v1258
        %v1260 = vpop.xlane.xlu0 %1259
        %v1261 = vrcp.pop %v1257
        %v1262 = vmul.f32 %v1252, %v1261
        %v1263 = vrcp.pop %v1260
        %v1264 = vmul.f32 %v1254, %v1263
        %1265 = vrot.lane.b32.xlu0 %v743, 96
        %v1266 = vpop.permute.xlu0 %1265
        %1267 = vrot.lane.b32.xlu0 %v746, 96
        %v1268 = vpop.permute.xlu0 %1267
        %v1272 = vsel %vm753, %v1262, 0
        %v1275 = vsel %vm753, %v1264, 0
        %1277 = vmatprep.subr.mxu0 0.0
        %1278 = vmatpush1.msra.mxu0 %v1266
        %1279 = vmatprep.subr.mxu0 0.0
        %1280 = vmatpush1.msra.mxu0 %v1268
        %1281 = vmatprep.subr.mxu0 0.0
        %1282 = vmatpush1.msra.mxu0 0.0
        %1283 = vmatprep.subr.mxu0 0.0
        %1284 = vmatpush1.msra.mxu0 0.0
        %1285 = vmatprep.subr.mxu0 0.0
        %1286 = vmatpush1.msra.mxu0 0.0
        %1287 = vmatprep.subr.mxu0 0.0
        %1288 = vmatpush1.msra.mxu0 0.0
        %1289 = vmatprep.subr.mxu0 0.0
        %1290 = vmatpush1.msra.mxu0 0.0
        %1291 = vmatprep.subr.mxu0 0.0
        %1292 = vmatpush1.msra.mxu0 0.0
        %1293 = vmatprep.subr.mxu0 0.0
        %1294 = vmatpush1.msra.mxu0 0.0
        %1295 = vmatprep.subr.mxu0 0.0
        %1296 = vmatpush1.msra.mxu0 0.0
        %1297 = vmatprep.subr.mxu0 0.0
        %1298 = vmatpush1.msra.mxu0 0.0
        %1299 = vmatprep.subr.mxu0 0.0
        %1300 = vmatpush1.msra.mxu0 0.0
        %1301 = vmatprep.subr.mxu0 0.0
        %1302 = vmatpush1.msra.mxu0 0.0
        %1303 = vmatprep.subr.mxu0 0.0
        %1304 = vmatpush1.msra.mxu0 0.0
        %1305 = vmatprep.subr.mxu0 0.0
        %1306 = vmatpush1.msra.mxu0 0.0
        %1307 = vmatprep.subr.mxu0 0.0
        %1308 = vmatpush1.msra.mxu0 0.0
        %1309 = vmatprep.subr.mxu0 0.0
        %1310 = vmatpush1.msra.mxu0 0.0
        %1311 = vmatprep.subr.mxu0 0.0
        %1312 = vmatpush1.msra.mxu0 0.0
        %1313 = vmatprep.subr.mxu0 0.0
        %1314 = vmatpush1.msra.mxu0 0.0
        %1315 = vmatprep.subr.mxu0 0.0
        %1316 = vmatpush1.msra.mxu0 0.0
        %1317 = vmatprep.subr.mxu0 0.0
        %1318 = vmatpush1.msra.mxu0 0.0
        %1319 = vmatprep.subr.mxu0 0.0
        %1320 = vmatpush1.msra.mxu0 0.0
        %1321 = vmatprep.subr.mxu0 0.0
        %1322 = vmatpush1.msra.mxu0 0.0
        %1323 = vmatprep.subr.mxu0 0.0
        %1324 = vmatpush1.msra.mxu0 0.0
        %1325 = vmatprep.subr.mxu0 0.0
        %1326 = vmatpush1.msra.mxu0 0.0
        %1327 = vmatprep.subr.mxu0 0.0
        %1328 = vmatpush1.msra.mxu0 0.0
        %1329 = vmatprep.subr.mxu0 0.0
        %1330 = vmatpush1.msra.mxu0 0.0
        %1331 = vmatprep.subr.mxu0 0.0
        %1332 = vmatpush1.msra.mxu0 0.0
        %1333 = vmatprep.subr.mxu0 0.0
        %1334 = vmatpush1.msra.mxu0 0.0
        %1335 = vmatprep.subr.mxu0 0.0
        %1336 = vmatpush1.msra.mxu0 0.0
        %1337 = vmatprep.subr.mxu0 0.0
        %1338 = vmatpush1.msra.mxu0 0.0
        %1339 = vmatprep.subr.mxu0 0.0
        %1340 = vmatpush1.msra.mxu0 0.0
        %1341 = vmatprep.mubr.f32.mxu0 0.0
        %1342 = vmatmul.mubr.f32.gmra.mrb[0].mxu0 %v1272
        %v1343 = vpop.f32.mrb[0].mxu0
        %v1344 = vadd.f32 0.0, %v1343
        %v1345 = vpop.f32.mrb[0].mxu0
        %1346 = vmatprep.mubr.f32.mxu0 0.0
        %1347 = vmatmul.mubr.f32.gmra.mrb[0].mxu0 %v1275
        %v1348 = vpop.f32.mrb[0].mxu0
        %v1349 = vadd.f32 0.0, %v1348
        %v1350 = vpop.f32.mrb[0].mxu0
        %1351 = vdwg.mxu0
        %1352 = vrot.lane.b32.xlu0 %v741, 80
        %v1353 = vpop.permute.xlu0 %1352
        %1354 = vrot.lane.b32.xlu0 %v744, 80
        %v1355 = vpop.permute.xlu0 %1354
        %1356 = vrot.lane.b32.xlu0 %v742, 80
        %v1357 = vpop.permute.xlu0 %1356
        %1358 = vrot.lane.b32.xlu0 %v745, 80
        %v1359 = vpop.permute.xlu0 %1358
        %v1360 = vsel %vm753, %v1353, 0
        %v1362 = vsel %vm753, %v1355, 0
        %v1364 = vsel %vm753, %v1357, 0
        %v1366 = vsel %vm753, %v1359, 0
        %1368 = vmatprep.subr.mxu0 0.0
        %1369 = vmatpush1.xpose.msra.mxu0 %v1364
        %1370 = vmatprep.subr.mxu0 0.0
        %1371 = vmatpush1.xpose.msra.mxu0 %v1366
        %1372 = vmatprep.subr.mxu0 0.0
        %1373 = vmatpush1.xpose.msra.mxu0 0.0
        %1374 = vmatprep.subr.mxu0 0.0
        %1375 = vmatpush1.xpose.msra.mxu0 0.0
        %1376 = vmatprep.subr.mxu0 0.0
        %1377 = vmatpush1.xpose.msra.mxu0 0.0
        %1378 = vmatprep.subr.mxu0 0.0
        %1379 = vmatpush1.xpose.msra.mxu0 0.0
        %1380 = vmatprep.subr.mxu0 0.0
        %1381 = vmatpush1.xpose.msra.mxu0 0.0
        %1382 = vmatprep.subr.mxu0 0.0
        %1383 = vmatpush1.xpose.msra.mxu0 0.0
        %1384 = vmatprep.subr.mxu0 0.0
        %1385 = vmatpush1.xpose.msra.mxu0 0.0
        %1386 = vmatprep.subr.mxu0 0.0
        %1387 = vmatpush1.xpose.msra.mxu0 0.0
        %1388 = vmatprep.subr.mxu0 0.0
        %1389 = vmatpush1.xpose.msra.mxu0 0.0
        %1390 = vmatprep.subr.mxu0 0.0
        %1391 = vmatpush1.xpose.msra.mxu0 0.0
        %1392 = vmatprep.subr.mxu0 0.0
        %1393 = vmatpush1.xpose.msra.mxu0 0.0
        %1394 = vmatprep.subr.mxu0 0.0
        %1395 = vmatpush1.xpose.msra.mxu0 0.0
        %1396 = vmatprep.subr.mxu0 0.0
        %1397 = vmatpush1.xpose.msra.mxu0 0.0
        %1398 = vmatprep.subr.mxu0 0.0
        %1399 = vmatpush1.xpose.msra.mxu0 0.0
        %1400 = vmatprep.subr.mxu0 0.0
        %1401 = vmatpush1.xpose.msra.mxu0 0.0
        %1402 = vmatprep.subr.mxu0 0.0
        %1403 = vmatpush1.xpose.msra.mxu0 0.0
        %1404 = vmatprep.subr.mxu0 0.0
        %1405 = vmatpush1.xpose.msra.mxu0 0.0
        %1406 = vmatprep.subr.mxu0 0.0
        %1407 = vmatpush1.xpose.msra.mxu0 0.0
        %1408 = vmatprep.subr.mxu0 0.0
        %1409 = vmatpush1.xpose.msra.mxu0 0.0
        %1410 = vmatprep.subr.mxu0 0.0
        %1411 = vmatpush1.xpose.msra.mxu0 0.0
        %1412 = vmatprep.subr.mxu0 0.0
        %1413 = vmatpush1.xpose.msra.mxu0 0.0
        %1414 = vmatprep.subr.mxu0 0.0
        %1415 = vmatpush1.xpose.msra.mxu0 0.0
        %1416 = vmatprep.subr.mxu0 0.0
        %1417 = vmatpush1.xpose.msra.mxu0 0.0
        %1418 = vmatprep.subr.mxu0 0.0
        %1419 = vmatpush1.xpose.msra.mxu0 0.0
        %1420 = vmatprep.subr.mxu0 0.0
        %1421 = vmatpush1.xpose.msra.mxu0 0.0
        %1422 = vmatprep.subr.mxu0 0.0
        %1423 = vmatpush1.xpose.msra.mxu0 0.0
        %1424 = vmatprep.subr.mxu0 0.0
        %1425 = vmatpush1.xpose.msra.mxu0 0.0
        %1426 = vmatprep.subr.mxu0 0.0
        %1427 = vmatpush1.xpose.msra.mxu0 0.0
        %1428 = vmatprep.subr.mxu0 0.0
        %1429 = vmatpush1.xpose.msra.mxu0 0.0
        %1430 = vmatprep.subr.mxu0 0.0
        %1431 = vmatpush1.xpose.msra.mxu0 0.0
        %1432 = vmatprep.mubr.f32.mxu0 0.0
        %1433 = vmatmul.mubr.f32.gmra.mrb[0].mxu0 %v1360
        %v1434 = vpop.f32.mrb[0].mxu0
        %v1435 = vadd.f32 0.0, %v1434
        %v1436 = vpop.f32.mrb[0].mxu0
        %1437 = vmatprep.mubr.f32.mxu0 0.0
        %1438 = vmatmul.mubr.f32.gmra.mrb[0].mxu0 %v1362
        %v1439 = vpop.f32.mrb[0].mxu0
        %v1440 = vadd.f32 0.0, %v1439
        %v1441 = vpop.f32.mrb[0].mxu0
        %1442 = vdwg.mxu0
        %v1443 = vmul.f32 %v1435, 0.25
        %v1444 = vmul.f32 %v1440, 0.25
        %v1445 = vsel %vm753, %v1443, -inf
        %1446 = vmax.xlane.f32.xlu0 %v1445
        %v1447 = vpop.xlane.xlu0 %1446
        %v1448 = vsel %vm753, %v1444, -inf
        %1449 = vmax.xlane.f32.xlu0 %v1448
        %v1450 = vpop.xlane.xlu0 %1449
        %v1451 = vsub.f32 %v1443, %v1447
        %v1452 = vsub.f32 %v1444, %v1450
        %v1453 = vmul.f32 %v1451, 1.442695
        %v1454 = vpow.pop %v1453
        %v1455 = vmul.f32 %v1452, 1.442695
        %v1456 = vpow.pop %v1455
        %v1457 = vsel %vm753, %v1454, 0.0
        %1458 = vadd.xlane.f32.xlu0 %v1457
        %v1459 = vpop.xlane.xlu0 %1458
        %v1460 = vsel %vm753, %v1456, 0.0
        %1461 = vadd.xlane.f32.xlu0 %v1460
        %v1462 = vpop.xlane.xlu0 %1461
        %v1463 = vrcp.pop %v1459
        %v1464 = vmul.f32 %v1454, %v1463
        %v1465 = vrcp.pop %v1462
        %v1466 = vmul.f32 %v1456, %v1465
        %1467 = vrot.lane.b32.xlu0 %v743, 80
        %v1468 = vpop.permute.xlu0 %1467
        %1469 = vrot.lane.b32.xlu0 %v746, 80
        %v1470 = vpop.permute.xlu0 %1469
        %v1474 = vsel %vm753, %v1464, 0
        %v1477 = vsel %vm753, %v1466, 0
        %1479 = vmatprep.subr.mxu0 0.0
        %1480 = vmatpush1.msra.mxu0 %v1468
        %1481 = vmatprep.subr.mxu0 0.0
        %1482 = vmatpush1.msra.mxu0 %v1470
        %1483 = vmatprep.subr.mxu0 0.0
        %1484 = vmatpush1.msra.mxu0 0.0
        %1485 = vmatprep.subr.mxu0 0.0
        %1486 = vmatpush1.msra.mxu0 0.0
        %1487 = vmatprep.subr.mxu0 0.0
        %1488 = vmatpush1.msra.mxu0 0.0
        %1489 = vmatprep.subr.mxu0 0.0
        %1490 = vmatpush1.msra.mxu0 0.0
        %1491 = vmatprep.subr.mxu0 0.0
        %1492 = vmatpush1.msra.mxu0 0.0
        %1493 = vmatprep.subr.mxu0 0.0
        %1494 = vmatpush1.msra.mxu0 0.0
        %1495 = vmatprep.subr.mxu0 0.0
        %1496 = vmatpush1.msra.mxu0 0.0
        %1497 = vmatprep.subr.mxu0 0.0
        %1498 = vmatpush1.msra.mxu0 0.0
        %1499 = vmatprep.subr.mxu0 0.0
        %1500 = vmatpush1.msra.mxu0 0.0
        %1501 = vmatprep.subr.mxu0 0.0
        %1502 = vmatpush1.msra.mxu0 0.0
        %1503 = vmatprep.subr.mxu0 0.0
        %1504 = vmatpush1.msra.mxu0 0.0
        %1505 = vmatprep.subr.mxu0 0.0
        %1506 = vmatpush1.msra.mxu0 0.0
        %1507 = vmatprep.subr.mxu0 0.0
        %1508 = vmatpush1.msra.mxu0 0.0
        %1509 = vmatprep.subr.mxu0 0.0
        %1510 = vmatpush1.msra.mxu0 0.0
        %1511 = vmatprep.subr.mxu0 0.0
        %1512 = vmatpush1.msra.mxu0 0.0
        %1513 = vmatprep.subr.mxu0 0.0
        %1514 = vmatpush1.msra.mxu0 0.0
        %1515 = vmatprep.subr.mxu0 0.0
        %1516 = vmatpush1.msra.mxu0 0.0
        %1517 = vmatprep.subr.mxu0 0.0
        %1518 = vmatpush1.msra.mxu0 0.0
        %1519 = vmatprep.subr.mxu0 0.0
        %1520 = vmatpush1.msra.mxu0 0.0
        %1521 = vmatprep.subr.mxu0 0.0
        %1522 = vmatpush1.msra.mxu0 0.0
        %1523 = vmatprep.subr.mxu0 0.0
        %1524 = vmatpush1.msra.mxu0 0.0
        %1525 = vmatprep.subr.mxu0 0.0
        %1526 = vmatpush1.msra.mxu0 0.0
        %1527 = vmatprep.subr.mxu0 0.0
        %1528 = vmatpush1.msra.mxu0 0.0
        %1529 = vmatprep.subr.mxu0 0.0
        %1530 = vmatpush1.msra.mxu0 0.0
        %1531 = vmatprep.subr.mxu0 0.0
        %1532 = vmatpush1.msra.mxu0 0.0
        %1533 = vmatprep.subr.mxu0 0.0
        %1534 = vmatpush1.msra.mxu0 0.0
        %1535 = vmatprep.subr.mxu0 0.0
        %1536 = vmatpush1.msra.mxu0 0.0
        %1537 = vmatprep.subr.mxu0 0.0
        %1538 = vmatpush1.msra.mxu0 0.0
        %1539 = vmatprep.subr.mxu0 0.0
        %1540 = vmatpush1.msra.mxu0 0.0
        %1541 = vmatprep.subr.mxu0 0.0
        %1542 = vmatpush1.msra.mxu0 0.0
        %1543 = vmatprep.mubr.f32.mxu0 0.0
        %1544 = vmatmul.mubr.f32.gmra.mrb[0].mxu0 %v1474
        %v1545 = vpop.f32.mrb[0].mxu0
        %v1546 = vadd.f32 0.0, %v1545
        %v1547 = vpop.f32.mrb[0].mxu0
        %1548 = vmatprep.mubr.f32.mxu0 0.0
        %1549 = vmatmul.mubr.f32.gmra.mrb[0].mxu0 %v1477
        %v1550 = vpop.f32.mrb[0].mxu0
        %v1551 = vadd.f32 0.0, %v1550
        %v1552 = vpop.f32.mrb[0].mxu0
        %1553 = vdwg.mxu0
        %1554 = vrot.lane.b32.xlu0 %v741, 64
        %v1555 = vpop.permute.xlu0 %1554
        %1556 = vrot.lane.b32.xlu0 %v744, 64
        %v1557 = vpop.permute.xlu0 %1556
        %1558 = vrot.lane.b32.xlu0 %v742, 64
        %v1559 = vpop.permute.xlu0 %1558
        %1560 = vrot.lane.b32.xlu0 %v745, 64
        %v1561 = vpop.permute.xlu0 %1560
        %v1562 = vsel %vm753, %v1555, 0
        %v1564 = vsel %vm753, %v1557, 0
        %v1566 = vsel %vm753, %v1559, 0
        %v1568 = vsel %vm753, %v1561, 0
        %1570 = vmatprep.subr.mxu0 0.0
        %1571 = vmatpush1.xpose.msra.mxu0 %v1566
        %1572 = vmatprep.subr.mxu0 0.0
        %1573 = vmatpush1.xpose.msra.mxu0 %v1568
        %1574 = vmatprep.subr.mxu0 0.0
        %1575 = vmatpush1.xpose.msra.mxu0 0.0
        %1576 = vmatprep.subr.mxu0 0.0
        %1577 = vmatpush1.xpose.msra.mxu0 0.0
        %1578 = vmatprep.subr.mxu0 0.0
        %1579 = vmatpush1.xpose.msra.mxu0 0.0
        %1580 = vmatprep.subr.mxu0 0.0
        %1581 = vmatpush1.xpose.msra.mxu0 0.0
        %1582 = vmatprep.subr.mxu0 0.0
        %1583 = vmatpush1.xpose.msra.mxu0 0.0
        %1584 = vmatprep.subr.mxu0 0.0
        %1585 = vmatpush1.xpose.msra.mxu0 0.0
        %1586 = vmatprep.subr.mxu0 0.0
        %1587 = vmatpush1.xpose.msra.mxu0 0.0
        %1588 = vmatprep.subr.mxu0 0.0
        %1589 = vmatpush1.xpose.msra.mxu0 0.0
        %1590 = vmatprep.subr.mxu0 0.0
        %1591 = vmatpush1.xpose.msra.mxu0 0.0
        %1592 = vmatprep.subr.mxu0 0.0
        %1593 = vmatpush1.xpose.msra.mxu0 0.0
        %1594 = vmatprep.subr.mxu0 0.0
        %1595 = vmatpush1.xpose.msra.mxu0 0.0
        %1596 = vmatprep.subr.mxu0 0.0
        %1597 = vmatpush1.xpose.msra.mxu0 0.0
        %1598 = vmatprep.subr.mxu0 0.0
        %1599 = vmatpush1.xpose.msra.mxu0 0.0
        %1600 = vmatprep.subr.mxu0 0.0
        %1601 = vmatpush1.xpose.msra.mxu0 0.0
        %1602 = vmatprep.subr.mxu0 0.0
        %1603 = vmatpush1.xpose.msra.mxu0 0.0
        %1604 = vmatprep.subr.mxu0 0.0
        %1605 = vmatpush1.xpose.msra.mxu0 0.0
        %1606 = vmatprep.subr.mxu0 0.0
        %1607 = vmatpush1.xpose.msra.mxu0 0.0
        %1608 = vmatprep.subr.mxu0 0.0
        %1609 = vmatpush1.xpose.msra.mxu0 0.0
        %1610 = vmatprep.subr.mxu0 0.0
        %1611 = vmatpush1.xpose.msra.mxu0 0.0
        %1612 = vmatprep.subr.mxu0 0.0
        %1613 = vmatpush1.xpose.msra.mxu0 0.0
        %1614 = vmatprep.subr.mxu0 0.0
        %1615 = vmatpush1.xpose.msra.mxu0 0.0
        %1616 = vmatprep.subr.mxu0 0.0
        %1617 = vmatpush1.xpose.msra.mxu0 0.0
        %1618 = vmatprep.subr.mxu0 0.0
        %1619 = vmatpush1.xpose.msra.mxu0 0.0
        %1620 = vmatprep.subr.mxu0 0.0
        %1621 = vmatpush1.xpose.msra.mxu0 0.0
        %1622 = vmatprep.subr.mxu0 0.0
        %1623 = vmatpush1.xpose.msra.mxu0 0.0
        %1624 = vmatprep.subr.mxu0 0.0
        %1625 = vmatpush1.xpose.msra.mxu0 0.0
        %1626 = vmatprep.subr.mxu0 0.0
        %1627 = vmatpush1.xpose.msra.mxu0 0.0
        %1628 = vmatprep.subr.mxu0 0.0
        %1629 = vmatpush1.xpose.msra.mxu0 0.0
        %1630 = vmatprep.subr.mxu0 0.0
        %1631 = vmatpush1.xpose.msra.mxu0 0.0
        %1632 = vmatprep.subr.mxu0 0.0
        %1633 = vmatpush1.xpose.msra.mxu0 0.0
        %1634 = vmatprep.mubr.f32.mxu0 0.0
        %1635 = vmatmul.mubr.f32.gmra.mrb[0].mxu0 %v1562
        %v1636 = vpop.f32.mrb[0].mxu0
        %v1637 = vadd.f32 0.0, %v1636
        %v1638 = vpop.f32.mrb[0].mxu0
        %1639 = vmatprep.mubr.f32.mxu0 0.0
        %1640 = vmatmul.mubr.f32.gmra.mrb[0].mxu0 %v1564
        %v1641 = vpop.f32.mrb[0].mxu0
        %v1642 = vadd.f32 0.0, %v1641
        %v1643 = vpop.f32.mrb[0].mxu0
        %1644 = vdwg.mxu0
        %v1645 = vmul.f32 %v1637, 0.25
        %v1646 = vmul.f32 %v1642, 0.25
        %v1647 = vsel %vm753, %v1645, -inf
        %1648 = vmax.xlane.f32.xlu0 %v1647
        %v1649 = vpop.xlane.xlu0 %1648
        %v1650 = vsel %vm753, %v1646, -inf
        %1651 = vmax.xlane.f32.xlu0 %v1650
        %v1652 = vpop.xlane.xlu0 %1651
        %v1653 = vsub.f32 %v1645, %v1649
        %v1654 = vsub.f32 %v1646, %v1652
        %v1655 = vmul.f32 %v1653, 1.442695
        %v1656 = vpow.pop %v1655
        %v1657 = vmul.f32 %v1654, 1.442695
        %v1658 = vpow.pop %v1657
        %v1659 = vsel %vm753, %v1656, 0.0
        %1660 = vadd.xlane.f32.xlu0 %v1659
        %v1661 = vpop.xlane.xlu0 %1660
        %v1662 = vsel %vm753, %v1658, 0.0
        %1663 = vadd.xlane.f32.xlu0 %v1662
        %v1664 = vpop.xlane.xlu0 %1663
        %v1665 = vrcp.pop %v1661
        %v1666 = vmul.f32 %v1656, %v1665
        %v1667 = vrcp.pop %v1664
        %v1668 = vmul.f32 %v1658, %v1667
        %1669 = vrot.lane.b32.xlu0 %v743, 64
        %v1670 = vpop.permute.xlu0 %1669
        %1671 = vrot.lane.b32.xlu0 %v746, 64
        %v1672 = vpop.permute.xlu0 %1671
        %v1676 = vsel %vm753, %v1666, 0
        %v1679 = vsel %vm753, %v1668, 0
        %1681 = vmatprep.subr.mxu0 0.0
        %1682 = vmatpush1.msra.mxu0 %v1670
        %1683 = vmatprep.subr.mxu0 0.0
        %1684 = vmatpush1.msra.mxu0 %v1672
        %1685 = vmatprep.subr.mxu0 0.0
        %1686 = vmatpush1.msra.mxu0 0.0
        %1687 = vmatprep.subr.mxu0 0.0
        %1688 = vmatpush1.msra.mxu0 0.0
        %1689 = vmatprep.subr.mxu0 0.0
        %1690 = vmatpush1.msra.mxu0 0.0
        %1691 = vmatprep.subr.mxu0 0.0
        %1692 = vmatpush1.msra.mxu0 0.0
        %1693 = vmatprep.subr.mxu0 0.0
        %1694 = vmatpush1.msra.mxu0 0.0
        %1695 = vmatprep.subr.mxu0 0.0
        %1696 = vmatpush1.msra.mxu0 0.0
        %1697 = vmatprep.subr.mxu0 0.0
        %1698 = vmatpush1.msra.mxu0 0.0
        %1699 = vmatprep.subr.mxu0 0.0
        %1700 = vmatpush1.msra.mxu0 0.0
        %1701 = vmatprep.subr.mxu0 0.0
        %1702 = vmatpush1.msra.mxu0 0.0
        %1703 = vmatprep.subr.mxu0 0.0
        %1704 = vmatpush1.msra.mxu0 0.0
        %1705 = vmatprep.subr.mxu0 0.0
        %1706 = vmatpush1.msra.mxu0 0.0
        %1707 = vmatprep.subr.mxu0 0.0
        %1708 = vmatpush1.msra.mxu0 0.0
        %1709 = vmatprep.subr.mxu0 0.0
        %1710 = vmatpush1.msra.mxu0 0.0
        %1711 = vmatprep.subr.mxu0 0.0
        %1712 = vmatpush1.msra.mxu0 0.0
        %1713 = vmatprep.subr.mxu0 0.0
        %1714 = vmatpush1.msra.mxu0 0.0
        %1715 = vmatprep.subr.mxu0 0.0
        %1716 = vmatpush1.msra.mxu0 0.0
        %1717 = vmatprep.subr.mxu0 0.0
        %1718 = vmatpush1.msra.mxu0 0.0
        %1719 = vmatprep.subr.mxu0 0.0
        %1720 = vmatpush1.msra.mxu0 0.0
        %1721 = vmatprep.subr.mxu0 0.0
        %1722 = vmatpush1.msra.mxu0 0.0
        %1723 = vmatprep.subr.mxu0 0.0
        %1724 = vmatpush1.msra.mxu0 0.0
        %1725 = vmatprep.subr.mxu0 0.0
        %1726 = vmatpush1.msra.mxu0 0.0
        %1727 = vmatprep.subr.mxu0 0.0
        %1728 = vmatpush1.msra.mxu0 0.0
        %1729 = vmatprep.subr.mxu0 0.0
        %1730 = vmatpush1.msra.mxu0 0.0
        %1731 = vmatprep.subr.mxu0 0.0
        %1732 = vmatpush1.msra.mxu0 0.0
        %1733 = vmatprep.subr.mxu0 0.0
        %1734 = vmatpush1.msra.mxu0 0.0
        %1735 = vmatprep.subr.mxu0 0.0
        %1736 = vmatpush1.msra.mxu0 0.0
        %1737 = vmatprep.subr.mxu0 0.0
        %1738 = vmatpush1.msra.mxu0 0.0
        %1739 = vmatprep.subr.mxu0 0.0
        %1740 = vmatpush1.msra.mxu0 0.0
        %1741 = vmatprep.subr.mxu0 0.0
        %1742 = vmatpush1.msra.mxu0 0.0
        %1743 = vmatprep.subr.mxu0 0.0
        %1744 = vmatpush1.msra.mxu0 0.0
        %1745 = vmatprep.mubr.f32.mxu0 0.0
        %1746 = vmatmul.mubr.f32.gmra.mrb[0].mxu0 %v1676
        %v1747 = vpop.f32.mrb[0].mxu0
        %v1748 = vadd.f32 0.0, %v1747
        %v1749 = vpop.f32.mrb[0].mxu0
        %1750 = vmatprep.mubr.f32.mxu0 0.0
        %1751 = vmatmul.mubr.f32.gmra.mrb[0].mxu0 %v1679
        %v1752 = vpop.f32.mrb[0].mxu0
        %v1753 = vadd.f32 0.0, %v1752
        %v1754 = vpop.f32.mrb[0].mxu0
        %1755 = vdwg.mxu0
        %1756 = vrot.lane.b32.xlu0 %v741, 48
        %v1757 = vpop.permute.xlu0 %1756
        %1758 = vrot.lane.b32.xlu0 %v744, 48
        %v1759 = vpop.permute.xlu0 %1758
        %1760 = vrot.lane.b32.xlu0 %v742, 48
        %v1761 = vpop.permute.xlu0 %1760
        %1762 = vrot.lane.b32.xlu0 %v745, 48
        %v1763 = vpop.permute.xlu0 %1762
        %v1764 = vsel %vm753, %v1757, 0
        %v1766 = vsel %vm753, %v1759, 0
        %v1768 = vsel %vm753, %v1761, 0
        %v1770 = vsel %vm753, %v1763, 0
        %1772 = vmatprep.subr.mxu0 0.0
        %1773 = vmatpush1.xpose.msra.mxu0 %v1768
        %1774 = vmatprep.subr.mxu0 0.0
        %1775 = vmatpush1.xpose.msra.mxu0 %v1770
        %1776 = vmatprep.subr.mxu0 0.0
        %1777 = vmatpush1.xpose.msra.mxu0 0.0
        %1778 = vmatprep.subr.mxu0 0.0
        %1779 = vmatpush1.xpose.msra.mxu0 0.0
        %1780 = vmatprep.subr.mxu0 0.0
        %1781 = vmatpush1.xpose.msra.mxu0 0.0
        %1782 = vmatprep.subr.mxu0 0.0
        %1783 = vmatpush1.xpose.msra.mxu0 0.0
        %1784 = vmatprep.subr.mxu0 0.0
        %1785 = vmatpush1.xpose.msra.mxu0 0.0
        %1786 = vmatprep.subr.mxu0 0.0
        %1787 = vmatpush1.xpose.msra.mxu0 0.0
        %1788 = vmatprep.subr.mxu0 0.0
        %1789 = vmatpush1.xpose.msra.mxu0 0.0
        %1790 = vmatprep.subr.mxu0 0.0
        %1791 = vmatpush1.xpose.msra.mxu0 0.0
        %1792 = vmatprep.subr.mxu0 0.0
        %1793 = vmatpush1.xpose.msra.mxu0 0.0
        %1794 = vmatprep.subr.mxu0 0.0
        %1795 = vmatpush1.xpose.msra.mxu0 0.0
        %1796 = vmatprep.subr.mxu0 0.0
        %1797 = vmatpush1.xpose.msra.mxu0 0.0
        %1798 = vmatprep.subr.mxu0 0.0
        %1799 = vmatpush1.xpose.msra.mxu0 0.0
        %1800 = vmatprep.subr.mxu0 0.0
        %1801 = vmatpush1.xpose.msra.mxu0 0.0
        %1802 = vmatprep.subr.mxu0 0.0
        %1803 = vmatpush1.xpose.msra.mxu0 0.0
        %1804 = vmatprep.subr.mxu0 0.0
        %1805 = vmatpush1.xpose.msra.mxu0 0.0
        %1806 = vmatprep.subr.mxu0 0.0
        %1807 = vmatpush1.xpose.msra.mxu0 0.0
        %1808 = vmatprep.subr.mxu0 0.0
        %1809 = vmatpush1.xpose.msra.mxu0 0.0
        %1810 = vmatprep.subr.mxu0 0.0
        %1811 = vmatpush1.xpose.msra.mxu0 0.0
        %1812 = vmatprep.subr.mxu0 0.0
        %1813 = vmatpush1.xpose.msra.mxu0 0.0
        %1814 = vmatprep.subr.mxu0 0.0
        %1815 = vmatpush1.xpose.msra.mxu0 0.0
        %1816 = vmatprep.subr.mxu0 0.0
        %1817 = vmatpush1.xpose.msra.mxu0 0.0
        %1818 = vmatprep.subr.mxu0 0.0
        %1819 = vmatpush1.xpose.msra.mxu0 0.0
        %1820 = vmatprep.subr.mxu0 0.0
        %1821 = vmatpush1.xpose.msra.mxu0 0.0
        %1822 = vmatprep.subr.mxu0 0.0
        %1823 = vmatpush1.xpose.msra.mxu0 0.0
        %1824 = vmatprep.subr.mxu0 0.0
        %1825 = vmatpush1.xpose.msra.mxu0 0.0
        %1826 = vmatprep.subr.mxu0 0.0
        %1827 = vmatpush1.xpose.msra.mxu0 0.0
        %1828 = vmatprep.subr.mxu0 0.0
        %1829 = vmatpush1.xpose.msra.mxu0 0.0
        %1830 = vmatprep.subr.mxu0 0.0
        %1831 = vmatpush1.xpose.msra.mxu0 0.0
        %1832 = vmatprep.subr.mxu0 0.0
        %1833 = vmatpush1.xpose.msra.mxu0 0.0
        %1834 = vmatprep.subr.mxu0 0.0
        %1835 = vmatpush1.xpose.msra.mxu0 0.0
        %1836 = vmatprep.mubr.f32.mxu0 0.0
        %1837 = vmatmul.mubr.f32.gmra.mrb[0].mxu0 %v1764
        %v1838 = vpop.f32.mrb[0].mxu0
        %v1839 = vadd.f32 0.0, %v1838
        %v1840 = vpop.f32.mrb[0].mxu0
        %1841 = vmatprep.mubr.f32.mxu0 0.0
        %1842 = vmatmul.mubr.f32.gmra.mrb[0].mxu0 %v1766
        %v1843 = vpop.f32.mrb[0].mxu0
        %v1844 = vadd.f32 0.0, %v1843
        %v1845 = vpop.f32.mrb[0].mxu0
        %1846 = vdwg.mxu0
        %v1847 = vmul.f32 %v1839, 0.25
        %v1848 = vmul.f32 %v1844, 0.25
        %v1849 = vsel %vm753, %v1847, -inf
        %1850 = vmax.xlane.f32.xlu0 %v1849
        %v1851 = vpop.xlane.xlu0 %1850
        %v1852 = vsel %vm753, %v1848, -inf
        %1853 = vmax.xlane.f32.xlu0 %v1852
        %v1854 = vpop.xlane.xlu0 %1853
        %v1855 = vsub.f32 %v1847, %v1851
        %v1856 = vsub.f32 %v1848, %v1854
        %v1857 = vmul.f32 %v1855, 1.442695
        %v1858 = vpow.pop %v1857
        %v1859 = vmul.f32 %v1856, 1.442695
        %v1860 = vpow.pop %v1859
        %v1861 = vsel %vm753, %v1858, 0.0
        %1862 = vadd.xlane.f32.xlu0 %v1861
        %v1863 = vpop.xlane.xlu0 %1862
        %v1864 = vsel %vm753, %v1860, 0.0
        %1865 = vadd.xlane.f32.xlu0 %v1864
        %v1866 = vpop.xlane.xlu0 %1865
        %v1867 = vrcp.pop %v1863
        %v1868 = vmul.f32 %v1858, %v1867
        %v1869 = vrcp.pop %v1866
        %v1870 = vmul.f32 %v1860, %v1869
        %1871 = vrot.lane.b32.xlu0 %v743, 48
        %v1872 = vpop.permute.xlu0 %1871
        %1873 = vrot.lane.b32.xlu0 %v746, 48
        %v1874 = vpop.permute.xlu0 %1873
        %v1878 = vsel %vm753, %v1868, 0
        %v1881 = vsel %vm753, %v1870, 0
        %1883 = vmatprep.subr.mxu0 0.0
        %1884 = vmatpush1.msra.mxu0 %v1872
        %1885 = vmatprep.subr.mxu0 0.0
        %1886 = vmatpush1.msra.mxu0 %v1874
        %1887 = vmatprep.subr.mxu0 0.0
        %1888 = vmatpush1.msra.mxu0 0.0
        %1889 = vmatprep.subr.mxu0 0.0
        %1890 = vmatpush1.msra.mxu0 0.0
        %1891 = vmatprep.subr.mxu0 0.0
        %1892 = vmatpush1.msra.mxu0 0.0
        %1893 = vmatprep.subr.mxu0 0.0
        %1894 = vmatpush1.msra.mxu0 0.0
        %1895 = vmatprep.subr.mxu0 0.0
        %1896 = vmatpush1.msra.mxu0 0.0
        %1897 = vmatprep.subr.mxu0 0.0
        %1898 = vmatpush1.msra.mxu0 0.0
        %1899 = vmatprep.subr.mxu0 0.0
        %1900 = vmatpush1.msra.mxu0 0.0
        %1901 = vmatprep.subr.mxu0 0.0
        %1902 = vmatpush1.msra.mxu0 0.0
        %1903 = vmatprep.subr.mxu0 0.0
        %1904 = vmatpush1.msra.mxu0 0.0
        %1905 = vmatprep.subr.mxu0 0.0
        %1906 = vmatpush1.msra.mxu0 0.0
        %1907 = vmatprep.subr.mxu0 0.0
        %1908 = vmatpush1.msra.mxu0 0.0
        %1909 = vmatprep.subr.mxu0 0.0
        %1910 = vmatpush1.msra.mxu0 0.0
        %1911 = vmatprep.subr.mxu0 0.0
        %1912 = vmatpush1.msra.mxu0 0.0
        %1913 = vmatprep.subr.mxu0 0.0
        %1914 = vmatpush1.msra.mxu0 0.0
        %1915 = vmatprep.subr.mxu0 0.0
        %1916 = vmatpush1.msra.mxu0 0.0
        %1917 = vmatprep.subr.mxu0 0.0
        %1918 = vmatpush1.msra.mxu0 0.0
        %1919 = vmatprep.subr.mxu0 0.0
        %1920 = vmatpush1.msra.mxu0 0.0
        %1921 = vmatprep.subr.mxu0 0.0
        %1922 = vmatpush1.msra.mxu0 0.0
        %1923 = vmatprep.subr.mxu0 0.0
        %1924 = vmatpush1.msra.mxu0 0.0
        %1925 = vmatprep.subr.mxu0 0.0
        %1926 = vmatpush1.msra.mxu0 0.0
        %1927 = vmatprep.subr.mxu0 0.0
        %1928 = vmatpush1.msra.mxu0 0.0
        %1929 = vmatprep.subr.mxu0 0.0
        %1930 = vmatpush1.msra.mxu0 0.0
        %1931 = vmatprep.subr.mxu0 0.0
        %1932 = vmatpush1.msra.mxu0 0.0
        %1933 = vmatprep.subr.mxu0 0.0
        %1934 = vmatpush1.msra.mxu0 0.0
        %1935 = vmatprep.subr.mxu0 0.0
        %1936 = vmatpush1.msra.mxu0 0.0
        %1937 = vmatprep.subr.mxu0 0.0
        %1938 = vmatpush1.msra.mxu0 0.0
        %1939 = vmatprep.subr.mxu0 0.0
        %1940 = vmatpush1.msra.mxu0 0.0
        %1941 = vmatprep.subr.mxu0 0.0
        %1942 = vmatpush1.msra.mxu0 0.0
        %1943 = vmatprep.subr.mxu0 0.0
        %1944 = vmatpush1.msra.mxu0 0.0
        %1945 = vmatprep.subr.mxu0 0.0
        %1946 = vmatpush1.msra.mxu0 0.0
        %1947 = vmatprep.mubr.f32.mxu0 0.0
        %1948 = vmatmul.mubr.f32.gmra.mrb[0].mxu0 %v1878
        %v1949 = vpop.f32.mrb[0].mxu0
        %v1950 = vadd.f32 0.0, %v1949
        %v1951 = vpop.f32.mrb[0].mxu0
        %1952 = vmatprep.mubr.f32.mxu0 0.0
        %1953 = vmatmul.mubr.f32.gmra.mrb[0].mxu0 %v1881
        %v1954 = vpop.f32.mrb[0].mxu0
        %v1955 = vadd.f32 0.0, %v1954
        %v1956 = vpop.f32.mrb[0].mxu0
        %1957 = vdwg.mxu0
        %1958 = vrot.lane.b32.xlu0 %v741, 32
        %v1959 = vpop.permute.xlu0 %1958
        %1960 = vrot.lane.b32.xlu0 %v744, 32
        %v1961 = vpop.permute.xlu0 %1960
        %1962 = vrot.lane.b32.xlu0 %v742, 32
        %v1963 = vpop.permute.xlu0 %1962
        %1964 = vrot.lane.b32.xlu0 %v745, 32
        %v1965 = vpop.permute.xlu0 %1964
        %v1966 = vsel %vm753, %v1959, 0
        %v1968 = vsel %vm753, %v1961, 0
        %v1970 = vsel %vm753, %v1963, 0
        %v1972 = vsel %vm753, %v1965, 0
        %1974 = vmatprep.subr.mxu0 0.0
        %1975 = vmatpush1.xpose.msra.mxu0 %v1970
        %1976 = vmatprep.subr.mxu0 0.0
        %1977 = vmatpush1.xpose.msra.mxu0 %v1972
        %1978 = vmatprep.subr.mxu0 0.0
        %1979 = vmatpush1.xpose.msra.mxu0 0.0
        %1980 = vmatprep.subr.mxu0 0.0
        %1981 = vmatpush1.xpose.msra.mxu0 0.0
        %1982 = vmatprep.subr.mxu0 0.0
        %1983 = vmatpush1.xpose.msra.mxu0 0.0
        %1984 = vmatprep.subr.mxu0 0.0
        %1985 = vmatpush1.xpose.msra.mxu0 0.0
        %1986 = vmatprep.subr.mxu0 0.0
        %1987 = vmatpush1.xpose.msra.mxu0 0.0
        %1988 = vmatprep.subr.mxu0 0.0
        %1989 = vmatpush1.xpose.msra.mxu0 0.0
        %1990 = vmatprep.subr.mxu0 0.0
        %1991 = vmatpush1.xpose.msra.mxu0 0.0
        %1992 = vmatprep.subr.mxu0 0.0
        %1993 = vmatpush1.xpose.msra.mxu0 0.0
        %1994 = vmatprep.subr.mxu0 0.0
        %1995 = vmatpush1.xpose.msra.mxu0 0.0
        %1996 = vmatprep.subr.mxu0 0.0
        %1997 = vmatpush1.xpose.msra.mxu0 0.0
        %1998 = vmatprep.subr.mxu0 0.0
        %1999 = vmatpush1.xpose.msra.mxu0 0.0
        %2000 = vmatprep.subr.mxu0 0.0
        %2001 = vmatpush1.xpose.msra.mxu0 0.0
        %2002 = vmatprep.subr.mxu0 0.0
        %2003 = vmatpush1.xpose.msra.mxu0 0.0
        %2004 = vmatprep.subr.mxu0 0.0
        %2005 = vmatpush1.xpose.msra.mxu0 0.0
        %2006 = vmatprep.subr.mxu0 0.0
        %2007 = vmatpush1.xpose.msra.mxu0 0.0
        %2008 = vmatprep.subr.mxu0 0.0
        %2009 = vmatpush1.xpose.msra.mxu0 0.0
        %2010 = vmatprep.subr.mxu0 0.0
        %2011 = vmatpush1.xpose.msra.mxu0 0.0
        %2012 = vmatprep.subr.mxu0 0.0
        %2013 = vmatpush1.xpose.msra.mxu0 0.0
        %2014 = vmatprep.subr.mxu0 0.0
        %2015 = vmatpush1.xpose.msra.mxu0 0.0
        %2016 = vmatprep.subr.mxu0 0.0
        %2017 = vmatpush1.xpose.msra.mxu0 0.0
        %2018 = vmatprep.subr.mxu0 0.0
        %2019 = vmatpush1.xpose.msra.mxu0 0.0
        %2020 = vmatprep.subr.mxu0 0.0
        %2021 = vmatpush1.xpose.msra.mxu0 0.0
        %2022 = vmatprep.subr.mxu0 0.0
        %2023 = vmatpush1.xpose.msra.mxu0 0.0
        %2024 = vmatprep.subr.mxu0 0.0
        %2025 = vmatpush1.xpose.msra.mxu0 0.0
        %2026 = vmatprep.subr.mxu0 0.0
        %2027 = vmatpush1.xpose.msra.mxu0 0.0
        %2028 = vmatprep.subr.mxu0 0.0
        %2029 = vmatpush1.xpose.msra.mxu0 0.0
        %2030 = vmatprep.subr.mxu0 0.0
        %2031 = vmatpush1.xpose.msra.mxu0 0.0
        %2032 = vmatprep.subr.mxu0 0.0
        %2033 = vmatpush1.xpose.msra.mxu0 0.0
        %2034 = vmatprep.subr.mxu0 0.0
        %2035 = vmatpush1.xpose.msra.mxu0 0.0
        %2036 = vmatprep.subr.mxu0 0.0
        %2037 = vmatpush1.xpose.msra.mxu0 0.0
        %2038 = vmatprep.mubr.f32.mxu0 0.0
        %2039 = vmatmul.mubr.f32.gmra.mrb[0].mxu0 %v1966
        %v2040 = vpop.f32.mrb[0].mxu0
        %v2041 = vadd.f32 0.0, %v2040
        %v2042 = vpop.f32.mrb[0].mxu0
        %2043 = vmatprep.mubr.f32.mxu0 0.0
        %2044 = vmatmul.mubr.f32.gmra.mrb[0].mxu0 %v1968
        %v2045 = vpop.f32.mrb[0].mxu0
        %v2046 = vadd.f32 0.0, %v2045
        %v2047 = vpop.f32.mrb[0].mxu0
        %2048 = vdwg.mxu0
        %v2049 = vmul.f32 %v2041, 0.25
        %v2050 = vmul.f32 %v2046, 0.25
        %v2051 = vsel %vm753, %v2049, -inf
        %2052 = vmax.xlane.f32.xlu0 %v2051
        %v2053 = vpop.xlane.xlu0 %2052
        %v2054 = vsel %vm753, %v2050, -inf
        %2055 = vmax.xlane.f32.xlu0 %v2054
        %v2056 = vpop.xlane.xlu0 %2055
        %v2057 = vsub.f32 %v2049, %v2053
        %v2058 = vsub.f32 %v2050, %v2056
        %v2059 = vmul.f32 %v2057, 1.442695
        %v2060 = vpow.pop %v2059
        %v2061 = vmul.f32 %v2058, 1.442695
        %v2062 = vpow.pop %v2061
        %v2063 = vsel %vm753, %v2060, 0.0
        %2064 = vadd.xlane.f32.xlu0 %v2063
        %v2065 = vpop.xlane.xlu0 %2064
        %v2066 = vsel %vm753, %v2062, 0.0
        %2067 = vadd.xlane.f32.xlu0 %v2066
        %v2068 = vpop.xlane.xlu0 %2067
        %v2069 = vrcp.pop %v2065
        %v2070 = vmul.f32 %v2060, %v2069
        %v2071 = vrcp.pop %v2068
        %v2072 = vmul.f32 %v2062, %v2071
        %2073 = vrot.lane.b32.xlu0 %v743, 32
        %v2074 = vpop.permute.xlu0 %2073
        %2075 = vrot.lane.b32.xlu0 %v746, 32
        %v2076 = vpop.permute.xlu0 %2075
        %v2080 = vsel %vm753, %v2070, 0
        %v2083 = vsel %vm753, %v2072, 0
        %2085 = vmatprep.subr.mxu0 0.0
        %2086 = vmatpush1.msra.mxu0 %v2074
        %2087 = vmatprep.subr.mxu0 0.0
        %2088 = vmatpush1.msra.mxu0 %v2076
        %2089 = vmatprep.subr.mxu0 0.0
        %2090 = vmatpush1.msra.mxu0 0.0
        %2091 = vmatprep.subr.mxu0 0.0
        %2092 = vmatpush1.msra.mxu0 0.0
        %2093 = vmatprep.subr.mxu0 0.0
        %2094 = vmatpush1.msra.mxu0 0.0
        %2095 = vmatprep.subr.mxu0 0.0
        %2096 = vmatpush1.msra.mxu0 0.0
        %2097 = vmatprep.subr.mxu0 0.0
        %2098 = vmatpush1.msra.mxu0 0.0
        %2099 = vmatprep.subr.mxu0 0.0
        %2100 = vmatpush1.msra.mxu0 0.0
        %2101 = vmatprep.subr.mxu0 0.0
        %2102 = vmatpush1.msra.mxu0 0.0
        %2103 = vmatprep.subr.mxu0 0.0
        %2104 = vmatpush1.msra.mxu0 0.0
        %2105 = vmatprep.subr.mxu0 0.0
        %2106 = vmatpush1.msra.mxu0 0.0
        %2107 = vmatprep.subr.mxu0 0.0
        %2108 = vmatpush1.msra.mxu0 0.0
        %2109 = vmatprep.subr.mxu0 0.0
        %2110 = vmatpush1.msra.mxu0 0.0
        %2111 = vmatprep.subr.mxu0 0.0
        %2112 = vmatpush1.msra.mxu0 0.0
        %2113 = vmatprep.subr.mxu0 0.0
        %2114 = vmatpush1.msra.mxu0 0.0
        %2115 = vmatprep.subr.mxu0 0.0
        %2116 = vmatpush1.msra.mxu0 0.0
        %2117 = vmatprep.subr.mxu0 0.0
        %2118 = vmatpush1.msra.mxu0 0.0
        %2119 = vmatprep.subr.mxu0 0.0
        %2120 = vmatpush1.msra.mxu0 0.0
        %2121 = vmatprep.subr.mxu0 0.0
        %2122 = vmatpush1.msra.mxu0 0.0
        %2123 = vmatprep.subr.mxu0 0.0
        %2124 = vmatpush1.msra.mxu0 0.0
        %2125 = vmatprep.subr.mxu0 0.0
        %2126 = vmatpush1.msra.mxu0 0.0
        %2127 = vmatprep.subr.mxu0 0.0
        %2128 = vmatpush1.msra.mxu0 0.0
        %2129 = vmatprep.subr.mxu0 0.0
        %2130 = vmatpush1.msra.mxu0 0.0
        %2131 = vmatprep.subr.mxu0 0.0
        %2132 = vmatpush1.msra.mxu0 0.0
        %2133 = vmatprep.subr.mxu0 0.0
        %2134 = vmatpush1.msra.mxu0 0.0
        %2135 = vmatprep.subr.mxu0 0.0
        %2136 = vmatpush1.msra.mxu0 0.0
        %2137 = vmatprep.subr.mxu0 0.0
        %2138 = vmatpush1.msra.mxu0 0.0
        %2139 = vmatprep.subr.mxu0 0.0
        %2140 = vmatpush1.msra.mxu0 0.0
        %2141 = vmatprep.subr.mxu0 0.0
        %2142 = vmatpush1.msra.mxu0 0.0
        %2143 = vmatprep.subr.mxu0 0.0
        %2144 = vmatpush1.msra.mxu0 0.0
        %2145 = vmatprep.subr.mxu0 0.0
        %2146 = vmatpush1.msra.mxu0 0.0
        %2147 = vmatprep.subr.mxu0 0.0
        %2148 = vmatpush1.msra.mxu0 0.0
        %2149 = vmatprep.mubr.f32.mxu0 0.0
        %2150 = vmatmul.mubr.f32.gmra.mrb[0].mxu0 %v2080
        %v2151 = vpop.f32.mrb[0].mxu0
        %v2152 = vadd.f32 0.0, %v2151
        %v2153 = vpop.f32.mrb[0].mxu0
        %2154 = vmatprep.mubr.f32.mxu0 0.0
        %2155 = vmatmul.mubr.f32.gmra.mrb[0].mxu0 %v2083
        %v2156 = vpop.f32.mrb[0].mxu0
        %v2157 = vadd.f32 0.0, %v2156
        %v2158 = vpop.f32.mrb[0].mxu0
        %2159 = vdwg.mxu0
        %2160 = vrot.lane.b32.xlu0 %v741, 16
        %v2161 = vpop.permute.xlu0 %2160
        %2162 = vrot.lane.b32.xlu0 %v744, 16
        %v2163 = vpop.permute.xlu0 %2162
        %2164 = vrot.lane.b32.xlu0 %v742, 16
        %v2165 = vpop.permute.xlu0 %2164
        %2166 = vrot.lane.b32.xlu0 %v745, 16
        %v2167 = vpop.permute.xlu0 %2166
        %v2168 = vsel %vm753, %v2161, 0
        %v2170 = vsel %vm753, %v2163, 0
        %v2172 = vsel %vm753, %v2165, 0
        %v2174 = vsel %vm753, %v2167, 0
        %2176 = vmatprep.subr.mxu0 0.0
        %2177 = vmatpush1.xpose.msra.mxu0 %v2172
        %2178 = vmatprep.subr.mxu0 0.0
        %2179 = vmatpush1.xpose.msra.mxu0 %v2174
        %2180 = vmatprep.subr.mxu0 0.0
        %2181 = vmatpush1.xpose.msra.mxu0 0.0
        %2182 = vmatprep.subr.mxu0 0.0
        %2183 = vmatpush1.xpose.msra.mxu0 0.0
        %2184 = vmatprep.subr.mxu0 0.0
        %2185 = vmatpush1.xpose.msra.mxu0 0.0
        %2186 = vmatprep.subr.mxu0 0.0
        %2187 = vmatpush1.xpose.msra.mxu0 0.0
        %2188 = vmatprep.subr.mxu0 0.0
        %2189 = vmatpush1.xpose.msra.mxu0 0.0
        %2190 = vmatprep.subr.mxu0 0.0
        %2191 = vmatpush1.xpose.msra.mxu0 0.0
        %2192 = vmatprep.subr.mxu0 0.0
        %2193 = vmatpush1.xpose.msra.mxu0 0.0
        %2194 = vmatprep.subr.mxu0 0.0
        %2195 = vmatpush1.xpose.msra.mxu0 0.0
        %2196 = vmatprep.subr.mxu0 0.0
        %2197 = vmatpush1.xpose.msra.mxu0 0.0
        %2198 = vmatprep.subr.mxu0 0.0
        %2199 = vmatpush1.xpose.msra.mxu0 0.0
        %2200 = vmatprep.subr.mxu0 0.0
        %2201 = vmatpush1.xpose.msra.mxu0 0.0
        %2202 = vmatprep.subr.mxu0 0.0
        %2203 = vmatpush1.xpose.msra.mxu0 0.0
        %2204 = vmatprep.subr.mxu0 0.0
        %2205 = vmatpush1.xpose.msra.mxu0 0.0
        %2206 = vmatprep.subr.mxu0 0.0
        %2207 = vmatpush1.xpose.msra.mxu0 0.0
        %2208 = vmatprep.subr.mxu0 0.0
        %2209 = vmatpush1.xpose.msra.mxu0 0.0
        %2210 = vmatprep.subr.mxu0 0.0
        %2211 = vmatpush1.xpose.msra.mxu0 0.0
        %2212 = vmatprep.subr.mxu0 0.0
        %2213 = vmatpush1.xpose.msra.mxu0 0.0
        %2214 = vmatprep.subr.mxu0 0.0
        %2215 = vmatpush1.xpose.msra.mxu0 0.0
        %2216 = vmatprep.subr.mxu0 0.0
        %2217 = vmatpush1.xpose.msra.mxu0 0.0
        %2218 = vmatprep.subr.mxu0 0.0
        %2219 = vmatpush1.xpose.msra.mxu0 0.0
        %2220 = vmatprep.subr.mxu0 0.0
        %2221 = vmatpush1.xpose.msra.mxu0 0.0
        %2222 = vmatprep.subr.mxu0 0.0
        %2223 = vmatpush1.xpose.msra.mxu0 0.0
        %2224 = vmatprep.subr.mxu0 0.0
        %2225 = vmatpush1.xpose.msra.mxu0 0.0
        %2226 = vmatprep.subr.mxu0 0.0
        %2227 = vmatpush1.xpose.msra.mxu0 0.0
        %2228 = vmatprep.subr.mxu0 0.0
        %2229 = vmatpush1.xpose.msra.mxu0 0.0
        %2230 = vmatprep.subr.mxu0 0.0
        %2231 = vmatpush1.xpose.msra.mxu0 0.0
        %2232 = vmatprep.subr.mxu0 0.0
        %2233 = vmatpush1.xpose.msra.mxu0 0.0
        %2234 = vmatprep.subr.mxu0 0.0
        %2235 = vmatpush1.xpose.msra.mxu0 0.0
        %2236 = vmatprep.subr.mxu0 0.0
        %2237 = vmatpush1.xpose.msra.mxu0 0.0
        %2238 = vmatprep.subr.mxu0 0.0
        %2239 = vmatpush1.xpose.msra.mxu0 0.0
        %2240 = vmatprep.mubr.f32.mxu0 0.0
        %2241 = vmatmul.mubr.f32.gmra.mrb[0].mxu0 %v2168
        %v2242 = vpop.f32.mrb[0].mxu0
        %v2243 = vadd.f32 0.0, %v2242
        %v2244 = vpop.f32.mrb[0].mxu0
        %2245 = vmatprep.mubr.f32.mxu0 0.0
        %2246 = vmatmul.mubr.f32.gmra.mrb[0].mxu0 %v2170
        %v2247 = vpop.f32.mrb[0].mxu0
        %v2248 = vadd.f32 0.0, %v2247
        %v2249 = vpop.f32.mrb[0].mxu0
        %2250 = vdwg.mxu0
        %v2251 = vmul.f32 %v2243, 0.25
        %v2252 = vmul.f32 %v2248, 0.25
        %v2253 = vsel %vm753, %v2251, -inf
        %2254 = vmax.xlane.f32.xlu0 %v2253
        %v2255 = vpop.xlane.xlu0 %2254
        %v2256 = vsel %vm753, %v2252, -inf
        %2257 = vmax.xlane.f32.xlu0 %v2256
        %v2258 = vpop.xlane.xlu0 %2257
        %v2259 = vsub.f32 %v2251, %v2255
        %v2260 = vsub.f32 %v2252, %v2258
        %v2261 = vmul.f32 %v2259, 1.442695
        %v2262 = vpow.pop %v2261
        %v2263 = vmul.f32 %v2260, 1.442695
        %v2264 = vpow.pop %v2263
        %v2265 = vsel %vm753, %v2262, 0.0
        %2266 = vadd.xlane.f32.xlu0 %v2265
        %v2267 = vpop.xlane.xlu0 %2266
        %v2268 = vsel %vm753, %v2264, 0.0
        %2269 = vadd.xlane.f32.xlu0 %v2268
        %v2270 = vpop.xlane.xlu0 %2269
        %v2271 = vrcp.pop %v2267
        %v2272 = vmul.f32 %v2262, %v2271
        %v2273 = vrcp.pop %v2270
        %v2274 = vmul.f32 %v2264, %v2273
        %2275 = vrot.lane.b32.xlu0 %v743, 16
        %v2276 = vpop.permute.xlu0 %2275
        %2277 = vrot.lane.b32.xlu0 %v746, 16
        %v2278 = vpop.permute.xlu0 %2277
        %v2282 = vsel %vm753, %v2272, 0
        %v2285 = vsel %vm753, %v2274, 0
        %2287 = vmatprep.subr.mxu0 0.0
        %2288 = vmatpush1.msra.mxu0 %v2276
        %2289 = vmatprep.subr.mxu0 0.0
        %2290 = vmatpush1.msra.mxu0 %v2278
        %2291 = vmatprep.subr.mxu0 0.0
        %2292 = vmatpush1.msra.mxu0 0.0
        %2293 = vmatprep.subr.mxu0 0.0
        %2294 = vmatpush1.msra.mxu0 0.0
        %2295 = vmatprep.subr.mxu0 0.0
        %2296 = vmatpush1.msra.mxu0 0.0
        %2297 = vmatprep.subr.mxu0 0.0
        %2298 = vmatpush1.msra.mxu0 0.0
        %2299 = vmatprep.subr.mxu0 0.0
        %2300 = vmatpush1.msra.mxu0 0.0
        %2301 = vmatprep.subr.mxu0 0.0
        %2302 = vmatpush1.msra.mxu0 0.0
        %2303 = vmatprep.subr.mxu0 0.0
        %2304 = vmatpush1.msra.mxu0 0.0
        %2305 = vmatprep.subr.mxu0 0.0
        %2306 = vmatpush1.msra.mxu0 0.0
        %2307 = vmatprep.subr.mxu0 0.0
        %2308 = vmatpush1.msra.mxu0 0.0
        %2309 = vmatprep.subr.mxu0 0.0
        %2310 = vmatpush1.msra.mxu0 0.0
        %2311 = vmatprep.subr.mxu0 0.0
        %2312 = vmatpush1.msra.mxu0 0.0
        %2313 = vmatprep.subr.mxu0 0.0
        %2314 = vmatpush1.msra.mxu0 0.0
        %2315 = vmatprep.subr.mxu0 0.0
        %2316 = vmatpush1.msra.mxu0 0.0
        %2317 = vmatprep.subr.mxu0 0.0
        %2318 = vmatpush1.msra.mxu0 0.0
        %2319 = vmatprep.subr.mxu0 0.0
        %2320 = vmatpush1.msra.mxu0 0.0
        %2321 = vmatprep.subr.mxu0 0.0
        %2322 = vmatpush1.msra.mxu0 0.0
        %2323 = vmatprep.subr.mxu0 0.0
        %2324 = vmatpush1.msra.mxu0 0.0
        %2325 = vmatprep.subr.mxu0 0.0
        %2326 = vmatpush1.msra.mxu0 0.0
        %2327 = vmatprep.subr.mxu0 0.0
        %2328 = vmatpush1.msra.mxu0 0.0
        %2329 = vmatprep.subr.mxu0 0.0
        %2330 = vmatpush1.msra.mxu0 0.0
        %2331 = vmatprep.subr.mxu0 0.0
        %2332 = vmatpush1.msra.mxu0 0.0
        %2333 = vmatprep.subr.mxu0 0.0
        %2334 = vmatpush1.msra.mxu0 0.0
        %2335 = vmatprep.subr.mxu0 0.0
        %2336 = vmatpush1.msra.mxu0 0.0
        %2337 = vmatprep.subr.mxu0 0.0
        %2338 = vmatpush1.msra.mxu0 0.0
        %2339 = vmatprep.subr.mxu0 0.0
        %2340 = vmatpush1.msra.mxu0 0.0
        %2341 = vmatprep.subr.mxu0 0.0
        %2342 = vmatpush1.msra.mxu0 0.0
        %2343 = vmatprep.subr.mxu0 0.0
        %2344 = vmatpush1.msra.mxu0 0.0
        %2345 = vmatprep.subr.mxu0 0.0
        %2346 = vmatpush1.msra.mxu0 0.0
        %2347 = vmatprep.subr.mxu0 0.0
        %2348 = vmatpush1.msra.mxu0 0.0
        %2349 = vmatprep.subr.mxu0 0.0
        %2350 = vmatpush1.msra.mxu0 0.0
        %2351 = vmatprep.mubr.f32.mxu0 0.0
        %2352 = vmatmul.mubr.f32.gmra.mrb[0].mxu0 %v2282
        %v2353 = vpop.f32.mrb[0].mxu0
        %v2354 = vadd.f32 0.0, %v2353
        %v2355 = vpop.f32.mrb[0].mxu0
        %2356 = vmatprep.mubr.f32.mxu0 0.0
        %2357 = vmatmul.mubr.f32.gmra.mrb[0].mxu0 %v2285
        %v2358 = vpop.f32.mrb[0].mxu0
        %v2359 = vadd.f32 0.0, %v2358
        %v2360 = vpop.f32.mrb[0].mxu0
        %2361 = vdwg.mxu0
        %2364 = vrot.lane.b32.xlu0 %v1142, 16
        %v2365 = vpop.permute.xlu0 %2364
        %2366 = vrot.lane.b32.xlu0 %v1147, 16
        %v2367 = vpop.permute.xlu0 %2366
        %2372 = vrot.lane.b32.xlu0 %v1344, 32
        %v2373 = vpop.permute.xlu0 %2372
        %2374 = vrot.lane.b32.xlu0 %v1349, 32
        %v2375 = vpop.permute.xlu0 %2374
        %2380 = vrot.lane.b32.xlu0 %v1546, 48
        %v2381 = vpop.permute.xlu0 %2380
        %2382 = vrot.lane.b32.xlu0 %v1551, 48
        %v2383 = vpop.permute.xlu0 %2382
        %2388 = vrot.lane.b32.xlu0 %v1748, 64
        %v2389 = vpop.permute.xlu0 %2388
        %2390 = vrot.lane.b32.xlu0 %v1753, 64
        %v2391 = vpop.permute.xlu0 %2390
        %2396 = vrot.lane.b32.xlu0 %v1950, 80
        %v2397 = vpop.permute.xlu0 %2396
        %2398 = vrot.lane.b32.xlu0 %v1955, 80
        %v2399 = vpop.permute.xlu0 %2398
        %2404 = vrot.lane.b32.xlu0 %v2152, 96
        %v2405 = vpop.permute.xlu0 %2404
        %2406 = vrot.lane.b32.xlu0 %v2157, 96
        %v2407 = vpop.permute.xlu0 %2406
        %2412 = vrot.lane.b32.xlu0 %v2354, 112
        %v2413 = vpop.permute.xlu0 %2412
        %2414 = vrot.lane.b32.xlu0 %v2359, 112
        %v2415 = vpop.permute.xlu0 %2414
        %v2418 = vsel %vm753, %v938, %v2365
        %v2419 = vsel %vm753, %v943, %v2367
        %vm2420 = vcmask 261120
        %v2421 = vsel %vm2420, %v2418, %v2373
        %v2422 = vsel %vm2420, %v2419, %v2375
        %vm2423 = vcmask 392192
        %v2424 = vsel %vm2423, %v2421, %v2381
        %v2425 = vsel %vm2423, %v2422, %v2383
        %vm2426 = vcmask 523264
        %v2427 = vsel %vm2426, %v2424, %v2389
        %v2428 = vsel %vm2426, %v2425, %v2391
        %vm2429 = vcmask 654336
        %v2430 = vsel %vm2429, %v2427, %v2397
        %v2431 = vsel %vm2429, %v2428, %v2399
        %vm2432 = vcmask 785408
        %v2433 = vsel %vm2432, %v2430, %v2405
        %v2434 = vsel %vm2432, %v2431, %v2407
        %vm2435 = vcmask 916480
        %v2436 = vsel %vm2435, %v2433, %v2413
        %v2437 = vsel %vm2435, %v2434, %v2415
        %v2439 = vsel %vm753, %v747, 0
        %v2442 = vsel %vm753, %v750, 0
        %v2445 = vsel %vm753, %v748, 0
        %v2448 = vsel %vm753, %v751, 0
        %2450 = vmatprep.subr.mxu0 0.0
        %2451 = vmatpush1.xpose.msra.mxu0 %v2445
        %2452 = vmatprep.subr.mxu0 0.0
        %2453 = vmatpush1.xpose.msra.mxu0 %v2448
        %2454 = vmatprep.subr.mxu0 0.0
        %2455 = vmatpush1.xpose.msra.mxu0 0.0
        %2456 = vmatprep.subr.mxu0 0.0
        %2457 = vmatpush1.xpose.msra.mxu0 0.0
        %2458 = vmatprep.subr.mxu0 0.0
        %2459 = vmatpush1.xpose.msra.mxu0 0.0
        %2460 = vmatprep.subr.mxu0 0.0
        %2461 = vmatpush1.xpose.msra.mxu0 0.0
        %2462 = vmatprep.subr.mxu0 0.0
        %2463 = vmatpush1.xpose.msra.mxu0 0.0
        %2464 = vmatprep.subr.mxu0 0.0
        %2465 = vmatpush1.xpose.msra.mxu0 0.0
        %2466 = vmatprep.subr.mxu0 0.0
        %2467 = vmatpush1.xpose.msra.mxu0 0.0
        %2468 = vmatprep.subr.mxu0 0.0
        %2469 = vmatpush1.xpose.msra.mxu0 0.0
        %2470 = vmatprep.subr.mxu0 0.0
        %2471 = vmatpush1.xpose.msra.mxu0 0.0
        %2472 = vmatprep.subr.mxu0 0.0
        %2473 = vmatpush1.xpose.msra.mxu0 0.0
        %2474 = vmatprep.subr.mxu0 0.0
        %2475 = vmatpush1.xpose.msra.mxu0 0.0
        %2476 = vmatprep.subr.mxu0 0.0
        %2477 = vmatpush1.xpose.msra.mxu0 0.0
        %2478 = vmatprep.subr.mxu0 0.0
        %2479 = vmatpush1.xpose.msra.mxu0 0.0
        %2480 = vmatprep.subr.mxu0 0.0
        %2481 = vmatpush1.xpose.msra.mxu0 0.0
        %2482 = vmatprep.subr.mxu0 0.0
        %2483 = vmatpush1.xpose.msra.mxu0 0.0
        %2484 = vmatprep.subr.mxu0 0.0
        %2485 = vmatpush1.xpose.msra.mxu0 0.0
        %2486 = vmatprep.subr.mxu0 0.0
        %2487 = vmatpush1.xpose.msra.mxu0 0.0
        %2488 = vmatprep.subr.mxu0 0.0
        %2489 = vmatpush1.xpose.msra.mxu0 0.0
        %2490 = vmatprep.subr.mxu0 0.0
        %2491 = vmatpush1.xpose.msra.mxu0 0.0
        %2492 = vmatprep.subr.mxu0 0.0
        %2493 = vmatpush1.xpose.msra.mxu0 0.0
        %2494 = vmatprep.subr.mxu0 0.0
        %2495 = vmatpush1.xpose.msra.mxu0 0.0
        %2496 = vmatprep.subr.mxu0 0.0
        %2497 = vmatpush1.xpose.msra.mxu0 0.0
        %2498 = vmatprep.subr.mxu0 0.0
        %2499 = vmatpush1.xpose.msra.mxu0 0.0
        %2500 = vmatprep.subr.mxu0 0.0
        %2501 = vmatpush1.xpose.msra.mxu0 0.0
        %2502 = vmatprep.subr.mxu0 0.0
        %2503 = vmatpush1.xpose.msra.mxu0 0.0
        %2504 = vmatprep.subr.mxu0 0.0
        %2505 = vmatpush1.xpose.msra.mxu0 0.0
        %2506 = vmatprep.subr.mxu0 0.0
        %2507 = vmatpush1.xpose.msra.mxu0 0.0
        %2508 = vmatprep.subr.mxu0 0.0
        %2509 = vmatpush1.xpose.msra.mxu0 0.0
        %2510 = vmatprep.subr.mxu0 0.0
        %2511 = vmatpush1.xpose.msra.mxu0 0.0
        %2512 = vmatprep.subr.mxu0 0.0
        %2513 = vmatpush1.xpose.msra.mxu0 0.0
        %2514 = vmatprep.mubr.f32.mxu0 0.0
        %2515 = vmatmul.mubr.f32.gmra.mrb[0].mxu0 %v2439
        %v2516 = vpop.f32.mrb[0].mxu0
        %v2517 = vadd.f32 0.0, %v2516
        %v2518 = vpop.f32.mrb[0].mxu0
        %2519 = vmatprep.mubr.f32.mxu0 0.0
        %2520 = vmatmul.mubr.f32.gmra.mrb[0].mxu0 %v2442
        %v2521 = vpop.f32.mrb[0].mxu0
        %v2522 = vadd.f32 0.0, %v2521
        %v2523 = vpop.f32.mrb[0].mxu0
        %2524 = vdwg.mxu0
        %v2525 = vmul.f32 %v2517, 0.25
        %v2526 = vmul.f32 %v2522, 0.25
        %v2527 = vsel %vm753, %v2525, -inf
        %2528 = vmax.xlane.f32.xlu0 %v2527
        %v2529 = vpop.xlane.xlu0 %2528
        %v2530 = vsel %vm753, %v2526, -inf
        %2531 = vmax.xlane.f32.xlu0 %v2530
        %v2532 = vpop.xlane.xlu0 %2531
        %v2533 = vsub.f32 %v2525, %v2529
        %v2534 = vsub.f32 %v2526, %v2532
        %v2535 = vmul.f32 %v2533, 1.442695
        %v2536 = vpow.pop %v2535
        %v2537 = vmul.f32 %v2534, 1.442695
        %v2538 = vpow.pop %v2537
        %v2539 = vsel %vm753, %v2536, 0.0
        %2540 = vadd.xlane.f32.xlu0 %v2539
        %v2541 = vpop.xlane.xlu0 %2540
        %v2542 = vsel %vm753, %v2538, 0.0
        %2543 = vadd.xlane.f32.xlu0 %v2542
        %v2544 = vpop.xlane.xlu0 %2543
        %v2545 = vrcp.pop %v2541
        %v2546 = vmul.f32 %v2536, %v2545
        %v2547 = vrcp.pop %v2544
        %v2548 = vmul.f32 %v2538, %v2547
        %v2550 = vsel %vm753, %v2546, 0
        %v2553 = vsel %vm753, %v2548, 0
        %2555 = vmatprep.subr.mxu0 0.0
        %2556 = vmatpush1.msra.mxu0 %v749
        %2557 = vmatprep.subr.mxu0 0.0
        %2558 = vmatpush1.msra.mxu0 %v752
        %2559 = vmatprep.subr.mxu0 0.0
        %2560 = vmatpush1.msra.mxu0 0.0
        %2561 = vmatprep.subr.mxu0 0.0
        %2562 = vmatpush1.msra.mxu0 0.0
        %2563 = vmatprep.subr.mxu0 0.0
        %2564 = vmatpush1.msra.mxu0 0.0
        %2565 = vmatprep.subr.mxu0 0.0
        %2566 = vmatpush1.msra.mxu0 0.0
        %2567 = vmatprep.subr.mxu0 0.0
        %2568 = vmatpush1.msra.mxu0 0.0
        %2569 = vmatprep.subr.mxu0 0.0
        %2570 = vmatpush1.msra.mxu0 0.0
        %2571 = vmatprep.subr.mxu0 0.0
        %2572 = vmatpush1.msra.mxu0 0.0
        %2573 = vmatprep.subr.mxu0 0.0
        %2574 = vmatpush1.msra.mxu0 0.0
        %2575 = vmatprep.subr.mxu0 0.0
        %2576 = vmatpush1.msra.mxu0 0.0
        %2577 = vmatprep.subr.mxu0 0.0
        %2578 = vmatpush1.msra.mxu0 0.0
        %2579 = vmatprep.subr.mxu0 0.0
        %2580 = vmatpush1.msra.mxu0 0.0
        %2581 = vmatprep.subr.mxu0 0.0
        %2582 = vmatpush1.msra.mxu0 0.0
        %2583 = vmatprep.subr.mxu0 0.0
        %2584 = vmatpush1.msra.mxu0 0.0
        %2585 = vmatprep.subr.mxu0 0.0
        %2586 = vmatpush1.msra.mxu0 0.0
        %2587 = vmatprep.subr.mxu0 0.0
        %2588 = vmatpush1.msra.mxu0 0.0
        %2589 = vmatprep.subr.mxu0 0.0
        %2590 = vmatpush1.msra.mxu0 0.0
        %2591 = vmatprep.subr.mxu0 0.0
        %2592 = vmatpush1.msra.mxu0 0.0
        %2593 = vmatprep.subr.mxu0 0.0
        %2594 = vmatpush1.msra.mxu0 0.0
        %2595 = vmatprep.subr.mxu0 0.0
        %2596 = vmatpush1.msra.mxu0 0.0
        %2597 = vmatprep.subr.mxu0 0.0
        %2598 = vmatpush1.msra.mxu0 0.0
        %2599 = vmatprep.subr.mxu0 0.0
        %2600 = vmatpush1.msra.mxu0 0.0
        %2601 = vmatprep.subr.mxu0 0.0
        %2602 = vmatpush1.msra.mxu0 0.0
        %2603 = vmatprep.subr.mxu0 0.0
        %2604 = vmatpush1.msra.mxu0 0.0
        %2605 = vmatprep.subr.mxu0 0.0
        %2606 = vmatpush1.msra.mxu0 0.0
        %2607 = vmatprep.subr.mxu0 0.0
        %2608 = vmatpush1.msra.mxu0 0.0
        %2609 = vmatprep.subr.mxu0 0.0
        %2610 = vmatpush1.msra.mxu0 0.0
        %2611 = vmatprep.subr.mxu0 0.0
        %2612 = vmatpush1.msra.mxu0 0.0
        %2613 = vmatprep.subr.mxu0 0.0
        %2614 = vmatpush1.msra.mxu0 0.0
        %2615 = vmatprep.subr.mxu0 0.0
        %2616 = vmatpush1.msra.mxu0 0.0
        %2617 = vmatprep.subr.mxu0 0.0
        %2618 = vmatpush1.msra.mxu0 0.0
        %2619 = vmatprep.mubr.f32.mxu0 0.0
        %2620 = vmatmul.mubr.f32.gmra.mrb[0].mxu0 %v2550
        %v2621 = vpop.f32.mrb[0].mxu0
        %v2622 = vadd.f32 0.0, %v2621
        %v2623 = vpop.f32.mrb[0].mxu0
        %2624 = vmatprep.mubr.f32.mxu0 0.0
        %2625 = vmatmul.mubr.f32.gmra.mrb[0].mxu0 %v2553
        %v2626 = vpop.f32.mrb[0].mxu0
        %v2627 = vadd.f32 0.0, %v2626
        %v2628 = vpop.f32.mrb[0].mxu0
        %2629 = vdwg.mxu0
        %2630 = vrot.lane.b32.xlu0 %v747, 112
        %v2631 = vpop.permute.xlu0 %2630
        %2632 = vrot.lane.b32.xlu0 %v750, 112
        %v2633 = vpop.permute.xlu0 %2632
        %2634 = vrot.lane.b32.xlu0 %v748, 112
        %v2635 = vpop.permute.xlu0 %2634
        %2636 = vrot.lane.b32.xlu0 %v751, 112
        %v2637 = vpop.permute.xlu0 %2636
        %v2638 = vsel %vm753, %v2631, 0
        %v2640 = vsel %vm753, %v2633, 0
        %v2642 = vsel %vm753, %v2635, 0
        %v2644 = vsel %vm753, %v2637, 0
        %2646 = vmatprep.subr.mxu0 0.0
        %2647 = vmatpush1.xpose.msra.mxu0 %v2642
        %2648 = vmatprep.subr.mxu0 0.0
        %2649 = vmatpush1.xpose.msra.mxu0 %v2644
        %2650 = vmatprep.subr.mxu0 0.0
        %2651 = vmatpush1.xpose.msra.mxu0 0.0
        %2652 = vmatprep.subr.mxu0 0.0
        %2653 = vmatpush1.xpose.msra.mxu0 0.0
        %2654 = vmatprep.subr.mxu0 0.0
        %2655 = vmatpush1.xpose.msra.mxu0 0.0
        %2656 = vmatprep.subr.mxu0 0.0
        %2657 = vmatpush1.xpose.msra.mxu0 0.0
        %2658 = vmatprep.subr.mxu0 0.0
        %2659 = vmatpush1.xpose.msra.mxu0 0.0
        %2660 = vmatprep.subr.mxu0 0.0
        %2661 = vmatpush1.xpose.msra.mxu0 0.0
        %2662 = vmatprep.subr.mxu0 0.0
        %2663 = vmatpush1.xpose.msra.mxu0 0.0
        %2664 = vmatprep.subr.mxu0 0.0
        %2665 = vmatpush1.xpose.msra.mxu0 0.0
        %2666 = vmatprep.subr.mxu0 0.0
        %2667 = vmatpush1.xpose.msra.mxu0 0.0
        %2668 = vmatprep.subr.mxu0 0.0
        %2669 = vmatpush1.xpose.msra.mxu0 0.0
        %2670 = vmatprep.subr.mxu0 0.0
        %2671 = vmatpush1.xpose.msra.mxu0 0.0
        %2672 = vmatprep.subr.mxu0 0.0
        %2673 = vmatpush1.xpose.msra.mxu0 0.0
        %2674 = vmatprep.subr.mxu0 0.0
        %2675 = vmatpush1.xpose.msra.mxu0 0.0
        %2676 = vmatprep.subr.mxu0 0.0
        %2677 = vmatpush1.xpose.msra.mxu0 0.0
        %2678 = vmatprep.subr.mxu0 0.0
        %2679 = vmatpush1.xpose.msra.mxu0 0.0
        %2680 = vmatprep.subr.mxu0 0.0
        %2681 = vmatpush1.xpose.msra.mxu0 0.0
        %2682 = vmatprep.subr.mxu0 0.0
        %2683 = vmatpush1.xpose.msra.mxu0 0.0
        %2684 = vmatprep.subr.mxu0 0.0
        %2685 = vmatpush1.xpose.msra.mxu0 0.0
        %2686 = vmatprep.subr.mxu0 0.0
        %2687 = vmatpush1.xpose.msra.mxu0 0.0
        %2688 = vmatprep.subr.mxu0 0.0
        %2689 = vmatpush1.xpose.msra.mxu0 0.0
        %2690 = vmatprep.subr.mxu0 0.0
        %2691 = vmatpush1.xpose.msra.mxu0 0.0
        %2692 = vmatprep.subr.mxu0 0.0
        %2693 = vmatpush1.xpose.msra.mxu0 0.0
        %2694 = vmatprep.subr.mxu0 0.0
        %2695 = vmatpush1.xpose.msra.mxu0 0.0
        %2696 = vmatprep.subr.mxu0 0.0
        %2697 = vmatpush1.xpose.msra.mxu0 0.0
        %2698 = vmatprep.subr.mxu0 0.0
        %2699 = vmatpush1.xpose.msra.mxu0 0.0
        %2700 = vmatprep.subr.mxu0 0.0
        %2701 = vmatpush1.xpose.msra.mxu0 0.0
        %2702 = vmatprep.subr.mxu0 0.0
        %2703 = vmatpush1.xpose.msra.mxu0 0.0
        %2704 = vmatprep.subr.mxu0 0.0
        %2705 = vmatpush1.xpose.msra.mxu0 0.0
        %2706 = vmatprep.subr.mxu0 0.0
        %2707 = vmatpush1.xpose.msra.mxu0 0.0
        %2708 = vmatprep.subr.mxu0 0.0
        %2709 = vmatpush1.xpose.msra.mxu0 0.0
        %2710 = vmatprep.mubr.f32.mxu0 0.0
        %2711 = vmatmul.mubr.f32.gmra.mrb[0].mxu0 %v2638
        %v2712 = vpop.f32.mrb[0].mxu0
        %v2713 = vadd.f32 0.0, %v2712
        %v2714 = vpop.f32.mrb[0].mxu0
        %2715 = vmatprep.mubr.f32.mxu0 0.0
        %2716 = vmatmul.mubr.f32.gmra.mrb[0].mxu0 %v2640
        %v2717 = vpop.f32.mrb[0].mxu0
        %v2718 = vadd.f32 0.0, %v2717
        %v2719 = vpop.f32.mrb[0].mxu0
        %2720 = vdwg.mxu0
        %v2721 = vmul.f32 %v2713, 0.25
        %v2722 = vmul.f32 %v2718, 0.25
        %v2723 = vsel %vm753, %v2721, -inf
        %2724 = vmax.xlane.f32.xlu0 %v2723
        %v2725 = vpop.xlane.xlu0 %2724
        %v2726 = vsel %vm753, %v2722, -inf
        %2727 = vmax.xlane.f32.xlu0 %v2726
        %v2728 = vpop.xlane.xlu0 %2727
        %v2729 = vsub.f32 %v2721, %v2725
        %v2730 = vsub.f32 %v2722, %v2728
        %v2731 = vmul.f32 %v2729, 1.442695
        %v2732 = vpow.pop %v2731
        %v2733 = vmul.f32 %v2730, 1.442695
        %v2734 = vpow.pop %v2733
        %v2735 = vsel %vm753, %v2732, 0.0
        %2736 = vadd.xlane.f32.xlu0 %v2735
        %v2737 = vpop.xlane.xlu0 %2736
        %v2738 = vsel %vm753, %v2734, 0.0
        %2739 = vadd.xlane.f32.xlu0 %v2738
        %v2740 = vpop.xlane.xlu0 %2739
        %v2741 = vrcp.pop %v2737
        %v2742 = vmul.f32 %v2732, %v2741
        %v2743 = vrcp.pop %v2740
        %v2744 = vmul.f32 %v2734, %v2743
        %2747 = vrot.lane.b32.xlu0 %v749, 112
        %v2748 = vpop.permute.xlu0 %2747
        %2749 = vrot.lane.b32.xlu0 %v752, 112
        %v2750 = vpop.permute.xlu0 %2749
        %v2754 = vsel %vm753, %v2742, 0
        %v2757 = vsel %vm753, %v2744, 0
        %2759 = vmatprep.subr.mxu0 0.0
        %2760 = vmatpush1.msra.mxu0 %v2748
        %2761 = vmatprep.subr.mxu0 0.0
        %2762 = vmatpush1.msra.mxu0 %v2750
        %2763 = vmatprep.subr.mxu0 0.0
        %2764 = vmatpush1.msra.mxu0 0.0
        %2765 = vmatprep.subr.mxu0 0.0
        %2766 = vmatpush1.msra.mxu0 0.0
        %2767 = vmatprep.subr.mxu0 0.0
        %2768 = vmatpush1.msra.mxu0 0.0
        %2769 = vmatprep.subr.mxu0 0.0
        %2770 = vmatpush1.msra.mxu0 0.0
        %2771 = vmatprep.subr.mxu0 0.0
        %2772 = vmatpush1.msra.mxu0 0.0
        %2773 = vmatprep.subr.mxu0 0.0
        %2774 = vmatpush1.msra.mxu0 0.0
        %2775 = vmatprep.subr.mxu0 0.0
        %2776 = vmatpush1.msra.mxu0 0.0
        %2777 = vmatprep.subr.mxu0 0.0
        %2778 = vmatpush1.msra.mxu0 0.0
        %2779 = vmatprep.subr.mxu0 0.0
        %2780 = vmatpush1.msra.mxu0 0.0
        %2781 = vmatprep.subr.mxu0 0.0
        %2782 = vmatpush1.msra.mxu0 0.0
        %2783 = vmatprep.subr.mxu0 0.0
        %2784 = vmatpush1.msra.mxu0 0.0
        %2785 = vmatprep.subr.mxu0 0.0
        %2786 = vmatpush1.msra.mxu0 0.0
        %2787 = vmatprep.subr.mxu0 0.0
        %2788 = vmatpush1.msra.mxu0 0.0
        %2789 = vmatprep.subr.mxu0 0.0
        %2790 = vmatpush1.msra.mxu0 0.0
        %2791 = vmatprep.subr.mxu0 0.0
        %2792 = vmatpush1.msra.mxu0 0.0
        %2793 = vmatprep.subr.mxu0 0.0
        %2794 = vmatpush1.msra.mxu0 0.0
        %2795 = vmatprep.subr.mxu0 0.0
        %2796 = vmatpush1.msra.mxu0 0.0
        %2797 = vmatprep.subr.mxu0 0.0
        %2798 = vmatpush1.msra.mxu0 0.0
        %2799 = vmatprep.subr.mxu0 0.0
        %2800 = vmatpush1.msra.mxu0 0.0
        %2801 = vmatprep.subr.mxu0 0.0
        %2802 = vmatpush1.msra.mxu0 0.0
        %2803 = vmatprep.subr.mxu0 0.0
        %2804 = vmatpush1.msra.mxu0 0.0
        %2805 = vmatprep.subr.mxu0 0.0
        %2806 = vmatpush1.msra.mxu0 0.0
        %2807 = vmatprep.subr.mxu0 0.0
        %2808 = vmatpush1.msra.mxu0 0.0
        %2809 = vmatprep.subr.mxu0 0.0
        %2810 = vmatpush1.msra.mxu0 0.0
        %2811 = vmatprep.subr.mxu0 0.0
        %2812 = vmatpush1.msra.mxu0 0.0
        %2813 = vmatprep.subr.mxu0 0.0
        %2814 = vmatpush1.msra.mxu0 0.0
        %2815 = vmatprep.subr.mxu0 0.0
        %2816 = vmatpush1.msra.mxu0 0.0
        %2817 = vmatprep.subr.mxu0 0.0
        %2818 = vmatpush1.msra.mxu0 0.0
        %2819 = vmatprep.subr.mxu0 0.0
        %2820 = vmatpush1.msra.mxu0 0.0
        %2821 = vmatprep.subr.mxu0 0.0
        %2822 = vmatpush1.msra.mxu0 0.0
        %2823 = vmatprep.mubr.f32.mxu0 0.0
        %2824 = vmatmul.mubr.f32.gmra.mrb[0].mxu0 %v2754
        %v2825 = vpop.f32.mrb[0].mxu0
        %v2826 = vadd.f32 0.0, %v2825
        %v2827 = vpop.f32.mrb[0].mxu0
        %2828 = vmatprep.mubr.f32.mxu0 0.0
        %2829 = vmatmul.mubr.f32.gmra.mrb[0].mxu0 %v2757
        %v2830 = vpop.f32.mrb[0].mxu0
        %v2831 = vadd.f32 0.0, %v2830
        %v2832 = vpop.f32.mrb[0].mxu0
        %2833 = vdwg.mxu0
        %2834 = vrot.lane.b32.xlu0 %v747, 96
        %v2835 = vpop.permute.xlu0 %2834
        %2836 = vrot.lane.b32.xlu0 %v750, 96
        %v2837 = vpop.permute.xlu0 %2836
        %2838 = vrot.lane.b32.xlu0 %v748, 96
        %v2839 = vpop.permute.xlu0 %2838
        %2840 = vrot.lane.b32.xlu0 %v751, 96
        %v2841 = vpop.permute.xlu0 %2840
        %v2842 = vsel %vm753, %v2835, 0
        %v2844 = vsel %vm753, %v2837, 0
        %v2846 = vsel %vm753, %v2839, 0
        %v2848 = vsel %vm753, %v2841, 0
        %2850 = vmatprep.subr.mxu0 0.0
        %2851 = vmatpush1.xpose.msra.mxu0 %v2846
        %2852 = vmatprep.subr.mxu0 0.0
        %2853 = vmatpush1.xpose.msra.mxu0 %v2848
        %2854 = vmatprep.subr.mxu0 0.0
        %2855 = vmatpush1.xpose.msra.mxu0 0.0
        %2856 = vmatprep.subr.mxu0 0.0
        %2857 = vmatpush1.xpose.msra.mxu0 0.0
        %2858 = vmatprep.subr.mxu0 0.0
        %2859 = vmatpush1.xpose.msra.mxu0 0.0
        %2860 = vmatprep.subr.mxu0 0.0
        %2861 = vmatpush1.xpose.msra.mxu0 0.0
        %2862 = vmatprep.subr.mxu0 0.0
        %2863 = vmatpush1.xpose.msra.mxu0 0.0
        %2864 = vmatprep.subr.mxu0 0.0
        %2865 = vmatpush1.xpose.msra.mxu0 0.0
        %2866 = vmatprep.subr.mxu0 0.0
        %2867 = vmatpush1.xpose.msra.mxu0 0.0
        %2868 = vmatprep.subr.mxu0 0.0
        %2869 = vmatpush1.xpose.msra.mxu0 0.0
        %2870 = vmatprep.subr.mxu0 0.0
        %2871 = vmatpush1.xpose.msra.mxu0 0.0
        %2872 = vmatprep.subr.mxu0 0.0
        %2873 = vmatpush1.xpose.msra.mxu0 0.0
        %2874 = vmatprep.subr.mxu0 0.0
        %2875 = vmatpush1.xpose.msra.mxu0 0.0
        %2876 = vmatprep.subr.mxu0 0.0
        %2877 = vmatpush1.xpose.msra.mxu0 0.0
        %2878 = vmatprep.subr.mxu0 0.0
        %2879 = vmatpush1.xpose.msra.mxu0 0.0
        %2880 = vmatprep.subr.mxu0 0.0
        %2881 = vmatpush1.xpose.msra.mxu0 0.0
        %2882 = vmatprep.subr.mxu0 0.0
        %2883 = vmatpush1.xpose.msra.mxu0 0.0
        %2884 = vmatprep.subr.mxu0 0.0
        %2885 = vmatpush1.xpose.msra.mxu0 0.0
        %2886 = vmatprep.subr.mxu0 0.0
        %2887 = vmatpush1.xpose.msra.mxu0 0.0
        %2888 = vmatprep.subr.mxu0 0.0
        %2889 = vmatpush1.xpose.msra.mxu0 0.0
        %2890 = vmatprep.subr.mxu0 0.0
        %2891 = vmatpush1.xpose.msra.mxu0 0.0
        %2892 = vmatprep.subr.mxu0 0.0
        %2893 = vmatpush1.xpose.msra.mxu0 0.0
        %2894 = vmatprep.subr.mxu0 0.0
        %2895 = vmatpush1.xpose.msra.mxu0 0.0
        %2896 = vmatprep.subr.mxu0 0.0
        %2897 = vmatpush1.xpose.msra.mxu0 0.0
        %2898 = vmatprep.subr.mxu0 0.0
        %2899 = vmatpush1.xpose.msra.mxu0 0.0
        %2900 = vmatprep.subr.mxu0 0.0
        %2901 = vmatpush1.xpose.msra.mxu0 0.0
        %2902 = vmatprep.subr.mxu0 0.0
        %2903 = vmatpush1.xpose.msra.mxu0 0.0
        %2904 = vmatprep.subr.mxu0 0.0
        %2905 = vmatpush1.xpose.msra.mxu0 0.0
        %2906 = vmatprep.subr.mxu0 0.0
        %2907 = vmatpush1.xpose.msra.mxu0 0.0
        %2908 = vmatprep.subr.mxu0 0.0
        %2909 = vmatpush1.xpose.msra.mxu0 0.0
        %2910 = vmatprep.subr.mxu0 0.0
        %2911 = vmatpush1.xpose.msra.mxu0 0.0
        %2912 = vmatprep.subr.mxu0 0.0
        %2913 = vmatpush1.xpose.msra.mxu0 0.0
        %2914 = vmatprep.mubr.f32.mxu0 0.0
        %2915 = vmatmul.mubr.f32.gmra.mrb[0].mxu0 %v2842
        %v2916 = vpop.f32.mrb[0].mxu0
        %v2917 = vadd.f32 0.0, %v2916
        %v2918 = vpop.f32.mrb[0].mxu0
        %2919 = vmatprep.mubr.f32.mxu0 0.0
        %2920 = vmatmul.mubr.f32.gmra.mrb[0].mxu0 %v2844
        %v2921 = vpop.f32.mrb[0].mxu0
        %v2922 = vadd.f32 0.0, %v2921
        %v2923 = vpop.f32.mrb[0].mxu0
        %2924 = vdwg.mxu0
        %v2925 = vmul.f32 %v2917, 0.25
        %v2926 = vmul.f32 %v2922, 0.25
        %v2927 = vsel %vm753, %v2925, -inf
        %2928 = vmax.xlane.f32.xlu0 %v2927
        %v2929 = vpop.xlane.xlu0 %2928
        %v2930 = vsel %vm753, %v2926, -inf
        %2931 = vmax.xlane.f32.xlu0 %v2930
        %v2932 = vpop.xlane.xlu0 %2931
        %v2933 = vsub.f32 %v2925, %v2929
        %v2934 = vsub.f32 %v2926, %v2932
        %v2935 = vmul.f32 %v2933, 1.442695
        %v2936 = vpow.pop %v2935
        %v2937 = vmul.f32 %v2934, 1.442695
        %v2938 = vpow.pop %v2937
        %v2939 = vsel %vm753, %v2936, 0.0
        %2940 = vadd.xlane.f32.xlu0 %v2939
        %v2941 = vpop.xlane.xlu0 %2940
        %v2942 = vsel %vm753, %v2938, 0.0
        %2943 = vadd.xlane.f32.xlu0 %v2942
        %v2944 = vpop.xlane.xlu0 %2943
        %v2945 = vrcp.pop %v2941
        %v2946 = vmul.f32 %v2936, %v2945
        %v2947 = vrcp.pop %v2944
        %v2948 = vmul.f32 %v2938, %v2947
        %2949 = vrot.lane.b32.xlu0 %v749, 96
        %v2950 = vpop.permute.xlu0 %2949
        %2951 = vrot.lane.b32.xlu0 %v752, 96
        %v2952 = vpop.permute.xlu0 %2951
        %v2956 = vsel %vm753, %v2946, 0
        %v2959 = vsel %vm753, %v2948, 0
        %2961 = vmatprep.subr.mxu0 0.0
        %2962 = vmatpush1.msra.mxu0 %v2950
        %2963 = vmatprep.subr.mxu0 0.0
        %2964 = vmatpush1.msra.mxu0 %v2952
        %2965 = vmatprep.subr.mxu0 0.0
        %2966 = vmatpush1.msra.mxu0 0.0
        %2967 = vmatprep.subr.mxu0 0.0
        %2968 = vmatpush1.msra.mxu0 0.0
        %2969 = vmatprep.subr.mxu0 0.0
        %2970 = vmatpush1.msra.mxu0 0.0
        %2971 = vmatprep.subr.mxu0 0.0
        %2972 = vmatpush1.msra.mxu0 0.0
        %2973 = vmatprep.subr.mxu0 0.0
        %2974 = vmatpush1.msra.mxu0 0.0
        %2975 = vmatprep.subr.mxu0 0.0
        %2976 = vmatpush1.msra.mxu0 0.0
        %2977 = vmatprep.subr.mxu0 0.0
        %2978 = vmatpush1.msra.mxu0 0.0
        %2979 = vmatprep.subr.mxu0 0.0
        %2980 = vmatpush1.msra.mxu0 0.0
        %2981 = vmatprep.subr.mxu0 0.0
        %2982 = vmatpush1.msra.mxu0 0.0
        %2983 = vmatprep.subr.mxu0 0.0
        %2984 = vmatpush1.msra.mxu0 0.0
        %2985 = vmatprep.subr.mxu0 0.0
        %2986 = vmatpush1.msra.mxu0 0.0
        %2987 = vmatprep.subr.mxu0 0.0
        %2988 = vmatpush1.msra.mxu0 0.0
        %2989 = vmatprep.subr.mxu0 0.0
        %2990 = vmatpush1.msra.mxu0 0.0
        %2991 = vmatprep.subr.mxu0 0.0
        %2992 = vmatpush1.msra.mxu0 0.0
        %2993 = vmatprep.subr.mxu0 0.0
        %2994 = vmatpush1.msra.mxu0 0.0
        %2995 = vmatprep.subr.mxu0 0.0
        %2996 = vmatpush1.msra.mxu0 0.0
        %2997 = vmatprep.subr.mxu0 0.0
        %2998 = vmatpush1.msra.mxu0 0.0
        %2999 = vmatprep.subr.mxu0 0.0
        %3000 = vmatpush1.msra.mxu0 0.0
        %3001 = vmatprep.subr.mxu0 0.0
        %3002 = vmatpush1.msra.mxu0 0.0
        %3003 = vmatprep.subr.mxu0 0.0
        %3004 = vmatpush1.msra.mxu0 0.0
        %3005 = vmatprep.subr.mxu0 0.0
        %3006 = vmatpush1.msra.mxu0 0.0
        %3007 = vmatprep.subr.mxu0 0.0
        %3008 = vmatpush1.msra.mxu0 0.0
        %3009 = vmatprep.subr.mxu0 0.0
        %3010 = vmatpush1.msra.mxu0 0.0
        %3011 = vmatprep.subr.mxu0 0.0
        %3012 = vmatpush1.msra.mxu0 0.0
        %3013 = vmatprep.subr.mxu0 0.0
        %3014 = vmatpush1.msra.mxu0 0.0
        %3015 = vmatprep.subr.mxu0 0.0
        %3016 = vmatpush1.msra.mxu0 0.0
        %3017 = vmatprep.subr.mxu0 0.0
        %3018 = vmatpush1.msra.mxu0 0.0
        %3019 = vmatprep.subr.mxu0 0.0
        %3020 = vmatpush1.msra.mxu0 0.0
        %3021 = vmatprep.subr.mxu0 0.0
        %3022 = vmatpush1.msra.mxu0 0.0
        %3023 = vmatprep.subr.mxu0 0.0
        %3024 = vmatpush1.msra.mxu0 0.0
        %3025 = vmatprep.mubr.f32.mxu0 0.0
        %3026 = vmatmul.mubr.f32.gmra.mrb[0].mxu0 %v2956
        %v3027 = vpop.f32.mrb[0].mxu0
        %v3028 = vadd.f32 0.0, %v3027
        %v3029 = vpop.f32.mrb[0].mxu0
        %3030 = vmatprep.mubr.f32.mxu0 0.0
        %3031 = vmatmul.mubr.f32.gmra.mrb[0].mxu0 %v2959
        %v3032 = vpop.f32.mrb[0].mxu0
        %v3033 = vadd.f32 0.0, %v3032
        %v3034 = vpop.f32.mrb[0].mxu0
        %3035 = vdwg.mxu0
        %3036 = vrot.lane.b32.xlu0 %v747, 80
        %v3037 = vpop.permute.xlu0 %3036
        %3038 = vrot.lane.b32.xlu0 %v750, 80
        %v3039 = vpop.permute.xlu0 %3038
        %3040 = vrot.lane.b32.xlu0 %v748, 80
        %v3041 = vpop.permute.xlu0 %3040
        %3042 = vrot.lane.b32.xlu0 %v751, 80
        %v3043 = vpop.permute.xlu0 %3042
        %v3044 = vsel %vm753, %v3037, 0
        %v3046 = vsel %vm753, %v3039, 0
        %v3048 = vsel %vm753, %v3041, 0
        %v3050 = vsel %vm753, %v3043, 0
        %3052 = vmatprep.subr.mxu0 0.0
        %3053 = vmatpush1.xpose.msra.mxu0 %v3048
        %3054 = vmatprep.subr.mxu0 0.0
        %3055 = vmatpush1.xpose.msra.mxu0 %v3050
        %3056 = vmatprep.subr.mxu0 0.0
        %3057 = vmatpush1.xpose.msra.mxu0 0.0
        %3058 = vmatprep.subr.mxu0 0.0
        %3059 = vmatpush1.xpose.msra.mxu0 0.0
        %3060 = vmatprep.subr.mxu0 0.0
        %3061 = vmatpush1.xpose.msra.mxu0 0.0
        %3062 = vmatprep.subr.mxu0 0.0
        %3063 = vmatpush1.xpose.msra.mxu0 0.0
        %3064 = vmatprep.subr.mxu0 0.0
        %3065 = vmatpush1.xpose.msra.mxu0 0.0
        %3066 = vmatprep.subr.mxu0 0.0
        %3067 = vmatpush1.xpose.msra.mxu0 0.0
        %3068 = vmatprep.subr.mxu0 0.0
        %3069 = vmatpush1.xpose.msra.mxu0 0.0
        %3070 = vmatprep.subr.mxu0 0.0
        %3071 = vmatpush1.xpose.msra.mxu0 0.0
        %3072 = vmatprep.subr.mxu0 0.0
        %3073 = vmatpush1.xpose.msra.mxu0 0.0
        %3074 = vmatprep.subr.mxu0 0.0
        %3075 = vmatpush1.xpose.msra.mxu0 0.0
        %3076 = vmatprep.subr.mxu0 0.0
        %3077 = vmatpush1.xpose.msra.mxu0 0.0
        %3078 = vmatprep.subr.mxu0 0.0
        %3079 = vmatpush1.xpose.msra.mxu0 0.0
        %3080 = vmatprep.subr.mxu0 0.0
        %3081 = vmatpush1.xpose.msra.mxu0 0.0
        %3082 = vmatprep.subr.mxu0 0.0
        %3083 = vmatpush1.xpose.msra.mxu0 0.0
        %3084 = vmatprep.subr.mxu0 0.0
        %3085 = vmatpush1.xpose.msra.mxu0 0.0
        %3086 = vmatprep.subr.mxu0 0.0
        %3087 = vmatpush1.xpose.msra.mxu0 0.0
        %3088 = vmatprep.subr.mxu0 0.0
        %3089 = vmatpush1.xpose.msra.mxu0 0.0
        %3090 = vmatprep.subr.mxu0 0.0
        %3091 = vmatpush1.xpose.msra.mxu0 0.0
        %3092 = vmatprep.subr.mxu0 0.0
        %3093 = vmatpush1.xpose.msra.mxu0 0.0
        %3094 = vmatprep.subr.mxu0 0.0
        %3095 = vmatpush1.xpose.msra.mxu0 0.0
        %3096 = vmatprep.subr.mxu0 0.0
        %3097 = vmatpush1.xpose.msra.mxu0 0.0
        %3098 = vmatprep.subr.mxu0 0.0
        %3099 = vmatpush1.xpose.msra.mxu0 0.0
        %3100 = vmatprep.subr.mxu0 0.0
        %3101 = vmatpush1.xpose.msra.mxu0 0.0
        %3102 = vmatprep.subr.mxu0 0.0
        %3103 = vmatpush1.xpose.msra.mxu0 0.0
        %3104 = vmatprep.subr.mxu0 0.0
        %3105 = vmatpush1.xpose.msra.mxu0 0.0
        %3106 = vmatprep.subr.mxu0 0.0
        %3107 = vmatpush1.xpose.msra.mxu0 0.0
        %3108 = vmatprep.subr.mxu0 0.0
        %3109 = vmatpush1.xpose.msra.mxu0 0.0
        %3110 = vmatprep.subr.mxu0 0.0
        %3111 = vmatpush1.xpose.msra.mxu0 0.0
        %3112 = vmatprep.subr.mxu0 0.0
        %3113 = vmatpush1.xpose.msra.mxu0 0.0
        %3114 = vmatprep.subr.mxu0 0.0
        %3115 = vmatpush1.xpose.msra.mxu0 0.0
        %3116 = vmatprep.mubr.f32.mxu0 0.0
        %3117 = vmatmul.mubr.f32.gmra.mrb[0].mxu0 %v3044
        %v3118 = vpop.f32.mrb[0].mxu0
        %v3119 = vadd.f32 0.0, %v3118
        %v3120 = vpop.f32.mrb[0].mxu0
        %3121 = vmatprep.mubr.f32.mxu0 0.0
        %3122 = vmatmul.mubr.f32.gmra.mrb[0].mxu0 %v3046
        %v3123 = vpop.f32.mrb[0].mxu0
        %v3124 = vadd.f32 0.0, %v3123
        %v3125 = vpop.f32.mrb[0].mxu0
        %3126 = vdwg.mxu0
        %v3127 = vmul.f32 %v3119, 0.25
        %v3128 = vmul.f32 %v3124, 0.25
        %v3129 = vsel %vm753, %v3127, -inf
        %3130 = vmax.xlane.f32.xlu0 %v3129
        %v3131 = vpop.xlane.xlu0 %3130
        %v3132 = vsel %vm753, %v3128, -inf
        %3133 = vmax.xlane.f32.xlu0 %v3132
        %v3134 = vpop.xlane.xlu0 %3133
        %v3135 = vsub.f32 %v3127, %v3131
        %v3136 = vsub.f32 %v3128, %v3134
        %v3137 = vmul.f32 %v3135, 1.442695
        %v3138 = vpow.pop %v3137
        %v3139 = vmul.f32 %v3136, 1.442695
        %v3140 = vpow.pop %v3139
        %v3141 = vsel %vm753, %v3138, 0.0
        %3142 = vadd.xlane.f32.xlu0 %v3141
        %v3143 = vpop.xlane.xlu0 %3142
        %v3144 = vsel %vm753, %v3140, 0.0
        %3145 = vadd.xlane.f32.xlu0 %v3144
        %v3146 = vpop.xlane.xlu0 %3145
        %v3147 = vrcp.pop %v3143
        %v3148 = vmul.f32 %v3138, %v3147
        %v3149 = vrcp.pop %v3146
        %v3150 = vmul.f32 %v3140, %v3149
        %3151 = vrot.lane.b32.xlu0 %v749, 80
        %v3152 = vpop.permute.xlu0 %3151
        %3153 = vrot.lane.b32.xlu0 %v752, 80
        %v3154 = vpop.permute.xlu0 %3153
        %v3158 = vsel %vm753, %v3148, 0
        %v3161 = vsel %vm753, %v3150, 0
        %3163 = vmatprep.subr.mxu0 0.0
        %3164 = vmatpush1.msra.mxu0 %v3152
        %3165 = vmatprep.subr.mxu0 0.0
        %3166 = vmatpush1.msra.mxu0 %v3154
        %3167 = vmatprep.subr.mxu0 0.0
        %3168 = vmatpush1.msra.mxu0 0.0
        %3169 = vmatprep.subr.mxu0 0.0
        %3170 = vmatpush1.msra.mxu0 0.0
        %3171 = vmatprep.subr.mxu0 0.0
        %3172 = vmatpush1.msra.mxu0 0.0
        %3173 = vmatprep.subr.mxu0 0.0
        %3174 = vmatpush1.msra.mxu0 0.0
        %3175 = vmatprep.subr.mxu0 0.0
        %3176 = vmatpush1.msra.mxu0 0.0
        %3177 = vmatprep.subr.mxu0 0.0
        %3178 = vmatpush1.msra.mxu0 0.0
        %3179 = vmatprep.subr.mxu0 0.0
        %3180 = vmatpush1.msra.mxu0 0.0
        %3181 = vmatprep.subr.mxu0 0.0
        %3182 = vmatpush1.msra.mxu0 0.0
        %3183 = vmatprep.subr.mxu0 0.0
        %3184 = vmatpush1.msra.mxu0 0.0
        %3185 = vmatprep.subr.mxu0 0.0
        %3186 = vmatpush1.msra.mxu0 0.0
        %3187 = vmatprep.subr.mxu0 0.0
        %3188 = vmatpush1.msra.mxu0 0.0
        %3189 = vmatprep.subr.mxu0 0.0
        %3190 = vmatpush1.msra.mxu0 0.0
        %3191 = vmatprep.subr.mxu0 0.0
        %3192 = vmatpush1.msra.mxu0 0.0
        %3193 = vmatprep.subr.mxu0 0.0
        %3194 = vmatpush1.msra.mxu0 0.0
        %3195 = vmatprep.subr.mxu0 0.0
        %3196 = vmatpush1.msra.mxu0 0.0
        %3197 = vmatprep.subr.mxu0 0.0
        %3198 = vmatpush1.msra.mxu0 0.0
        %3199 = vmatprep.subr.mxu0 0.0
        %3200 = vmatpush1.msra.mxu0 0.0
        %3201 = vmatprep.subr.mxu0 0.0
        %3202 = vmatpush1.msra.mxu0 0.0
        %3203 = vmatprep.subr.mxu0 0.0
        %3204 = vmatpush1.msra.mxu0 0.0
        %3205 = vmatprep.subr.mxu0 0.0
        %3206 = vmatpush1.msra.mxu0 0.0
        %3207 = vmatprep.subr.mxu0 0.0
        %3208 = vmatpush1.msra.mxu0 0.0
        %3209 = vmatprep.subr.mxu0 0.0
        %3210 = vmatpush1.msra.mxu0 0.0
        %3211 = vmatprep.subr.mxu0 0.0
        %3212 = vmatpush1.msra.mxu0 0.0
        %3213 = vmatprep.subr.mxu0 0.0
        %3214 = vmatpush1.msra.mxu0 0.0
        %3215 = vmatprep.subr.mxu0 0.0
        %3216 = vmatpush1.msra.mxu0 0.0
        %3217 = vmatprep.subr.mxu0 0.0
        %3218 = vmatpush1.msra.mxu0 0.0
        %3219 = vmatprep.subr.mxu0 0.0
        %3220 = vmatpush1.msra.mxu0 0.0
        %3221 = vmatprep.subr.mxu0 0.0
        %3222 = vmatpush1.msra.mxu0 0.0
        %3223 = vmatprep.subr.mxu0 0.0
        %3224 = vmatpush1.msra.mxu0 0.0
        %3225 = vmatprep.subr.mxu0 0.0
        %3226 = vmatpush1.msra.mxu0 0.0
        %3227 = vmatprep.mubr.f32.mxu0 0.0
        %3228 = vmatmul.mubr.f32.gmra.mrb[0].mxu0 %v3158
        %v3229 = vpop.f32.mrb[0].mxu0
        %v3230 = vadd.f32 0.0, %v3229
        %v3231 = vpop.f32.mrb[0].mxu0
        %3232 = vmatprep.mubr.f32.mxu0 0.0
        %3233 = vmatmul.mubr.f32.gmra.mrb[0].mxu0 %v3161
        %v3234 = vpop.f32.mrb[0].mxu0
        %v3235 = vadd.f32 0.0, %v3234
        %v3236 = vpop.f32.mrb[0].mxu0
        %3237 = vdwg.mxu0
        %3238 = vrot.lane.b32.xlu0 %v747, 64
        %v3239 = vpop.permute.xlu0 %3238
        %3240 = vrot.lane.b32.xlu0 %v750, 64
        %v3241 = vpop.permute.xlu0 %3240
        %3242 = vrot.lane.b32.xlu0 %v748, 64
        %v3243 = vpop.permute.xlu0 %3242
        %3244 = vrot.lane.b32.xlu0 %v751, 64
        %v3245 = vpop.permute.xlu0 %3244
        %v3246 = vsel %vm753, %v3239, 0
        %v3248 = vsel %vm753, %v3241, 0
        %v3250 = vsel %vm753, %v3243, 0
        %v3252 = vsel %vm753, %v3245, 0
        %3254 = vmatprep.subr.mxu0 0.0
        %3255 = vmatpush1.xpose.msra.mxu0 %v3250
        %3256 = vmatprep.subr.mxu0 0.0
        %3257 = vmatpush1.xpose.msra.mxu0 %v3252
        %3258 = vmatprep.subr.mxu0 0.0
        %3259 = vmatpush1.xpose.msra.mxu0 0.0
        %3260 = vmatprep.subr.mxu0 0.0
        %3261 = vmatpush1.xpose.msra.mxu0 0.0
        %3262 = vmatprep.subr.mxu0 0.0
        %3263 = vmatpush1.xpose.msra.mxu0 0.0
        %3264 = vmatprep.subr.mxu0 0.0
        %3265 = vmatpush1.xpose.msra.mxu0 0.0
        %3266 = vmatprep.subr.mxu0 0.0
        %3267 = vmatpush1.xpose.msra.mxu0 0.0
        %3268 = vmatprep.subr.mxu0 0.0
        %3269 = vmatpush1.xpose.msra.mxu0 0.0
        %3270 = vmatprep.subr.mxu0 0.0
        %3271 = vmatpush1.xpose.msra.mxu0 0.0
        %3272 = vmatprep.subr.mxu0 0.0
        %3273 = vmatpush1.xpose.msra.mxu0 0.0
        %3274 = vmatprep.subr.mxu0 0.0
        %3275 = vmatpush1.xpose.msra.mxu0 0.0
        %3276 = vmatprep.subr.mxu0 0.0
        %3277 = vmatpush1.xpose.msra.mxu0 0.0
        %3278 = vmatprep.subr.mxu0 0.0
        %3279 = vmatpush1.xpose.msra.mxu0 0.0
        %3280 = vmatprep.subr.mxu0 0.0
        %3281 = vmatpush1.xpose.msra.mxu0 0.0
        %3282 = vmatprep.subr.mxu0 0.0
        %3283 = vmatpush1.xpose.msra.mxu0 0.0
        %3284 = vmatprep.subr.mxu0 0.0
        %3285 = vmatpush1.xpose.msra.mxu0 0.0
        %3286 = vmatprep.subr.mxu0 0.0
        %3287 = vmatpush1.xpose.msra.mxu0 0.0
        %3288 = vmatprep.subr.mxu0 0.0
        %3289 = vmatpush1.xpose.msra.mxu0 0.0
        %3290 = vmatprep.subr.mxu0 0.0
        %3291 = vmatpush1.xpose.msra.mxu0 0.0
        %3292 = vmatprep.subr.mxu0 0.0
        %3293 = vmatpush1.xpose.msra.mxu0 0.0
        %3294 = vmatprep.subr.mxu0 0.0
        %3295 = vmatpush1.xpose.msra.mxu0 0.0
        %3296 = vmatprep.subr.mxu0 0.0
        %3297 = vmatpush1.xpose.msra.mxu0 0.0
        %3298 = vmatprep.subr.mxu0 0.0
        %3299 = vmatpush1.xpose.msra.mxu0 0.0
        %3300 = vmatprep.subr.mxu0 0.0
        %3301 = vmatpush1.xpose.msra.mxu0 0.0
        %3302 = vmatprep.subr.mxu0 0.0
        %3303 = vmatpush1.xpose.msra.mxu0 0.0
        %3304 = vmatprep.subr.mxu0 0.0
        %3305 = vmatpush1.xpose.msra.mxu0 0.0
        %3306 = vmatprep.subr.mxu0 0.0
        %3307 = vmatpush1.xpose.msra.mxu0 0.0
        %3308 = vmatprep.subr.mxu0 0.0
        %3309 = vmatpush1.xpose.msra.mxu0 0.0
        %3310 = vmatprep.subr.mxu0 0.0
        %3311 = vmatpush1.xpose.msra.mxu0 0.0
        %3312 = vmatprep.subr.mxu0 0.0
        %3313 = vmatpush1.xpose.msra.mxu0 0.0
        %3314 = vmatprep.subr.mxu0 0.0
        %3315 = vmatpush1.xpose.msra.mxu0 0.0
        %3316 = vmatprep.subr.mxu0 0.0
        %3317 = vmatpush1.xpose.msra.mxu0 0.0
        %3318 = vmatprep.mubr.f32.mxu0 0.0
        %3319 = vmatmul.mubr.f32.gmra.mrb[0].mxu0 %v3246
        %v3320 = vpop.f32.mrb[0].mxu0
        %v3321 = vadd.f32 0.0, %v3320
        %v3322 = vpop.f32.mrb[0].mxu0
        %3323 = vmatprep.mubr.f32.mxu0 0.0
        %3324 = vmatmul.mubr.f32.gmra.mrb[0].mxu0 %v3248
        %v3325 = vpop.f32.mrb[0].mxu0
        %v3326 = vadd.f32 0.0, %v3325
        %v3327 = vpop.f32.mrb[0].mxu0
        %3328 = vdwg.mxu0
        %v3329 = vmul.f32 %v3321, 0.25
        %v3330 = vmul.f32 %v3326, 0.25
        %v3331 = vsel %vm753, %v3329, -inf
        %3332 = vmax.xlane.f32.xlu0 %v3331
        %v3333 = vpop.xlane.xlu0 %3332
        %v3334 = vsel %vm753, %v3330, -inf
        %3335 = vmax.xlane.f32.xlu0 %v3334
        %v3336 = vpop.xlane.xlu0 %3335
        %v3337 = vsub.f32 %v3329, %v3333
        %v3338 = vsub.f32 %v3330, %v3336
        %v3339 = vmul.f32 %v3337, 1.442695
        %v3340 = vpow.pop %v3339
        %v3341 = vmul.f32 %v3338, 1.442695
        %v3342 = vpow.pop %v3341
        %v3343 = vsel %vm753, %v3340, 0.0
        %3344 = vadd.xlane.f32.xlu0 %v3343
        %v3345 = vpop.xlane.xlu0 %3344
        %v3346 = vsel %vm753, %v3342, 0.0
        %3347 = vadd.xlane.f32.xlu0 %v3346
        %v3348 = vpop.xlane.xlu0 %3347
        %v3349 = vrcp.pop %v3345
        %v3350 = vmul.f32 %v3340, %v3349
        %v3351 = vrcp.pop %v3348
        %v3352 = vmul.f32 %v3342, %v3351
        %3353 = vrot.lane.b32.xlu0 %v749, 64
        %v3354 = vpop.permute.xlu0 %3353
        %3355 = vrot.lane.b32.xlu0 %v752, 64
        %v3356 = vpop.permute.xlu0 %3355
        %v3360 = vsel %vm753, %v3350, 0
        %v3363 = vsel %vm753, %v3352, 0
        %3365 = vmatprep.subr.mxu0 0.0
        %3366 = vmatpush1.msra.mxu0 %v3354
        %3367 = vmatprep.subr.mxu0 0.0
        %3368 = vmatpush1.msra.mxu0 %v3356
        %3369 = vmatprep.subr.mxu0 0.0
        %3370 = vmatpush1.msra.mxu0 0.0
        %3371 = vmatprep.subr.mxu0 0.0
        %3372 = vmatpush1.msra.mxu0 0.0
        %3373 = vmatprep.subr.mxu0 0.0
        %3374 = vmatpush1.msra.mxu0 0.0
        %3375 = vmatprep.subr.mxu0 0.0
        %3376 = vmatpush1.msra.mxu0 0.0
        %3377 = vmatprep.subr.mxu0 0.0
        %3378 = vmatpush1.msra.mxu0 0.0
        %3379 = vmatprep.subr.mxu0 0.0
        %3380 = vmatpush1.msra.mxu0 0.0
        %3381 = vmatprep.subr.mxu0 0.0
        %3382 = vmatpush1.msra.mxu0 0.0
        %3383 = vmatprep.subr.mxu0 0.0
        %3384 = vmatpush1.msra.mxu0 0.0
        %3385 = vmatprep.subr.mxu0 0.0
        %3386 = vmatpush1.msra.mxu0 0.0
        %3387 = vmatprep.subr.mxu0 0.0
        %3388 = vmatpush1.msra.mxu0 0.0
        %3389 = vmatprep.subr.mxu0 0.0
        %3390 = vmatpush1.msra.mxu0 0.0
        %3391 = vmatprep.subr.mxu0 0.0
        %3392 = vmatpush1.msra.mxu0 0.0
        %3393 = vmatprep.subr.mxu0 0.0
        %3394 = vmatpush1.msra.mxu0 0.0
        %3395 = vmatprep.subr.mxu0 0.0
        %3396 = vmatpush1.msra.mxu0 0.0
        %3397 = vmatprep.subr.mxu0 0.0
        %3398 = vmatpush1.msra.mxu0 0.0
        %3399 = vmatprep.subr.mxu0 0.0
        %3400 = vmatpush1.msra.mxu0 0.0
        %3401 = vmatprep.subr.mxu0 0.0
        %3402 = vmatpush1.msra.mxu0 0.0
        %3403 = vmatprep.subr.mxu0 0.0
        %3404 = vmatpush1.msra.mxu0 0.0
        %3405 = vmatprep.subr.mxu0 0.0
        %3406 = vmatpush1.msra.mxu0 0.0
        %3407 = vmatprep.subr.mxu0 0.0
        %3408 = vmatpush1.msra.mxu0 0.0
        %3409 = vmatprep.subr.mxu0 0.0
        %3410 = vmatpush1.msra.mxu0 0.0
        %3411 = vmatprep.subr.mxu0 0.0
        %3412 = vmatpush1.msra.mxu0 0.0
        %3413 = vmatprep.subr.mxu0 0.0
        %3414 = vmatpush1.msra.mxu0 0.0
        %3415 = vmatprep.subr.mxu0 0.0
        %3416 = vmatpush1.msra.mxu0 0.0
        %3417 = vmatprep.subr.mxu0 0.0
        %3418 = vmatpush1.msra.mxu0 0.0
        %3419 = vmatprep.subr.mxu0 0.0
        %3420 = vmatpush1.msra.mxu0 0.0
        %3421 = vmatprep.subr.mxu0 0.0
        %3422 = vmatpush1.msra.mxu0 0.0
        %3423 = vmatprep.subr.mxu0 0.0
        %3424 = vmatpush1.msra.mxu0 0.0
        %3425 = vmatprep.subr.mxu0 0.0
        %3426 = vmatpush1.msra.mxu0 0.0
        %3427 = vmatprep.subr.mxu0 0.0
        %3428 = vmatpush1.msra.mxu0 0.0
        %3429 = vmatprep.mubr.f32.mxu0 0.0
        %3430 = vmatmul.mubr.f32.gmra.mrb[0].mxu0 %v3360
        %v3431 = vpop.f32.mrb[0].mxu0
        %v3432 = vadd.f32 0.0, %v3431
        %v3433 = vpop.f32.mrb[0].mxu0
        %3434 = vmatprep.mubr.f32.mxu0 0.0
        %3435 = vmatmul.mubr.f32.gmra.mrb[0].mxu0 %v3363
        %v3436 = vpop.f32.mrb[0].mxu0
        %v3437 = vadd.f32 0.0, %v3436
        %v3438 = vpop.f32.mrb[0].mxu0
        %3439 = vdwg.mxu0
        %3440 = vrot.lane.b32.xlu0 %v747, 48
        %v3441 = vpop.permute.xlu0 %3440
        %3442 = vrot.lane.b32.xlu0 %v750, 48
        %v3443 = vpop.permute.xlu0 %3442
        %3444 = vrot.lane.b32.xlu0 %v748, 48
        %v3445 = vpop.permute.xlu0 %3444
        %3446 = vrot.lane.b32.xlu0 %v751, 48
        %v3447 = vpop.permute.xlu0 %3446
        %v3448 = vsel %vm753, %v3441, 0
        %v3450 = vsel %vm753, %v3443, 0
        %v3452 = vsel %vm753, %v3445, 0
        %v3454 = vsel %vm753, %v3447, 0
        %3456 = vmatprep.subr.mxu0 0.0
        %3457 = vmatpush1.xpose.msra.mxu0 %v3452
        %3458 = vmatprep.subr.mxu0 0.0
        %3459 = vmatpush1.xpose.msra.mxu0 %v3454
        %3460 = vmatprep.subr.mxu0 0.0
        %3461 = vmatpush1.xpose.msra.mxu0 0.0
        %3462 = vmatprep.subr.mxu0 0.0
        %3463 = vmatpush1.xpose.msra.mxu0 0.0
        %3464 = vmatprep.subr.mxu0 0.0
        %3465 = vmatpush1.xpose.msra.mxu0 0.0
        %3466 = vmatprep.subr.mxu0 0.0
        %3467 = vmatpush1.xpose.msra.mxu0 0.0
        %3468 = vmatprep.subr.mxu0 0.0
        %3469 = vmatpush1.xpose.msra.mxu0 0.0
        %3470 = vmatprep.subr.mxu0 0.0
        %3471 = vmatpush1.xpose.msra.mxu0 0.0
        %3472 = vmatprep.subr.mxu0 0.0
        %3473 = vmatpush1.xpose.msra.mxu0 0.0
        %3474 = vmatprep.subr.mxu0 0.0
        %3475 = vmatpush1.xpose.msra.mxu0 0.0
        %3476 = vmatprep.subr.mxu0 0.0
        %3477 = vmatpush1.xpose.msra.mxu0 0.0
        %3478 = vmatprep.subr.mxu0 0.0
        %3479 = vmatpush1.xpose.msra.mxu0 0.0
        %3480 = vmatprep.subr.mxu0 0.0
        %3481 = vmatpush1.xpose.msra.mxu0 0.0
        %3482 = vmatprep.subr.mxu0 0.0
        %3483 = vmatpush1.xpose.msra.mxu0 0.0
        %3484 = vmatprep.subr.mxu0 0.0
        %3485 = vmatpush1.xpose.msra.mxu0 0.0
        %3486 = vmatprep.subr.mxu0 0.0
        %3487 = vmatpush1.xpose.msra.mxu0 0.0
        %3488 = vmatprep.subr.mxu0 0.0
        %3489 = vmatpush1.xpose.msra.mxu0 0.0
        %3490 = vmatprep.subr.mxu0 0.0
        %3491 = vmatpush1.xpose.msra.mxu0 0.0
        %3492 = vmatprep.subr.mxu0 0.0
        %3493 = vmatpush1.xpose.msra.mxu0 0.0
        %3494 = vmatprep.subr.mxu0 0.0
        %3495 = vmatpush1.xpose.msra.mxu0 0.0
        %3496 = vmatprep.subr.mxu0 0.0
        %3497 = vmatpush1.xpose.msra.mxu0 0.0
        %3498 = vmatprep.subr.mxu0 0.0
        %3499 = vmatpush1.xpose.msra.mxu0 0.0
        %3500 = vmatprep.subr.mxu0 0.0
        %3501 = vmatpush1.xpose.msra.mxu0 0.0
        %3502 = vmatprep.subr.mxu0 0.0
        %3503 = vmatpush1.xpose.msra.mxu0 0.0
        %3504 = vmatprep.subr.mxu0 0.0
        %3505 = vmatpush1.xpose.msra.mxu0 0.0
        %3506 = vmatprep.subr.mxu0 0.0
        %3507 = vmatpush1.xpose.msra.mxu0 0.0
        %3508 = vmatprep.subr.mxu0 0.0
        %3509 = vmatpush1.xpose.msra.mxu0 0.0
        %3510 = vmatprep.subr.mxu0 0.0
        %3511 = vmatpush1.xpose.msra.mxu0 0.0
        %3512 = vmatprep.subr.mxu0 0.0
        %3513 = vmatpush1.xpose.msra.mxu0 0.0
        %3514 = vmatprep.subr.mxu0 0.0
        %3515 = vmatpush1.xpose.msra.mxu0 0.0
        %3516 = vmatprep.subr.mxu0 0.0
        %3517 = vmatpush1.xpose.msra.mxu0 0.0
        %3518 = vmatprep.subr.mxu0 0.0
        %3519 = vmatpush1.xpose.msra.mxu0 0.0
        %3520 = vmatprep.mubr.f32.mxu0 0.0
        %3521 = vmatmul.mubr.f32.gmra.mrb[0].mxu0 %v3448
        %v3522 = vpop.f32.mrb[0].mxu0
        %v3523 = vadd.f32 0.0, %v3522
        %v3524 = vpop.f32.mrb[0].mxu0
        %3525 = vmatprep.mubr.f32.mxu0 0.0
        %3526 = vmatmul.mubr.f32.gmra.mrb[0].mxu0 %v3450
        %v3527 = vpop.f32.mrb[0].mxu0
        %v3528 = vadd.f32 0.0, %v3527
        %v3529 = vpop.f32.mrb[0].mxu0
        %3530 = vdwg.mxu0
        %v3531 = vmul.f32 %v3523, 0.25
        %v3532 = vmul.f32 %v3528, 0.25
        %v3533 = vsel %vm753, %v3531, -inf
        %3534 = vmax.xlane.f32.xlu0 %v3533
        %v3535 = vpop.xlane.xlu0 %3534
        %v3536 = vsel %vm753, %v3532, -inf
        %3537 = vmax.xlane.f32.xlu0 %v3536
        %v3538 = vpop.xlane.xlu0 %3537
        %v3539 = vsub.f32 %v3531, %v3535
        %v3540 = vsub.f32 %v3532, %v3538
        %v3541 = vmul.f32 %v3539, 1.442695
        %v3542 = vpow.pop %v3541
        %v3543 = vmul.f32 %v3540, 1.442695
        %v3544 = vpow.pop %v3543
        %v3545 = vsel %vm753, %v3542, 0.0
        %3546 = vadd.xlane.f32.xlu0 %v3545
        %v3547 = vpop.xlane.xlu0 %3546
        %v3548 = vsel %vm753, %v3544, 0.0
        %3549 = vadd.xlane.f32.xlu0 %v3548
        %v3550 = vpop.xlane.xlu0 %3549
        %v3551 = vrcp.pop %v3547
        %v3552 = vmul.f32 %v3542, %v3551
        %v3553 = vrcp.pop %v3550
        %v3554 = vmul.f32 %v3544, %v3553
        %3555 = vrot.lane.b32.xlu0 %v749, 48
        %v3556 = vpop.permute.xlu0 %3555
        %3557 = vrot.lane.b32.xlu0 %v752, 48
        %v3558 = vpop.permute.xlu0 %3557
        %v3562 = vsel %vm753, %v3552, 0
        %v3565 = vsel %vm753, %v3554, 0
        %3567 = vmatprep.subr.mxu0 0.0
        %3568 = vmatpush1.msra.mxu0 %v3556
        %3569 = vmatprep.subr.mxu0 0.0
        %3570 = vmatpush1.msra.mxu0 %v3558
        %3571 = vmatprep.subr.mxu0 0.0
        %3572 = vmatpush1.msra.mxu0 0.0
        %3573 = vmatprep.subr.mxu0 0.0
        %3574 = vmatpush1.msra.mxu0 0.0
        %3575 = vmatprep.subr.mxu0 0.0
        %3576 = vmatpush1.msra.mxu0 0.0
        %3577 = vmatprep.subr.mxu0 0.0
        %3578 = vmatpush1.msra.mxu0 0.0
        %3579 = vmatprep.subr.mxu0 0.0
        %3580 = vmatpush1.msra.mxu0 0.0
        %3581 = vmatprep.subr.mxu0 0.0
        %3582 = vmatpush1.msra.mxu0 0.0
        %3583 = vmatprep.subr.mxu0 0.0
        %3584 = vmatpush1.msra.mxu0 0.0
        %3585 = vmatprep.subr.mxu0 0.0
        %3586 = vmatpush1.msra.mxu0 0.0
        %3587 = vmatprep.subr.mxu0 0.0
        %3588 = vmatpush1.msra.mxu0 0.0
        %3589 = vmatprep.subr.mxu0 0.0
        %3590 = vmatpush1.msra.mxu0 0.0
        %3591 = vmatprep.subr.mxu0 0.0
        %3592 = vmatpush1.msra.mxu0 0.0
        %3593 = vmatprep.subr.mxu0 0.0
        %3594 = vmatpush1.msra.mxu0 0.0
        %3595 = vmatprep.subr.mxu0 0.0
        %3596 = vmatpush1.msra.mxu0 0.0
        %3597 = vmatprep.subr.mxu0 0.0
        %3598 = vmatpush1.msra.mxu0 0.0
        %3599 = vmatprep.subr.mxu0 0.0
        %3600 = vmatpush1.msra.mxu0 0.0
        %3601 = vmatprep.subr.mxu0 0.0
        %3602 = vmatpush1.msra.mxu0 0.0
        %3603 = vmatprep.subr.mxu0 0.0
        %3604 = vmatpush1.msra.mxu0 0.0
        %3605 = vmatprep.subr.mxu0 0.0
        %3606 = vmatpush1.msra.mxu0 0.0
        %3607 = vmatprep.subr.mxu0 0.0
        %3608 = vmatpush1.msra.mxu0 0.0
        %3609 = vmatprep.subr.mxu0 0.0
        %3610 = vmatpush1.msra.mxu0 0.0
        %3611 = vmatprep.subr.mxu0 0.0
        %3612 = vmatpush1.msra.mxu0 0.0
        %3613 = vmatprep.subr.mxu0 0.0
        %3614 = vmatpush1.msra.mxu0 0.0
        %3615 = vmatprep.subr.mxu0 0.0
        %3616 = vmatpush1.msra.mxu0 0.0
        %3617 = vmatprep.subr.mxu0 0.0
        %3618 = vmatpush1.msra.mxu0 0.0
        %3619 = vmatprep.subr.mxu0 0.0
        %3620 = vmatpush1.msra.mxu0 0.0
        %3621 = vmatprep.subr.mxu0 0.0
        %3622 = vmatpush1.msra.mxu0 0.0
        %3623 = vmatprep.subr.mxu0 0.0
        %3624 = vmatpush1.msra.mxu0 0.0
        %3625 = vmatprep.subr.mxu0 0.0
        %3626 = vmatpush1.msra.mxu0 0.0
        %3627 = vmatprep.subr.mxu0 0.0
        %3628 = vmatpush1.msra.mxu0 0.0
        %3629 = vmatprep.subr.mxu0 0.0
        %3630 = vmatpush1.msra.mxu0 0.0
        %3631 = vmatprep.mubr.f32.mxu0 0.0
        %3632 = vmatmul.mubr.f32.gmra.mrb[0].mxu0 %v3562
        %v3633 = vpop.f32.mrb[0].mxu0
        %v3634 = vadd.f32 0.0, %v3633
        %v3635 = vpop.f32.mrb[0].mxu0
        %3636 = vmatprep.mubr.f32.mxu0 0.0
        %3637 = vmatmul.mubr.f32.gmra.mrb[0].mxu0 %v3565
        %v3638 = vpop.f32.mrb[0].mxu0
        %v3639 = vadd.f32 0.0, %v3638
        %v3640 = vpop.f32.mrb[0].mxu0
        %3641 = vdwg.mxu0
        %3642 = vrot.lane.b32.xlu0 %v747, 32
        %v3643 = vpop.permute.xlu0 %3642
        %3644 = vrot.lane.b32.xlu0 %v750, 32
        %v3645 = vpop.permute.xlu0 %3644
        %3646 = vrot.lane.b32.xlu0 %v748, 32
        %v3647 = vpop.permute.xlu0 %3646
        %3648 = vrot.lane.b32.xlu0 %v751, 32
        %v3649 = vpop.permute.xlu0 %3648
        %v3650 = vsel %vm753, %v3643, 0
        %v3652 = vsel %vm753, %v3645, 0
        %v3654 = vsel %vm753, %v3647, 0
        %v3656 = vsel %vm753, %v3649, 0
        %3658 = vmatprep.subr.mxu0 0.0
        %3659 = vmatpush1.xpose.msra.mxu0 %v3654
        %3660 = vmatprep.subr.mxu0 0.0
        %3661 = vmatpush1.xpose.msra.mxu0 %v3656
        %3662 = vmatprep.subr.mxu0 0.0
        %3663 = vmatpush1.xpose.msra.mxu0 0.0
        %3664 = vmatprep.subr.mxu0 0.0
        %3665 = vmatpush1.xpose.msra.mxu0 0.0
        %3666 = vmatprep.subr.mxu0 0.0
        %3667 = vmatpush1.xpose.msra.mxu0 0.0
        %3668 = vmatprep.subr.mxu0 0.0
        %3669 = vmatpush1.xpose.msra.mxu0 0.0
        %3670 = vmatprep.subr.mxu0 0.0
        %3671 = vmatpush1.xpose.msra.mxu0 0.0
        %3672 = vmatprep.subr.mxu0 0.0
        %3673 = vmatpush1.xpose.msra.mxu0 0.0
        %3674 = vmatprep.subr.mxu0 0.0
        %3675 = vmatpush1.xpose.msra.mxu0 0.0
        %3676 = vmatprep.subr.mxu0 0.0
        %3677 = vmatpush1.xpose.msra.mxu0 0.0
        %3678 = vmatprep.subr.mxu0 0.0
        %3679 = vmatpush1.xpose.msra.mxu0 0.0
        %3680 = vmatprep.subr.mxu0 0.0
        %3681 = vmatpush1.xpose.msra.mxu0 0.0
        %3682 = vmatprep.subr.mxu0 0.0
        %3683 = vmatpush1.xpose.msra.mxu0 0.0
        %3684 = vmatprep.subr.mxu0 0.0
        %3685 = vmatpush1.xpose.msra.mxu0 0.0
        %3686 = vmatprep.subr.mxu0 0.0
        %3687 = vmatpush1.xpose.msra.mxu0 0.0
        %3688 = vmatprep.subr.mxu0 0.0
        %3689 = vmatpush1.xpose.msra.mxu0 0.0
        %3690 = vmatprep.subr.mxu0 0.0
        %3691 = vmatpush1.xpose.msra.mxu0 0.0
        %3692 = vmatprep.subr.mxu0 0.0
        %3693 = vmatpush1.xpose.msra.mxu0 0.0
        %3694 = vmatprep.subr.mxu0 0.0
        %3695 = vmatpush1.xpose.msra.mxu0 0.0
        %3696 = vmatprep.subr.mxu0 0.0
        %3697 = vmatpush1.xpose.msra.mxu0 0.0
        %3698 = vmatprep.subr.mxu0 0.0
        %3699 = vmatpush1.xpose.msra.mxu0 0.0
        %3700 = vmatprep.subr.mxu0 0.0
        %3701 = vmatpush1.xpose.msra.mxu0 0.0
        %3702 = vmatprep.subr.mxu0 0.0
        %3703 = vmatpush1.xpose.msra.mxu0 0.0
        %3704 = vmatprep.subr.mxu0 0.0
        %3705 = vmatpush1.xpose.msra.mxu0 0.0
        %3706 = vmatprep.subr.mxu0 0.0
        %3707 = vmatpush1.xpose.msra.mxu0 0.0
        %3708 = vmatprep.subr.mxu0 0.0
        %3709 = vmatpush1.xpose.msra.mxu0 0.0
        %3710 = vmatprep.subr.mxu0 0.0
        %3711 = vmatpush1.xpose.msra.mxu0 0.0
        %3712 = vmatprep.subr.mxu0 0.0
        %3713 = vmatpush1.xpose.msra.mxu0 0.0
        %3714 = vmatprep.subr.mxu0 0.0
        %3715 = vmatpush1.xpose.msra.mxu0 0.0
        %3716 = vmatprep.subr.mxu0 0.0
        %3717 = vmatpush1.xpose.msra.mxu0 0.0
        %3718 = vmatprep.subr.mxu0 0.0
        %3719 = vmatpush1.xpose.msra.mxu0 0.0
        %3720 = vmatprep.subr.mxu0 0.0
        %3721 = vmatpush1.xpose.msra.mxu0 0.0
        %3722 = vmatprep.mubr.f32.mxu0 0.0
        %3723 = vmatmul.mubr.f32.gmra.mrb[0].mxu0 %v3650
        %v3724 = vpop.f32.mrb[0].mxu0
        %v3725 = vadd.f32 0.0, %v3724
        %v3726 = vpop.f32.mrb[0].mxu0
        %3727 = vmatprep.mubr.f32.mxu0 0.0
        %3728 = vmatmul.mubr.f32.gmra.mrb[0].mxu0 %v3652
        %v3729 = vpop.f32.mrb[0].mxu0
        %v3730 = vadd.f32 0.0, %v3729
        %v3731 = vpop.f32.mrb[0].mxu0
        %3732 = vdwg.mxu0
        %v3733 = vmul.f32 %v3725, 0.25
        %v3734 = vmul.f32 %v3730, 0.25
        %v3735 = vsel %vm753, %v3733, -inf
        %3736 = vmax.xlane.f32.xlu0 %v3735
        %v3737 = vpop.xlane.xlu0 %3736
        %v3738 = vsel %vm753, %v3734, -inf
        %3739 = vmax.xlane.f32.xlu0 %v3738
        %v3740 = vpop.xlane.xlu0 %3739
        %v3741 = vsub.f32 %v3733, %v3737
        %v3742 = vsub.f32 %v3734, %v3740
        %v3743 = vmul.f32 %v3741, 1.442695
        %v3744 = vpow.pop %v3743
        %v3745 = vmul.f32 %v3742, 1.442695
        %v3746 = vpow.pop %v3745
        %v3747 = vsel %vm753, %v3744, 0.0
        %3748 = vadd.xlane.f32.xlu0 %v3747
        %v3749 = vpop.xlane.xlu0 %3748
        %v3750 = vsel %vm753, %v3746, 0.0
        %3751 = vadd.xlane.f32.xlu0 %v3750
        %v3752 = vpop.xlane.xlu0 %3751
        %v3753 = vrcp.pop %v3749
        %v3754 = vmul.f32 %v3744, %v3753
        %v3755 = vrcp.pop %v3752
        %v3756 = vmul.f32 %v3746, %v3755
        %3757 = vrot.lane.b32.xlu0 %v749, 32
        %v3758 = vpop.permute.xlu0 %3757
        %3759 = vrot.lane.b32.xlu0 %v752, 32
        %v3760 = vpop.permute.xlu0 %3759
        %v3764 = vsel %vm753, %v3754, 0
        %v3767 = vsel %vm753, %v3756, 0
        %3769 = vmatprep.subr.mxu0 0.0
        %3770 = vmatpush1.msra.mxu0 %v3758
        %3771 = vmatprep.subr.mxu0 0.0
        %3772 = vmatpush1.msra.mxu0 %v3760
        %3773 = vmatprep.subr.mxu0 0.0
        %3774 = vmatpush1.msra.mxu0 0.0
        %3775 = vmatprep.subr.mxu0 0.0
        %3776 = vmatpush1.msra.mxu0 0.0
        %3777 = vmatprep.subr.mxu0 0.0
        %3778 = vmatpush1.msra.mxu0 0.0
        %3779 = vmatprep.subr.mxu0 0.0
        %3780 = vmatpush1.msra.mxu0 0.0
        %3781 = vmatprep.subr.mxu0 0.0
        %3782 = vmatpush1.msra.mxu0 0.0
        %3783 = vmatprep.subr.mxu0 0.0
        %3784 = vmatpush1.msra.mxu0 0.0
        %3785 = vmatprep.subr.mxu0 0.0
        %3786 = vmatpush1.msra.mxu0 0.0
        %3787 = vmatprep.subr.mxu0 0.0
        %3788 = vmatpush1.msra.mxu0 0.0
        %3789 = vmatprep.subr.mxu0 0.0
        %3790 = vmatpush1.msra.mxu0 0.0
        %3791 = vmatprep.subr.mxu0 0.0
        %3792 = vmatpush1.msra.mxu0 0.0
        %3793 = vmatprep.subr.mxu0 0.0
        %3794 = vmatpush1.msra.mxu0 0.0
        %3795 = vmatprep.subr.mxu0 0.0
        %3796 = vmatpush1.msra.mxu0 0.0
        %3797 = vmatprep.subr.mxu0 0.0
        %3798 = vmatpush1.msra.mxu0 0.0
        %3799 = vmatprep.subr.mxu0 0.0
        %3800 = vmatpush1.msra.mxu0 0.0
        %3801 = vmatprep.subr.mxu0 0.0
        %3802 = vmatpush1.msra.mxu0 0.0
        %3803 = vmatprep.subr.mxu0 0.0
        %3804 = vmatpush1.msra.mxu0 0.0
        %3805 = vmatprep.subr.mxu0 0.0
        %3806 = vmatpush1.msra.mxu0 0.0
        %3807 = vmatprep.subr.mxu0 0.0
        %3808 = vmatpush1.msra.mxu0 0.0
        %3809 = vmatprep.subr.mxu0 0.0
        %3810 = vmatpush1.msra.mxu0 0.0
        %3811 = vmatprep.subr.mxu0 0.0
        %3812 = vmatpush1.msra.mxu0 0.0
        %3813 = vmatprep.subr.mxu0 0.0
        %3814 = vmatpush1.msra.mxu0 0.0
        %3815 = vmatprep.subr.mxu0 0.0
        %3816 = vmatpush1.msra.mxu0 0.0
        %3817 = vmatprep.subr.mxu0 0.0
        %3818 = vmatpush1.msra.mxu0 0.0
        %3819 = vmatprep.subr.mxu0 0.0
        %3820 = vmatpush1.msra.mxu0 0.0
        %3821 = vmatprep.subr.mxu0 0.0
        %3822 = vmatpush1.msra.mxu0 0.0
        %3823 = vmatprep.subr.mxu0 0.0
        %3824 = vmatpush1.msra.mxu0 0.0
        %3825 = vmatprep.subr.mxu0 0.0
        %3826 = vmatpush1.msra.mxu0 0.0
        %3827 = vmatprep.subr.mxu0 0.0
        %3828 = vmatpush1.msra.mxu0 0.0
        %3829 = vmatprep.subr.mxu0 0.0
        %3830 = vmatpush1.msra.mxu0 0.0
        %3831 = vmatprep.subr.mxu0 0.0
        %3832 = vmatpush1.msra.mxu0 0.0
        %3833 = vmatprep.mubr.f32.mxu0 0.0
        %3834 = vmatmul.mubr.f32.gmra.mrb[0].mxu0 %v3764
        %v3835 = vpop.f32.mrb[0].mxu0
        %v3836 = vadd.f32 0.0, %v3835
        %v3837 = vpop.f32.mrb[0].mxu0
        %3838 = vmatprep.mubr.f32.mxu0 0.0
        %3839 = vmatmul.mubr.f32.gmra.mrb[0].mxu0 %v3767
        %v3840 = vpop.f32.mrb[0].mxu0
        %v3841 = vadd.f32 0.0, %v3840
        %v3842 = vpop.f32.mrb[0].mxu0
        %3843 = vdwg.mxu0
        %3844 = vrot.lane.b32.xlu0 %v747, 16
        %v3845 = vpop.permute.xlu0 %3844
        %3846 = vrot.lane.b32.xlu0 %v750, 16
        %v3847 = vpop.permute.xlu0 %3846
        %3848 = vrot.lane.b32.xlu0 %v748, 16
        %v3849 = vpop.permute.xlu0 %3848
        %3850 = vrot.lane.b32.xlu0 %v751, 16
        %v3851 = vpop.permute.xlu0 %3850
        %v3852 = vsel %vm753, %v3845, 0
        %v3854 = vsel %vm753, %v3847, 0
        %v3856 = vsel %vm753, %v3849, 0
        %v3858 = vsel %vm753, %v3851, 0
        %3860 = vmatprep.subr.mxu0 0.0
        %3861 = vmatpush1.xpose.msra.mxu0 %v3856
        %3862 = vmatprep.subr.mxu0 0.0
        %3863 = vmatpush1.xpose.msra.mxu0 %v3858
        %3864 = vmatprep.subr.mxu0 0.0
        %3865 = vmatpush1.xpose.msra.mxu0 0.0
        %3866 = vmatprep.subr.mxu0 0.0
        %3867 = vmatpush1.xpose.msra.mxu0 0.0
        %3868 = vmatprep.subr.mxu0 0.0
        %3869 = vmatpush1.xpose.msra.mxu0 0.0
        %3870 = vmatprep.subr.mxu0 0.0
        %3871 = vmatpush1.xpose.msra.mxu0 0.0
        %3872 = vmatprep.subr.mxu0 0.0
        %3873 = vmatpush1.xpose.msra.mxu0 0.0
        %3874 = vmatprep.subr.mxu0 0.0
        %3875 = vmatpush1.xpose.msra.mxu0 0.0
        %3876 = vmatprep.subr.mxu0 0.0
        %3877 = vmatpush1.xpose.msra.mxu0 0.0
        %3878 = vmatprep.subr.mxu0 0.0
        %3879 = vmatpush1.xpose.msra.mxu0 0.0
        %3880 = vmatprep.subr.mxu0 0.0
        %3881 = vmatpush1.xpose.msra.mxu0 0.0
        %3882 = vmatprep.subr.mxu0 0.0
        %3883 = vmatpush1.xpose.msra.mxu0 0.0
        %3884 = vmatprep.subr.mxu0 0.0
        %3885 = vmatpush1.xpose.msra.mxu0 0.0
        %3886 = vmatprep.subr.mxu0 0.0
        %3887 = vmatpush1.xpose.msra.mxu0 0.0
        %3888 = vmatprep.subr.mxu0 0.0
        %3889 = vmatpush1.xpose.msra.mxu0 0.0
        %3890 = vmatprep.subr.mxu0 0.0
        %3891 = vmatpush1.xpose.msra.mxu0 0.0
        %3892 = vmatprep.subr.mxu0 0.0
        %3893 = vmatpush1.xpose.msra.mxu0 0.0
        %3894 = vmatprep.subr.mxu0 0.0
        %3895 = vmatpush1.xpose.msra.mxu0 0.0
        %3896 = vmatprep.subr.mxu0 0.0
        %3897 = vmatpush1.xpose.msra.mxu0 0.0
        %3898 = vmatprep.subr.mxu0 0.0
        %3899 = vmatpush1.xpose.msra.mxu0 0.0
        %3900 = vmatprep.subr.mxu0 0.0
        %3901 = vmatpush1.xpose.msra.mxu0 0.0
        %3902 = vmatprep.subr.mxu0 0.0
        %3903 = vmatpush1.xpose.msra.mxu0 0.0
        %3904 = vmatprep.subr.mxu0 0.0
        %3905 = vmatpush1.xpose.msra.mxu0 0.0
        %3906 = vmatprep.subr.mxu0 0.0
        %3907 = vmatpush1.xpose.msra.mxu0 0.0
        %3908 = vmatprep.subr.mxu0 0.0
        %3909 = vmatpush1.xpose.msra.mxu0 0.0
        %3910 = vmatprep.subr.mxu0 0.0
        %3911 = vmatpush1.xpose.msra.mxu0 0.0
        %3912 = vmatprep.subr.mxu0 0.0
        %3913 = vmatpush1.xpose.msra.mxu0 0.0
        %3914 = vmatprep.subr.mxu0 0.0
        %3915 = vmatpush1.xpose.msra.mxu0 0.0
        %3916 = vmatprep.subr.mxu0 0.0
        %3917 = vmatpush1.xpose.msra.mxu0 0.0
        %3918 = vmatprep.subr.mxu0 0.0
        %3919 = vmatpush1.xpose.msra.mxu0 0.0
        %3920 = vmatprep.subr.mxu0 0.0
        %3921 = vmatpush1.xpose.msra.mxu0 0.0
        %3922 = vmatprep.subr.mxu0 0.0
        %3923 = vmatpush1.xpose.msra.mxu0 0.0
        %3924 = vmatprep.mubr.f32.mxu0 0.0
        %3925 = vmatmul.mubr.f32.gmra.mrb[0].mxu0 %v3852
        %v3926 = vpop.f32.mrb[0].mxu0
        %v3927 = vadd.f32 0.0, %v3926
        %v3928 = vpop.f32.mrb[0].mxu0
        %3929 = vmatprep.mubr.f32.mxu0 0.0
        %3930 = vmatmul.mubr.f32.gmra.mrb[0].mxu0 %v3854
        %v3931 = vpop.f32.mrb[0].mxu0
        %v3932 = vadd.f32 0.0, %v3931
        %v3933 = vpop.f32.mrb[0].mxu0
        %3934 = vdwg.mxu0
        %v3935 = vmul.f32 %v3927, 0.25
        %v3936 = vmul.f32 %v3932, 0.25
        %v3937 = vsel %vm753, %v3935, -inf
        %3938 = vmax.xlane.f32.xlu0 %v3937
        %v3939 = vpop.xlane.xlu0 %3938
        %v3940 = vsel %vm753, %v3936, -inf
        %3941 = vmax.xlane.f32.xlu0 %v3940
        %v3942 = vpop.xlane.xlu0 %3941
        %v3943 = vsub.f32 %v3935, %v3939
        %v3944 = vsub.f32 %v3936, %v3942
        %v3945 = vmul.f32 %v3943, 1.442695
        %v3946 = vpow.pop %v3945
        %v3947 = vmul.f32 %v3944, 1.442695
        %v3948 = vpow.pop %v3947
        %v3949 = vsel %vm753, %v3946, 0.0
        %3950 = vadd.xlane.f32.xlu0 %v3949
        %v3951 = vpop.xlane.xlu0 %3950
        %v3952 = vsel %vm753, %v3948, 0.0
        %3953 = vadd.xlane.f32.xlu0 %v3952
        %v3954 = vpop.xlane.xlu0 %3953
        %v3955 = vrcp.pop %v3951
        %v3956 = vmul.f32 %v3946, %v3955
        %v3957 = vrcp.pop %v3954
        %v3958 = vmul.f32 %v3948, %v3957
        %3959 = vrot.lane.b32.xlu0 %v749, 16
        %v3960 = vpop.permute.xlu0 %3959
        %3961 = vrot.lane.b32.xlu0 %v752, 16
        %v3962 = vpop.permute.xlu0 %3961
        %v3966 = vsel %vm753, %v3956, 0
        %v3969 = vsel %vm753, %v3958, 0
        %3971 = vmatprep.subr.mxu0 0.0
        %3972 = vmatpush1.msra.mxu0 %v3960
        %3973 = vmatprep.subr.mxu0 0.0
        %3974 = vmatpush1.msra.mxu0 %v3962
        %3975 = vmatprep.subr.mxu0 0.0
        %3976 = vmatpush1.msra.mxu0 0.0
        %3977 = vmatprep.subr.mxu0 0.0
        %3978 = vmatpush1.msra.mxu0 0.0
        %3979 = vmatprep.subr.mxu0 0.0
        %3980 = vmatpush1.msra.mxu0 0.0
        %3981 = vmatprep.subr.mxu0 0.0
        %3982 = vmatpush1.msra.mxu0 0.0
        %3983 = vmatprep.subr.mxu0 0.0
        %3984 = vmatpush1.msra.mxu0 0.0
        %3985 = vmatprep.subr.mxu0 0.0
        %3986 = vmatpush1.msra.mxu0 0.0
        %3987 = vmatprep.subr.mxu0 0.0
        %3988 = vmatpush1.msra.mxu0 0.0
        %3989 = vmatprep.subr.mxu0 0.0
        %3990 = vmatpush1.msra.mxu0 0.0
        %3991 = vmatprep.subr.mxu0 0.0
        %3992 = vmatpush1.msra.mxu0 0.0
        %3993 = vmatprep.subr.mxu0 0.0
        %3994 = vmatpush1.msra.mxu0 0.0
        %3995 = vmatprep.subr.mxu0 0.0
        %3996 = vmatpush1.msra.mxu0 0.0
        %3997 = vmatprep.subr.mxu0 0.0
        %3998 = vmatpush1.msra.mxu0 0.0
        %3999 = vmatprep.subr.mxu0 0.0
        %4000 = vmatpush1.msra.mxu0 0.0
        %4001 = vmatprep.subr.mxu0 0.0
        %4002 = vmatpush1.msra.mxu0 0.0
        %4003 = vmatprep.subr.mxu0 0.0
        %4004 = vmatpush1.msra.mxu0 0.0
        %4005 = vmatprep.subr.mxu0 0.0
        %4006 = vmatpush1.msra.mxu0 0.0
        %4007 = vmatprep.subr.mxu0 0.0
        %4008 = vmatpush1.msra.mxu0 0.0
        %4009 = vmatprep.subr.mxu0 0.0
        %4010 = vmatpush1.msra.mxu0 0.0
        %4011 = vmatprep.subr.mxu0 0.0
        %4012 = vmatpush1.msra.mxu0 0.0
        %4013 = vmatprep.subr.mxu0 0.0
        %4014 = vmatpush1.msra.mxu0 0.0
        %4015 = vmatprep.subr.mxu0 0.0
        %4016 = vmatpush1.msra.mxu0 0.0
        %4017 = vmatprep.subr.mxu0 0.0
        %4018 = vmatpush1.msra.mxu0 0.0
        %4019 = vmatprep.subr.mxu0 0.0
        %4020 = vmatpush1.msra.mxu0 0.0
        %4021 = vmatprep.subr.mxu0 0.0
        %4022 = vmatpush1.msra.mxu0 0.0
        %4023 = vmatprep.subr.mxu0 0.0
        %4024 = vmatpush1.msra.mxu0 0.0
        %4025 = vmatprep.subr.mxu0 0.0
        %4026 = vmatpush1.msra.mxu0 0.0
        %4027 = vmatprep.subr.mxu0 0.0
        %4028 = vmatpush1.msra.mxu0 0.0
        %4029 = vmatprep.subr.mxu0 0.0
        %4030 = vmatpush1.msra.mxu0 0.0
        %4031 = vmatprep.subr.mxu0 0.0
        %4032 = vmatpush1.msra.mxu0 0.0
        %4033 = vmatprep.subr.mxu0 0.0
        %4034 = vmatpush1.msra.mxu0 0.0
        %4035 = vmatprep.mubr.f32.mxu0 0.0
        %4036 = vmatmul.mubr.f32.gmra.mrb[0].mxu0 %v3966
        %v4037 = vpop.f32.mrb[0].mxu0
        %v4038 = vadd.f32 0.0, %v4037
        %v4039 = vpop.f32.mrb[0].mxu0
        %4040 = vmatprep.mubr.f32.mxu0 0.0
        %4041 = vmatmul.mubr.f32.gmra.mrb[0].mxu0 %v3969
        %v4042 = vpop.f32.mrb[0].mxu0
        %v4043 = vadd.f32 0.0, %v4042
        %v4044 = vpop.f32.mrb[0].mxu0
        %4045 = vdwg.mxu0
        %4048 = vrot.lane.b32.xlu0 %v2826, 16
        %v4049 = vpop.permute.xlu0 %4048
        %4050 = vrot.lane.b32.xlu0 %v2831, 16
        %v4051 = vpop.permute.xlu0 %4050
        %4056 = vrot.lane.b32.xlu0 %v3028, 32
        %v4057 = vpop.permute.xlu0 %4056
        %4058 = vrot.lane.b32.xlu0 %v3033, 32
        %v4059 = vpop.permute.xlu0 %4058
        %4064 = vrot.lane.b32.xlu0 %v3230, 48
        %v4065 = vpop.permute.xlu0 %4064
        %4066 = vrot.lane.b32.xlu0 %v3235, 48
        %v4067 = vpop.permute.xlu0 %4066
        %4072 = vrot.lane.b32.xlu0 %v3432, 64
        %v4073 = vpop.permute.xlu0 %4072
        %4074 = vrot.lane.b32.xlu0 %v3437, 64
        %v4075 = vpop.permute.xlu0 %4074
        %4080 = vrot.lane.b32.xlu0 %v3634, 80
        %v4081 = vpop.permute.xlu0 %4080
        %4082 = vrot.lane.b32.xlu0 %v3639, 80
        %v4083 = vpop.permute.xlu0 %4082
        %4088 = vrot.lane.b32.xlu0 %v3836, 96
        %v4089 = vpop.permute.xlu0 %4088
        %4090 = vrot.lane.b32.xlu0 %v3841, 96
        %v4091 = vpop.permute.xlu0 %4090
        %4096 = vrot.lane.b32.xlu0 %v4038, 112
        %v4097 = vpop.permute.xlu0 %4096
        %4098 = vrot.lane.b32.xlu0 %v4043, 112
        %v4099 = vpop.permute.xlu0 %4098
        %v4102 = vsel %vm753, %v2622, %v4049
        %v4103 = vsel %vm753, %v2627, %v4051
        %v4104 = vsel %vm2420, %v4102, %v4057
        %v4105 = vsel %vm2420, %v4103, %v4059
        %v4106 = vsel %vm2423, %v4104, %v4065
        %v4107 = vsel %vm2423, %v4105, %v4067
        %v4108 = vsel %vm2426, %v4106, %v4073
        %v4109 = vsel %vm2426, %v4107, %v4075
        %v4110 = vsel %vm2429, %v4108, %v4081
        %v4111 = vsel %vm2429, %v4109, %v4083
        %v4112 = vsel %vm2432, %v4110, %v4089
        %v4113 = vsel %vm2432, %v4111, %v4091
        %v4114 = vsel %vm2435, %v4112, %v4097
        %v4115 = vsel %vm2435, %v4113, %v4099
        %v4116 = vand.u32 2147483647, %v2436
        %v4117 = vand.u32 2147483647, %v2437
        %v4118 = vand.u32 2147483647, %v4114
        %v4119 = vand.u32 2147483647, %v4115
        %4120 = vmax.xlane.f32.xlu0 %v4116
        %v4121 = vpop.xlane.xlu0 %4120
        %4122 = vmax.xlane.f32.xlu0 %v4117
        %v4123 = vpop.xlane.xlu0 %4122
        %4124 = vmax.xlane.f32.xlu0 %v4118
        %v4125 = vpop.xlane.xlu0 %4124
        %4126 = vmax.xlane.f32.xlu0 %v4119
        %v4127 = vpop.xlane.xlu0 %4126
        %vm4128 = vcmp.gt.f32.partialorder %v4121, 0.0
        %vm4129 = vcmp.gt.f32.partialorder %v4123, 0.0
        %vm4130 = vcmp.gt.f32.partialorder %v4125, 0.0
        %vm4131 = vcmp.gt.f32.partialorder %v4127, 0.0
        %v4132 = vsel %vm4128, %v4121, 1.0
        %v4133 = vsel %vm4129, %v4123, 1.0
        %v4134 = vsel %vm4130, %v4125, 1.0
        %v4135 = vsel %vm4131, %v4127, 1.0
        %v4136 = vrcp.pop %v4132
        %v4137 = vmul.f32 57344.0, %v4136
        %v4138 = vrcp.pop %v4133
        %v4139 = vmul.f32 57344.0, %v4138
        %v4140 = vrcp.pop %v4134
        %v4141 = vmul.f32 57344.0, %v4140
        %v4142 = vrcp.pop %v4135
        %v4143 = vmul.f32 57344.0, %v4142
        %v4144 = vsel %vm4128, %v4137, 1.0
        %v4145 = vsel %vm4129, %v4139, 1.0
        %v4146 = vsel %vm4130, %v4141, 1.0
        %v4147 = vsel %vm4131, %v4143, 1.0
        %v4148 = vmul.f32 %v4121, 1.7438617e-05
        %v4149 = vmul.f32 %v4123, 1.7438617e-05
        %v4150 = vmul.f32 %v4125, 1.7438617e-05
        %v4151 = vmul.f32 %v4127, 1.7438617e-05
        %v4152 = vsel %vm4128, %v4148, 1.0
        %v4153 = vsel %vm4129, %v4149, 1.0
        %v4154 = vsel %vm4130, %v4150, 1.0
        %v4155 = vsel %vm4131, %v4151, 1.0
        %v4156 = vmul.f32 %v2436, %v4144
        %v4157 = vmul.f32 %v2437, %v4145
        %v4158 = vmul.f32 %v4114, %v4146
        %v4159 = vmul.f32 %v4115, %v4147
        %v4160 = vmul.f32 %v4156, 2097153.0
        %v4161 = vmul.f32 %v4157, 2097153.0
        %v4162 = vmul.f32 %v4158, 2097153.0
        %v4163 = vmul.f32 %v4159, 2097153.0
        %v4164 = vsub.f32 %v4160, %v4156
        %v4165 = vsub.f32 %v4161, %v4157
        %v4166 = vsub.f32 %v4162, %v4158
        %v4167 = vsub.f32 %v4163, %v4159
        %v4168 = vsub.f32 %v4160, %v4164
        %v4169 = vsub.f32 %v4161, %v4165
        %v4170 = vsub.f32 %v4162, %v4166
        %v4171 = vsub.f32 %v4163, %v4167
        %v4172 = vmul.f32 %v4156, 65536.0
        %v4173 = vmul.f32 %v4157, 65536.0
        %v4174 = vmul.f32 %v4158, 65536.0
        %v4175 = vmul.f32 %v4159, 65536.0
        %v4176 = vadd.f32 %v4172, 12582912.0
        %v4177 = vadd.f32 %v4173, 12582912.0
        %v4178 = vadd.f32 %v4174, 12582912.0
        %v4179 = vadd.f32 %v4175, 12582912.0
        %v4180 = vsub.f32 %v4176, 12582912.0
        %v4181 = vsub.f32 %v4177, 12582912.0
        %v4182 = vsub.f32 %v4178, 12582912.0
        %v4183 = vsub.f32 %v4179, 12582912.0
        %v4184 = vmul.f32 %v4180, 1.5258789e-05
        %v4185 = vmul.f32 %v4181, 1.5258789e-05
        %v4186 = vmul.f32 %v4182, 1.5258789e-05
        %v4187 = vmul.f32 %v4183, 1.5258789e-05
        %v4188 = vand.u32 2147483647, %v4156
        %v4189 = vand.u32 2147483647, %v4157
        %v4190 = vand.u32 2147483647, %v4158
        %v4191 = vand.u32 2147483647, %v4159
        %vm4192 = vcmp.lt.f32.partialorder %v4188, 6.1035156e-05
        %vm4193 = vcmp.lt.f32.partialorder %v4189, 6.1035156e-05
        %vm4194 = vcmp.lt.f32.partialorder %v4190, 6.1035156e-05
        %vm4195 = vcmp.lt.f32.partialorder %v4191, 6.1035156e-05
        %v4196 = vsel %vm4192, %v4184, %v4168
        %v4197 = vsel %vm4193, %v4185, %v4169
        %v4198 = vsel %vm4194, %v4186, %v4170
        %v4199 = vsel %vm4195, %v4187, %v4171
        %v4200 = vmax.f32 %v4196, -57344.0
        %v4201 = vmax.f32 %v4197, -57344.0
        %v4202 = vmax.f32 %v4198, -57344.0
        %v4203 = vmax.f32 %v4199, -57344.0
        %v4204 = vmin.f32 %v4200, 57344.0
        %v4205 = vmin.f32 %v4201, 57344.0
        %v4206 = vmin.f32 %v4202, 57344.0
        %v4207 = vmin.f32 %v4203, 57344.0
        %v4208 = vpack.c.bf16 %v4205, %v4204
        %v4209 = vpack.c.bf16 %v4207, %v4206
        %v4210 = vunpack.c.h.b16 %v336
        %v4211 = vunpack.c.h.b16 %v339
        %v4212 = vunpack.c.h.b16 %v342
        %v4213 = vunpack.c.h.b16 %v345
        %v4214 = vunpack.c.h.b16 %v348
        %v4215 = vunpack.c.h.b16 %v351
        %v4216 = vunpack.c.h.b16 %v354
        %v4217 = vunpack.c.h.b16 %v357
        %v4218 = vunpack.c.h.b16 %v360
        %v4219 = vunpack.c.h.b16 %v363
        %v4220 = vunpack.c.h.b16 %v366
        %v4221 = vunpack.c.h.b16 %v369
        %v4222 = vunpack.c.h.b16 %v372
        %v4223 = vunpack.c.h.b16 %v375
        %v4224 = vunpack.c.h.b16 %v378
        %v4225 = vunpack.c.h.b16 %v381
        %v4226 = vpack.c.b16 %v4211, %v4210
        %v4227 = vpack.c.b16 %v4213, %v4212
        %v4228 = vpack.c.b16 %v4215, %v4214
        %v4229 = vpack.c.b16 %v4217, %v4216
        %v4230 = vpack.c.b16 %v4219, %v4218
        %v4231 = vpack.c.b16 %v4221, %v4220
        %v4232 = vpack.c.b16 %v4223, %v4222
        %v4233 = vpack.c.b16 %v4225, %v4224
        %4242 = vmatprep.subr.bf16.mxu0 0
        %4243 = vmatpush1.bf16.msra.mxu0 %v4226
        %4244 = vmatprep.subr.bf16.mxu0 0
        %4245 = vmatpush1.bf16.msra.mxu0 %v4227
        %4246 = vmatprep.subr.bf16.mxu0 0
        %4247 = vmatpush1.bf16.msra.mxu0 %v4228
        %4248 = vmatprep.subr.bf16.mxu0 0
        %4249 = vmatpush1.bf16.msra.mxu0 %v4229
        %4250 = vmatprep.subr.bf16.mxu0 0
        %4251 = vmatpush1.bf16.msra.mxu0 %v4230
        %4252 = vmatprep.subr.bf16.mxu0 0
        %4253 = vmatpush1.bf16.msra.mxu0 %v4231
        %4254 = vmatprep.subr.bf16.mxu0 0
        %4255 = vmatpush1.bf16.msra.mxu0 %v4232
        %4256 = vmatprep.subr.bf16.mxu0 0
        %4257 = vmatpush1.bf16.msra.mxu0 %v4233
        %4258 = vmatprep.subr.bf16.mxu0 0
        %4259 = vmatpush1.bf16.msra.mxu0 0
        %4260 = vmatprep.subr.bf16.mxu0 0
        %4261 = vmatpush1.bf16.msra.mxu0 0
        %4262 = vmatprep.subr.bf16.mxu0 0
        %4263 = vmatpush1.bf16.msra.mxu0 0
        %4264 = vmatprep.subr.bf16.mxu0 0
        %4265 = vmatpush1.bf16.msra.mxu0 0
        %4266 = vmatprep.subr.bf16.mxu0 0
        %4267 = vmatpush1.bf16.msra.mxu0 0
        %4268 = vmatprep.subr.bf16.mxu0 0
        %4269 = vmatpush1.bf16.msra.mxu0 0
        %4270 = vmatprep.subr.bf16.mxu0 0
        %4271 = vmatpush1.bf16.msra.mxu0 0
        %4272 = vmatprep.subr.bf16.mxu0 0
        %4273 = vmatpush1.bf16.msra.mxu0 0
        %4274 = vmatprep.mubr.bf16.mxu0 0
        %4275 = vmatmul.mubr.bf16.gmra.mrb[0].mxu0 %v4208
        %v4276 = vpop.f32.mrb[0].mxu0
        %v4277 = vadd.f32 0.0, %v4276
        %v4278 = vpop.f32.mrb[0].mxu0
        %v4279 = vpop.f32.mrb[0].mxu0
        %v4280 = vadd.f32 0.0, %v4279
        %v4281 = vpop.f32.mrb[0].mxu0
        %4282 = vmatprep.mubr.bf16.mxu0 0
        %4283 = vmatmul.mubr.bf16.gmra.mrb[0].mxu0 %v4209
        %v4284 = vpop.f32.mrb[0].mxu0
        %v4285 = vadd.f32 0.0, %v4284
        %v4286 = vpop.f32.mrb[0].mxu0
        %v4287 = vpop.f32.mrb[0].mxu0
        %v4288 = vadd.f32 0.0, %v4287
        %v4289 = vpop.f32.mrb[0].mxu0
        %4290 = vdwg.mxu0
        %v4291 = vmul.f32 %v4277, %v4152
        %v4292 = vmul.f32 %v4280, %v4153
        %v4293 = vmul.f32 %v4285, %v4154
        %v4294 = vmul.f32 %v4288, %v4155
        %v4295 = vadd.f32 %v331, %v4291
        %v4296 = vadd.f32 %v332, %v4292
        %v4297 = vadd.f32 %v333, %v4293
        %v4298 = vadd.f32 %v334, %v4294
        %4299 = vadd.xlane.f32.xlu0 %v4295
        %v4300 = vpop.xlane.xlu0 %4299
        %4301 = vadd.xlane.f32.xlu0 %v4296
        %v4302 = vpop.xlane.xlu0 %4301
        %4303 = vadd.xlane.f32.xlu0 %v4297
        %v4304 = vpop.xlane.xlu0 %4303
        %4305 = vadd.xlane.f32.xlu0 %v4298
        %v4306 = vpop.xlane.xlu0 %4305
        %v4307 = vrcp.pop 128.0
        %v4308 = vmul.f32 %v4300, %v4307
        %v4309 = vmul.f32 %v4302, %v4307
        %v4310 = vmul.f32 %v4304, %v4307
        %v4311 = vmul.f32 %v4306, %v4307
        %v4312 = vsub.f32 %v4295, %v4308
        %v4313 = vsub.f32 %v4296, %v4309
        %v4314 = vsub.f32 %v4297, %v4310
        %v4315 = vsub.f32 %v4298, %v4311
        %v4316 = vmul.f32 %v4312, %v4312
        %v4317 = vmul.f32 %v4313, %v4313
        %v4318 = vmul.f32 %v4314, %v4314
        %v4319 = vmul.f32 %v4315, %v4315
        %4320 = vadd.xlane.f32.xlu0 %v4316
        %v4321 = vpop.xlane.xlu0 %4320
        %4322 = vadd.xlane.f32.xlu0 %v4317
        %v4323 = vpop.xlane.xlu0 %4322
        %4324 = vadd.xlane.f32.xlu0 %v4318
        %v4325 = vpop.xlane.xlu0 %4324
        %4326 = vadd.xlane.f32.xlu0 %v4319
        %v4327 = vpop.xlane.xlu0 %4326
        %v4328 = vmul.f32 %v4321, %v4307
        %v4329 = vmul.f32 %v4323, %v4307
        %v4330 = vmul.f32 %v4325, %v4307
        %v4331 = vmul.f32 %v4327, %v4307
        %v4332 = vadd.f32 %v4328, 1e-05
        %v4333 = vadd.f32 %v4329, 1e-05
        %v4334 = vadd.f32 %v4330, 1e-05
        %v4335 = vadd.f32 %v4331, 1e-05
        %v4336 = vrsqrt.pop %v4332
        %v4337 = vrsqrt.pop %v4333
        %v4338 = vrsqrt.pop %v4334
        %v4339 = vrsqrt.pop %v4335
        %v4340 = vmul.f32 %v4312, %v4336
        %v4341 = vmul.f32 %v4313, %v4337
        %v4342 = vmul.f32 %v4314, %v4338
        %v4343 = vmul.f32 %v4315, %v4339
        %v4344 = vlaneseq
        %v4345 = vshrl.u32 %v4344, 7
        %v4346 = vsub.s32 2, %v4345
        %v4347 = vrot.slane %v415, %v4346
        %v4348 = vmul.f32 %v4340, %v4347
        %v4349 = vmul.f32 %v4341, %v4347
        %v4350 = vmul.f32 %v4342, %v4347
        %v4351 = vmul.f32 %v4343, %v4347
        %v4352 = vlaneseq
        %v4353 = vshrl.u32 %v4352, 7
        %v4354 = vsub.s32 2, %v4353
        %v4355 = vrot.slane %v416, %v4354
        %v4356 = vadd.f32 %v4348, %v4355
        %v4357 = vadd.f32 %v4349, %v4355
        %v4358 = vadd.f32 %v4350, %v4355
        %v4359 = vadd.f32 %v4351, %v4355
        %v4360 = vand.u32 2147483647, %v4356
        %v4361 = vand.u32 2147483647, %v4357
        %v4362 = vand.u32 2147483647, %v4358
        %v4363 = vand.u32 2147483647, %v4359
        %4364 = vmax.xlane.f32.xlu0 %v4360
        %v4365 = vpop.xlane.xlu0 %4364
        %4366 = vmax.xlane.f32.xlu0 %v4361
        %v4367 = vpop.xlane.xlu0 %4366
        %4368 = vmax.xlane.f32.xlu0 %v4362
        %v4369 = vpop.xlane.xlu0 %4368
        %4370 = vmax.xlane.f32.xlu0 %v4363
        %v4371 = vpop.xlane.xlu0 %4370
        %vm4372 = vcmp.gt.f32.partialorder %v4365, 0.0
        %vm4373 = vcmp.gt.f32.partialorder %v4367, 0.0
        %vm4374 = vcmp.gt.f32.partialorder %v4369, 0.0
        %vm4375 = vcmp.gt.f32.partialorder %v4371, 0.0
        %v4376 = vsel %vm4372, %v4365, 1.0
        %v4377 = vsel %vm4373, %v4367, 1.0
        %v4378 = vsel %vm4374, %v4369, 1.0
        %v4379 = vsel %vm4375, %v4371, 1.0
        %v4380 = vrcp.pop %v4376
        %v4381 = vmul.f32 448.0, %v4380
        %v4382 = vrcp.pop %v4377
        %v4383 = vmul.f32 448.0, %v4382
        %v4384 = vrcp.pop %v4378
        %v4385 = vmul.f32 448.0, %v4384
        %v4386 = vrcp.pop %v4379
        %v4387 = vmul.f32 448.0, %v4386
        %v4388 = vsel %vm4372, %v4381, 1.0
        %v4389 = vsel %vm4373, %v4383, 1.0
        %v4390 = vsel %vm4374, %v4385, 1.0
        %v4391 = vsel %vm4375, %v4387, 1.0
        %v4392 = vmul.f32 %v4365, 0.002232143
        %v4393 = vmul.f32 %v4367, 0.002232143
        %v4394 = vmul.f32 %v4369, 0.002232143
        %v4395 = vmul.f32 %v4371, 0.002232143
        %v4396 = vsel %vm4372, %v4392, 1.0
        %v4397 = vsel %vm4373, %v4393, 1.0
        %v4398 = vsel %vm4374, %v4394, 1.0
        %v4399 = vsel %vm4375, %v4395, 1.0
        %v4400 = vmul.f32 %v4356, %v4388
        %v4401 = vmul.f32 %v4357, %v4389
        %v4402 = vmul.f32 %v4358, %v4390
        %v4403 = vmul.f32 %v4359, %v4391
        %v4404 = vmul.f32 %v4400, 1048577.0
        %v4405 = vmul.f32 %v4401, 1048577.0
        %v4406 = vmul.f32 %v4402, 1048577.0
        %v4407 = vmul.f32 %v4403, 1048577.0
        %v4408 = vsub.f32 %v4404, %v4400
        %v4409 = vsub.f32 %v4405, %v4401
        %v4410 = vsub.f32 %v4406, %v4402
        %v4411 = vsub.f32 %v4407, %v4403
        %v4412 = vsub.f32 %v4404, %v4408
        %v4413 = vsub.f32 %v4405, %v4409
        %v4414 = vsub.f32 %v4406, %v4410
        %v4415 = vsub.f32 %v4407, %v4411
        %v4416 = vmul.f32 %v4400, 512.0
        %v4417 = vmul.f32 %v4401, 512.0
        %v4418 = vmul.f32 %v4402, 512.0
        %v4419 = vmul.f32 %v4403, 512.0
        %v4420 = vadd.f32 %v4416, 12582912.0
        %v4421 = vadd.f32 %v4417, 12582912.0
        %v4422 = vadd.f32 %v4418, 12582912.0
        %v4423 = vadd.f32 %v4419, 12582912.0
        %v4424 = vsub.f32 %v4420, 12582912.0
        %v4425 = vsub.f32 %v4421, 12582912.0
        %v4426 = vsub.f32 %v4422, 12582912.0
        %v4427 = vsub.f32 %v4423, 12582912.0
        %v4428 = vmul.f32 %v4424, 0.001953125
        %v4429 = vmul.f32 %v4425, 0.001953125
        %v4430 = vmul.f32 %v4426, 0.001953125
        %v4431 = vmul.f32 %v4427, 0.001953125
        %v4432 = vand.u32 2147483647, %v4400
        %v4433 = vand.u32 2147483647, %v4401
        %v4434 = vand.u32 2147483647, %v4402
        %v4435 = vand.u32 2147483647, %v4403
        %vm4436 = vcmp.lt.f32.partialorder %v4432, 0.015625
        %vm4437 = vcmp.lt.f32.partialorder %v4433, 0.015625
        %vm4438 = vcmp.lt.f32.partialorder %v4434, 0.015625
        %vm4439 = vcmp.lt.f32.partialorder %v4435, 0.015625
        %v4440 = vsel %vm4436, %v4428, %v4412
        %v4441 = vsel %vm4437, %v4429, %v4413
        %v4442 = vsel %vm4438, %v4430, %v4414
        %v4443 = vsel %vm4439, %v4431, %v4415
        %v4444 = vmax.f32 %v4440, -448.0
        %v4445 = vmax.f32 %v4441, -448.0
        %v4446 = vmax.f32 %v4442, -448.0
        %v4447 = vmax.f32 %v4443, -448.0
        %v4448 = vmin.f32 %v4444, 448.0
        %v4449 = vmin.f32 %v4445, 448.0
        %v4450 = vmin.f32 %v4446, 448.0
        %v4451 = vmin.f32 %v4447, 448.0
        %v4452 = vpack.c.bf16 %v4449, %v4448
        %v4453 = vpack.c.bf16 %v4451, %v4450
        %v4470 = vunpack.c.l.b16 %v337
        %v4471 = vunpack.c.h.b16 %v337
        %v4472 = vunpack.c.l.b16 %v340
        %v4473 = vunpack.c.h.b16 %v340
        %v4474 = vunpack.c.l.b16 %v343
        %v4475 = vunpack.c.h.b16 %v343
        %v4476 = vunpack.c.l.b16 %v346
        %v4477 = vunpack.c.h.b16 %v346
        %v4478 = vunpack.c.l.b16 %v349
        %v4479 = vunpack.c.h.b16 %v349
        %v4480 = vunpack.c.l.b16 %v352
        %v4481 = vunpack.c.h.b16 %v352
        %v4482 = vunpack.c.l.b16 %v355
        %v4483 = vunpack.c.h.b16 %v355
        %v4484 = vunpack.c.l.b16 %v358
        %v4485 = vunpack.c.h.b16 %v358
        %v4486 = vunpack.c.l.b16 %v361
        %v4487 = vunpack.c.h.b16 %v361
        %v4488 = vunpack.c.l.b16 %v364
        %v4489 = vunpack.c.h.b16 %v364
        %v4490 = vunpack.c.l.b16 %v367
        %v4491 = vunpack.c.h.b16 %v367
        %v4492 = vunpack.c.l.b16 %v370
        %v4493 = vunpack.c.h.b16 %v370
        %v4494 = vunpack.c.l.b16 %v373
        %v4495 = vunpack.c.h.b16 %v373
        %v4496 = vunpack.c.l.b16 %v376
        %v4497 = vunpack.c.h.b16 %v376
        %v4498 = vunpack.c.l.b16 %v379
        %v4499 = vunpack.c.h.b16 %v379
        %v4500 = vunpack.c.l.b16 %v382
        %v4501 = vunpack.c.h.b16 %v382
        %v4502 = vpack.c.b16 %v4472, %v4470
        %v4503 = vpack.c.b16 %v4473, %v4471
        %v4504 = vpack.c.b16 %v4476, %v4474
        %v4505 = vpack.c.b16 %v4477, %v4475
        %v4506 = vpack.c.b16 %v4480, %v4478
        %v4507 = vpack.c.b16 %v4481, %v4479
        %v4508 = vpack.c.b16 %v4484, %v4482
        %v4509 = vpack.c.b16 %v4485, %v4483
        %v4510 = vpack.c.b16 %v4488, %v4486
        %v4511 = vpack.c.b16 %v4489, %v4487
        %v4512 = vpack.c.b16 %v4492, %v4490
        %v4513 = vpack.c.b16 %v4493, %v4491
        %v4514 = vpack.c.b16 %v4496, %v4494
        %v4515 = vpack.c.b16 %v4497, %v4495
        %v4516 = vpack.c.b16 %v4500, %v4498
        %v4517 = vpack.c.b16 %v4501, %v4499
        %4534 = vmatprep.subr.bf16.mxu0 %v4503
        %4535 = vmatpush1.bf16.msra.mxu0 %v4502
        %4536 = vmatprep.subr.bf16.mxu0 %v4505
        %4537 = vmatpush1.bf16.msra.mxu0 %v4504
        %4538 = vmatprep.subr.bf16.mxu0 %v4507
        %4539 = vmatpush1.bf16.msra.mxu0 %v4506
        %4540 = vmatprep.subr.bf16.mxu0 %v4509
        %4541 = vmatpush1.bf16.msra.mxu0 %v4508
        %4542 = vmatprep.subr.bf16.mxu0 %v4511
        %4543 = vmatpush1.bf16.msra.mxu0 %v4510
        %4544 = vmatprep.subr.bf16.mxu0 %v4513
        %4545 = vmatpush1.bf16.msra.mxu0 %v4512
        %4546 = vmatprep.subr.bf16.mxu0 %v4515
        %4547 = vmatpush1.bf16.msra.mxu0 %v4514
        %4548 = vmatprep.subr.bf16.mxu0 %v4517
        %4549 = vmatpush1.bf16.msra.mxu0 %v4516
        %4550 = vmatprep.subr.bf16.mxu0 0
        %4551 = vmatpush1.bf16.msra.mxu0 0
        %4552 = vmatprep.subr.bf16.mxu0 0
        %4553 = vmatpush1.bf16.msra.mxu0 0
        %4554 = vmatprep.subr.bf16.mxu0 0
        %4555 = vmatpush1.bf16.msra.mxu0 0
        %4556 = vmatprep.subr.bf16.mxu0 0
        %4557 = vmatpush1.bf16.msra.mxu0 0
        %4558 = vmatprep.subr.bf16.mxu0 0
        %4559 = vmatpush1.bf16.msra.mxu0 0
        %4560 = vmatprep.subr.bf16.mxu0 0
        %4561 = vmatpush1.bf16.msra.mxu0 0
        %4562 = vmatprep.subr.bf16.mxu0 0
        %4563 = vmatpush1.bf16.msra.mxu0 0
        %4564 = vmatprep.subr.bf16.mxu0 0
        %4565 = vmatpush1.bf16.msra.mxu0 0
        %4566 = vmatprep.mubr.bf16.mxu0 0
        %4567 = vmatmul.mubr.bf16.gmra.mrb[0].mxu0 %v4452
        %v4568 = vpop.f32.mrb[0].mxu0
        %v4569 = vadd.f32 0.0, %v4568
        %v4570 = vpop.f32.mrb[0].mxu0
        %v4571 = vadd.f32 0.0, %v4570
        %v4572 = vpop.f32.mrb[0].mxu0
        %v4573 = vadd.f32 0.0, %v4572
        %v4574 = vpop.f32.mrb[0].mxu0
        %v4575 = vadd.f32 0.0, %v4574
        %4576 = vmatprep.mubr.bf16.mxu0 0
        %4577 = vmatmul.mubr.bf16.gmra.mrb[0].mxu0 %v4453
        %v4578 = vpop.f32.mrb[0].mxu0
        %v4579 = vadd.f32 0.0, %v4578
        %v4580 = vpop.f32.mrb[0].mxu0
        %v4581 = vadd.f32 0.0, %v4580
        %v4582 = vpop.f32.mrb[0].mxu0
        %v4583 = vadd.f32 0.0, %v4582
        %v4584 = vpop.f32.mrb[0].mxu0
        %v4585 = vadd.f32 0.0, %v4584
        %4586 = vdwg.mxu0
        %v4587 = vmul.f32 %v4569, %v4396
        %v4588 = vmul.f32 %v4571, %v4396
        %v4589 = vmul.f32 %v4573, %v4397
        %v4590 = vmul.f32 %v4575, %v4397
        %v4591 = vmul.f32 %v4579, %v4398
        %v4592 = vmul.f32 %v4581, %v4398
        %v4593 = vmul.f32 %v4583, %v4399
        %v4594 = vmul.f32 %v4585, %v4399
        %v4595 = vlaneseq
        %v4596 = vshrl.u32 %v4595, 7
        %v4597 = vsub.s32 0, %v4596
        %v4598 = vrot.slane %v415, %v4597
        %v4599 = vlaneseq
        %v4600 = vshrl.u32 %v4599, 7
        %v4601 = vsub.s32 0, %v4600
        %v4602 = vrot.slane %v416, %v4601
        %v4603 = vadd.f32 %v4587, %v4598
        %v4604 = vadd.f32 %v4588, %v4602
        %v4605 = vadd.f32 %v4589, %v4598
        %v4606 = vadd.f32 %v4590, %v4602
        %v4607 = vadd.f32 %v4591, %v4598
        %v4608 = vadd.f32 %v4592, %v4602
        %v4609 = vadd.f32 %v4593, %v4598
        %v4610 = vadd.f32 %v4594, %v4602
        %v4611 = vmul.f32 %v4603, 0.5
        %v4612 = vmul.f32 %v4604, 0.5
        %v4613 = vmul.f32 %v4605, 0.5
        %v4614 = vmul.f32 %v4606, 0.5
        %v4615 = vmul.f32 %v4607, 0.5
        %v4616 = vmul.f32 %v4608, 0.5
        %v4617 = vmul.f32 %v4609, 0.5
        %v4618 = vmul.f32 %v4610, 0.5
        %v4619 = vmul.f32 %v4603, 0.70710677
        %v4620 = vmul.f32 %v4604, 0.70710677
        %v4621 = vmul.f32 %v4605, 0.70710677
        %v4622 = vmul.f32 %v4606, 0.70710677
        %v4623 = vmul.f32 %v4607, 0.70710677
        %v4624 = vmul.f32 %v4608, 0.70710677
        %v4625 = vmul.f32 %v4609, 0.70710677
        %v4626 = vmul.f32 %v4610, 0.70710677
        %v4627 = vand.u32 2147483647, %v4619
        %v4628 = vand.u32 2147483647, %v4620
        %v4629 = vand.u32 2147483647, %v4621
        %v4630 = vand.u32 2147483647, %v4622
        %v4631 = vand.u32 2147483647, %v4623
        %v4632 = vand.u32 2147483647, %v4624
        %v4633 = vand.u32 2147483647, %v4625
        %v4634 = vand.u32 2147483647, %v4626
        %v4635 = vmul.f32 %v4627, 0.3275911
        %v4636 = vmul.f32 %v4628, 0.3275911
        %v4637 = vmul.f32 %v4629, 0.3275911
        %v4638 = vmul.f32 %v4630, 0.3275911
        %v4639 = vmul.f32 %v4631, 0.3275911
        %v4640 = vmul.f32 %v4632, 0.3275911
        %v4641 = vmul.f32 %v4633, 0.3275911
        %v4642 = vmul.f32 %v4634, 0.3275911
        %v4643 = vadd.f32 %v4635, 1.0
        %v4644 = vadd.f32 %v4636, 1.0
        %v4645 = vadd.f32 %v4637, 1.0
        %v4646 = vadd.f32 %v4638, 1.0
        %v4647 = vadd.f32 %v4639, 1.0
        %v4648 = vadd.f32 %v4640, 1.0
        %v4649 = vadd.f32 %v4641, 1.0
        %v4650 = vadd.f32 %v4642, 1.0
        %v4651 = vrcp.pop %v4643
        %v4652 = vmul.f32 1.0, %v4651
        %v4653 = vrcp.pop %v4644
        %v4654 = vmul.f32 1.0, %v4653
        %v4655 = vrcp.pop %v4645
        %v4656 = vmul.f32 1.0, %v4655
        %v4657 = vrcp.pop %v4646
        %v4658 = vmul.f32 1.0, %v4657
        %v4659 = vrcp.pop %v4647
        %v4660 = vmul.f32 1.0, %v4659
        %v4661 = vrcp.pop %v4648
        %v4662 = vmul.f32 1.0, %v4661
        %v4663 = vrcp.pop %v4649
        %v4664 = vmul.f32 1.0, %v4663
        %v4665 = vrcp.pop %v4650
        %v4666 = vmul.f32 1.0, %v4665
        %v4667 = vmul.f32 %v4652, 1.0614054
        %v4668 = vmul.f32 %v4654, 1.0614054
        %v4669 = vmul.f32 %v4656, 1.0614054
        %v4670 = vmul.f32 %v4658, 1.0614054
        %v4671 = vmul.f32 %v4660, 1.0614054
        %v4672 = vmul.f32 %v4662, 1.0614054
        %v4673 = vmul.f32 %v4664, 1.0614054
        %v4674 = vmul.f32 %v4666, 1.0614054
        %v4675 = vadd.f32 %v4667, -1.4531521
        %v4676 = vadd.f32 %v4668, -1.4531521
        %v4677 = vadd.f32 %v4669, -1.4531521
        %v4678 = vadd.f32 %v4670, -1.4531521
        %v4679 = vadd.f32 %v4671, -1.4531521
        %v4680 = vadd.f32 %v4672, -1.4531521
        %v4681 = vadd.f32 %v4673, -1.4531521
        %v4682 = vadd.f32 %v4674, -1.4531521
        %v4683 = vmul.f32 %v4675, %v4652
        %v4684 = vmul.f32 %v4676, %v4654
        %v4685 = vmul.f32 %v4677, %v4656
        %v4686 = vmul.f32 %v4678, %v4658
        %v4687 = vmul.f32 %v4679, %v4660
        %v4688 = vmul.f32 %v4680, %v4662
        %v4689 = vmul.f32 %v4681, %v4664
        %v4690 = vmul.f32 %v4682, %v4666
        %v4691 = vadd.f32 %v4683, 1.4214138
        %v4692 = vadd.f32 %v4684, 1.4214138
        %v4693 = vadd.f32 %v4685, 1.4214138
        %v4694 = vadd.f32 %v4686, 1.4214138
        %v4695 = vadd.f32 %v4687, 1.4214138
        %v4696 = vadd.f32 %v4688, 1.4214138
        %v4697 = vadd.f32 %v4689, 1.4214138
        %v4698 = vadd.f32 %v4690, 1.4214138
        %v4699 = vmul.f32 %v4691, %v4652
        %v4700 = vmul.f32 %v4692, %v4654
        %v4701 = vmul.f32 %v4693, %v4656
        %v4702 = vmul.f32 %v4694, %v4658
        %v4703 = vmul.f32 %v4695, %v4660
        %v4704 = vmul.f32 %v4696, %v4662
        %v4705 = vmul.f32 %v4697, %v4664
        %v4706 = vmul.f32 %v4698, %v4666
        %v4707 = vadd.f32 %v4699, -0.28449672
        %v4708 = vadd.f32 %v4700, -0.28449672
        %v4709 = vadd.f32 %v4701, -0.28449672
        %v4710 = vadd.f32 %v4702, -0.28449672
        %v4711 = vadd.f32 %v4703, -0.28449672
        %v4712 = vadd.f32 %v4704, -0.28449672
        %v4713 = vadd.f32 %v4705, -0.28449672
        %v4714 = vadd.f32 %v4706, -0.28449672
        %v4715 = vmul.f32 %v4707, %v4652
        %v4716 = vmul.f32 %v4708, %v4654
        %v4717 = vmul.f32 %v4709, %v4656
        %v4718 = vmul.f32 %v4710, %v4658
        %v4719 = vmul.f32 %v4711, %v4660
        %v4720 = vmul.f32 %v4712, %v4662
        %v4721 = vmul.f32 %v4713, %v4664
        %v4722 = vmul.f32 %v4714, %v4666
        %v4723 = vadd.f32 %v4715, 0.2548296
        %v4724 = vadd.f32 %v4716, 0.2548296
        %v4725 = vadd.f32 %v4717, 0.2548296
        %v4726 = vadd.f32 %v4718, 0.2548296
        %v4727 = vadd.f32 %v4719, 0.2548296
        %v4728 = vadd.f32 %v4720, 0.2548296
        %v4729 = vadd.f32 %v4721, 0.2548296
        %v4730 = vadd.f32 %v4722, 0.2548296
        %v4731 = vmul.f32 %v4723, %v4652
        %v4732 = vmul.f32 %v4724, %v4654
        %v4733 = vmul.f32 %v4725, %v4656
        %v4734 = vmul.f32 %v4726, %v4658
        %v4735 = vmul.f32 %v4727, %v4660
        %v4736 = vmul.f32 %v4728, %v4662
        %v4737 = vmul.f32 %v4729, %v4664
        %v4738 = vmul.f32 %v4730, %v4666
        %v4739 = vsub.f32 0.0, %v4627
        %v4740 = vsub.f32 0.0, %v4628
        %v4741 = vsub.f32 0.0, %v4629
        %v4742 = vsub.f32 0.0, %v4630
        %v4743 = vsub.f32 0.0, %v4631
        %v4744 = vsub.f32 0.0, %v4632
        %v4745 = vsub.f32 0.0, %v4633
        %v4746 = vsub.f32 0.0, %v4634
        %v4747 = vmul.f32 %v4739, %v4627
        %v4748 = vmul.f32 %v4740, %v4628
        %v4749 = vmul.f32 %v4741, %v4629
        %v4750 = vmul.f32 %v4742, %v4630
        %v4751 = vmul.f32 %v4743, %v4631
        %v4752 = vmul.f32 %v4744, %v4632
        %v4753 = vmul.f32 %v4745, %v4633
        %v4754 = vmul.f32 %v4746, %v4634
        %v4755 = vmul.f32 %v4747, 1.442695
        %v4756 = vpow.pop %v4755
        %v4757 = vmul.f32 %v4748, 1.442695
        %v4758 = vpow.pop %v4757
        %v4759 = vmul.f32 %v4749, 1.442695
        %v4760 = vpow.pop %v4759
        %v4761 = vmul.f32 %v4750, 1.442695
        %v4762 = vpow.pop %v4761
        %v4763 = vmul.f32 %v4751, 1.442695
        %v4764 = vpow.pop %v4763
        %v4765 = vmul.f32 %v4752, 1.442695
        %v4766 = vpow.pop %v4765
        %v4767 = vmul.f32 %v4753, 1.442695
        %v4768 = vpow.pop %v4767
        %v4769 = vmul.f32 %v4754, 1.442695
        %v4770 = vpow.pop %v4769
        %v4771 = vmul.f32 %v4731, %v4756
        %v4772 = vmul.f32 %v4732, %v4758
        %v4773 = vmul.f32 %v4733, %v4760
        %v4774 = vmul.f32 %v4734, %v4762
        %v4775 = vmul.f32 %v4735, %v4764
        %v4776 = vmul.f32 %v4736, %v4766
        %v4777 = vmul.f32 %v4737, %v4768
        %v4778 = vmul.f32 %v4738, %v4770
        %v4779 = vsub.f32 1.0, %v4771
        %v4780 = vsub.f32 1.0, %v4772
        %v4781 = vsub.f32 1.0, %v4773
        %v4782 = vsub.f32 1.0, %v4774
        %v4783 = vsub.f32 1.0, %v4775
        %v4784 = vsub.f32 1.0, %v4776
        %v4785 = vsub.f32 1.0, %v4777
        %v4786 = vsub.f32 1.0, %v4778
        %vm4787 = vcmp.ge.f32.partialorder %v4619, 0.0
        %vm4788 = vcmp.ge.f32.partialorder %v4620, 0.0
        %vm4789 = vcmp.ge.f32.partialorder %v4621, 0.0
        %vm4790 = vcmp.ge.f32.partialorder %v4622, 0.0
        %vm4791 = vcmp.ge.f32.partialorder %v4623, 0.0
        %vm4792 = vcmp.ge.f32.partialorder %v4624, 0.0
        %vm4793 = vcmp.ge.f32.partialorder %v4625, 0.0
        %vm4794 = vcmp.ge.f32.partialorder %v4626, 0.0
        %v4795 = vsub.f32 0.0, %v4779
        %v4796 = vsub.f32 0.0, %v4780
        %v4797 = vsub.f32 0.0, %v4781
        %v4798 = vsub.f32 0.0, %v4782
        %v4799 = vsub.f32 0.0, %v4783
        %v4800 = vsub.f32 0.0, %v4784
        %v4801 = vsub.f32 0.0, %v4785
        %v4802 = vsub.f32 0.0, %v4786
        %v4803 = vsel %vm4787, %v4779, %v4795
        %v4804 = vsel %vm4788, %v4780, %v4796
        %v4805 = vsel %vm4789, %v4781, %v4797
        %v4806 = vsel %vm4790, %v4782, %v4798
        %v4807 = vsel %vm4791, %v4783, %v4799
        %v4808 = vsel %vm4792, %v4784, %v4800
        %v4809 = vsel %vm4793, %v4785, %v4801
        %v4810 = vsel %vm4794, %v4786, %v4802
        %v4811 = vadd.f32 %v4803, 1.0
        %v4812 = vadd.f32 %v4804, 1.0
        %v4813 = vadd.f32 %v4805, 1.0
        %v4814 = vadd.f32 %v4806, 1.0
        %v4815 = vadd.f32 %v4807, 1.0
        %v4816 = vadd.f32 %v4808, 1.0
        %v4817 = vadd.f32 %v4809, 1.0
        %v4818 = vadd.f32 %v4810, 1.0
        %v4819 = vmul.f32 %v4611, %v4811
        %v4820 = vmul.f32 %v4612, %v4812
        %v4821 = vmul.f32 %v4613, %v4813
        %v4822 = vmul.f32 %v4614, %v4814
        %v4823 = vmul.f32 %v4615, %v4815
        %v4824 = vmul.f32 %v4616, %v4816
        %v4825 = vmul.f32 %v4617, %v4817
        %v4826 = vmul.f32 %v4618, %v4818
        %v4827 = vand.u32 2147483647, %v4819
        %v4828 = vand.u32 2147483647, %v4821
        %v4829 = vand.u32 2147483647, %v4823
        %v4830 = vand.u32 2147483647, %v4825
        %4831 = vmax.xlane.f32.xlu0 %v4827
        %v4832 = vpop.xlane.xlu0 %4831
        %4833 = vmax.xlane.f32.xlu0 %v4828
        %v4834 = vpop.xlane.xlu0 %4833
        %4835 = vmax.xlane.f32.xlu0 %v4829
        %v4836 = vpop.xlane.xlu0 %4835
        %4837 = vmax.xlane.f32.xlu0 %v4830
        %v4838 = vpop.xlane.xlu0 %4837
        %vm4839 = vcmp.gt.f32.partialorder %v4832, 0.0
        %vm4840 = vcmp.gt.f32.partialorder %v4834, 0.0
        %vm4841 = vcmp.gt.f32.partialorder %v4836, 0.0
        %vm4842 = vcmp.gt.f32.partialorder %v4838, 0.0
        %v4843 = vsel %vm4839, %v4832, 1.0
        %v4844 = vsel %vm4840, %v4834, 1.0
        %v4845 = vsel %vm4841, %v4836, 1.0
        %v4846 = vsel %vm4842, %v4838, 1.0
        %v4847 = vrcp.pop %v4843
        %v4848 = vmul.f32 448.0, %v4847
        %v4849 = vrcp.pop %v4844
        %v4850 = vmul.f32 448.0, %v4849
        %v4851 = vrcp.pop %v4845
        %v4852 = vmul.f32 448.0, %v4851
        %v4853 = vrcp.pop %v4846
        %v4854 = vmul.f32 448.0, %v4853
        %v4855 = vsel %vm4839, %v4848, 1.0
        %v4856 = vsel %vm4840, %v4850, 1.0
        %v4857 = vsel %vm4841, %v4852, 1.0
        %v4858 = vsel %vm4842, %v4854, 1.0
        %v4859 = vmul.f32 %v4832, 0.002232143
        %v4860 = vmul.f32 %v4834, 0.002232143
        %v4861 = vmul.f32 %v4836, 0.002232143
        %v4862 = vmul.f32 %v4838, 0.002232143
        %v4863 = vsel %vm4839, %v4859, 1.0
        %v4864 = vsel %vm4840, %v4860, 1.0
        %v4865 = vsel %vm4841, %v4861, 1.0
        %v4866 = vsel %vm4842, %v4862, 1.0
        %v4867 = vmul.f32 %v4819, %v4855
        %v4868 = vmul.f32 %v4821, %v4856
        %v4869 = vmul.f32 %v4823, %v4857
        %v4870 = vmul.f32 %v4825, %v4858
        %v4871 = vmul.f32 %v4867, 1048577.0
        %v4872 = vmul.f32 %v4868, 1048577.0
        %v4873 = vmul.f32 %v4869, 1048577.0
        %v4874 = vmul.f32 %v4870, 1048577.0
        %v4875 = vsub.f32 %v4871, %v4867
        %v4876 = vsub.f32 %v4872, %v4868
        %v4877 = vsub.f32 %v4873, %v4869
        %v4878 = vsub.f32 %v4874, %v4870
        %v4879 = vsub.f32 %v4871, %v4875
        %v4880 = vsub.f32 %v4872, %v4876
        %v4881 = vsub.f32 %v4873, %v4877
        %v4882 = vsub.f32 %v4874, %v4878
        %v4883 = vmul.f32 %v4867, 512.0
        %v4884 = vmul.f32 %v4868, 512.0
        %v4885 = vmul.f32 %v4869, 512.0
        %v4886 = vmul.f32 %v4870, 512.0
        %v4887 = vadd.f32 %v4883, 12582912.0
        %v4888 = vadd.f32 %v4884, 12582912.0
        %v4889 = vadd.f32 %v4885, 12582912.0
        %v4890 = vadd.f32 %v4886, 12582912.0
        %v4891 = vsub.f32 %v4887, 12582912.0
        %v4892 = vsub.f32 %v4888, 12582912.0
        %v4893 = vsub.f32 %v4889, 12582912.0
        %v4894 = vsub.f32 %v4890, 12582912.0
        %v4895 = vmul.f32 %v4891, 0.001953125
        %v4896 = vmul.f32 %v4892, 0.001953125
        %v4897 = vmul.f32 %v4893, 0.001953125
        %v4898 = vmul.f32 %v4894, 0.001953125
        %v4899 = vand.u32 2147483647, %v4867
        %v4900 = vand.u32 2147483647, %v4868
        %v4901 = vand.u32 2147483647, %v4869
        %v4902 = vand.u32 2147483647, %v4870
        %vm4903 = vcmp.lt.f32.partialorder %v4899, 0.015625
        %vm4904 = vcmp.lt.f32.partialorder %v4900, 0.015625
        %vm4905 = vcmp.lt.f32.partialorder %v4901, 0.015625
        %vm4906 = vcmp.lt.f32.partialorder %v4902, 0.015625
        %v4907 = vsel %vm4903, %v4895, %v4879
        %v4908 = vsel %vm4904, %v4896, %v4880
        %v4909 = vsel %vm4905, %v4897, %v4881
        %v4910 = vsel %vm4906, %v4898, %v4882
        %v4911 = vmax.f32 %v4907, -448.0
        %v4912 = vmax.f32 %v4908, -448.0
        %v4913 = vmax.f32 %v4909, -448.0
        %v4914 = vmax.f32 %v4910, -448.0
        %v4915 = vmin.f32 %v4911, 448.0
        %v4916 = vmin.f32 %v4912, 448.0
        %v4917 = vmin.f32 %v4913, 448.0
        %v4918 = vmin.f32 %v4914, 448.0
        %v4919 = vpack.c.bf16 %v4916, %v4915
        %v4920 = vpack.c.bf16 %v4918, %v4917
        %v4937 = vunpack.c.l.b16 %v383
        %v4938 = vunpack.c.l.b16 %v384
        %v4939 = vunpack.c.l.b16 %v385
        %v4940 = vunpack.c.l.b16 %v386
        %v4941 = vunpack.c.l.b16 %v387
        %v4942 = vunpack.c.l.b16 %v388
        %v4943 = vunpack.c.l.b16 %v389
        %v4944 = vunpack.c.l.b16 %v390
        %v4945 = vunpack.c.l.b16 %v391
        %v4946 = vunpack.c.l.b16 %v392
        %v4947 = vunpack.c.l.b16 %v393
        %v4948 = vunpack.c.l.b16 %v394
        %v4949 = vunpack.c.l.b16 %v395
        %v4950 = vunpack.c.l.b16 %v396
        %v4951 = vunpack.c.l.b16 %v397
        %v4952 = vunpack.c.l.b16 %v398
        %v4953 = vpack.c.b16 %v4938, %v4937
        %v4954 = vpack.c.b16 %v4940, %v4939
        %v4955 = vpack.c.b16 %v4942, %v4941
        %v4956 = vpack.c.b16 %v4944, %v4943
        %v4957 = vpack.c.b16 %v4946, %v4945
        %v4958 = vpack.c.b16 %v4948, %v4947
        %v4959 = vpack.c.b16 %v4950, %v4949
        %v4960 = vpack.c.b16 %v4952, %v4951
        %4969 = vmatprep.subr.bf16.mxu0 0
        %4970 = vmatpush1.bf16.msra.mxu0 %v4953
        %4971 = vmatprep.subr.bf16.mxu0 0
        %4972 = vmatpush1.bf16.msra.mxu0 %v4954
        %4973 = vmatprep.subr.bf16.mxu0 0
        %4974 = vmatpush1.bf16.msra.mxu0 %v4955
        %4975 = vmatprep.subr.bf16.mxu0 0
        %4976 = vmatpush1.bf16.msra.mxu0 %v4956
        %4977 = vmatprep.subr.bf16.mxu0 0
        %4978 = vmatpush1.bf16.msra.mxu0 %v4957
        %4979 = vmatprep.subr.bf16.mxu0 0
        %4980 = vmatpush1.bf16.msra.mxu0 %v4958
        %4981 = vmatprep.subr.bf16.mxu0 0
        %4982 = vmatpush1.bf16.msra.mxu0 %v4959
        %4983 = vmatprep.subr.bf16.mxu0 0
        %4984 = vmatpush1.bf16.msra.mxu0 %v4960
        %4985 = vmatprep.subr.bf16.mxu0 0
        %4986 = vmatpush1.bf16.msra.mxu0 0
        %4987 = vmatprep.subr.bf16.mxu0 0
        %4988 = vmatpush1.bf16.msra.mxu0 0
        %4989 = vmatprep.subr.bf16.mxu0 0
        %4990 = vmatpush1.bf16.msra.mxu0 0
        %4991 = vmatprep.subr.bf16.mxu0 0
        %4992 = vmatpush1.bf16.msra.mxu0 0
        %4993 = vmatprep.subr.bf16.mxu0 0
        %4994 = vmatpush1.bf16.msra.mxu0 0
        %4995 = vmatprep.subr.bf16.mxu0 0
        %4996 = vmatpush1.bf16.msra.mxu0 0
        %4997 = vmatprep.subr.bf16.mxu0 0
        %4998 = vmatpush1.bf16.msra.mxu0 0
        %4999 = vmatprep.subr.bf16.mxu0 0
        %5000 = vmatpush1.bf16.msra.mxu0 0
        %5001 = vmatprep.mubr.bf16.mxu0 0
        %5002 = vmatmul.mubr.bf16.gmra.mrb[0].mxu0 %v4919
        %v5003 = vpop.f32.mrb[0].mxu0
        %v5004 = vadd.f32 0.0, %v5003
        %v5005 = vpop.f32.mrb[0].mxu0
        %v5006 = vpop.f32.mrb[0].mxu0
        %v5007 = vadd.f32 0.0, %v5006
        %v5008 = vpop.f32.mrb[0].mxu0
        %5009 = vmatprep.mubr.bf16.mxu0 0
        %5010 = vmatmul.mubr.bf16.gmra.mrb[0].mxu0 %v4920
        %v5011 = vpop.f32.mrb[0].mxu0
        %v5012 = vadd.f32 0.0, %v5011
        %v5013 = vpop.f32.mrb[0].mxu0
        %v5014 = vpop.f32.mrb[0].mxu0
        %v5015 = vadd.f32 0.0, %v5014
        %v5016 = vpop.f32.mrb[0].mxu0
        %5017 = vdwg.mxu0
        %v5018 = vmul.f32 %v5004, %v4863
        %v5019 = vmul.f32 %v5007, %v4864
        %v5020 = vmul.f32 %v5012, %v4865
        %v5021 = vmul.f32 %v5015, %v4866
        %v5022 = vand.u32 2147483647, %v4820
        %v5023 = vand.u32 2147483647, %v4822
        %v5024 = vand.u32 2147483647, %v4824
        %v5025 = vand.u32 2147483647, %v4826
        %5026 = vmax.xlane.f32.xlu0 %v5022
        %v5027 = vpop.xlane.xlu0 %5026
        %5028 = vmax.xlane.f32.xlu0 %v5023
        %v5029 = vpop.xlane.xlu0 %5028
        %5030 = vmax.xlane.f32.xlu0 %v5024
        %v5031 = vpop.xlane.xlu0 %5030
        %5032 = vmax.xlane.f32.xlu0 %v5025
        %v5033 = vpop.xlane.xlu0 %5032
        %vm5034 = vcmp.gt.f32.partialorder %v5027, 0.0
        %vm5035 = vcmp.gt.f32.partialorder %v5029, 0.0
        %vm5036 = vcmp.gt.f32.partialorder %v5031, 0.0
        %vm5037 = vcmp.gt.f32.partialorder %v5033, 0.0
        %v5038 = vsel %vm5034, %v5027, 1.0
        %v5039 = vsel %vm5035, %v5029, 1.0
        %v5040 = vsel %vm5036, %v5031, 1.0
        %v5041 = vsel %vm5037, %v5033, 1.0
        %v5042 = vrcp.pop %v5038
        %v5043 = vmul.f32 448.0, %v5042
        %v5044 = vrcp.pop %v5039
        %v5045 = vmul.f32 448.0, %v5044
        %v5046 = vrcp.pop %v5040
        %v5047 = vmul.f32 448.0, %v5046
        %v5048 = vrcp.pop %v5041
        %v5049 = vmul.f32 448.0, %v5048
        %v5050 = vsel %vm5034, %v5043, 1.0
        %v5051 = vsel %vm5035, %v5045, 1.0
        %v5052 = vsel %vm5036, %v5047, 1.0
        %v5053 = vsel %vm5037, %v5049, 1.0
        %v5054 = vmul.f32 %v5027, 0.002232143
        %v5055 = vmul.f32 %v5029, 0.002232143
        %v5056 = vmul.f32 %v5031, 0.002232143
        %v5057 = vmul.f32 %v5033, 0.002232143
        %v5058 = vsel %vm5034, %v5054, 1.0
        %v5059 = vsel %vm5035, %v5055, 1.0
        %v5060 = vsel %vm5036, %v5056, 1.0
        %v5061 = vsel %vm5037, %v5057, 1.0
        %v5062 = vmul.f32 %v4820, %v5050
        %v5063 = vmul.f32 %v4822, %v5051
        %v5064 = vmul.f32 %v4824, %v5052
        %v5065 = vmul.f32 %v4826, %v5053
        %v5066 = vmul.f32 %v5062, 1048577.0
        %v5067 = vmul.f32 %v5063, 1048577.0
        %v5068 = vmul.f32 %v5064, 1048577.0
        %v5069 = vmul.f32 %v5065, 1048577.0
        %v5070 = vsub.f32 %v5066, %v5062
        %v5071 = vsub.f32 %v5067, %v5063
        %v5072 = vsub.f32 %v5068, %v5064
        %v5073 = vsub.f32 %v5069, %v5065
        %v5074 = vsub.f32 %v5066, %v5070
        %v5075 = vsub.f32 %v5067, %v5071
        %v5076 = vsub.f32 %v5068, %v5072
        %v5077 = vsub.f32 %v5069, %v5073
        %v5078 = vmul.f32 %v5062, 512.0
        %v5079 = vmul.f32 %v5063, 512.0
        %v5080 = vmul.f32 %v5064, 512.0
        %v5081 = vmul.f32 %v5065, 512.0
        %v5082 = vadd.f32 %v5078, 12582912.0
        %v5083 = vadd.f32 %v5079, 12582912.0
        %v5084 = vadd.f32 %v5080, 12582912.0
        %v5085 = vadd.f32 %v5081, 12582912.0
        %v5086 = vsub.f32 %v5082, 12582912.0
        %v5087 = vsub.f32 %v5083, 12582912.0
        %v5088 = vsub.f32 %v5084, 12582912.0
        %v5089 = vsub.f32 %v5085, 12582912.0
        %v5090 = vmul.f32 %v5086, 0.001953125
        %v5091 = vmul.f32 %v5087, 0.001953125
        %v5092 = vmul.f32 %v5088, 0.001953125
        %v5093 = vmul.f32 %v5089, 0.001953125
        %v5094 = vand.u32 2147483647, %v5062
        %v5095 = vand.u32 2147483647, %v5063
        %v5096 = vand.u32 2147483647, %v5064
        %v5097 = vand.u32 2147483647, %v5065
        %vm5098 = vcmp.lt.f32.partialorder %v5094, 0.015625
        %vm5099 = vcmp.lt.f32.partialorder %v5095, 0.015625
        %vm5100 = vcmp.lt.f32.partialorder %v5096, 0.015625
        %vm5101 = vcmp.lt.f32.partialorder %v5097, 0.015625
        %v5102 = vsel %vm5098, %v5090, %v5074
        %v5103 = vsel %vm5099, %v5091, %v5075
        %v5104 = vsel %vm5100, %v5092, %v5076
        %v5105 = vsel %vm5101, %v5093, %v5077
        %v5106 = vmax.f32 %v5102, -448.0
        %v5107 = vmax.f32 %v5103, -448.0
        %v5108 = vmax.f32 %v5104, -448.0
        %v5109 = vmax.f32 %v5105, -448.0
        %v5110 = vmin.f32 %v5106, 448.0
        %v5111 = vmin.f32 %v5107, 448.0
        %v5112 = vmin.f32 %v5108, 448.0
        %v5113 = vmin.f32 %v5109, 448.0
        %v5114 = vpack.c.bf16 %v5111, %v5110
        %v5115 = vpack.c.bf16 %v5113, %v5112
        %v5132 = vunpack.c.l.b16 %v399
        %v5133 = vunpack.c.l.b16 %v400
        %v5134 = vunpack.c.l.b16 %v401
        %v5135 = vunpack.c.l.b16 %v402
        %v5136 = vunpack.c.l.b16 %v403
        %v5137 = vunpack.c.l.b16 %v404
        %v5138 = vunpack.c.l.b16 %v405
        %v5139 = vunpack.c.l.b16 %v406
        %v5140 = vunpack.c.l.b16 %v407
        %v5141 = vunpack.c.l.b16 %v408
        %v5142 = vunpack.c.l.b16 %v409
        %v5143 = vunpack.c.l.b16 %v410
        %v5144 = vunpack.c.l.b16 %v411
        %v5145 = vunpack.c.l.b16 %v412
        %v5146 = vunpack.c.l.b16 %v413
        %v5147 = vunpack.c.l.b16 %v414
        %v5148 = vpack.c.b16 %v5133, %v5132
        %v5149 = vpack.c.b16 %v5135, %v5134
        %v5150 = vpack.c.b16 %v5137, %v5136
        %v5151 = vpack.c.b16 %v5139, %v5138
        %v5152 = vpack.c.b16 %v5141, %v5140
        %v5153 = vpack.c.b16 %v5143, %v5142
        %v5154 = vpack.c.b16 %v5145, %v5144
        %v5155 = vpack.c.b16 %v5147, %v5146
        %5164 = vmatprep.subr.bf16.mxu0 0
        %5165 = vmatpush1.bf16.msra.mxu0 %v5148
        %5166 = vmatprep.subr.bf16.mxu0 0
        %5167 = vmatpush1.bf16.msra.mxu0 %v5149
        %5168 = vmatprep.subr.bf16.mxu0 0
        %5169 = vmatpush1.bf16.msra.mxu0 %v5150
        %5170 = vmatprep.subr.bf16.mxu0 0
        %5171 = vmatpush1.bf16.msra.mxu0 %v5151
        %5172 = vmatprep.subr.bf16.mxu0 0
        %5173 = vmatpush1.bf16.msra.mxu0 %v5152
        %5174 = vmatprep.subr.bf16.mxu0 0
        %5175 = vmatpush1.bf16.msra.mxu0 %v5153
        %5176 = vmatprep.subr.bf16.mxu0 0
        %5177 = vmatpush1.bf16.msra.mxu0 %v5154
        %5178 = vmatprep.subr.bf16.mxu0 0
        %5179 = vmatpush1.bf16.msra.mxu0 %v5155
        %5180 = vmatprep.subr.bf16.mxu0 0
        %5181 = vmatpush1.bf16.msra.mxu0 0
        %5182 = vmatprep.subr.bf16.mxu0 0
        %5183 = vmatpush1.bf16.msra.mxu0 0
        %5184 = vmatprep.subr.bf16.mxu0 0
        %5185 = vmatpush1.bf16.msra.mxu0 0
        %5186 = vmatprep.subr.bf16.mxu0 0
        %5187 = vmatpush1.bf16.msra.mxu0 0
        %5188 = vmatprep.subr.bf16.mxu0 0
        %5189 = vmatpush1.bf16.msra.mxu0 0
        %5190 = vmatprep.subr.bf16.mxu0 0
        %5191 = vmatpush1.bf16.msra.mxu0 0
        %5192 = vmatprep.subr.bf16.mxu0 0
        %5193 = vmatpush1.bf16.msra.mxu0 0
        %5194 = vmatprep.subr.bf16.mxu0 0
        %5195 = vmatpush1.bf16.msra.mxu0 0
        %5196 = vmatprep.mubr.bf16.mxu0 0
        %5197 = vmatmul.mubr.bf16.gmra.mrb[0].mxu0 %v5114
        %v5198 = vpop.f32.mrb[0].mxu0
        %v5199 = vadd.f32 0.0, %v5198
        %v5200 = vpop.f32.mrb[0].mxu0
        %v5201 = vpop.f32.mrb[0].mxu0
        %v5202 = vadd.f32 0.0, %v5201
        %v5203 = vpop.f32.mrb[0].mxu0
        %5204 = vmatprep.mubr.bf16.mxu0 0
        %5205 = vmatmul.mubr.bf16.gmra.mrb[0].mxu0 %v5115
        %v5206 = vpop.f32.mrb[0].mxu0
        %v5207 = vadd.f32 0.0, %v5206
        %v5208 = vpop.f32.mrb[0].mxu0
        %v5209 = vpop.f32.mrb[0].mxu0
        %v5210 = vadd.f32 0.0, %v5209
        %v5211 = vpop.f32.mrb[0].mxu0
        %5212 = vdwg.mxu0
        %v5213 = vmul.f32 %v5199, %v5058
        %v5214 = vmul.f32 %v5202, %v5059
        %v5215 = vmul.f32 %v5207, %v5060
        %v5216 = vmul.f32 %v5210, %v5061
        %v5217 = vadd.f32 %v5018, %v5213
        %v5218 = vadd.f32 %v5019, %v5214
        %v5219 = vadd.f32 %v5020, %v5215
        %v5220 = vadd.f32 %v5021, %v5216
        %v5221 = vlaneseq
        %v5222 = vshrl.u32 %v5221, 7
        %v5223 = vsub.s32 1, %v5222
        %v5224 = vrot.slane %v415, %v5223
        %v5225 = vadd.f32 %v5217, %v5224
        %v5226 = vadd.f32 %v5218, %v5224
        %v5227 = vadd.f32 %v5219, %v5224
        %v5228 = vadd.f32 %v5220, %v5224
        %v5229 = vadd.f32 %v4356, %v5225
        %v5230 = vadd.f32 %v4357, %v5226
        %v5231 = vadd.f32 %v4358, %v5227
        %v5232 = vadd.f32 %v4359, %v5228
        %5233 = vadd.xlane.f32.xlu0 %v5229
        %v5234 = vpop.xlane.xlu0 %5233
        %5235 = vadd.xlane.f32.xlu0 %v5230
        %v5236 = vpop.xlane.xlu0 %5235
        %5237 = vadd.xlane.f32.xlu0 %v5231
        %v5238 = vpop.xlane.xlu0 %5237
        %5239 = vadd.xlane.f32.xlu0 %v5232
        %v5240 = vpop.xlane.xlu0 %5239
        %v5241 = vmul.f32 %v5234, %v4307
        %v5242 = vmul.f32 %v5236, %v4307
        %v5243 = vmul.f32 %v5238, %v4307
        %v5244 = vmul.f32 %v5240, %v4307
        %v5245 = vsub.f32 %v5229, %v5241
        %v5246 = vsub.f32 %v5230, %v5242
        %v5247 = vsub.f32 %v5231, %v5243
        %v5248 = vsub.f32 %v5232, %v5244
        %v5249 = vmul.f32 %v5245, %v5245
        %v5250 = vmul.f32 %v5246, %v5246
        %v5251 = vmul.f32 %v5247, %v5247
        %v5252 = vmul.f32 %v5248, %v5248
        %5253 = vadd.xlane.f32.xlu0 %v5249
        %v5254 = vpop.xlane.xlu0 %5253
        %5255 = vadd.xlane.f32.xlu0 %v5250
        %v5256 = vpop.xlane.xlu0 %5255
        %5257 = vadd.xlane.f32.xlu0 %v5251
        %v5258 = vpop.xlane.xlu0 %5257
        %5259 = vadd.xlane.f32.xlu0 %v5252
        %v5260 = vpop.xlane.xlu0 %5259
        %v5261 = vmul.f32 %v5254, %v4307
        %v5262 = vmul.f32 %v5256, %v4307
        %v5263 = vmul.f32 %v5258, %v4307
        %v5264 = vmul.f32 %v5260, %v4307
        %v5265 = vadd.f32 %v5261, 1e-05
        %v5266 = vadd.f32 %v5262, 1e-05
        %v5267 = vadd.f32 %v5263, 1e-05
        %v5268 = vadd.f32 %v5264, 1e-05
        %v5269 = vrsqrt.pop %v5265
        %v5270 = vrsqrt.pop %v5266
        %v5271 = vrsqrt.pop %v5267
        %v5272 = vrsqrt.pop %v5268
        %v5273 = vmul.f32 %v5245, %v5269
        %v5274 = vmul.f32 %v5246, %v5270
        %v5275 = vmul.f32 %v5247, %v5271
        %v5276 = vmul.f32 %v5248, %v5272
        %v5277 = vlaneseq
        %v5278 = vshrl.u32 %v5277, 7
        %v5279 = vsub.s32 3, %v5278
        %v5280 = vrot.slane %v415, %v5279
        %v5281 = vmul.f32 %v5273, %v5280
        %v5282 = vmul.f32 %v5274, %v5280
        %v5283 = vmul.f32 %v5275, %v5280
        %v5284 = vmul.f32 %v5276, %v5280
        %v5285 = vlaneseq
        %v5286 = vshrl.u32 %v5285, 7
        %v5287 = vsub.s32 3, %v5286
        %v5288 = vrot.slane %v416, %v5287
        %v5289 = vadd.f32 %v5281, %v5288
        %v5290 = vadd.f32 %v5282, %v5288
        %v5291 = vadd.f32 %v5283, %v5288
        %v5292 = vadd.f32 %v5284, %v5288
        %p5293 = scmp.ne.s32.totalorder %s23, 5
        // Predicated region
        $region61: #{minilm_forward.2} parent=39 // pred_check
          %p5294 = pneg %p5293
        $region62: #{minilm_forward.2} parent=39 // pred_check_branch
          %5296 = sbr.rel (%p5294) target = $region64
        $region63: #{minilm_forward.2} parent=39 // pred_region
          %5297 = vst [vmem:[%s5] sm:$0xff] %v5289
          %5298 = vst [vmem:[%s5 + $0x8] sm:$0xff] %v5290
          %5299 = vst [vmem:[%s5 + $0x10] sm:$0xff] %v5291
          %5300 = vst [vmem:[%s5 + $0x18] sm:$0xff] %v5292
        $region64: #{minilm_forward.2} parent=39 // pred_fallthru
          _
        %p5301 = scmp.eq.s32.totalorder %s23, 5
        // Predicated region
        $region65: #{minilm_forward.2} parent=39 // pred_check
          %p5302 = pneg %p5301
        $region66: #{minilm_forward.2} parent=39 // pred_check_branch
          %5304 = sbr.rel (%p5302) target = $region68
        $region67: #{minilm_forward.2} parent=39 // pred_region
          %v5305 = vld [vmem:[#allocation7] sm:$0xff]
          %5306 = vadd.xlane.f32.xlu0 %v5289
          %v5307 = vpop.xlane.xlu0 %5306
          %5308 = vadd.xlane.f32.xlu0 %v5290
          %v5309 = vpop.xlane.xlu0 %5308
          %5310 = vadd.xlane.f32.xlu0 %v5291
          %v5311 = vpop.xlane.xlu0 %5310
          %5312 = vadd.xlane.f32.xlu0 %v5292
          %v5313 = vpop.xlane.xlu0 %5312
          %v5314 = vmul.f32 %v5307, %v4307
          %v5315 = vmul.f32 %v5309, %v4307
          %v5316 = vmul.f32 %v5311, %v4307
          %v5317 = vmul.f32 %v5313, %v4307
          %v5318 = vsub.f32 %v5289, %v5314
          %v5319 = vsub.f32 %v5290, %v5315
          %v5320 = vsub.f32 %v5291, %v5316
          %v5321 = vsub.f32 %v5292, %v5317
          %v5322 = vmul.f32 %v5318, %v5318
          %v5323 = vmul.f32 %v5319, %v5319
          %v5324 = vmul.f32 %v5320, %v5320
          %v5325 = vmul.f32 %v5321, %v5321
          %5326 = vadd.xlane.f32.xlu0 %v5322
          %v5327 = vpop.xlane.xlu0 %5326
          %5328 = vadd.xlane.f32.xlu0 %v5323
          %v5329 = vpop.xlane.xlu0 %5328
          %5330 = vadd.xlane.f32.xlu0 %v5324
          %v5331 = vpop.xlane.xlu0 %5330
          %5332 = vadd.xlane.f32.xlu0 %v5325
          %v5333 = vpop.xlane.xlu0 %5332
          %v5334 = vmul.f32 %v5327, %v4307
          %v5335 = vmul.f32 %v5329, %v4307
          %v5336 = vmul.f32 %v5331, %v4307
          %v5337 = vmul.f32 %v5333, %v4307
          %v5338 = vadd.f32 %v5334, 1e-05
          %v5339 = vadd.f32 %v5335, 1e-05
          %v5340 = vadd.f32 %v5336, 1e-05
          %v5341 = vadd.f32 %v5337, 1e-05
          %v5342 = vrsqrt.pop %v5338
          %v5343 = vrsqrt.pop %v5339
          %v5344 = vrsqrt.pop %v5340
          %v5345 = vrsqrt.pop %v5341
          %v5346 = vmul.f32 %v5318, %v5342
          %v5347 = vmul.f32 %v5319, %v5343
          %v5348 = vmul.f32 %v5320, %v5344
          %v5349 = vmul.f32 %v5321, %v5345
          %v5350 = vlaneseq
          %v5351 = vshrl.u32 %v5350, 7
          %v5352 = vsub.s32 0, %v5351
          %v5353 = vrot.slane %v5305, %v5352
          %v5354 = vmul.f32 %v5346, %v5353
          %v5355 = vmul.f32 %v5347, %v5353
          %v5356 = vmul.f32 %v5348, %v5353
          %v5357 = vmul.f32 %v5349, %v5353
          %v5358 = vlaneseq
          %v5359 = vshrl.u32 %v5358, 7
          %v5360 = vsub.s32 1, %v5359
          %v5361 = vrot.slane %v5305, %v5360
          %v5362 = vadd.f32 %v5354, %v5361
          %v5363 = vadd.f32 %v5355, %v5361
          %v5364 = vadd.f32 %v5356, %v5361
          %v5365 = vadd.f32 %v5357, %v5361
          %5366 = vadd.xlane.f32.xlu0 %v5362
          %v5367 = vpop.xlane.xlu0 %5366
          %5368 = vadd.xlane.f32.xlu0 %v5363
          %v5369 = vpop.xlane.xlu0 %5368
          %5370 = vadd.xlane.f32.xlu0 %v5364
          %v5371 = vpop.xlane.xlu0 %5370
          %5372 = vadd.xlane.f32.xlu0 %v5365
          %v5373 = vpop.xlane.xlu0 %5372
          %v5374 = vmul.f32 %v5367, %v4307
          %v5375 = vmul.f32 %v5369, %v4307
          %v5376 = vmul.f32 %v5371, %v4307
          %v5377 = vmul.f32 %v5373, %v4307
          %v5378 = vsub.f32 %v5362, %v5374
          %v5379 = vsub.f32 %v5363, %v5375
          %v5380 = vsub.f32 %v5364, %v5376
          %v5381 = vsub.f32 %v5365, %v5377
          %v5382 = vmul.f32 %v5378, %v5378
          %v5383 = vmul.f32 %v5379, %v5379
          %v5384 = vmul.f32 %v5380, %v5380
          %v5385 = vmul.f32 %v5381, %v5381
          %5386 = vadd.xlane.f32.xlu0 %v5382
          %v5387 = vpop.xlane.xlu0 %5386
          %5388 = vadd.xlane.f32.xlu0 %v5383
          %v5389 = vpop.xlane.xlu0 %5388
          %5390 = vadd.xlane.f32.xlu0 %v5384
          %v5391 = vpop.xlane.xlu0 %5390
          %5392 = vadd.xlane.f32.xlu0 %v5385
          %v5393 = vpop.xlane.xlu0 %5392
          %v5394 = vmul.f32 %v5387, %v4307
          %v5395 = vmul.f32 %v5389, %v4307
          %v5396 = vmul.f32 %v5391, %v4307
          %v5397 = vmul.f32 %v5393, %v4307
          %v5398 = vadd.f32 %v5394, 1e-05
          %v5399 = vadd.f32 %v5395, 1e-05
          %v5400 = vadd.f32 %v5396, 1e-05
          %v5401 = vadd.f32 %v5397, 1e-05
          %v5402 = vrsqrt.pop %v5398
          %v5403 = vrsqrt.pop %v5399
          %v5404 = vrsqrt.pop %v5400
          %v5405 = vrsqrt.pop %v5401
          %v5406 = vmul.f32 %v5378, %v5402
          %v5407 = vmul.f32 %v5379, %v5403
          %v5408 = vmul.f32 %v5380, %v5404
          %v5409 = vmul.f32 %v5381, %v5405
          %v5410 = vlaneseq
          %v5411 = vshrl.u32 %v5410, 7
          %v5412 = vsub.s32 2, %v5411
          %v5413 = vrot.slane %v5305, %v5412
          %v5414 = vmul.f32 %v5406, %v5413
          %v5415 = vmul.f32 %v5407, %v5413
          %v5416 = vmul.f32 %v5408, %v5413
          %v5417 = vmul.f32 %v5409, %v5413
          %v5418 = vlaneseq
          %v5419 = vshrl.u32 %v5418, 7
          %v5420 = vsub.s32 3, %v5419
          %v5421 = vrot.slane %v5305, %v5420
          %v5422 = vadd.f32 %v5414, %v5421
          %v5423 = vadd.f32 %v5415, %v5421
          %v5424 = vadd.f32 %v5416, %v5421
          %v5425 = vadd.f32 %v5417, %v5421
          %5426 = vst [vmem:[%s5] sm:$0xff] %v5422
          %5427 = vst [vmem:[%s5 + $0x8] sm:$0xff] %v5423
          %5428 = vst [vmem:[%s5 + $0x10] sm:$0xff] %v5424
          %5429 = vst [vmem:[%s5 + $0x18] sm:$0xff] %v5425
        $region68: #{minilm_forward.2} parent=39 // pred_fallthru
          _
        // Predicated region
        $region69: #{minilm_forward.2} parent=39 // pred_check
          %p5430 = pneg %p156
        $region70: #{minilm_forward.2} parent=39 // pred_check_branch
          %5432 = sbr.rel (%p5430) target = $region72
        $region71: #{minilm_forward.2} parent=39 // pred_region
          _
        $region72: #{minilm_forward.2} parent=39 // pred_fallthru
          _
        // Predicated region
        $region73: #{minilm_forward.2} parent=39 // pred_check
          %p5433 = pneg %p156
        $region74: #{minilm_forward.2} parent=39 // pred_check_branch
          %5435 = sbr.rel (%p5433) target = $region76
        $region75: #{minilm_forward.2} parent=39 // pred_region
          _
        $region76: #{minilm_forward.2} parent=39 // pred_fallthru
          _
      $region40: #{minilm_forward.2} parent=5 // pred_fallthru
        _
      %p5436 = scmp.le.s32.totalorder 2, %s18
      // Predicated region
      $region77: #{minilm_forward.2} parent=5 // pred_check
        %p5437 = pneg %p5436
      $region78: #{minilm_forward.2} parent=5 // pred_check_branch
        %5439 = sbr.rel (%p5437) target = $region80
      $region79: #{minilm_forward.2} parent=5 // pred_region
        %s5440 = ssub.s32 %s18, 2
      $region80: #{minilm_forward.2} parent=5 // pred_fallthru
        _
    $region6: #{minilm_forward.2} parent=1 // loop_footer
      %s22 = sadd.s32 1, %s18
    $region7: #{minilm_forward.2} parent=1 // loop_footer_branch
      %17 = sbr.rel target = $region3
    $region8: #{minilm_forward.2} parent=1 // loop_exit
      _
    %5441 = vsyncpa [#allocation3], 1
    %s5442 = scalar_lea.sflag [#allocation3], 1
    %5443 = vsyncpa %s5442, 1
    %5444 = vsyncpa [#allocation5], 1
    %s5445 = scalar_lea.sflag [#allocation5], 1
    %5446 = vsyncpa %s5445, 1
    %5447 = vsyncpa [#allocation8], 1

</llo_original>
